<compile_context>
chip_gen: v6e
topology: v6e:2x2x1
jax: 0.10.0
libtpu: 0.0.40
codegen_flags: <defaults>
</compile_context>

<pallas_src>
import numpy as np
import jax
import jax.numpy as jnp
from jax import lax
from jax.experimental import pallas as pl
from jax.experimental.pallas import tpu as pltpu  # noqa: F401  (TPU backend)


# ---------------------------------------------------------------- parameters

def _bn_fold(key, c):
    # eval-mode BatchNorm folded into per-channel scale/bias
    k1, k2, k3, k4 = jax.random.split(key, 4)
    gamma = jax.random.uniform(k1, (c,), minval=0.5, maxval=1.5)
    beta = 0.1 * jax.random.normal(k2, (c,))
    mean = 0.1 * jax.random.normal(k3, (c,))
    var = jax.random.uniform(k4, (c,), minval=0.5, maxval=1.5)
    scale = gamma / jnp.sqrt(var + 1e-5)
    bias = beta - mean * scale
    return scale.astype(jnp.float32), bias.astype(jnp.float32)


def _conv_w(key, kh, kw, cin, cout):
    return (0.2 * jax.random.normal(key, (kh, kw, cin, cout))).astype(jnp.float32)


def init_params(key, num_branches, num_blocks, channels):
    params = {"branches": [], "fuse": []}
    for i in range(num_branches):
        c = channels[i]
        blocks = []
        for _ in range(num_blocks[i]):
            key, k1, k2, k3, k4 = jax.random.split(key, 5)
            s1, b1 = _bn_fold(k2, c)
            s2, b2 = _bn_fold(k4, c)
            blocks.append({"w1": _conv_w(k1, 3, 3, c, c), "s1": s1, "b1": b1,
                           "w2": _conv_w(k3, 3, 3, c, c), "s2": s2, "b2": b2})
        params["branches"].append(blocks)
    for i in range(num_branches):
        row = []
        for j in range(num_branches):
            if j == i:
                row.append(None)
            elif j > i:
                key, kw_, kb_ = jax.random.split(key, 3)
                s, b = _bn_fold(kb_, channels[i])
                row.append({"w": _conv_w(kw_, 1, 1, channels[j], channels[i]),
                            "s": s, "b": b})
            else:
                convs = []
                for k in range(i - j):
                    cout = channels[i] if k == i - j - 1 else channels[j]
                    key, kw_, kb_ = jax.random.split(key, 3)
                    s, b = _bn_fold(kb_, cout)
                    convs.append({"w": _conv_w(kw_, 3, 3, channels[j], cout),
                                  "s": s, "b": b})
                row.append(convs)
        params["fuse"].append(row)
    return params


# --------------------------------------- host-side, run-ONCE packing/constants

def pack_params(params, channels):
    """Fold eval-mode BN scale into the matmul-ready weights and consolidate
    the whole module's parameters into TWO contiguous buffers (one DMA each):
        w_all : (n_convs, Cmax, 9*Cmax) f32, zero-padded, scale folded in
        b_all : (Cmax, n_convs)         f32, zero-padded
    Conv order (matches the kernel): branch0 blocks (conv1, conv2), branch1
    blocks (conv1, conv2), fuse-up (1x1), fuse-down (3x3 s=2)."""
    convs = []
    for branch in params["branches"]:
        for blk in branch:
            convs.append((blk["w1"], blk["s1"], blk["b1"]))
            convs.append((blk["w2"], blk["s2"], blk["b2"]))
    f_up = params["fuse"][0][1]        # 1x1 conv + BN   (branch1 -> branch0)
    convs.append((f_up["w"], f_up["s"], f_up["b"]))
    f_dn = params["fuse"][1][0][0]     # 3x3 s=2 conv+BN (branch0 -> branch1)
    convs.append((f_dn["w"], f_dn["s"], f_dn["b"]))

    cmax = max(channels)
    kmax = 9 * cmax
    n = len(convs)
    w_all = np.zeros((n, cmax, kmax), np.float32)
    b_all = np.zeros((cmax, n), np.float32)
    for j, (w, s, b) in enumerate(convs):
        w = np.asarray(w); s = np.asarray(s); b = np.asarray(b)
        kh, kw, cin, cout = w.shape
        w2d = np.transpose(w, (3, 0, 1, 2)).reshape(cout, kh * kw * cin)
        w_all[j, :cout, :w2d.shape[1]] = w2d * s[:, None]   # fold BN scale
        b_all[:cout, j] = b
    return jnp.asarray(w_all), jnp.asarray(b_all)


def _tap_masks_np(N, H, W):
    """(9, N*H*W) f32 validity masks per 3x3 tap (pad=1 zero border + kill
    row / image-boundary wrap-around of the flattened layout), tap order
    (dy, dx) row-major."""
    L = N * H * W
    lane = np.arange(L)
    xx = lane % W
    yy = (lane // W) % H
    rows = []
    for dy in (-1, 0, 1):
        for dx in (-1, 0, 1):
            rows.append((xx + dx >= 0) & (xx + dx < W) &
                        (yy + dy >= 0) & (yy + dy < H))
    return np.stack(rows, 0).astype(np.float32)


def _up_mat_np(N, H0, W0):
    """(L1, L0) 0/1 nearest-neighbour 2x replication matrix."""
    H1, W1 = H0 // 2, W0 // 2
    L0, L1 = N * H0 * W0, N * H1 * W1
    p = np.arange(L0)
    n, r = p // (H0 * W0), p % (H0 * W0)
    src = n * (H1 * W1) + (r // W0 // 2) * W1 + (r % W0) // 2
    m = np.zeros((L1, L0), np.float32)
    m[src, p] = 1.0
    return m


def _down_sel_np(N, H0, W0):
    """(L0, L1) 0/1 stride-2 column-selection matrix."""
    H1, W1 = H0 // 2, W0 // 2
    L0, L1 = N * H0 * W0, N * H1 * W1
    q = np.arange(L1)
    n, r = q // (H1 * W1), q % (H1 * W1)
    src = n * (H0 * W0) + 2 * (r // W1) * W0 + 2 * (r % W1)
    m = np.zeros((L0, L1), np.float32)
    m[src, q] = 1.0
    return m


# ------------------------------------------------------- fused Pallas module

def make_hr_module_pallas(N, H0, W0, channels, num_blocks):
    """Builds a jitted (x0_nchw, x1_nchw, w_all, b_all) -> [out0, out1] (NCHW)
    forward where the whole HighResolutionModule runs in a single pallas_call."""
    # TODO(synk): generalize the fused fuse-layer wiring beyond 2 branches.
    assert len(channels) == 2 and len(num_blocks) == 2
    C0, C1 = channels
    H1, W1 = H0 // 2, W0 // 2
    L0, L1 = N * H0 * W0, N * H1 * W1

    # ---- static, iota-free constants (precomputed on the host, DMA'd once)
    masks0_c = jnp.asarray(_tap_masks_np(N, H0, W0))   # (9, L0)
    masks1_c = jnp.asarray(_tap_masks_np(N, H1, W1))   # (9, L1)
    up_mat_c = jnp.asarray(_up_mat_np(N, H0, W0))      # (L1, L0)
    sel_mat_c = jnp.asarray(_down_sel_np(N, H0, W0))   # (L0, L1)

    TAPS = [(dy, dx) for dy in (-1, 0, 1) for dx in (-1, 0, 1)]

    def kernel(x0_ref, x1_ref, w_ref, b_ref, m0_ref, m1_ref, up_ref, sel_ref,
               out0_ref, out1_ref):
        b_all = b_ref[...]                 # (Cmax, n_convs)
        masks0 = m0_ref[...] > 0.5         # (9, L0) bool
        masks1 = m1_ref[...] > 0.5         # (9, L1) bool

        conv_idx = iter(range(10))

        def im2col(x, W, L, masks):
            # x: (Cin, L) -> (9*Cin, L).  Tap shifts via XLU rolls; wrapped
            # and out-of-image taps zeroed with the precomputed masks.
            cols = []
            for t, (dy, dx) in enumerate(TAPS):
                d = dy * W + dx
                if d == 0:
                    cols.append(x)                       # center tap, mask==1
                else:
                    shifted = pltpu.roll(x, shift=(-d) % L, axis=1)
                    cols.append(jnp.where(masks[t:t + 1, :], shifted, 0.0))
            return jnp.concatenate(cols, axis=0)

        def conv_w(j, cout, K):
            return w_ref[j, :cout, :K]     # scale already folded in

        def bias(j, cout):
            return b_all[:cout, j:j + 1]

        def conv3x3_bn(x, cin, cout, W, L, masks, relu, residual=None):
            j = next(conv_idx)
            y = jnp.dot(conv_w(j, cout, 9 * cin), im2col(x, W, L, masks),
                        preferred_element_type=jnp.float32)   # (Cout, L)
            y = y + bias(j, cout)
            if residual is not None:
                y = y + residual
            return jnp.maximum(y, 0.0) if relu else y

        # ---- branches: sequences of BasicBlocks (expansion=1) -------------
        h0 = x0_ref[...]
        for _ in range(num_blocks[0]):
            t0 = conv3x3_bn(h0, C0, C0, W0, L0, masks0, relu=True)
            h0 = conv3x3_bn(t0, C0, C0, W0, L0, masks0, relu=True, residual=h0)
        h1 = x1_ref[...]
        for _ in range(num_blocks[1]):
            t1 = conv3x3_bn(h1, C1, C1, W1, L1, masks1, relu=True)
            h1 = conv3x3_bn(t1, C1, C1, W1, L1, masks1, relu=True, residual=h1)

        # ---- fuse output 0: relu(h0 + up2x(bn(conv1x1(h1)))) --------------
        j = next(conv_idx)
        t_up = jnp.dot(conv_w(j, C0, C1), h1,
                       preferred_element_type=jnp.float32) + bias(j, C0)
        up = jnp.dot(t_up, up_ref[...], preferred_element_type=jnp.float32)
        out0_ref[...] = jnp.maximum(h0 + up, 0.0)

        # ---- fuse output 1: relu(h1 + bn(conv3x3_stride2(h0))) ------------
        j = next(conv_idx)
        full = jnp.dot(conv_w(j, C1, 9 * C0), im2col(h0, W0, L0, masks0),
                       preferred_element_type=jnp.float32)        # (C1, L0)
        dn = jnp.dot(full, sel_ref[...],
                     preferred_element_type=jnp.float32) + bias(j, C1)
        out1_ref[...] = jnp.maximum(h1 + dn, 0.0)

    @jax.jit
    def run(x0_nchw, x1_nchw, w_all, b_all):
        # NCHW -> lane-dense (C, N*H*W) only at the module boundary.
        x0 = jnp.transpose(x0_nchw, (1, 0, 2, 3)).reshape(C0, L0)
        x1 = jnp.transpose(x1_nchw, (1, 0, 2, 3)).reshape(C1, L1)
        out0, out1 = pl.pallas_call(
            kernel,
            out_shape=(jax.ShapeDtypeStruct((C0, L0), jnp.float32),
                       jax.ShapeDtypeStruct((C1, L1), jnp.float32)),
        )(x0, x1, w_all, b_all, masks0_c, masks1_c, up_mat_c, sel_mat_c)
        o0 = jnp.transpose(out0.reshape(C0, N, H0, W0), (1, 0, 2, 3))
        o1 = jnp.transpose(out1.reshape(C1, N, H1, W1), (1, 0, 2, 3))
        return [o0, o1]

    return run


# -------------------------------------------------- pure-JAX (XLA) reference

def conv_bn_ref(x, w, scale, bias, *, pad, stride=1, relu=False, residual=None):
    out = lax.conv_general_dilated(
        x, w, window_strides=(stride, stride),
        padding=((pad, pad), (pad, pad)),
        dimension_numbers=('NHWC', 'HWIO', 'NHWC'))
    out = out * scale[None, None, None, :] + bias[None, None, None, :]
    if residual is not None:
        out = out + residual
    if relu:
        out = jnp.maximum(out, 0.0)
    return out


def hr_module_forward_ref(xs, params):
    nb = len(xs)
    ys = []
    for i in range(nb):
        h = xs[i]
        for blk in params["branches"][i]:
            inp = h
            t = conv_bn_ref(h, blk["w1"], blk["s1"], blk["b1"], pad=1, relu=True)
            h = conv_bn_ref(t, blk["w2"], blk["s2"], blk["b2"], pad=1, relu=True,
                            residual=inp)
        ys.append(h)
    outs = []
    for i in range(nb):
        acc = None
        for j in range(nb):
            if j == i:
                t = ys[j]
            elif j > i:
                f = params["fuse"][i][j]
                t = conv_bn_ref(ys[j], f["w"], f["s"], f["b"], pad=0, relu=False)
                s = 2 ** (j - i)
                t = jnp.repeat(jnp.repeat(t, s, axis=1), s, axis=2)
            else:
                t = ys[j]
                fl = params["fuse"][i][j]
                for k, f in enumerate(fl):
                    last = k == len(fl) - 1
                    t = conv_bn_ref(t, f["w"], f["s"], f["b"], pad=1, stride=2,
                                    relu=not last)
            acc = t if acc is None else acc + t
        outs.append(jnp.maximum(acc, 0.0))
    return outs


# --------------------------------------------------------------------- main

if __name__ == "__main__":
    N = 2
    num_branches = 2
    num_blocks = [2, 2]
    channels = [8, 16]
    H0 = W0 = 16

    key = jax.random.PRNGKey(0)
    key, kp = jax.random.split(key)
    params = init_params(kp, num_branches, num_blocks, channels)

    key, k0, k1 = jax.random.split(key, 3)
    # NCHW inputs, as the PyTorch module would receive them
    x0_nchw = jax.random.normal(k0, (N, channels[0], H0, W0), jnp.float32)
    x1_nchw = jax.random.normal(k1, (N, channels[1], H0 // 2, W0 // 2), jnp.float32)

    # run-once, host-side weight packing (eval-mode constants) — NOT per call
    w_all, b_all = pack_params(params, channels)

    run = make_hr_module_pallas(N, H0, W0, channels, num_blocks)
    outs = run(x0_nchw, x1_nchw, w_all, b_all)
    outs = jax.block_until_ready(outs)

    # verify against the pure-JAX reference of the same module
    xs_nhwc = [jnp.transpose(x0_nchw, (0, 2, 3, 1)),
               jnp.transpose(x1_nchw, (0, 2, 3, 1))]
    refs = hr_module_forward_ref(xs_nhwc, params)
    refs = [jnp.transpose(o, (0, 3, 1, 2)) for o in refs]

    for o, r in zip(outs, refs):
        np.testing.assert_allclose(np.asarray(o), np.asarray(r),
                                   rtol=2e-3, atol=2e-3)
    print("KERNEL_OK")
</pallas_src>

<mosaic_0001>
module attributes {stable_mosaic.version = 11 : i64} {
  func.func @kernel(%arg0: memref<8x512xf32, #tpu.memory_space<vmem>>, %arg1: memref<16x128xf32, #tpu.memory_space<vmem>>, %arg2: memref<10x16x144xf32, #tpu.memory_space<vmem>>, %arg3: memref<16x10xf32, #tpu.memory_space<vmem>>, %arg4: memref<9x512xf32, #tpu.memory_space<vmem>>, %arg5: memref<9x128xf32, #tpu.memory_space<vmem>>, %arg6: memref<128x512xf32, #tpu.memory_space<vmem>>, %arg7: memref<512x128xf32, #tpu.memory_space<vmem>>, %arg8: memref<8x512xf32, #tpu.memory_space<vmem>>, %arg9: memref<16x128xf32, #tpu.memory_space<vmem>>) attributes {dimension_semantics = [], scalar_prefetch = 0 : i64, scratch_operands = 0 : i64, tpu.core_type = #tpu.core_type<tc>} {
    %c0 = arith.constant 0 : index
    %c0_0 = arith.constant 0 : index
    %0 = vector.load %arg3[%c0, %c0_0] : memref<16x10xf32, #tpu.memory_space<vmem>>, vector<16x10xf32>
    %c0_1 = arith.constant 0 : index
    %c0_2 = arith.constant 0 : index
    %1 = vector.load %arg4[%c0_1, %c0_2] : memref<9x512xf32, #tpu.memory_space<vmem>>, vector<9x512xf32>
    %cst = arith.constant 5.000000e-01 : f32
    %2 = vector.broadcast %cst : f32 to vector<9x512xf32>
    %3 = arith.cmpf ogt, %1, %2 : vector<9x512xf32>
    %c0_3 = arith.constant 0 : index
    %c0_4 = arith.constant 0 : index
    %4 = vector.load %arg5[%c0_3, %c0_4] : memref<9x128xf32, #tpu.memory_space<vmem>>, vector<9x128xf32>
    %cst_5 = arith.constant 5.000000e-01 : f32
    %5 = vector.broadcast %cst_5 : f32 to vector<9x128xf32>
    %6 = arith.cmpf ogt, %4, %5 : vector<9x128xf32>
    %c0_6 = arith.constant 0 : index
    %c0_7 = arith.constant 0 : index
    %7 = vector.load %arg0[%c0_6, %c0_7] : memref<8x512xf32, #tpu.memory_space<vmem>>, vector<8x512xf32>
    %c0_8 = arith.constant 0 : index
    %c0_9 = arith.constant 0 : index
    %c0_10 = arith.constant 0 : index
    %8 = vector.load %arg2[%c0_8, %c0_9, %c0_10] : memref<10x16x144xf32, #tpu.memory_space<vmem>>, vector<1x8x72xf32>
    %9 = vector.shape_cast %8 : vector<1x8x72xf32> to vector<8x72xf32>
    %c17_i32 = arith.constant 17 : i32
    %10 = tpu.dynamic_rotate %7 by %c17_i32 dim 1 : vector<8x512xf32>, i32 -> vector<8x512xf32>
    %11 = vector.extract_strided_slice %3 {offsets = [0, 0], sizes = [1, 512], strides = [1, 1]} : vector<9x512xi1> to vector<1x512xi1>
    %cst_11 = arith.constant 0.000000e+00 : f32
    %12 = vector.shape_cast %11 : vector<1x512xi1> to vector<1x512xi1>
    %13 = vector.broadcast %12 : vector<1x512xi1> to vector<8x512xi1>
    %14 = vector.broadcast %cst_11 : f32 to vector<8x512xf32>
    %15 = arith.select %13, %10, %14 : vector<8x512xi1>, vector<8x512xf32>
    %c16_i32 = arith.constant 16 : i32
    %16 = tpu.dynamic_rotate %7 by %c16_i32 dim 1 : vector<8x512xf32>, i32 -> vector<8x512xf32>
    %17 = vector.extract_strided_slice %3 {offsets = [1, 0], sizes = [1, 512], strides = [1, 1]} : vector<9x512xi1> to vector<1x512xi1>
    %cst_12 = arith.constant 0.000000e+00 : f32
    %18 = vector.shape_cast %17 : vector<1x512xi1> to vector<1x512xi1>
    %19 = vector.broadcast %18 : vector<1x512xi1> to vector<8x512xi1>
    %20 = vector.broadcast %cst_12 : f32 to vector<8x512xf32>
    %21 = arith.select %19, %16, %20 : vector<8x512xi1>, vector<8x512xf32>
    %c15_i32 = arith.constant 15 : i32
    %22 = tpu.dynamic_rotate %7 by %c15_i32 dim 1 : vector<8x512xf32>, i32 -> vector<8x512xf32>
    %23 = vector.extract_strided_slice %3 {offsets = [2, 0], sizes = [1, 512], strides = [1, 1]} : vector<9x512xi1> to vector<1x512xi1>
    %cst_13 = arith.constant 0.000000e+00 : f32
    %24 = vector.shape_cast %23 : vector<1x512xi1> to vector<1x512xi1>
    %25 = vector.broadcast %24 : vector<1x512xi1> to vector<8x512xi1>
    %26 = vector.broadcast %cst_13 : f32 to vector<8x512xf32>
    %27 = arith.select %25, %22, %26 : vector<8x512xi1>, vector<8x512xf32>
    %c1_i32 = arith.constant 1 : i32
    %28 = tpu.dynamic_rotate %7 by %c1_i32 dim 1 : vector<8x512xf32>, i32 -> vector<8x512xf32>
    %29 = vector.extract_strided_slice %3 {offsets = [3, 0], sizes = [1, 512], strides = [1, 1]} : vector<9x512xi1> to vector<1x512xi1>
    %cst_14 = arith.constant 0.000000e+00 : f32
    %30 = vector.shape_cast %29 : vector<1x512xi1> to vector<1x512xi1>
    %31 = vector.broadcast %30 : vector<1x512xi1> to vector<8x512xi1>
    %32 = vector.broadcast %cst_14 : f32 to vector<8x512xf32>
    %33 = arith.select %31, %28, %32 : vector<8x512xi1>, vector<8x512xf32>
    %c511_i32 = arith.constant 511 : i32
    %34 = tpu.dynamic_rotate %7 by %c511_i32 dim 1 : vector<8x512xf32>, i32 -> vector<8x512xf32>
    %35 = vector.extract_strided_slice %3 {offsets = [5, 0], sizes = [1, 512], strides = [1, 1]} : vector<9x512xi1> to vector<1x512xi1>
    %cst_15 = arith.constant 0.000000e+00 : f32
    %36 = vector.shape_cast %35 : vector<1x512xi1> to vector<1x512xi1>
    %37 = vector.broadcast %36 : vector<1x512xi1> to vector<8x512xi1>
    %38 = vector.broadcast %cst_15 : f32 to vector<8x512xf32>
    %39 = arith.select %37, %34, %38 : vector<8x512xi1>, vector<8x512xf32>
    %c497_i32 = arith.constant 497 : i32
    %40 = tpu.dynamic_rotate %7 by %c497_i32 dim 1 : vector<8x512xf32>, i32 -> vector<8x512xf32>
    %41 = vector.extract_strided_slice %3 {offsets = [6, 0], sizes = [1, 512], strides = [1, 1]} : vector<9x512xi1> to vector<1x512xi1>
    %cst_16 = arith.constant 0.000000e+00 : f32
    %42 = vector.shape_cast %41 : vector<1x512xi1> to vector<1x512xi1>
    %43 = vector.broadcast %42 : vector<1x512xi1> to vector<8x512xi1>
    %44 = vector.broadcast %cst_16 : f32 to vector<8x512xf32>
    %45 = arith.select %43, %40, %44 : vector<8x512xi1>, vector<8x512xf32>
    %c496_i32 = arith.constant 496 : i32
    %46 = tpu.dynamic_rotate %7 by %c496_i32 dim 1 : vector<8x512xf32>, i32 -> vector<8x512xf32>
    %47 = vector.extract_strided_slice %3 {offsets = [7, 0], sizes = [1, 512], strides = [1, 1]} : vector<9x512xi1> to vector<1x512xi1>
    %cst_17 = arith.constant 0.000000e+00 : f32
    %48 = vector.shape_cast %47 : vector<1x512xi1> to vector<1x512xi1>
    %49 = vector.broadcast %48 : vector<1x512xi1> to vector<8x512xi1>
    %50 = vector.broadcast %cst_17 : f32 to vector<8x512xf32>
    %51 = arith.select %49, %46, %50 : vector<8x512xi1>, vector<8x512xf32>
    %c495_i32 = arith.constant 495 : i32
    %52 = tpu.dynamic_rotate %7 by %c495_i32 dim 1 : vector<8x512xf32>, i32 -> vector<8x512xf32>
    %53 = vector.extract_strided_slice %3 {offsets = [8, 0], sizes = [1, 512], strides = [1, 1]} : vector<9x512xi1> to vector<1x512xi1>
    %cst_18 = arith.constant 0.000000e+00 : f32
    %54 = vector.shape_cast %53 : vector<1x512xi1> to vector<1x512xi1>
    %55 = vector.broadcast %54 : vector<1x512xi1> to vector<8x512xi1>
    %56 = vector.broadcast %cst_18 : f32 to vector<8x512xf32>
    %57 = arith.select %55, %52, %56 : vector<8x512xi1>, vector<8x512xf32>
    %58 = tpu.concatenate %15, %21, %27, %33, %7, %39, %45, %51, %57 in 0 : vector<8x512xf32>, vector<8x512xf32>, vector<8x512xf32>, vector<8x512xf32>, vector<8x512xf32>, vector<8x512xf32>, vector<8x512xf32>, vector<8x512xf32>, vector<8x512xf32> -> vector<72x512xf32>
    %cst_19 = arith.constant dense<0.000000e+00> : vector<8x512xf32>
    %59 = tpu.matmul %9, %58, %cst_19 {dimension_numbers = #tpu.dot_dimension_numbers<[1], [0], [0], [1], [0, 0, 1, 1], [], []>} : vector<8x72xf32>, vector<72x512xf32>, vector<8x512xf32> -> vector<8x512xf32>
    %60 = vector.extract_strided_slice %0 {offsets = [0, 0], sizes = [8, 1], strides = [1, 1]} : vector<16x10xf32> to vector<8x1xf32>
    %61 = vector.broadcast %60 : vector<8x1xf32> to vector<8x512xf32>
    %62 = arith.addf %59, %61 : vector<8x512xf32>
    %cst_20 = arith.constant 0.000000e+00 : f32
    %63 = vector.broadcast %cst_20 : f32 to vector<8x512xf32>
    %64 = arith.maximumf %62, %63 : vector<8x512xf32>
    %c1 = arith.constant 1 : index
    %c0_21 = arith.constant 0 : index
    %c0_22 = arith.constant 0 : index
    %65 = vector.load %arg2[%c1, %c0_21, %c0_22] : memref<10x16x144xf32, #tpu.memory_space<vmem>>, vector<1x8x72xf32>
    %66 = vector.shape_cast %65 : vector<1x8x72xf32> to vector<8x72xf32>
    %c17_i32_23 = arith.constant 17 : i32
    %67 = tpu.dynamic_rotate %64 by %c17_i32_23 dim 1 : vector<8x512xf32>, i32 -> vector<8x512xf32>
    %68 = vector.extract_strided_slice %3 {offsets = [0, 0], sizes = [1, 512], strides = [1, 1]} : vector<9x512xi1> to vector<1x512xi1>
    %cst_24 = arith.constant 0.000000e+00 : f32
    %69 = vector.shape_cast %68 : vector<1x512xi1> to vector<1x512xi1>
    %70 = vector.broadcast %69 : vector<1x512xi1> to vector<8x512xi1>
    %71 = vector.broadcast %cst_24 : f32 to vector<8x512xf32>
    %72 = arith.select %70, %67, %71 : vector<8x512xi1>, vector<8x512xf32>
    %c16_i32_25 = arith.constant 16 : i32
    %73 = tpu.dynamic_rotate %64 by %c16_i32_25 dim 1 : vector<8x512xf32>, i32 -> vector<8x512xf32>
    %74 = vector.extract_strided_slice %3 {offsets = [1, 0], sizes = [1, 512], strides = [1, 1]} : vector<9x512xi1> to vector<1x512xi1>
    %cst_26 = arith.constant 0.000000e+00 : f32
    %75 = vector.shape_cast %74 : vector<1x512xi1> to vector<1x512xi1>
    %76 = vector.broadcast %75 : vector<1x512xi1> to vector<8x512xi1>
    %77 = vector.broadcast %cst_26 : f32 to vector<8x512xf32>
    %78 = arith.select %76, %73, %77 : vector<8x512xi1>, vector<8x512xf32>
    %c15_i32_27 = arith.constant 15 : i32
    %79 = tpu.dynamic_rotate %64 by %c15_i32_27 dim 1 : vector<8x512xf32>, i32 -> vector<8x512xf32>
    %80 = vector.extract_strided_slice %3 {offsets = [2, 0], sizes = [1, 512], strides = [1, 1]} : vector<9x512xi1> to vector<1x512xi1>
    %cst_28 = arith.constant 0.000000e+00 : f32
    %81 = vector.shape_cast %80 : vector<1x512xi1> to vector<1x512xi1>
    %82 = vector.broadcast %81 : vector<1x512xi1> to vector<8x512xi1>
    %83 = vector.broadcast %cst_28 : f32 to vector<8x512xf32>
    %84 = arith.select %82, %79, %83 : vector<8x512xi1>, vector<8x512xf32>
    %c1_i32_29 = arith.constant 1 : i32
    %85 = tpu.dynamic_rotate %64 by %c1_i32_29 dim 1 : vector<8x512xf32>, i32 -> vector<8x512xf32>
    %86 = vector.extract_strided_slice %3 {offsets = [3, 0], sizes = [1, 512], strides = [1, 1]} : vector<9x512xi1> to vector<1x512xi1>
    %cst_30 = arith.constant 0.000000e+00 : f32
    %87 = vector.shape_cast %86 : vector<1x512xi1> to vector<1x512xi1>
    %88 = vector.broadcast %87 : vector<1x512xi1> to vector<8x512xi1>
    %89 = vector.broadcast %cst_30 : f32 to vector<8x512xf32>
    %90 = arith.select %88, %85, %89 : vector<8x512xi1>, vector<8x512xf32>
    %c511_i32_31 = arith.constant 511 : i32
    %91 = tpu.dynamic_rotate %64 by %c511_i32_31 dim 1 : vector<8x512xf32>, i32 -> vector<8x512xf32>
    %92 = vector.extract_strided_slice %3 {offsets = [5, 0], sizes = [1, 512], strides = [1, 1]} : vector<9x512xi1> to vector<1x512xi1>
    %cst_32 = arith.constant 0.000000e+00 : f32
    %93 = vector.shape_cast %92 : vector<1x512xi1> to vector<1x512xi1>
    %94 = vector.broadcast %93 : vector<1x512xi1> to vector<8x512xi1>
    %95 = vector.broadcast %cst_32 : f32 to vector<8x512xf32>
    %96 = arith.select %94, %91, %95 : vector<8x512xi1>, vector<8x512xf32>
    %c497_i32_33 = arith.constant 497 : i32
    %97 = tpu.dynamic_rotate %64 by %c497_i32_33 dim 1 : vector<8x512xf32>, i32 -> vector<8x512xf32>
    %98 = vector.extract_strided_slice %3 {offsets = [6, 0], sizes = [1, 512], strides = [1, 1]} : vector<9x512xi1> to vector<1x512xi1>
    %cst_34 = arith.constant 0.000000e+00 : f32
    %99 = vector.shape_cast %98 : vector<1x512xi1> to vector<1x512xi1>
    %100 = vector.broadcast %99 : vector<1x512xi1> to vector<8x512xi1>
    %101 = vector.broadcast %cst_34 : f32 to vector<8x512xf32>
    %102 = arith.select %100, %97, %101 : vector<8x512xi1>, vector<8x512xf32>
    %c496_i32_35 = arith.constant 496 : i32
    %103 = tpu.dynamic_rotate %64 by %c496_i32_35 dim 1 : vector<8x512xf32>, i32 -> vector<8x512xf32>
    %104 = vector.extract_strided_slice %3 {offsets = [7, 0], sizes = [1, 512], strides = [1, 1]} : vector<9x512xi1> to vector<1x512xi1>
    %cst_36 = arith.constant 0.000000e+00 : f32
    %105 = vector.shape_cast %104 : vector<1x512xi1> to vector<1x512xi1>
    %106 = vector.broadcast %105 : vector<1x512xi1> to vector<8x512xi1>
    %107 = vector.broadcast %cst_36 : f32 to vector<8x512xf32>
    %108 = arith.select %106, %103, %107 : vector<8x512xi1>, vector<8x512xf32>
    %c495_i32_37 = arith.constant 495 : i32
    %109 = tpu.dynamic_rotate %64 by %c495_i32_37 dim 1 : vector<8x512xf32>, i32 -> vector<8x512xf32>
    %110 = vector.extract_strided_slice %3 {offsets = [8, 0], sizes = [1, 512], strides = [1, 1]} : vector<9x512xi1> to vector<1x512xi1>
    %cst_38 = arith.constant 0.000000e+00 : f32
    %111 = vector.shape_cast %110 : vector<1x512xi1> to vector<1x512xi1>
    %112 = vector.broadcast %111 : vector<1x512xi1> to vector<8x512xi1>
    %113 = vector.broadcast %cst_38 : f32 to vector<8x512xf32>
    %114 = arith.select %112, %109, %113 : vector<8x512xi1>, vector<8x512xf32>
    %115 = tpu.concatenate %72, %78, %84, %90, %64, %96, %102, %108, %114 in 0 : vector<8x512xf32>, vector<8x512xf32>, vector<8x512xf32>, vector<8x512xf32>, vector<8x512xf32>, vector<8x512xf32>, vector<8x512xf32>, vector<8x512xf32>, vector<8x512xf32> -> vector<72x512xf32>
    %cst_39 = arith.constant dense<0.000000e+00> : vector<8x512xf32>
    %116 = tpu.matmul %66, %115, %cst_39 {dimension_numbers = #tpu.dot_dimension_numbers<[1], [0], [0], [1], [0, 0, 1, 1], [], []>} : vector<8x72xf32>, vector<72x512xf32>, vector<8x512xf32> -> vector<8x512xf32>
    %117 = vector.extract_strided_slice %0 {offsets = [0, 1], sizes = [8, 1], strides = [1, 1]} : vector<16x10xf32> to vector<8x1xf32>
    %118 = vector.broadcast %117 : vector<8x1xf32> to vector<8x512xf32>
    %119 = arith.addf %116, %118 : vector<8x512xf32>
    %120 = arith.addf %119, %7 : vector<8x512xf32>
    %cst_40 = arith.constant 0.000000e+00 : f32
    %121 = vector.broadcast %cst_40 : f32 to vector<8x512xf32>
    %122 = arith.maximumf %120, %121 : vector<8x512xf32>
    %c2 = arith.constant 2 : index
    %c0_41 = arith.constant 0 : index
    %c0_42 = arith.constant 0 : index
    %123 = vector.load %arg2[%c2, %c0_41, %c0_42] : memref<10x16x144xf32, #tpu.memory_space<vmem>>, vector<1x8x72xf32>
    %124 = vector.shape_cast %123 : vector<1x8x72xf32> to vector<8x72xf32>
    %c17_i32_43 = arith.constant 17 : i32
    %125 = tpu.dynamic_rotate %122 by %c17_i32_43 dim 1 : vector<8x512xf32>, i32 -> vector<8x512xf32>
    %126 = vector.extract_strided_slice %3 {offsets = [0, 0], sizes = [1, 512], strides = [1, 1]} : vector<9x512xi1> to vector<1x512xi1>
    %cst_44 = arith.constant 0.000000e+00 : f32
    %127 = vector.shape_cast %126 : vector<1x512xi1> to vector<1x512xi1>
    %128 = vector.broadcast %127 : vector<1x512xi1> to vector<8x512xi1>
    %129 = vector.broadcast %cst_44 : f32 to vector<8x512xf32>
    %130 = arith.select %128, %125, %129 : vector<8x512xi1>, vector<8x512xf32>
    %c16_i32_45 = arith.constant 16 : i32
    %131 = tpu.dynamic_rotate %122 by %c16_i32_45 dim 1 : vector<8x512xf32>, i32 -> vector<8x512xf32>
    %132 = vector.extract_strided_slice %3 {offsets = [1, 0], sizes = [1, 512], strides = [1, 1]} : vector<9x512xi1> to vector<1x512xi1>
    %cst_46 = arith.constant 0.000000e+00 : f32
    %133 = vector.shape_cast %132 : vector<1x512xi1> to vector<1x512xi1>
    %134 = vector.broadcast %133 : vector<1x512xi1> to vector<8x512xi1>
    %135 = vector.broadcast %cst_46 : f32 to vector<8x512xf32>
    %136 = arith.select %134, %131, %135 : vector<8x512xi1>, vector<8x512xf32>
    %c15_i32_47 = arith.constant 15 : i32
    %137 = tpu.dynamic_rotate %122 by %c15_i32_47 dim 1 : vector<8x512xf32>, i32 -> vector<8x512xf32>
    %138 = vector.extract_strided_slice %3 {offsets = [2, 0], sizes = [1, 512], strides = [1, 1]} : vector<9x512xi1> to vector<1x512xi1>
    %cst_48 = arith.constant 0.000000e+00 : f32
    %139 = vector.shape_cast %138 : vector<1x512xi1> to vector<1x512xi1>
    %140 = vector.broadcast %139 : vector<1x512xi1> to vector<8x512xi1>
    %141 = vector.broadcast %cst_48 : f32 to vector<8x512xf32>
    %142 = arith.select %140, %137, %141 : vector<8x512xi1>, vector<8x512xf32>
    %c1_i32_49 = arith.constant 1 : i32
    %143 = tpu.dynamic_rotate %122 by %c1_i32_49 dim 1 : vector<8x512xf32>, i32 -> vector<8x512xf32>
    %144 = vector.extract_strided_slice %3 {offsets = [3, 0], sizes = [1, 512], strides = [1, 1]} : vector<9x512xi1> to vector<1x512xi1>
    %cst_50 = arith.constant 0.000000e+00 : f32
    %145 = vector.shape_cast %144 : vector<1x512xi1> to vector<1x512xi1>
    %146 = vector.broadcast %145 : vector<1x512xi1> to vector<8x512xi1>
    %147 = vector.broadcast %cst_50 : f32 to vector<8x512xf32>
    %148 = arith.select %146, %143, %147 : vector<8x512xi1>, vector<8x512xf32>
    %c511_i32_51 = arith.constant 511 : i32
    %149 = tpu.dynamic_rotate %122 by %c511_i32_51 dim 1 : vector<8x512xf32>, i32 -> vector<8x512xf32>
    %150 = vector.extract_strided_slice %3 {offsets = [5, 0], sizes = [1, 512], strides = [1, 1]} : vector<9x512xi1> to vector<1x512xi1>
    %cst_52 = arith.constant 0.000000e+00 : f32
    %151 = vector.shape_cast %150 : vector<1x512xi1> to vector<1x512xi1>
    %152 = vector.broadcast %151 : vector<1x512xi1> to vector<8x512xi1>
    %153 = vector.broadcast %cst_52 : f32 to vector<8x512xf32>
    %154 = arith.select %152, %149, %153 : vector<8x512xi1>, vector<8x512xf32>
    %c497_i32_53 = arith.constant 497 : i32
    %155 = tpu.dynamic_rotate %122 by %c497_i32_53 dim 1 : vector<8x512xf32>, i32 -> vector<8x512xf32>
    %156 = vector.extract_strided_slice %3 {offsets = [6, 0], sizes = [1, 512], strides = [1, 1]} : vector<9x512xi1> to vector<1x512xi1>
    %cst_54 = arith.constant 0.000000e+00 : f32
    %157 = vector.shape_cast %156 : vector<1x512xi1> to vector<1x512xi1>
    %158 = vector.broadcast %157 : vector<1x512xi1> to vector<8x512xi1>
    %159 = vector.broadcast %cst_54 : f32 to vector<8x512xf32>
    %160 = arith.select %158, %155, %159 : vector<8x512xi1>, vector<8x512xf32>
    %c496_i32_55 = arith.constant 496 : i32
    %161 = tpu.dynamic_rotate %122 by %c496_i32_55 dim 1 : vector<8x512xf32>, i32 -> vector<8x512xf32>
    %162 = vector.extract_strided_slice %3 {offsets = [7, 0], sizes = [1, 512], strides = [1, 1]} : vector<9x512xi1> to vector<1x512xi1>
    %cst_56 = arith.constant 0.000000e+00 : f32
    %163 = vector.shape_cast %162 : vector<1x512xi1> to vector<1x512xi1>
    %164 = vector.broadcast %163 : vector<1x512xi1> to vector<8x512xi1>
    %165 = vector.broadcast %cst_56 : f32 to vector<8x512xf32>
    %166 = arith.select %164, %161, %165 : vector<8x512xi1>, vector<8x512xf32>
    %c495_i32_57 = arith.constant 495 : i32
    %167 = tpu.dynamic_rotate %122 by %c495_i32_57 dim 1 : vector<8x512xf32>, i32 -> vector<8x512xf32>
    %168 = vector.extract_strided_slice %3 {offsets = [8, 0], sizes = [1, 512], strides = [1, 1]} : vector<9x512xi1> to vector<1x512xi1>
    %cst_58 = arith.constant 0.000000e+00 : f32
    %169 = vector.shape_cast %168 : vector<1x512xi1> to vector<1x512xi1>
    %170 = vector.broadcast %169 : vector<1x512xi1> to vector<8x512xi1>
    %171 = vector.broadcast %cst_58 : f32 to vector<8x512xf32>
    %172 = arith.select %170, %167, %171 : vector<8x512xi1>, vector<8x512xf32>
    %173 = tpu.concatenate %130, %136, %142, %148, %122, %154, %160, %166, %172 in 0 : vector<8x512xf32>, vector<8x512xf32>, vector<8x512xf32>, vector<8x512xf32>, vector<8x512xf32>, vector<8x512xf32>, vector<8x512xf32>, vector<8x512xf32>, vector<8x512xf32> -> vector<72x512xf32>
    %cst_59 = arith.constant dense<0.000000e+00> : vector<8x512xf32>
    %174 = tpu.matmul %124, %173, %cst_59 {dimension_numbers = #tpu.dot_dimension_numbers<[1], [0], [0], [1], [0, 0, 1, 1], [], []>} : vector<8x72xf32>, vector<72x512xf32>, vector<8x512xf32> -> vector<8x512xf32>
    %175 = vector.extract_strided_slice %0 {offsets = [0, 2], sizes = [8, 1], strides = [1, 1]} : vector<16x10xf32> to vector<8x1xf32>
    %176 = vector.broadcast %175 : vector<8x1xf32> to vector<8x512xf32>
    %177 = arith.addf %174, %176 : vector<8x512xf32>
    %cst_60 = arith.constant 0.000000e+00 : f32
    %178 = vector.broadcast %cst_60 : f32 to vector<8x512xf32>
    %179 = arith.maximumf %177, %178 : vector<8x512xf32>
    %c3 = arith.constant 3 : index
    %c0_61 = arith.constant 0 : index
    %c0_62 = arith.constant 0 : index
    %180 = vector.load %arg2[%c3, %c0_61, %c0_62] : memref<10x16x144xf32, #tpu.memory_space<vmem>>, vector<1x8x72xf32>
    %181 = vector.shape_cast %180 : vector<1x8x72xf32> to vector<8x72xf32>
    %c17_i32_63 = arith.constant 17 : i32
    %182 = tpu.dynamic_rotate %179 by %c17_i32_63 dim 1 : vector<8x512xf32>, i32 -> vector<8x512xf32>
    %183 = vector.extract_strided_slice %3 {offsets = [0, 0], sizes = [1, 512], strides = [1, 1]} : vector<9x512xi1> to vector<1x512xi1>
    %cst_64 = arith.constant 0.000000e+00 : f32
    %184 = vector.shape_cast %183 : vector<1x512xi1> to vector<1x512xi1>
    %185 = vector.broadcast %184 : vector<1x512xi1> to vector<8x512xi1>
    %186 = vector.broadcast %cst_64 : f32 to vector<8x512xf32>
    %187 = arith.select %185, %182, %186 : vector<8x512xi1>, vector<8x512xf32>
    %c16_i32_65 = arith.constant 16 : i32
    %188 = tpu.dynamic_rotate %179 by %c16_i32_65 dim 1 : vector<8x512xf32>, i32 -> vector<8x512xf32>
    %189 = vector.extract_strided_slice %3 {offsets = [1, 0], sizes = [1, 512], strides = [1, 1]} : vector<9x512xi1> to vector<1x512xi1>
    %cst_66 = arith.constant 0.000000e+00 : f32
    %190 = vector.shape_cast %189 : vector<1x512xi1> to vector<1x512xi1>
    %191 = vector.broadcast %190 : vector<1x512xi1> to vector<8x512xi1>
    %192 = vector.broadcast %cst_66 : f32 to vector<8x512xf32>
    %193 = arith.select %191, %188, %192 : vector<8x512xi1>, vector<8x512xf32>
    %c15_i32_67 = arith.constant 15 : i32
    %194 = tpu.dynamic_rotate %179 by %c15_i32_67 dim 1 : vector<8x512xf32>, i32 -> vector<8x512xf32>
    %195 = vector.extract_strided_slice %3 {offsets = [2, 0], sizes = [1, 512], strides = [1, 1]} : vector<9x512xi1> to vector<1x512xi1>
    %cst_68 = arith.constant 0.000000e+00 : f32
    %196 = vector.shape_cast %195 : vector<1x512xi1> to vector<1x512xi1>
    %197 = vector.broadcast %196 : vector<1x512xi1> to vector<8x512xi1>
    %198 = vector.broadcast %cst_68 : f32 to vector<8x512xf32>
    %199 = arith.select %197, %194, %198 : vector<8x512xi1>, vector<8x512xf32>
    %c1_i32_69 = arith.constant 1 : i32
    %200 = tpu.dynamic_rotate %179 by %c1_i32_69 dim 1 : vector<8x512xf32>, i32 -> vector<8x512xf32>
    %201 = vector.extract_strided_slice %3 {offsets = [3, 0], sizes = [1, 512], strides = [1, 1]} : vector<9x512xi1> to vector<1x512xi1>
    %cst_70 = arith.constant 0.000000e+00 : f32
    %202 = vector.shape_cast %201 : vector<1x512xi1> to vector<1x512xi1>
    %203 = vector.broadcast %202 : vector<1x512xi1> to vector<8x512xi1>
    %204 = vector.broadcast %cst_70 : f32 to vector<8x512xf32>
    %205 = arith.select %203, %200, %204 : vector<8x512xi1>, vector<8x512xf32>
    %c511_i32_71 = arith.constant 511 : i32
    %206 = tpu.dynamic_rotate %179 by %c511_i32_71 dim 1 : vector<8x512xf32>, i32 -> vector<8x512xf32>
    %207 = vector.extract_strided_slice %3 {offsets = [5, 0], sizes = [1, 512], strides = [1, 1]} : vector<9x512xi1> to vector<1x512xi1>
    %cst_72 = arith.constant 0.000000e+00 : f32
    %208 = vector.shape_cast %207 : vector<1x512xi1> to vector<1x512xi1>
    %209 = vector.broadcast %208 : vector<1x512xi1> to vector<8x512xi1>
    %210 = vector.broadcast %cst_72 : f32 to vector<8x512xf32>
    %211 = arith.select %209, %206, %210 : vector<8x512xi1>, vector<8x512xf32>
    %c497_i32_73 = arith.constant 497 : i32
    %212 = tpu.dynamic_rotate %179 by %c497_i32_73 dim 1 : vector<8x512xf32>, i32 -> vector<8x512xf32>
    %213 = vector.extract_strided_slice %3 {offsets = [6, 0], sizes = [1, 512], strides = [1, 1]} : vector<9x512xi1> to vector<1x512xi1>
    %cst_74 = arith.constant 0.000000e+00 : f32
    %214 = vector.shape_cast %213 : vector<1x512xi1> to vector<1x512xi1>
    %215 = vector.broadcast %214 : vector<1x512xi1> to vector<8x512xi1>
    %216 = vector.broadcast %cst_74 : f32 to vector<8x512xf32>
    %217 = arith.select %215, %212, %216 : vector<8x512xi1>, vector<8x512xf32>
    %c496_i32_75 = arith.constant 496 : i32
    %218 = tpu.dynamic_rotate %179 by %c496_i32_75 dim 1 : vector<8x512xf32>, i32 -> vector<8x512xf32>
    %219 = vector.extract_strided_slice %3 {offsets = [7, 0], sizes = [1, 512], strides = [1, 1]} : vector<9x512xi1> to vector<1x512xi1>
    %cst_76 = arith.constant 0.000000e+00 : f32
    %220 = vector.shape_cast %219 : vector<1x512xi1> to vector<1x512xi1>
    %221 = vector.broadcast %220 : vector<1x512xi1> to vector<8x512xi1>
    %222 = vector.broadcast %cst_76 : f32 to vector<8x512xf32>
    %223 = arith.select %221, %218, %222 : vector<8x512xi1>, vector<8x512xf32>
    %c495_i32_77 = arith.constant 495 : i32
    %224 = tpu.dynamic_rotate %179 by %c495_i32_77 dim 1 : vector<8x512xf32>, i32 -> vector<8x512xf32>
    %225 = vector.extract_strided_slice %3 {offsets = [8, 0], sizes = [1, 512], strides = [1, 1]} : vector<9x512xi1> to vector<1x512xi1>
    %cst_78 = arith.constant 0.000000e+00 : f32
    %226 = vector.shape_cast %225 : vector<1x512xi1> to vector<1x512xi1>
    %227 = vector.broadcast %226 : vector<1x512xi1> to vector<8x512xi1>
    %228 = vector.broadcast %cst_78 : f32 to vector<8x512xf32>
    %229 = arith.select %227, %224, %228 : vector<8x512xi1>, vector<8x512xf32>
    %230 = tpu.concatenate %187, %193, %199, %205, %179, %211, %217, %223, %229 in 0 : vector<8x512xf32>, vector<8x512xf32>, vector<8x512xf32>, vector<8x512xf32>, vector<8x512xf32>, vector<8x512xf32>, vector<8x512xf32>, vector<8x512xf32>, vector<8x512xf32> -> vector<72x512xf32>
    %cst_79 = arith.constant dense<0.000000e+00> : vector<8x512xf32>
    %231 = tpu.matmul %181, %230, %cst_79 {dimension_numbers = #tpu.dot_dimension_numbers<[1], [0], [0], [1], [0, 0, 1, 1], [], []>} : vector<8x72xf32>, vector<72x512xf32>, vector<8x512xf32> -> vector<8x512xf32>
    %232 = vector.extract_strided_slice %0 {offsets = [0, 3], sizes = [8, 1], strides = [1, 1]} : vector<16x10xf32> to vector<8x1xf32>
    %233 = vector.broadcast %232 : vector<8x1xf32> to vector<8x512xf32>
    %234 = arith.addf %231, %233 : vector<8x512xf32>
    %235 = arith.addf %234, %122 : vector<8x512xf32>
    %cst_80 = arith.constant 0.000000e+00 : f32
    %236 = vector.broadcast %cst_80 : f32 to vector<8x512xf32>
    %237 = arith.maximumf %235, %236 : vector<8x512xf32>
    %c0_81 = arith.constant 0 : index
    %c0_82 = arith.constant 0 : index
    %238 = vector.load %arg1[%c0_81, %c0_82] : memref<16x128xf32, #tpu.memory_space<vmem>>, vector<16x128xf32>
    %c4 = arith.constant 4 : index
    %c0_83 = arith.constant 0 : index
    %c0_84 = arith.constant 0 : index
    %239 = vector.load %arg2[%c4, %c0_83, %c0_84] : memref<10x16x144xf32, #tpu.memory_space<vmem>>, vector<1x16x144xf32>
    %240 = vector.shape_cast %239 : vector<1x16x144xf32> to vector<16x144xf32>
    %c9_i32 = arith.constant 9 : i32
    %241 = tpu.dynamic_rotate %238 by %c9_i32 dim 1 : vector<16x128xf32>, i32 -> vector<16x128xf32>
    %242 = vector.extract_strided_slice %6 {offsets = [0, 0], sizes = [1, 128], strides = [1, 1]} : vector<9x128xi1> to vector<1x128xi1>
    %cst_85 = arith.constant 0.000000e+00 : f32
    %243 = vector.shape_cast %242 : vector<1x128xi1> to vector<1x128xi1>
    %244 = vector.broadcast %243 : vector<1x128xi1> to vector<16x128xi1>
    %245 = vector.broadcast %cst_85 : f32 to vector<16x128xf32>
    %246 = arith.select %244, %241, %245 : vector<16x128xi1>, vector<16x128xf32>
    %c8_i32 = arith.constant 8 : i32
    %247 = tpu.dynamic_rotate %238 by %c8_i32 dim 1 : vector<16x128xf32>, i32 -> vector<16x128xf32>
    %248 = vector.extract_strided_slice %6 {offsets = [1, 0], sizes = [1, 128], strides = [1, 1]} : vector<9x128xi1> to vector<1x128xi1>
    %cst_86 = arith.constant 0.000000e+00 : f32
    %249 = vector.shape_cast %248 : vector<1x128xi1> to vector<1x128xi1>
    %250 = vector.broadcast %249 : vector<1x128xi1> to vector<16x128xi1>
    %251 = vector.broadcast %cst_86 : f32 to vector<16x128xf32>
    %252 = arith.select %250, %247, %251 : vector<16x128xi1>, vector<16x128xf32>
    %c7_i32 = arith.constant 7 : i32
    %253 = tpu.dynamic_rotate %238 by %c7_i32 dim 1 : vector<16x128xf32>, i32 -> vector<16x128xf32>
    %254 = vector.extract_strided_slice %6 {offsets = [2, 0], sizes = [1, 128], strides = [1, 1]} : vector<9x128xi1> to vector<1x128xi1>
    %cst_87 = arith.constant 0.000000e+00 : f32
    %255 = vector.shape_cast %254 : vector<1x128xi1> to vector<1x128xi1>
    %256 = vector.broadcast %255 : vector<1x128xi1> to vector<16x128xi1>
    %257 = vector.broadcast %cst_87 : f32 to vector<16x128xf32>
    %258 = arith.select %256, %253, %257 : vector<16x128xi1>, vector<16x128xf32>
    %c1_i32_88 = arith.constant 1 : i32
    %259 = tpu.dynamic_rotate %238 by %c1_i32_88 dim 1 : vector<16x128xf32>, i32 -> vector<16x128xf32>
    %260 = vector.extract_strided_slice %6 {offsets = [3, 0], sizes = [1, 128], strides = [1, 1]} : vector<9x128xi1> to vector<1x128xi1>
    %cst_89 = arith.constant 0.000000e+00 : f32
    %261 = vector.shape_cast %260 : vector<1x128xi1> to vector<1x128xi1>
    %262 = vector.broadcast %261 : vector<1x128xi1> to vector<16x128xi1>
    %263 = vector.broadcast %cst_89 : f32 to vector<16x128xf32>
    %264 = arith.select %262, %259, %263 : vector<16x128xi1>, vector<16x128xf32>
    %c127_i32 = arith.constant 127 : i32
    %265 = tpu.dynamic_rotate %238 by %c127_i32 dim 1 : vector<16x128xf32>, i32 -> vector<16x128xf32>
    %266 = vector.extract_strided_slice %6 {offsets = [5, 0], sizes = [1, 128], strides = [1, 1]} : vector<9x128xi1> to vector<1x128xi1>
    %cst_90 = arith.constant 0.000000e+00 : f32
    %267 = vector.shape_cast %266 : vector<1x128xi1> to vector<1x128xi1>
    %268 = vector.broadcast %267 : vector<1x128xi1> to vector<16x128xi1>
    %269 = vector.broadcast %cst_90 : f32 to vector<16x128xf32>
    %270 = arith.select %268, %265, %269 : vector<16x128xi1>, vector<16x128xf32>
    %c121_i32 = arith.constant 121 : i32
    %271 = tpu.dynamic_rotate %238 by %c121_i32 dim 1 : vector<16x128xf32>, i32 -> vector<16x128xf32>
    %272 = vector.extract_strided_slice %6 {offsets = [6, 0], sizes = [1, 128], strides = [1, 1]} : vector<9x128xi1> to vector<1x128xi1>
    %cst_91 = arith.constant 0.000000e+00 : f32
    %273 = vector.shape_cast %272 : vector<1x128xi1> to vector<1x128xi1>
    %274 = vector.broadcast %273 : vector<1x128xi1> to vector<16x128xi1>
    %275 = vector.broadcast %cst_91 : f32 to vector<16x128xf32>
    %276 = arith.select %274, %271, %275 : vector<16x128xi1>, vector<16x128xf32>
    %c120_i32 = arith.constant 120 : i32
    %277 = tpu.dynamic_rotate %238 by %c120_i32 dim 1 : vector<16x128xf32>, i32 -> vector<16x128xf32>
    %278 = vector.extract_strided_slice %6 {offsets = [7, 0], sizes = [1, 128], strides = [1, 1]} : vector<9x128xi1> to vector<1x128xi1>
    %cst_92 = arith.constant 0.000000e+00 : f32
    %279 = vector.shape_cast %278 : vector<1x128xi1> to vector<1x128xi1>
    %280 = vector.broadcast %279 : vector<1x128xi1> to vector<16x128xi1>
    %281 = vector.broadcast %cst_92 : f32 to vector<16x128xf32>
    %282 = arith.select %280, %277, %281 : vector<16x128xi1>, vector<16x128xf32>
    %c119_i32 = arith.constant 119 : i32
    %283 = tpu.dynamic_rotate %238 by %c119_i32 dim 1 : vector<16x128xf32>, i32 -> vector<16x128xf32>
    %284 = vector.extract_strided_slice %6 {offsets = [8, 0], sizes = [1, 128], strides = [1, 1]} : vector<9x128xi1> to vector<1x128xi1>
    %cst_93 = arith.constant 0.000000e+00 : f32
    %285 = vector.shape_cast %284 : vector<1x128xi1> to vector<1x128xi1>
    %286 = vector.broadcast %285 : vector<1x128xi1> to vector<16x128xi1>
    %287 = vector.broadcast %cst_93 : f32 to vector<16x128xf32>
    %288 = arith.select %286, %283, %287 : vector<16x128xi1>, vector<16x128xf32>
    %289 = tpu.concatenate %246, %252, %258, %264, %238, %270, %276, %282, %288 in 0 : vector<16x128xf32>, vector<16x128xf32>, vector<16x128xf32>, vector<16x128xf32>, vector<16x128xf32>, vector<16x128xf32>, vector<16x128xf32>, vector<16x128xf32>, vector<16x128xf32> -> vector<144x128xf32>
    %cst_94 = arith.constant dense<0.000000e+00> : vector<16x128xf32>
    %290 = tpu.matmul %240, %289, %cst_94 {dimension_numbers = #tpu.dot_dimension_numbers<[1], [0], [0], [1], [0, 0, 1, 1], [], []>} : vector<16x144xf32>, vector<144x128xf32>, vector<16x128xf32> -> vector<16x128xf32>
    %291 = vector.extract_strided_slice %0 {offsets = [0, 4], sizes = [16, 1], strides = [1, 1]} : vector<16x10xf32> to vector<16x1xf32>
    %292 = vector.broadcast %291 : vector<16x1xf32> to vector<16x128xf32>
    %293 = arith.addf %290, %292 : vector<16x128xf32>
    %cst_95 = arith.constant 0.000000e+00 : f32
    %294 = vector.broadcast %cst_95 : f32 to vector<16x128xf32>
    %295 = arith.maximumf %293, %294 : vector<16x128xf32>
    %c5 = arith.constant 5 : index
    %c0_96 = arith.constant 0 : index
    %c0_97 = arith.constant 0 : index
    %296 = vector.load %arg2[%c5, %c0_96, %c0_97] : memref<10x16x144xf32, #tpu.memory_space<vmem>>, vector<1x16x144xf32>
    %297 = vector.shape_cast %296 : vector<1x16x144xf32> to vector<16x144xf32>
    %c9_i32_98 = arith.constant 9 : i32
    %298 = tpu.dynamic_rotate %295 by %c9_i32_98 dim 1 : vector<16x128xf32>, i32 -> vector<16x128xf32>
    %299 = vector.extract_strided_slice %6 {offsets = [0, 0], sizes = [1, 128], strides = [1, 1]} : vector<9x128xi1> to vector<1x128xi1>
    %cst_99 = arith.constant 0.000000e+00 : f32
    %300 = vector.shape_cast %299 : vector<1x128xi1> to vector<1x128xi1>
    %301 = vector.broadcast %300 : vector<1x128xi1> to vector<16x128xi1>
    %302 = vector.broadcast %cst_99 : f32 to vector<16x128xf32>
    %303 = arith.select %301, %298, %302 : vector<16x128xi1>, vector<16x128xf32>
    %c8_i32_100 = arith.constant 8 : i32
    %304 = tpu.dynamic_rotate %295 by %c8_i32_100 dim 1 : vector<16x128xf32>, i32 -> vector<16x128xf32>
    %305 = vector.extract_strided_slice %6 {offsets = [1, 0], sizes = [1, 128], strides = [1, 1]} : vector<9x128xi1> to vector<1x128xi1>
    %cst_101 = arith.constant 0.000000e+00 : f32
    %306 = vector.shape_cast %305 : vector<1x128xi1> to vector<1x128xi1>
    %307 = vector.broadcast %306 : vector<1x128xi1> to vector<16x128xi1>
    %308 = vector.broadcast %cst_101 : f32 to vector<16x128xf32>
    %309 = arith.select %307, %304, %308 : vector<16x128xi1>, vector<16x128xf32>
    %c7_i32_102 = arith.constant 7 : i32
    %310 = tpu.dynamic_rotate %295 by %c7_i32_102 dim 1 : vector<16x128xf32>, i32 -> vector<16x128xf32>
    %311 = vector.extract_strided_slice %6 {offsets = [2, 0], sizes = [1, 128], strides = [1, 1]} : vector<9x128xi1> to vector<1x128xi1>
    %cst_103 = arith.constant 0.000000e+00 : f32
    %312 = vector.shape_cast %311 : vector<1x128xi1> to vector<1x128xi1>
    %313 = vector.broadcast %312 : vector<1x128xi1> to vector<16x128xi1>
    %314 = vector.broadcast %cst_103 : f32 to vector<16x128xf32>
    %315 = arith.select %313, %310, %314 : vector<16x128xi1>, vector<16x128xf32>
    %c1_i32_104 = arith.constant 1 : i32
    %316 = tpu.dynamic_rotate %295 by %c1_i32_104 dim 1 : vector<16x128xf32>, i32 -> vector<16x128xf32>
    %317 = vector.extract_strided_slice %6 {offsets = [3, 0], sizes = [1, 128], strides = [1, 1]} : vector<9x128xi1> to vector<1x128xi1>
    %cst_105 = arith.constant 0.000000e+00 : f32
    %318 = vector.shape_cast %317 : vector<1x128xi1> to vector<1x128xi1>
    %319 = vector.broadcast %318 : vector<1x128xi1> to vector<16x128xi1>
    %320 = vector.broadcast %cst_105 : f32 to vector<16x128xf32>
    %321 = arith.select %319, %316, %320 : vector<16x128xi1>, vector<16x128xf32>
    %c127_i32_106 = arith.constant 127 : i32
    %322 = tpu.dynamic_rotate %295 by %c127_i32_106 dim 1 : vector<16x128xf32>, i32 -> vector<16x128xf32>
    %323 = vector.extract_strided_slice %6 {offsets = [5, 0], sizes = [1, 128], strides = [1, 1]} : vector<9x128xi1> to vector<1x128xi1>
    %cst_107 = arith.constant 0.000000e+00 : f32
    %324 = vector.shape_cast %323 : vector<1x128xi1> to vector<1x128xi1>
    %325 = vector.broadcast %324 : vector<1x128xi1> to vector<16x128xi1>
    %326 = vector.broadcast %cst_107 : f32 to vector<16x128xf32>
    %327 = arith.select %325, %322, %326 : vector<16x128xi1>, vector<16x128xf32>
    %c121_i32_108 = arith.constant 121 : i32
    %328 = tpu.dynamic_rotate %295 by %c121_i32_108 dim 1 : vector<16x128xf32>, i32 -> vector<16x128xf32>
    %329 = vector.extract_strided_slice %6 {offsets = [6, 0], sizes = [1, 128], strides = [1, 1]} : vector<9x128xi1> to vector<1x128xi1>
    %cst_109 = arith.constant 0.000000e+00 : f32
    %330 = vector.shape_cast %329 : vector<1x128xi1> to vector<1x128xi1>
    %331 = vector.broadcast %330 : vector<1x128xi1> to vector<16x128xi1>
    %332 = vector.broadcast %cst_109 : f32 to vector<16x128xf32>
    %333 = arith.select %331, %328, %332 : vector<16x128xi1>, vector<16x128xf32>
    %c120_i32_110 = arith.constant 120 : i32
    %334 = tpu.dynamic_rotate %295 by %c120_i32_110 dim 1 : vector<16x128xf32>, i32 -> vector<16x128xf32>
    %335 = vector.extract_strided_slice %6 {offsets = [7, 0], sizes = [1, 128], strides = [1, 1]} : vector<9x128xi1> to vector<1x128xi1>
    %cst_111 = arith.constant 0.000000e+00 : f32
    %336 = vector.shape_cast %335 : vector<1x128xi1> to vector<1x128xi1>
    %337 = vector.broadcast %336 : vector<1x128xi1> to vector<16x128xi1>
    %338 = vector.broadcast %cst_111 : f32 to vector<16x128xf32>
    %339 = arith.select %337, %334, %338 : vector<16x128xi1>, vector<16x128xf32>
    %c119_i32_112 = arith.constant 119 : i32
    %340 = tpu.dynamic_rotate %295 by %c119_i32_112 dim 1 : vector<16x128xf32>, i32 -> vector<16x128xf32>
    %341 = vector.extract_strided_slice %6 {offsets = [8, 0], sizes = [1, 128], strides = [1, 1]} : vector<9x128xi1> to vector<1x128xi1>
    %cst_113 = arith.constant 0.000000e+00 : f32
    %342 = vector.shape_cast %341 : vector<1x128xi1> to vector<1x128xi1>
    %343 = vector.broadcast %342 : vector<1x128xi1> to vector<16x128xi1>
    %344 = vector.broadcast %cst_113 : f32 to vector<16x128xf32>
    %345 = arith.select %343, %340, %344 : vector<16x128xi1>, vector<16x128xf32>
    %346 = tpu.concatenate %303, %309, %315, %321, %295, %327, %333, %339, %345 in 0 : vector<16x128xf32>, vector<16x128xf32>, vector<16x128xf32>, vector<16x128xf32>, vector<16x128xf32>, vector<16x128xf32>, vector<16x128xf32>, vector<16x128xf32>, vector<16x128xf32> -> vector<144x128xf32>
    %cst_114 = arith.constant dense<0.000000e+00> : vector<16x128xf32>
    %347 = tpu.matmul %297, %346, %cst_114 {dimension_numbers = #tpu.dot_dimension_numbers<[1], [0], [0], [1], [0, 0, 1, 1], [], []>} : vector<16x144xf32>, vector<144x128xf32>, vector<16x128xf32> -> vector<16x128xf32>
    %348 = vector.extract_strided_slice %0 {offsets = [0, 5], sizes = [16, 1], strides = [1, 1]} : vector<16x10xf32> to vector<16x1xf32>
    %349 = vector.broadcast %348 : vector<16x1xf32> to vector<16x128xf32>
    %350 = arith.addf %347, %349 : vector<16x128xf32>
    %351 = arith.addf %350, %238 : vector<16x128xf32>
    %cst_115 = arith.constant 0.000000e+00 : f32
    %352 = vector.broadcast %cst_115 : f32 to vector<16x128xf32>
    %353 = arith.maximumf %351, %352 : vector<16x128xf32>
    %c6 = arith.constant 6 : index
    %c0_116 = arith.constant 0 : index
    %c0_117 = arith.constant 0 : index
    %354 = vector.load %arg2[%c6, %c0_116, %c0_117] : memref<10x16x144xf32, #tpu.memory_space<vmem>>, vector<1x16x144xf32>
    %355 = vector.shape_cast %354 : vector<1x16x144xf32> to vector<16x144xf32>
    %c9_i32_118 = arith.constant 9 : i32
    %356 = tpu.dynamic_rotate %353 by %c9_i32_118 dim 1 : vector<16x128xf32>, i32 -> vector<16x128xf32>
    %357 = vector.extract_strided_slice %6 {offsets = [0, 0], sizes = [1, 128], strides = [1, 1]} : vector<9x128xi1> to vector<1x128xi1>
    %cst_119 = arith.constant 0.000000e+00 : f32
    %358 = vector.shape_cast %357 : vector<1x128xi1> to vector<1x128xi1>
    %359 = vector.broadcast %358 : vector<1x128xi1> to vector<16x128xi1>
    %360 = vector.broadcast %cst_119 : f32 to vector<16x128xf32>
    %361 = arith.select %359, %356, %360 : vector<16x128xi1>, vector<16x128xf32>
    %c8_i32_120 = arith.constant 8 : i32
    %362 = tpu.dynamic_rotate %353 by %c8_i32_120 dim 1 : vector<16x128xf32>, i32 -> vector<16x128xf32>
    %363 = vector.extract_strided_slice %6 {offsets = [1, 0], sizes = [1, 128], strides = [1, 1]} : vector<9x128xi1> to vector<1x128xi1>
    %cst_121 = arith.constant 0.000000e+00 : f32
    %364 = vector.shape_cast %363 : vector<1x128xi1> to vector<1x128xi1>
    %365 = vector.broadcast %364 : vector<1x128xi1> to vector<16x128xi1>
    %366 = vector.broadcast %cst_121 : f32 to vector<16x128xf32>
    %367 = arith.select %365, %362, %366 : vector<16x128xi1>, vector<16x128xf32>
    %c7_i32_122 = arith.constant 7 : i32
    %368 = tpu.dynamic_rotate %353 by %c7_i32_122 dim 1 : vector<16x128xf32>, i32 -> vector<16x128xf32>
    %369 = vector.extract_strided_slice %6 {offsets = [2, 0], sizes = [1, 128], strides = [1, 1]} : vector<9x128xi1> to vector<1x128xi1>
    %cst_123 = arith.constant 0.000000e+00 : f32
    %370 = vector.shape_cast %369 : vector<1x128xi1> to vector<1x128xi1>
    %371 = vector.broadcast %370 : vector<1x128xi1> to vector<16x128xi1>
    %372 = vector.broadcast %cst_123 : f32 to vector<16x128xf32>
    %373 = arith.select %371, %368, %372 : vector<16x128xi1>, vector<16x128xf32>
    %c1_i32_124 = arith.constant 1 : i32
    %374 = tpu.dynamic_rotate %353 by %c1_i32_124 dim 1 : vector<16x128xf32>, i32 -> vector<16x128xf32>
    %375 = vector.extract_strided_slice %6 {offsets = [3, 0], sizes = [1, 128], strides = [1, 1]} : vector<9x128xi1> to vector<1x128xi1>
    %cst_125 = arith.constant 0.000000e+00 : f32
    %376 = vector.shape_cast %375 : vector<1x128xi1> to vector<1x128xi1>
    %377 = vector.broadcast %376 : vector<1x128xi1> to vector<16x128xi1>
    %378 = vector.broadcast %cst_125 : f32 to vector<16x128xf32>
    %379 = arith.select %377, %374, %378 : vector<16x128xi1>, vector<16x128xf32>
    %c127_i32_126 = arith.constant 127 : i32
    %380 = tpu.dynamic_rotate %353 by %c127_i32_126 dim 1 : vector<16x128xf32>, i32 -> vector<16x128xf32>
    %381 = vector.extract_strided_slice %6 {offsets = [5, 0], sizes = [1, 128], strides = [1, 1]} : vector<9x128xi1> to vector<1x128xi1>
    %cst_127 = arith.constant 0.000000e+00 : f32
    %382 = vector.shape_cast %381 : vector<1x128xi1> to vector<1x128xi1>
    %383 = vector.broadcast %382 : vector<1x128xi1> to vector<16x128xi1>
    %384 = vector.broadcast %cst_127 : f32 to vector<16x128xf32>
    %385 = arith.select %383, %380, %384 : vector<16x128xi1>, vector<16x128xf32>
    %c121_i32_128 = arith.constant 121 : i32
    %386 = tpu.dynamic_rotate %353 by %c121_i32_128 dim 1 : vector<16x128xf32>, i32 -> vector<16x128xf32>
    %387 = vector.extract_strided_slice %6 {offsets = [6, 0], sizes = [1, 128], strides = [1, 1]} : vector<9x128xi1> to vector<1x128xi1>
    %cst_129 = arith.constant 0.000000e+00 : f32
    %388 = vector.shape_cast %387 : vector<1x128xi1> to vector<1x128xi1>
    %389 = vector.broadcast %388 : vector<1x128xi1> to vector<16x128xi1>
    %390 = vector.broadcast %cst_129 : f32 to vector<16x128xf32>
    %391 = arith.select %389, %386, %390 : vector<16x128xi1>, vector<16x128xf32>
    %c120_i32_130 = arith.constant 120 : i32
    %392 = tpu.dynamic_rotate %353 by %c120_i32_130 dim 1 : vector<16x128xf32>, i32 -> vector<16x128xf32>
    %393 = vector.extract_strided_slice %6 {offsets = [7, 0], sizes = [1, 128], strides = [1, 1]} : vector<9x128xi1> to vector<1x128xi1>
    %cst_131 = arith.constant 0.000000e+00 : f32
    %394 = vector.shape_cast %393 : vector<1x128xi1> to vector<1x128xi1>
    %395 = vector.broadcast %394 : vector<1x128xi1> to vector<16x128xi1>
    %396 = vector.broadcast %cst_131 : f32 to vector<16x128xf32>
    %397 = arith.select %395, %392, %396 : vector<16x128xi1>, vector<16x128xf32>
    %c119_i32_132 = arith.constant 119 : i32
    %398 = tpu.dynamic_rotate %353 by %c119_i32_132 dim 1 : vector<16x128xf32>, i32 -> vector<16x128xf32>
    %399 = vector.extract_strided_slice %6 {offsets = [8, 0], sizes = [1, 128], strides = [1, 1]} : vector<9x128xi1> to vector<1x128xi1>
    %cst_133 = arith.constant 0.000000e+00 : f32
    %400 = vector.shape_cast %399 : vector<1x128xi1> to vector<1x128xi1>
    %401 = vector.broadcast %400 : vector<1x128xi1> to vector<16x128xi1>
    %402 = vector.broadcast %cst_133 : f32 to vector<16x128xf32>
    %403 = arith.select %401, %398, %402 : vector<16x128xi1>, vector<16x128xf32>
    %404 = tpu.concatenate %361, %367, %373, %379, %353, %385, %391, %397, %403 in 0 : vector<16x128xf32>, vector<16x128xf32>, vector<16x128xf32>, vector<16x128xf32>, vector<16x128xf32>, vector<16x128xf32>, vector<16x128xf32>, vector<16x128xf32>, vector<16x128xf32> -> vector<144x128xf32>
    %cst_134 = arith.constant dense<0.000000e+00> : vector<16x128xf32>
    %405 = tpu.matmul %355, %404, %cst_134 {dimension_numbers = #tpu.dot_dimension_numbers<[1], [0], [0], [1], [0, 0, 1, 1], [], []>} : vector<16x144xf32>, vector<144x128xf32>, vector<16x128xf32> -> vector<16x128xf32>
    %406 = vector.extract_strided_slice %0 {offsets = [0, 6], sizes = [16, 1], strides = [1, 1]} : vector<16x10xf32> to vector<16x1xf32>
    %407 = vector.broadcast %406 : vector<16x1xf32> to vector<16x128xf32>
    %408 = arith.addf %405, %407 : vector<16x128xf32>
    %cst_135 = arith.constant 0.000000e+00 : f32
    %409 = vector.broadcast %cst_135 : f32 to vector<16x128xf32>
    %410 = arith.maximumf %408, %409 : vector<16x128xf32>
    %c7 = arith.constant 7 : index
    %c0_136 = arith.constant 0 : index
    %c0_137 = arith.constant 0 : index
    %411 = vector.load %arg2[%c7, %c0_136, %c0_137] : memref<10x16x144xf32, #tpu.memory_space<vmem>>, vector<1x16x144xf32>
    %412 = vector.shape_cast %411 : vector<1x16x144xf32> to vector<16x144xf32>
    %c9_i32_138 = arith.constant 9 : i32
    %413 = tpu.dynamic_rotate %410 by %c9_i32_138 dim 1 : vector<16x128xf32>, i32 -> vector<16x128xf32>
    %414 = vector.extract_strided_slice %6 {offsets = [0, 0], sizes = [1, 128], strides = [1, 1]} : vector<9x128xi1> to vector<1x128xi1>
    %cst_139 = arith.constant 0.000000e+00 : f32
    %415 = vector.shape_cast %414 : vector<1x128xi1> to vector<1x128xi1>
    %416 = vector.broadcast %415 : vector<1x128xi1> to vector<16x128xi1>
    %417 = vector.broadcast %cst_139 : f32 to vector<16x128xf32>
    %418 = arith.select %416, %413, %417 : vector<16x128xi1>, vector<16x128xf32>
    %c8_i32_140 = arith.constant 8 : i32
    %419 = tpu.dynamic_rotate %410 by %c8_i32_140 dim 1 : vector<16x128xf32>, i32 -> vector<16x128xf32>
    %420 = vector.extract_strided_slice %6 {offsets = [1, 0], sizes = [1, 128], strides = [1, 1]} : vector<9x128xi1> to vector<1x128xi1>
    %cst_141 = arith.constant 0.000000e+00 : f32
    %421 = vector.shape_cast %420 : vector<1x128xi1> to vector<1x128xi1>
    %422 = vector.broadcast %421 : vector<1x128xi1> to vector<16x128xi1>
    %423 = vector.broadcast %cst_141 : f32 to vector<16x128xf32>
    %424 = arith.select %422, %419, %423 : vector<16x128xi1>, vector<16x128xf32>
    %c7_i32_142 = arith.constant 7 : i32
    %425 = tpu.dynamic_rotate %410 by %c7_i32_142 dim 1 : vector<16x128xf32>, i32 -> vector<16x128xf32>
    %426 = vector.extract_strided_slice %6 {offsets = [2, 0], sizes = [1, 128], strides = [1, 1]} : vector<9x128xi1> to vector<1x128xi1>
    %cst_143 = arith.constant 0.000000e+00 : f32
    %427 = vector.shape_cast %426 : vector<1x128xi1> to vector<1x128xi1>
    %428 = vector.broadcast %427 : vector<1x128xi1> to vector<16x128xi1>
    %429 = vector.broadcast %cst_143 : f32 to vector<16x128xf32>
    %430 = arith.select %428, %425, %429 : vector<16x128xi1>, vector<16x128xf32>
    %c1_i32_144 = arith.constant 1 : i32
    %431 = tpu.dynamic_rotate %410 by %c1_i32_144 dim 1 : vector<16x128xf32>, i32 -> vector<16x128xf32>
    %432 = vector.extract_strided_slice %6 {offsets = [3, 0], sizes = [1, 128], strides = [1, 1]} : vector<9x128xi1> to vector<1x128xi1>
    %cst_145 = arith.constant 0.000000e+00 : f32
    %433 = vector.shape_cast %432 : vector<1x128xi1> to vector<1x128xi1>
    %434 = vector.broadcast %433 : vector<1x128xi1> to vector<16x128xi1>
    %435 = vector.broadcast %cst_145 : f32 to vector<16x128xf32>
    %436 = arith.select %434, %431, %435 : vector<16x128xi1>, vector<16x128xf32>
    %c127_i32_146 = arith.constant 127 : i32
    %437 = tpu.dynamic_rotate %410 by %c127_i32_146 dim 1 : vector<16x128xf32>, i32 -> vector<16x128xf32>
    %438 = vector.extract_strided_slice %6 {offsets = [5, 0], sizes = [1, 128], strides = [1, 1]} : vector<9x128xi1> to vector<1x128xi1>
    %cst_147 = arith.constant 0.000000e+00 : f32
    %439 = vector.shape_cast %438 : vector<1x128xi1> to vector<1x128xi1>
    %440 = vector.broadcast %439 : vector<1x128xi1> to vector<16x128xi1>
    %441 = vector.broadcast %cst_147 : f32 to vector<16x128xf32>
    %442 = arith.select %440, %437, %441 : vector<16x128xi1>, vector<16x128xf32>
    %c121_i32_148 = arith.constant 121 : i32
    %443 = tpu.dynamic_rotate %410 by %c121_i32_148 dim 1 : vector<16x128xf32>, i32 -> vector<16x128xf32>
    %444 = vector.extract_strided_slice %6 {offsets = [6, 0], sizes = [1, 128], strides = [1, 1]} : vector<9x128xi1> to vector<1x128xi1>
    %cst_149 = arith.constant 0.000000e+00 : f32
    %445 = vector.shape_cast %444 : vector<1x128xi1> to vector<1x128xi1>
    %446 = vector.broadcast %445 : vector<1x128xi1> to vector<16x128xi1>
    %447 = vector.broadcast %cst_149 : f32 to vector<16x128xf32>
    %448 = arith.select %446, %443, %447 : vector<16x128xi1>, vector<16x128xf32>
    %c120_i32_150 = arith.constant 120 : i32
    %449 = tpu.dynamic_rotate %410 by %c120_i32_150 dim 1 : vector<16x128xf32>, i32 -> vector<16x128xf32>
    %450 = vector.extract_strided_slice %6 {offsets = [7, 0], sizes = [1, 128], strides = [1, 1]} : vector<9x128xi1> to vector<1x128xi1>
    %cst_151 = arith.constant 0.000000e+00 : f32
    %451 = vector.shape_cast %450 : vector<1x128xi1> to vector<1x128xi1>
    %452 = vector.broadcast %451 : vector<1x128xi1> to vector<16x128xi1>
    %453 = vector.broadcast %cst_151 : f32 to vector<16x128xf32>
    %454 = arith.select %452, %449, %453 : vector<16x128xi1>, vector<16x128xf32>
    %c119_i32_152 = arith.constant 119 : i32
    %455 = tpu.dynamic_rotate %410 by %c119_i32_152 dim 1 : vector<16x128xf32>, i32 -> vector<16x128xf32>
    %456 = vector.extract_strided_slice %6 {offsets = [8, 0], sizes = [1, 128], strides = [1, 1]} : vector<9x128xi1> to vector<1x128xi1>
    %cst_153 = arith.constant 0.000000e+00 : f32
    %457 = vector.shape_cast %456 : vector<1x128xi1> to vector<1x128xi1>
    %458 = vector.broadcast %457 : vector<1x128xi1> to vector<16x128xi1>
    %459 = vector.broadcast %cst_153 : f32 to vector<16x128xf32>
    %460 = arith.select %458, %455, %459 : vector<16x128xi1>, vector<16x128xf32>
    %461 = tpu.concatenate %418, %424, %430, %436, %410, %442, %448, %454, %460 in 0 : vector<16x128xf32>, vector<16x128xf32>, vector<16x128xf32>, vector<16x128xf32>, vector<16x128xf32>, vector<16x128xf32>, vector<16x128xf32>, vector<16x128xf32>, vector<16x128xf32> -> vector<144x128xf32>
    %cst_154 = arith.constant dense<0.000000e+00> : vector<16x128xf32>
    %462 = tpu.matmul %412, %461, %cst_154 {dimension_numbers = #tpu.dot_dimension_numbers<[1], [0], [0], [1], [0, 0, 1, 1], [], []>} : vector<16x144xf32>, vector<144x128xf32>, vector<16x128xf32> -> vector<16x128xf32>
    %463 = vector.extract_strided_slice %0 {offsets = [0, 7], sizes = [16, 1], strides = [1, 1]} : vector<16x10xf32> to vector<16x1xf32>
    %464 = vector.broadcast %463 : vector<16x1xf32> to vector<16x128xf32>
    %465 = arith.addf %462, %464 : vector<16x128xf32>
    %466 = arith.addf %465, %353 : vector<16x128xf32>
    %cst_155 = arith.constant 0.000000e+00 : f32
    %467 = vector.broadcast %cst_155 : f32 to vector<16x128xf32>
    %468 = arith.maximumf %466, %467 : vector<16x128xf32>
    %c8 = arith.constant 8 : index
    %c0_156 = arith.constant 0 : index
    %c0_157 = arith.constant 0 : index
    %469 = vector.load %arg2[%c8, %c0_156, %c0_157] : memref<10x16x144xf32, #tpu.memory_space<vmem>>, vector<1x8x16xf32>
    %470 = vector.shape_cast %469 : vector<1x8x16xf32> to vector<8x16xf32>
    %cst_158 = arith.constant dense<0.000000e+00> : vector<8x128xf32>
    %471 = tpu.matmul %470, %468, %cst_158 {dimension_numbers = #tpu.dot_dimension_numbers<[1], [0], [0], [1], [0, 0, 1, 1], [], []>} : vector<8x16xf32>, vector<16x128xf32>, vector<8x128xf32> -> vector<8x128xf32>
    %472 = vector.extract_strided_slice %0 {offsets = [0, 8], sizes = [8, 1], strides = [1, 1]} : vector<16x10xf32> to vector<8x1xf32>
    %473 = vector.broadcast %472 : vector<8x1xf32> to vector<8x128xf32>
    %474 = arith.addf %471, %473 : vector<8x128xf32>
    %c0_159 = arith.constant 0 : index
    %c0_160 = arith.constant 0 : index
    %475 = vector.load %arg6[%c0_159, %c0_160] : memref<128x512xf32, #tpu.memory_space<vmem>>, vector<128x512xf32>
    %cst_161 = arith.constant dense<0.000000e+00> : vector<8x512xf32>
    %476 = tpu.matmul %474, %475, %cst_161 {dimension_numbers = #tpu.dot_dimension_numbers<[1], [0], [0], [1], [0, 0, 1, 1], [], []>} : vector<8x128xf32>, vector<128x512xf32>, vector<8x512xf32> -> vector<8x512xf32>
    %477 = arith.addf %237, %476 : vector<8x512xf32>
    %cst_162 = arith.constant 0.000000e+00 : f32
    %478 = vector.broadcast %cst_162 : f32 to vector<8x512xf32>
    %479 = arith.maximumf %477, %478 : vector<8x512xf32>
    %c0_163 = arith.constant 0 : index
    %c0_164 = arith.constant 0 : index
    %480 = vector.load %arg8[%c0_163, %c0_164] : memref<8x512xf32, #tpu.memory_space<vmem>>, vector<8x512xf32>
    tpu.vector_store %arg8[%c0_163, %c0_164], %479 {strides = array<i32>} : memref<8x512xf32, #tpu.memory_space<vmem>>, vector<8x512xf32>,
    %c9 = arith.constant 9 : index
    %c0_165 = arith.constant 0 : index
    %c0_166 = arith.constant 0 : index
    %481 = vector.load %arg2[%c9, %c0_165, %c0_166] : memref<10x16x144xf32, #tpu.memory_space<vmem>>, vector<1x16x72xf32>
    %482 = vector.shape_cast %481 : vector<1x16x72xf32> to vector<16x72xf32>
    %c17_i32_167 = arith.constant 17 : i32
    %483 = tpu.dynamic_rotate %237 by %c17_i32_167 dim 1 : vector<8x512xf32>, i32 -> vector<8x512xf32>
    %484 = vector.extract_strided_slice %3 {offsets = [0, 0], sizes = [1, 512], strides = [1, 1]} : vector<9x512xi1> to vector<1x512xi1>
    %cst_168 = arith.constant 0.000000e+00 : f32
    %485 = vector.shape_cast %484 : vector<1x512xi1> to vector<1x512xi1>
    %486 = vector.broadcast %485 : vector<1x512xi1> to vector<8x512xi1>
    %487 = vector.broadcast %cst_168 : f32 to vector<8x512xf32>
    %488 = arith.select %486, %483, %487 : vector<8x512xi1>, vector<8x512xf32>
    %c16_i32_169 = arith.constant 16 : i32
    %489 = tpu.dynamic_rotate %237 by %c16_i32_169 dim 1 : vector<8x512xf32>, i32 -> vector<8x512xf32>
    %490 = vector.extract_strided_slice %3 {offsets = [1, 0], sizes = [1, 512], strides = [1, 1]} : vector<9x512xi1> to vector<1x512xi1>
    %cst_170 = arith.constant 0.000000e+00 : f32
    %491 = vector.shape_cast %490 : vector<1x512xi1> to vector<1x512xi1>
    %492 = vector.broadcast %491 : vector<1x512xi1> to vector<8x512xi1>
    %493 = vector.broadcast %cst_170 : f32 to vector<8x512xf32>
    %494 = arith.select %492, %489, %493 : vector<8x512xi1>, vector<8x512xf32>
    %c15_i32_171 = arith.constant 15 : i32
    %495 = tpu.dynamic_rotate %237 by %c15_i32_171 dim 1 : vector<8x512xf32>, i32 -> vector<8x512xf32>
    %496 = vector.extract_strided_slice %3 {offsets = [2, 0], sizes = [1, 512], strides = [1, 1]} : vector<9x512xi1> to vector<1x512xi1>
    %cst_172 = arith.constant 0.000000e+00 : f32
    %497 = vector.shape_cast %496 : vector<1x512xi1> to vector<1x512xi1>
    %498 = vector.broadcast %497 : vector<1x512xi1> to vector<8x512xi1>
    %499 = vector.broadcast %cst_172 : f32 to vector<8x512xf32>
    %500 = arith.select %498, %495, %499 : vector<8x512xi1>, vector<8x512xf32>
    %c1_i32_173 = arith.constant 1 : i32
    %501 = tpu.dynamic_rotate %237 by %c1_i32_173 dim 1 : vector<8x512xf32>, i32 -> vector<8x512xf32>
    %502 = vector.extract_strided_slice %3 {offsets = [3, 0], sizes = [1, 512], strides = [1, 1]} : vector<9x512xi1> to vector<1x512xi1>
    %cst_174 = arith.constant 0.000000e+00 : f32
    %503 = vector.shape_cast %502 : vector<1x512xi1> to vector<1x512xi1>
    %504 = vector.broadcast %503 : vector<1x512xi1> to vector<8x512xi1>
    %505 = vector.broadcast %cst_174 : f32 to vector<8x512xf32>
    %506 = arith.select %504, %501, %505 : vector<8x512xi1>, vector<8x512xf32>
    %c511_i32_175 = arith.constant 511 : i32
    %507 = tpu.dynamic_rotate %237 by %c511_i32_175 dim 1 : vector<8x512xf32>, i32 -> vector<8x512xf32>
    %508 = vector.extract_strided_slice %3 {offsets = [5, 0], sizes = [1, 512], strides = [1, 1]} : vector<9x512xi1> to vector<1x512xi1>
    %cst_176 = arith.constant 0.000000e+00 : f32
    %509 = vector.shape_cast %508 : vector<1x512xi1> to vector<1x512xi1>
    %510 = vector.broadcast %509 : vector<1x512xi1> to vector<8x512xi1>
    %511 = vector.broadcast %cst_176 : f32 to vector<8x512xf32>
    %512 = arith.select %510, %507, %511 : vector<8x512xi1>, vector<8x512xf32>
    %c497_i32_177 = arith.constant 497 : i32
    %513 = tpu.dynamic_rotate %237 by %c497_i32_177 dim 1 : vector<8x512xf32>, i32 -> vector<8x512xf32>
    %514 = vector.extract_strided_slice %3 {offsets = [6, 0], sizes = [1, 512], strides = [1, 1]} : vector<9x512xi1> to vector<1x512xi1>
    %cst_178 = arith.constant 0.000000e+00 : f32
    %515 = vector.shape_cast %514 : vector<1x512xi1> to vector<1x512xi1>
    %516 = vector.broadcast %515 : vector<1x512xi1> to vector<8x512xi1>
    %517 = vector.broadcast %cst_178 : f32 to vector<8x512xf32>
    %518 = arith.select %516, %513, %517 : vector<8x512xi1>, vector<8x512xf32>
    %c496_i32_179 = arith.constant 496 : i32
    %519 = tpu.dynamic_rotate %237 by %c496_i32_179 dim 1 : vector<8x512xf32>, i32 -> vector<8x512xf32>
    %520 = vector.extract_strided_slice %3 {offsets = [7, 0], sizes = [1, 512], strides = [1, 1]} : vector<9x512xi1> to vector<1x512xi1>
    %cst_180 = arith.constant 0.000000e+00 : f32
    %521 = vector.shape_cast %520 : vector<1x512xi1> to vector<1x512xi1>
    %522 = vector.broadcast %521 : vector<1x512xi1> to vector<8x512xi1>
    %523 = vector.broadcast %cst_180 : f32 to vector<8x512xf32>
    %524 = arith.select %522, %519, %523 : vector<8x512xi1>, vector<8x512xf32>
    %c495_i32_181 = arith.constant 495 : i32
    %525 = tpu.dynamic_rotate %237 by %c495_i32_181 dim 1 : vector<8x512xf32>, i32 -> vector<8x512xf32>
    %526 = vector.extract_strided_slice %3 {offsets = [8, 0], sizes = [1, 512], strides = [1, 1]} : vector<9x512xi1> to vector<1x512xi1>
    %cst_182 = arith.constant 0.000000e+00 : f32
    %527 = vector.shape_cast %526 : vector<1x512xi1> to vector<1x512xi1>
    %528 = vector.broadcast %527 : vector<1x512xi1> to vector<8x512xi1>
    %529 = vector.broadcast %cst_182 : f32 to vector<8x512xf32>
    %530 = arith.select %528, %525, %529 : vector<8x512xi1>, vector<8x512xf32>
    %531 = tpu.concatenate %488, %494, %500, %506, %237, %512, %518, %524, %530 in 0 : vector<8x512xf32>, vector<8x512xf32>, vector<8x512xf32>, vector<8x512xf32>, vector<8x512xf32>, vector<8x512xf32>, vector<8x512xf32>, vector<8x512xf32>, vector<8x512xf32> -> vector<72x512xf32>
    %cst_183 = arith.constant dense<0.000000e+00> : vector<16x512xf32>
    %532 = tpu.matmul %482, %531, %cst_183 {dimension_numbers = #tpu.dot_dimension_numbers<[1], [0], [0], [1], [0, 0, 1, 1], [], []>} : vector<16x72xf32>, vector<72x512xf32>, vector<16x512xf32> -> vector<16x512xf32>
    %c0_184 = arith.constant 0 : index
    %c0_185 = arith.constant 0 : index
    %533 = vector.load %arg7[%c0_184, %c0_185] : memref<512x128xf32, #tpu.memory_space<vmem>>, vector<512x128xf32>
    %cst_186 = arith.constant dense<0.000000e+00> : vector<16x128xf32>
    %534 = tpu.matmul %532, %533, %cst_186 {dimension_numbers = #tpu.dot_dimension_numbers<[1], [0], [0], [1], [0, 0, 1, 1], [], []>} : vector<16x512xf32>, vector<512x128xf32>, vector<16x128xf32> -> vector<16x128xf32>
    %535 = vector.extract_strided_slice %0 {offsets = [0, 9], sizes = [16, 1], strides = [1, 1]} : vector<16x10xf32> to vector<16x1xf32>
    %536 = vector.broadcast %535 : vector<16x1xf32> to vector<16x128xf32>
    %537 = arith.addf %534, %536 : vector<16x128xf32>
    %538 = arith.addf %468, %537 : vector<16x128xf32>
    %cst_187 = arith.constant 0.000000e+00 : f32
    %539 = vector.broadcast %cst_187 : f32 to vector<16x128xf32>
    %540 = arith.maximumf %538, %539 : vector<16x128xf32>
    %c0_188 = arith.constant 0 : index
    %c0_189 = arith.constant 0 : index
    %541 = vector.load %arg9[%c0_188, %c0_189] : memref<16x128xf32, #tpu.memory_space<vmem>>, vector<16x128xf32>
    tpu.vector_store %arg9[%c0_188, %c0_189], %540 {strides = array<i32>} : memref<16x128xf32, #tpu.memory_space<vmem>>, vector<16x128xf32>,
    return
  }
}

</mosaic_0001>

<llo_original>
// kernel: run.1
$region0: #{run.1}
  #allocation0 [shape = 'u32[]', space=smem, size = 0x4, offset = 0x4, fixed_abs, tag = 'smem constant byte address 0x4 - core index']
  #allocation1 [shape = 'u32[144,128]{1,0:T(1,128)}', space=vmem, size = 0x12000, scoped, tag = 'internal scratch']
  %s0 = inlined_call_operand.vmem [shape: f32[8,512], index: 0, kind: input, shape index: {}]
  %s1 = inlined_call_operand.vmem [shape: f32[16,128], index: 1, kind: input, shape index: {}]
  %s2 = inlined_call_operand.vmem [shape: f32[10,16,144], index: 2, kind: input, shape index: {}]
  %s3 = inlined_call_operand.vmem [shape: f32[16,10], index: 3, kind: input, shape index: {}]
  %s4 = inlined_call_operand.vmem [shape: f32[9,512], index: 4, kind: input, shape index: {}]
  %s5 = inlined_call_operand.vmem [shape: f32[9,128], index: 5, kind: input, shape index: {}]
  %s6 = inlined_call_operand.vmem [shape: f32[128,512], index: 6, kind: input, shape index: {}]
  %s7 = inlined_call_operand.hbm [shape: f32[512,128], index: 7, kind: input, shape index: {}]
  %s8 = inlined_call_operand.vmem [shape: f32[8,512], index: 8, kind: output, shape index: {0}]
  %s9 = inlined_call_operand.vmem [shape: f32[16,128], index: 9, kind: output, shape index: {1}]
  %10 = xla_tuple %s8, %s9
  %s11 = sld [smem:[#allocation0]]
  $region54: #{run.1} parent=0
    _
  %s13 = ssub.s32 1, %s11
  %s14 = scalar_select 0, %s13, %s11
  $region1: #{run.1} parent=0
    #allocation2 [shape = 'u8[262144]{0}', space=vmem, size = 0x40000, scoped, tag = 'input window, operand 7, single buffered']
    #allocation3 [shape = 's32[1]{0}', space=sflag, size = 0x4, scoped, tag = 'scoped memory for run.1']
    %15 = vsyncpa [#allocation3], 0
    // Predicated region
    $region2: #{run.1} parent=1 // pred_check
      _
    $region3: #{run.1} parent=1 // pred_check_branch
      %17 = sbr.rel (0) target = $region5
    $region4: #{run.1} parent=1 // pred_region
      _
    $region5: #{run.1} parent=1 // pred_fallthru
      _
    // Predicated region
    $region6: #{run.1} parent=1 // pred_check
      _
    $region7: #{run.1} parent=1 // pred_check_branch
      %19 = sbr.rel (0) target = $region9
    $region8: #{run.1} parent=1 // pred_region
      _
    $region9: #{run.1} parent=1 // pred_fallthru
      _
    // Predicated region
    $region10: #{run.1} parent=1 // pred_check
      _
    $region11: #{run.1} parent=1 // pred_check_branch
      %21 = sbr.rel (0) target = $region13
    $region12: #{run.1} parent=1 // pred_region
      _
    $region13: #{run.1} parent=1 // pred_fallthru
      _
    // Predicated region
    $region14: #{run.1} parent=1 // pred_check
      _
    $region15: #{run.1} parent=1 // pred_check_branch
      %23 = sbr.rel (0) target = $region17
    $region16: #{run.1} parent=1 // pred_region
      _
    $region17: #{run.1} parent=1 // pred_fallthru
      _
    // Predicated region
    $region18: #{run.1} parent=1 // pred_check
      _
    $region19: #{run.1} parent=1 // pred_check_branch
      %25 = sbr.rel (0) target = $region21
    $region20: #{run.1} parent=1 // pred_region
      _
    $region21: #{run.1} parent=1 // pred_fallthru
      _
    // Predicated region
    $region22: #{run.1} parent=1 // pred_check
      _
    $region23: #{run.1} parent=1 // pred_check_branch
      %27 = sbr.rel (0) target = $region25
    $region24: #{run.1} parent=1 // pred_region
      _
    $region25: #{run.1} parent=1 // pred_fallthru
      _
    // Predicated region
    $region26: #{run.1} parent=1 // pred_check
      _
    $region27: #{run.1} parent=1 // pred_check_branch
      %29 = sbr.rel (0) target = $region29
    $region28: #{run.1} parent=1 // pred_region
      _
    $region29: #{run.1} parent=1 // pred_fallthru
      _
    // Predicated region
    $region30: #{run.1} parent=1 // pred_check
      _
    $region31: #{run.1} parent=1 // pred_check_branch
      %31 = sbr.rel (0) target = $region33
    $region32: #{run.1} parent=1 // pred_region
      %s33 = ssub.s32 8192, 8192
      %34 = vsyncadd [#allocation3], %s33
      %s35 = sshll.u32 [#allocation2], 4
      %s36 = int_to_ptr.vmem [resolvable:$true] %s35
      %41 = dma.hbm_to_vmem [thread:$0]  %s7, 8192, %s36, [#allocation3], 128, 128, 8
    $region33: #{run.1} parent=1 // pred_fallthru
      _
    // Predicated region
    $region34: #{run.1} parent=1 // pred_check
      _
    $region35: #{run.1} parent=1 // pred_check_branch
      %43 = sbr.rel (0) target = $region37
    $region36: #{run.1} parent=1 // pred_region
      %44 = dma.done [#allocation3], 8192
    $region37: #{run.1} parent=1 // pred_fallthru
      _
    %v45 = vld [vmem:[%s3] sm:$0xff]
    %v46 = vld [vmem:[%s3 + $0x8] sm:$0xff]
    %v47 = vld [vmem:[%s4] sm:$0xff]
    %v48 = vld [vmem:[%s4 + $0x8] sm:$0xff]
    %v49 = vld [vmem:[%s4 + $0x10] sm:$0xff]
    %v50 = vld [vmem:[%s4 + $0x18] sm:$0xff]
    %v51 = vld [vmem:[%s4 + $0x20] sm:$0x1]
    %v52 = vld [vmem:[%s4 + $0x28] sm:$0x1]
    %v53 = vld [vmem:[%s4 + $0x30] sm:$0x1]
    %v54 = vld [vmem:[%s4 + $0x38] sm:$0x1]
    %vm55 = vcmp.gt.f32.partialorder %v47, 0.5
    %vm56 = vcmp.gt.f32.partialorder %v48, 0.5
    %vm57 = vcmp.gt.f32.partialorder %v49, 0.5
    %vm58 = vcmp.gt.f32.partialorder %v50, 0.5
    %vm59 = vcmp.gt.f32.partialorder %v51, 0.5
    %vm60 = vcmp.gt.f32.partialorder %v52, 0.5
    %vm61 = vcmp.gt.f32.partialorder %v53, 0.5
    %vm62 = vcmp.gt.f32.partialorder %v54, 0.5
    %v63 = vld [vmem:[%s5] sm:$0xff]
    %v64 = vld [vmem:[%s5 + $0x8] sm:$0x1]
    %vm65 = vcmp.gt.f32.partialorder %v63, 0.5
    %vm66 = vcmp.gt.f32.partialorder %v64, 0.5
    %v67 = vld [vmem:[%s0] sm:$0xff]
    %v68 = vld [vmem:[%s0 + $0x8] sm:$0xff]
    %v69 = vld [vmem:[%s0 + $0x10] sm:$0xff]
    %v70 = vld [vmem:[%s0 + $0x18] sm:$0xff]
    %v71 = vld [vmem:[%s2] sm:$0xff]
    %72 = vrot.lane.b32.xlu0 %v67, 17
    %v73 = vpop.permute.xlu0 %72
    %74 = vrot.lane.b32.xlu0 %v68, 17
    %v75 = vpop.permute.xlu0 %74
    %76 = vrot.lane.b32.xlu0 %v69, 17
    %v77 = vpop.permute.xlu0 %76
    %78 = vrot.lane.b32.xlu0 %v70, 17
    %v79 = vpop.permute.xlu0 %78
    %v80 = vlaneseq
    %v81 = vand.u32 %v80, 127
    %vm82 = vcmp.lt.s32.totalorder %v81, 17
    %v83 = vsel %vm82, %v77, %v79
    %v84 = vsel %vm82, %v75, %v77
    %v85 = vsel %vm82, %v73, %v75
    %v86 = vsel %vm82, %v79, %v73
    %v87 = vsel %vm55, 1, 0
    %v88 = vsel %vm56, 1, 0
    %v89 = vsel %vm57, 1, 0
    %v90 = vsel %vm58, 1, 0
    %vm91 = vcmp.eq.s32.totalorder %v87, 1
    %vm92 = vcmp.eq.s32.totalorder %v88, 1
    %vm93 = vcmp.eq.s32.totalorder %v89, 1
    %vm94 = vcmp.eq.s32.totalorder %v90, 1
    %v99 = vrot.slane %v86, 1
    %v100 = vrot.slane %v85, 1
    %v101 = vrot.slane %v84, 1
    %v102 = vrot.slane %v83, 1
    %v103 = vrot.slane %v86, 2
    %v104 = vrot.slane %v85, 2
    %v105 = vrot.slane %v84, 2
    %v106 = vrot.slane %v83, 2
    %v107 = vrot.slane %v86, 3
    %v108 = vrot.slane %v85, 3
    %v109 = vrot.slane %v84, 3
    %v110 = vrot.slane %v83, 3
    %v111 = vrot.slane %v86, 4
    %v112 = vrot.slane %v85, 4
    %v113 = vrot.slane %v84, 4
    %v114 = vrot.slane %v83, 4
    %v115 = vrot.slane %v86, 5
    %v116 = vrot.slane %v85, 5
    %v117 = vrot.slane %v84, 5
    %v118 = vrot.slane %v83, 5
    %v119 = vrot.slane %v86, 6
    %v120 = vrot.slane %v85, 6
    %v121 = vrot.slane %v84, 6
    %v122 = vrot.slane %v83, 6
    %v123 = vrot.slane %v86, 7
    %v124 = vrot.slane %v85, 7
    %v125 = vrot.slane %v84, 7
    %v126 = vrot.slane %v83, 7
    %v159 = vsel %vm91, %v86, 0.0
    %v160 = vsel %vm92, %v85, 0.0
    %v161 = vsel %vm93, %v84, 0.0
    %v162 = vsel %vm94, %v83, 0.0
    %v163 = vsel %vm91, %v99, 0.0
    %v164 = vsel %vm92, %v100, 0.0
    %v165 = vsel %vm93, %v101, 0.0
    %v166 = vsel %vm94, %v102, 0.0
    %v167 = vsel %vm91, %v103, 0.0
    %v168 = vsel %vm92, %v104, 0.0
    %v169 = vsel %vm93, %v105, 0.0
    %v170 = vsel %vm94, %v106, 0.0
    %v171 = vsel %vm91, %v107, 0.0
    %v172 = vsel %vm92, %v108, 0.0
    %v173 = vsel %vm93, %v109, 0.0
    %v174 = vsel %vm94, %v110, 0.0
    %v175 = vsel %vm91, %v111, 0.0
    %v176 = vsel %vm92, %v112, 0.0
    %v177 = vsel %vm93, %v113, 0.0
    %v178 = vsel %vm94, %v114, 0.0
    %v179 = vsel %vm91, %v115, 0.0
    %v180 = vsel %vm92, %v116, 0.0
    %v181 = vsel %vm93, %v117, 0.0
    %v182 = vsel %vm94, %v118, 0.0
    %v183 = vsel %vm91, %v119, 0.0
    %v184 = vsel %vm92, %v120, 0.0
    %v185 = vsel %vm93, %v121, 0.0
    %v186 = vsel %vm94, %v122, 0.0
    %v187 = vsel %vm91, %v123, 0.0
    %v188 = vsel %vm92, %v124, 0.0
    %v189 = vsel %vm93, %v125, 0.0
    %v190 = vsel %vm94, %v126, 0.0
    %191 = vrot.lane.b32.xlu0 %v67, 16
    %v192 = vpop.permute.xlu0 %191
    %193 = vrot.lane.b32.xlu0 %v68, 16
    %v194 = vpop.permute.xlu0 %193
    %195 = vrot.lane.b32.xlu0 %v69, 16
    %v196 = vpop.permute.xlu0 %195
    %197 = vrot.lane.b32.xlu0 %v70, 16
    %v198 = vpop.permute.xlu0 %197
    %vm199 = vcmp.lt.s32.totalorder %v81, 16
    %v200 = vsel %vm199, %v196, %v198
    %v201 = vsel %vm199, %v194, %v196
    %v202 = vsel %vm199, %v192, %v194
    %v203 = vsel %vm199, %v198, %v192
    %v208 = vrot.slane %v203, 7
    %v209 = vrot.slane %v202, 7
    %v210 = vrot.slane %v201, 7
    %v211 = vrot.slane %v200, 7
    %v212 = vrot.slane %v203, 1
    %v213 = vrot.slane %v202, 1
    %v214 = vrot.slane %v201, 1
    %v215 = vrot.slane %v200, 1
    %v216 = vrot.slane %v203, 2
    %v217 = vrot.slane %v202, 2
    %v218 = vrot.slane %v201, 2
    %v219 = vrot.slane %v200, 2
    %v220 = vrot.slane %v203, 3
    %v221 = vrot.slane %v202, 3
    %v222 = vrot.slane %v201, 3
    %v223 = vrot.slane %v200, 3
    %v224 = vrot.slane %v203, 4
    %v225 = vrot.slane %v202, 4
    %v226 = vrot.slane %v201, 4
    %v227 = vrot.slane %v200, 4
    %v228 = vrot.slane %v203, 5
    %v229 = vrot.slane %v202, 5
    %v230 = vrot.slane %v201, 5
    %v231 = vrot.slane %v200, 5
    %v232 = vrot.slane %v203, 6
    %v233 = vrot.slane %v202, 6
    %v234 = vrot.slane %v201, 6
    %v235 = vrot.slane %v200, 6
    %v268 = vsel %vm91, %v208, 0.0
    %v269 = vsel %vm92, %v209, 0.0
    %v270 = vsel %vm93, %v210, 0.0
    %v271 = vsel %vm94, %v211, 0.0
    %v272 = vsel %vm91, %v203, 0.0
    %v273 = vsel %vm92, %v202, 0.0
    %v274 = vsel %vm93, %v201, 0.0
    %v275 = vsel %vm94, %v200, 0.0
    %v276 = vsel %vm91, %v212, 0.0
    %v277 = vsel %vm92, %v213, 0.0
    %v278 = vsel %vm93, %v214, 0.0
    %v279 = vsel %vm94, %v215, 0.0
    %v280 = vsel %vm91, %v216, 0.0
    %v281 = vsel %vm92, %v217, 0.0
    %v282 = vsel %vm93, %v218, 0.0
    %v283 = vsel %vm94, %v219, 0.0
    %v284 = vsel %vm91, %v220, 0.0
    %v285 = vsel %vm92, %v221, 0.0
    %v286 = vsel %vm93, %v222, 0.0
    %v287 = vsel %vm94, %v223, 0.0
    %v288 = vsel %vm91, %v224, 0.0
    %v289 = vsel %vm92, %v225, 0.0
    %v290 = vsel %vm93, %v226, 0.0
    %v291 = vsel %vm94, %v227, 0.0
    %v292 = vsel %vm91, %v228, 0.0
    %v293 = vsel %vm92, %v229, 0.0
    %v294 = vsel %vm93, %v230, 0.0
    %v295 = vsel %vm94, %v231, 0.0
    %v296 = vsel %vm91, %v232, 0.0
    %v297 = vsel %vm92, %v233, 0.0
    %v298 = vsel %vm93, %v234, 0.0
    %v299 = vsel %vm94, %v235, 0.0
    %300 = vrot.lane.b32.xlu0 %v67, 15
    %v301 = vpop.permute.xlu0 %300
    %302 = vrot.lane.b32.xlu0 %v68, 15
    %v303 = vpop.permute.xlu0 %302
    %304 = vrot.lane.b32.xlu0 %v69, 15
    %v305 = vpop.permute.xlu0 %304
    %306 = vrot.lane.b32.xlu0 %v70, 15
    %v307 = vpop.permute.xlu0 %306
    %vm308 = vcmp.lt.s32.totalorder %v81, 15
    %v309 = vsel %vm308, %v305, %v307
    %v310 = vsel %vm308, %v303, %v305
    %v311 = vsel %vm308, %v301, %v303
    %v312 = vsel %vm308, %v307, %v301
    %v317 = vrot.slane %v312, 6
    %v318 = vrot.slane %v311, 6
    %v319 = vrot.slane %v310, 6
    %v320 = vrot.slane %v309, 6
    %v321 = vrot.slane %v312, 7
    %v322 = vrot.slane %v311, 7
    %v323 = vrot.slane %v310, 7
    %v324 = vrot.slane %v309, 7
    %v325 = vrot.slane %v312, 1
    %v326 = vrot.slane %v311, 1
    %v327 = vrot.slane %v310, 1
    %v328 = vrot.slane %v309, 1
    %v329 = vrot.slane %v312, 2
    %v330 = vrot.slane %v311, 2
    %v331 = vrot.slane %v310, 2
    %v332 = vrot.slane %v309, 2
    %v333 = vrot.slane %v312, 3
    %v334 = vrot.slane %v311, 3
    %v335 = vrot.slane %v310, 3
    %v336 = vrot.slane %v309, 3
    %v337 = vrot.slane %v312, 4
    %v338 = vrot.slane %v311, 4
    %v339 = vrot.slane %v310, 4
    %v340 = vrot.slane %v309, 4
    %v341 = vrot.slane %v312, 5
    %v342 = vrot.slane %v311, 5
    %v343 = vrot.slane %v310, 5
    %v344 = vrot.slane %v309, 5
    %v377 = vsel %vm91, %v317, 0.0
    %v378 = vsel %vm92, %v318, 0.0
    %v379 = vsel %vm93, %v319, 0.0
    %v380 = vsel %vm94, %v320, 0.0
    %v381 = vsel %vm91, %v321, 0.0
    %v382 = vsel %vm92, %v322, 0.0
    %v383 = vsel %vm93, %v323, 0.0
    %v384 = vsel %vm94, %v324, 0.0
    %v385 = vsel %vm91, %v312, 0.0
    %v386 = vsel %vm92, %v311, 0.0
    %v387 = vsel %vm93, %v310, 0.0
    %v388 = vsel %vm94, %v309, 0.0
    %v389 = vsel %vm91, %v325, 0.0
    %v390 = vsel %vm92, %v326, 0.0
    %v391 = vsel %vm93, %v327, 0.0
    %v392 = vsel %vm94, %v328, 0.0
    %v393 = vsel %vm91, %v329, 0.0
    %v394 = vsel %vm92, %v330, 0.0
    %v395 = vsel %vm93, %v331, 0.0
    %v396 = vsel %vm94, %v332, 0.0
    %v397 = vsel %vm91, %v333, 0.0
    %v398 = vsel %vm92, %v334, 0.0
    %v399 = vsel %vm93, %v335, 0.0
    %v400 = vsel %vm94, %v336, 0.0
    %v401 = vsel %vm91, %v337, 0.0
    %v402 = vsel %vm92, %v338, 0.0
    %v403 = vsel %vm93, %v339, 0.0
    %v404 = vsel %vm94, %v340, 0.0
    %v405 = vsel %vm91, %v341, 0.0
    %v406 = vsel %vm92, %v342, 0.0
    %v407 = vsel %vm93, %v343, 0.0
    %v408 = vsel %vm94, %v344, 0.0
    %409 = vrot.lane.b32.xlu0 %v67, 1
    %v410 = vpop.permute.xlu0 %409
    %411 = vrot.lane.b32.xlu0 %v68, 1
    %v412 = vpop.permute.xlu0 %411
    %413 = vrot.lane.b32.xlu0 %v69, 1
    %v414 = vpop.permute.xlu0 %413
    %415 = vrot.lane.b32.xlu0 %v70, 1
    %v416 = vpop.permute.xlu0 %415
    %vm417 = vcmp.lt.s32.totalorder %v81, 1
    %v418 = vsel %vm417, %v414, %v416
    %v419 = vsel %vm417, %v412, %v414
    %v420 = vsel %vm417, %v410, %v412
    %v421 = vsel %vm417, %v416, %v410
    %v426 = vrot.slane %v421, 5
    %v427 = vrot.slane %v420, 5
    %v428 = vrot.slane %v419, 5
    %v429 = vrot.slane %v418, 5
    %v430 = vrot.slane %v421, 6
    %v431 = vrot.slane %v420, 6
    %v432 = vrot.slane %v419, 6
    %v433 = vrot.slane %v418, 6
    %v434 = vrot.slane %v421, 7
    %v435 = vrot.slane %v420, 7
    %v436 = vrot.slane %v419, 7
    %v437 = vrot.slane %v418, 7
    %v438 = vrot.slane %v421, 1
    %v439 = vrot.slane %v420, 1
    %v440 = vrot.slane %v419, 1
    %v441 = vrot.slane %v418, 1
    %v442 = vrot.slane %v421, 2
    %v443 = vrot.slane %v420, 2
    %v444 = vrot.slane %v419, 2
    %v445 = vrot.slane %v418, 2
    %v446 = vrot.slane %v421, 3
    %v447 = vrot.slane %v420, 3
    %v448 = vrot.slane %v419, 3
    %v449 = vrot.slane %v418, 3
    %v450 = vrot.slane %v421, 4
    %v451 = vrot.slane %v420, 4
    %v452 = vrot.slane %v419, 4
    %v453 = vrot.slane %v418, 4
    %v486 = vsel %vm91, %v426, 0.0
    %v487 = vsel %vm92, %v427, 0.0
    %v488 = vsel %vm93, %v428, 0.0
    %v489 = vsel %vm94, %v429, 0.0
    %v490 = vsel %vm91, %v430, 0.0
    %v491 = vsel %vm92, %v431, 0.0
    %v492 = vsel %vm93, %v432, 0.0
    %v493 = vsel %vm94, %v433, 0.0
    %v494 = vsel %vm91, %v434, 0.0
    %v495 = vsel %vm92, %v435, 0.0
    %v496 = vsel %vm93, %v436, 0.0
    %v497 = vsel %vm94, %v437, 0.0
    %v498 = vsel %vm91, %v421, 0.0
    %v499 = vsel %vm92, %v420, 0.0
    %v500 = vsel %vm93, %v419, 0.0
    %v501 = vsel %vm94, %v418, 0.0
    %v502 = vsel %vm91, %v438, 0.0
    %v503 = vsel %vm92, %v439, 0.0
    %v504 = vsel %vm93, %v440, 0.0
    %v505 = vsel %vm94, %v441, 0.0
    %v506 = vsel %vm91, %v442, 0.0
    %v507 = vsel %vm92, %v443, 0.0
    %v508 = vsel %vm93, %v444, 0.0
    %v509 = vsel %vm94, %v445, 0.0
    %v510 = vsel %vm91, %v446, 0.0
    %v511 = vsel %vm92, %v447, 0.0
    %v512 = vsel %vm93, %v448, 0.0
    %v513 = vsel %vm94, %v449, 0.0
    %v514 = vsel %vm91, %v450, 0.0
    %v515 = vsel %vm92, %v451, 0.0
    %v516 = vsel %vm93, %v452, 0.0
    %v517 = vsel %vm94, %v453, 0.0
    %518 = vrot.lane.b32.xlu0 %v67, 127
    %v519 = vpop.permute.xlu0 %518
    %520 = vrot.lane.b32.xlu0 %v68, 127
    %v521 = vpop.permute.xlu0 %520
    %522 = vrot.lane.b32.xlu0 %v69, 127
    %v523 = vpop.permute.xlu0 %522
    %524 = vrot.lane.b32.xlu0 %v70, 127
    %v525 = vpop.permute.xlu0 %524
    %vm526 = vcmp.lt.s32.totalorder %v81, 127
    %v527 = vsel %vm526, %v523, %v525
    %v528 = vsel %vm526, %v521, %v523
    %v529 = vsel %vm526, %v519, %v521
    %v530 = vsel %vm526, %v525, %v519
    %v535 = vrot.slane %v529, 3
    %v536 = vrot.slane %v528, 3
    %v537 = vrot.slane %v527, 3
    %v538 = vrot.slane %v530, 3
    %v539 = vrot.slane %v529, 4
    %v540 = vrot.slane %v528, 4
    %v541 = vrot.slane %v527, 4
    %v542 = vrot.slane %v530, 4
    %v543 = vrot.slane %v529, 5
    %v544 = vrot.slane %v528, 5
    %v545 = vrot.slane %v527, 5
    %v546 = vrot.slane %v530, 5
    %v547 = vrot.slane %v529, 6
    %v548 = vrot.slane %v528, 6
    %v549 = vrot.slane %v527, 6
    %v550 = vrot.slane %v530, 6
    %v551 = vrot.slane %v529, 7
    %v552 = vrot.slane %v528, 7
    %v553 = vrot.slane %v527, 7
    %v554 = vrot.slane %v530, 7
    %v555 = vrot.slane %v529, 1
    %v556 = vrot.slane %v528, 1
    %v557 = vrot.slane %v527, 1
    %v558 = vrot.slane %v530, 1
    %v559 = vrot.slane %v529, 2
    %v560 = vrot.slane %v528, 2
    %v561 = vrot.slane %v527, 2
    %v562 = vrot.slane %v530, 2
    %v595 = vsel %vm91, %v535, 0.0
    %v596 = vsel %vm92, %v536, 0.0
    %v597 = vsel %vm93, %v537, 0.0
    %v598 = vsel %vm94, %v538, 0.0
    %v599 = vsel %vm91, %v539, 0.0
    %v600 = vsel %vm92, %v540, 0.0
    %v601 = vsel %vm93, %v541, 0.0
    %v602 = vsel %vm94, %v542, 0.0
    %v603 = vsel %vm91, %v543, 0.0
    %v604 = vsel %vm92, %v544, 0.0
    %v605 = vsel %vm93, %v545, 0.0
    %v606 = vsel %vm94, %v546, 0.0
    %v607 = vsel %vm91, %v547, 0.0
    %v608 = vsel %vm92, %v548, 0.0
    %v609 = vsel %vm93, %v549, 0.0
    %v610 = vsel %vm94, %v550, 0.0
    %v611 = vsel %vm91, %v551, 0.0
    %v612 = vsel %vm92, %v552, 0.0
    %v613 = vsel %vm93, %v553, 0.0
    %v614 = vsel %vm94, %v554, 0.0
    %v615 = vsel %vm91, %v529, 0.0
    %v616 = vsel %vm92, %v528, 0.0
    %v617 = vsel %vm93, %v527, 0.0
    %v618 = vsel %vm94, %v530, 0.0
    %v619 = vsel %vm91, %v555, 0.0
    %v620 = vsel %vm92, %v556, 0.0
    %v621 = vsel %vm93, %v557, 0.0
    %v622 = vsel %vm94, %v558, 0.0
    %v623 = vsel %vm91, %v559, 0.0
    %v624 = vsel %vm92, %v560, 0.0
    %v625 = vsel %vm93, %v561, 0.0
    %v626 = vsel %vm94, %v562, 0.0
    %627 = vrot.lane.b32.xlu0 %v67, 113
    %v628 = vpop.permute.xlu0 %627
    %629 = vrot.lane.b32.xlu0 %v68, 113
    %v630 = vpop.permute.xlu0 %629
    %631 = vrot.lane.b32.xlu0 %v69, 113
    %v632 = vpop.permute.xlu0 %631
    %633 = vrot.lane.b32.xlu0 %v70, 113
    %v634 = vpop.permute.xlu0 %633
    %vm635 = vcmp.lt.s32.totalorder %v81, 113
    %v636 = vsel %vm635, %v632, %v634
    %v637 = vsel %vm635, %v630, %v632
    %v638 = vsel %vm635, %v628, %v630
    %v639 = vsel %vm635, %v634, %v628
    %v644 = vrot.slane %v638, 2
    %v645 = vrot.slane %v637, 2
    %v646 = vrot.slane %v636, 2
    %v647 = vrot.slane %v639, 2
    %v648 = vrot.slane %v638, 3
    %v649 = vrot.slane %v637, 3
    %v650 = vrot.slane %v636, 3
    %v651 = vrot.slane %v639, 3
    %v652 = vrot.slane %v638, 4
    %v653 = vrot.slane %v637, 4
    %v654 = vrot.slane %v636, 4
    %v655 = vrot.slane %v639, 4
    %v656 = vrot.slane %v638, 5
    %v657 = vrot.slane %v637, 5
    %v658 = vrot.slane %v636, 5
    %v659 = vrot.slane %v639, 5
    %v660 = vrot.slane %v638, 6
    %v661 = vrot.slane %v637, 6
    %v662 = vrot.slane %v636, 6
    %v663 = vrot.slane %v639, 6
    %v664 = vrot.slane %v638, 7
    %v665 = vrot.slane %v637, 7
    %v666 = vrot.slane %v636, 7
    %v667 = vrot.slane %v639, 7
    %v668 = vrot.slane %v638, 1
    %v669 = vrot.slane %v637, 1
    %v670 = vrot.slane %v636, 1
    %v671 = vrot.slane %v639, 1
    %v704 = vsel %vm91, %v644, 0.0
    %v705 = vsel %vm92, %v645, 0.0
    %v706 = vsel %vm93, %v646, 0.0
    %v707 = vsel %vm94, %v647, 0.0
    %v708 = vsel %vm91, %v648, 0.0
    %v709 = vsel %vm92, %v649, 0.0
    %v710 = vsel %vm93, %v650, 0.0
    %v711 = vsel %vm94, %v651, 0.0
    %v712 = vsel %vm91, %v652, 0.0
    %v713 = vsel %vm92, %v653, 0.0
    %v714 = vsel %vm93, %v654, 0.0
    %v715 = vsel %vm94, %v655, 0.0
    %v716 = vsel %vm91, %v656, 0.0
    %v717 = vsel %vm92, %v657, 0.0
    %v718 = vsel %vm93, %v658, 0.0
    %v719 = vsel %vm94, %v659, 0.0
    %v720 = vsel %vm91, %v660, 0.0
    %v721 = vsel %vm92, %v661, 0.0
    %v722 = vsel %vm93, %v662, 0.0
    %v723 = vsel %vm94, %v663, 0.0
    %v724 = vsel %vm91, %v664, 0.0
    %v725 = vsel %vm92, %v665, 0.0
    %v726 = vsel %vm93, %v666, 0.0
    %v727 = vsel %vm94, %v667, 0.0
    %v728 = vsel %vm91, %v638, 0.0
    %v729 = vsel %vm92, %v637, 0.0
    %v730 = vsel %vm93, %v636, 0.0
    %v731 = vsel %vm94, %v639, 0.0
    %v732 = vsel %vm91, %v668, 0.0
    %v733 = vsel %vm92, %v669, 0.0
    %v734 = vsel %vm93, %v670, 0.0
    %v735 = vsel %vm94, %v671, 0.0
    %736 = vrot.lane.b32.xlu0 %v67, 112
    %v737 = vpop.permute.xlu0 %736
    %738 = vrot.lane.b32.xlu0 %v68, 112
    %v739 = vpop.permute.xlu0 %738
    %740 = vrot.lane.b32.xlu0 %v69, 112
    %v741 = vpop.permute.xlu0 %740
    %742 = vrot.lane.b32.xlu0 %v70, 112
    %v743 = vpop.permute.xlu0 %742
    %vm744 = vcmp.lt.s32.totalorder %v81, 112
    %v745 = vsel %vm744, %v741, %v743
    %v746 = vsel %vm744, %v739, %v741
    %v747 = vsel %vm744, %v737, %v739
    %v748 = vsel %vm744, %v743, %v737
    %v753 = vrot.slane %v747, 1
    %v754 = vrot.slane %v746, 1
    %v755 = vrot.slane %v745, 1
    %v756 = vrot.slane %v748, 1
    %v757 = vrot.slane %v747, 2
    %v758 = vrot.slane %v746, 2
    %v759 = vrot.slane %v745, 2
    %v760 = vrot.slane %v748, 2
    %v761 = vrot.slane %v747, 3
    %v762 = vrot.slane %v746, 3
    %v763 = vrot.slane %v745, 3
    %v764 = vrot.slane %v748, 3
    %v765 = vrot.slane %v747, 4
    %v766 = vrot.slane %v746, 4
    %v767 = vrot.slane %v745, 4
    %v768 = vrot.slane %v748, 4
    %v769 = vrot.slane %v747, 5
    %v770 = vrot.slane %v746, 5
    %v771 = vrot.slane %v745, 5
    %v772 = vrot.slane %v748, 5
    %v773 = vrot.slane %v747, 6
    %v774 = vrot.slane %v746, 6
    %v775 = vrot.slane %v745, 6
    %v776 = vrot.slane %v748, 6
    %v777 = vrot.slane %v747, 7
    %v778 = vrot.slane %v746, 7
    %v779 = vrot.slane %v745, 7
    %v780 = vrot.slane %v748, 7
    %v813 = vsel %vm91, %v753, 0.0
    %v814 = vsel %vm92, %v754, 0.0
    %v815 = vsel %vm93, %v755, 0.0
    %v816 = vsel %vm94, %v756, 0.0
    %v817 = vsel %vm91, %v757, 0.0
    %v818 = vsel %vm92, %v758, 0.0
    %v819 = vsel %vm93, %v759, 0.0
    %v820 = vsel %vm94, %v760, 0.0
    %v821 = vsel %vm91, %v761, 0.0
    %v822 = vsel %vm92, %v762, 0.0
    %v823 = vsel %vm93, %v763, 0.0
    %v824 = vsel %vm94, %v764, 0.0
    %v825 = vsel %vm91, %v765, 0.0
    %v826 = vsel %vm92, %v766, 0.0
    %v827 = vsel %vm93, %v767, 0.0
    %v828 = vsel %vm94, %v768, 0.0
    %v829 = vsel %vm91, %v769, 0.0
    %v830 = vsel %vm92, %v770, 0.0
    %v831 = vsel %vm93, %v771, 0.0
    %v832 = vsel %vm94, %v772, 0.0
    %v833 = vsel %vm91, %v773, 0.0
    %v834 = vsel %vm92, %v774, 0.0
    %v835 = vsel %vm93, %v775, 0.0
    %v836 = vsel %vm94, %v776, 0.0
    %v837 = vsel %vm91, %v777, 0.0
    %v838 = vsel %vm92, %v778, 0.0
    %v839 = vsel %vm93, %v779, 0.0
    %v840 = vsel %vm94, %v780, 0.0
    %v841 = vsel %vm91, %v747, 0.0
    %v842 = vsel %vm92, %v746, 0.0
    %v843 = vsel %vm93, %v745, 0.0
    %v844 = vsel %vm94, %v748, 0.0
    %845 = vrot.lane.b32.xlu0 %v67, 111
    %v846 = vpop.permute.xlu0 %845
    %847 = vrot.lane.b32.xlu0 %v68, 111
    %v848 = vpop.permute.xlu0 %847
    %849 = vrot.lane.b32.xlu0 %v69, 111
    %v850 = vpop.permute.xlu0 %849
    %851 = vrot.lane.b32.xlu0 %v70, 111
    %v852 = vpop.permute.xlu0 %851
    %vm853 = vcmp.lt.s32.totalorder %v81, 111
    %v854 = vsel %vm853, %v850, %v852
    %v855 = vsel %vm853, %v848, %v850
    %v856 = vsel %vm853, %v846, %v848
    %v857 = vsel %vm853, %v852, %v846
    %v858 = vsel %vm59, 1, 0
    %v859 = vsel %vm60, 1, 0
    %v860 = vsel %vm61, 1, 0
    %v861 = vsel %vm62, 1, 0
    %vm862 = vcmp.eq.s32.totalorder %v858, 1
    %vm863 = vcmp.eq.s32.totalorder %v859, 1
    %vm864 = vcmp.eq.s32.totalorder %v860, 1
    %vm865 = vcmp.eq.s32.totalorder %v861, 1
    %v870 = vrot.slane %v856, 1
    %v871 = vrot.slane %v855, 1
    %v872 = vrot.slane %v854, 1
    %v873 = vrot.slane %v857, 1
    %v874 = vrot.slane %v856, 2
    %v875 = vrot.slane %v855, 2
    %v876 = vrot.slane %v854, 2
    %v877 = vrot.slane %v857, 2
    %v878 = vrot.slane %v856, 3
    %v879 = vrot.slane %v855, 3
    %v880 = vrot.slane %v854, 3
    %v881 = vrot.slane %v857, 3
    %v882 = vrot.slane %v856, 4
    %v883 = vrot.slane %v855, 4
    %v884 = vrot.slane %v854, 4
    %v885 = vrot.slane %v857, 4
    %v886 = vrot.slane %v856, 5
    %v887 = vrot.slane %v855, 5
    %v888 = vrot.slane %v854, 5
    %v889 = vrot.slane %v857, 5
    %v890 = vrot.slane %v856, 6
    %v891 = vrot.slane %v855, 6
    %v892 = vrot.slane %v854, 6
    %v893 = vrot.slane %v857, 6
    %v894 = vrot.slane %v856, 7
    %v895 = vrot.slane %v855, 7
    %v896 = vrot.slane %v854, 7
    %v897 = vrot.slane %v857, 7
    %v930 = vsel %vm862, %v856, 0.0
    %v931 = vsel %vm863, %v855, 0.0
    %v932 = vsel %vm864, %v854, 0.0
    %v933 = vsel %vm865, %v857, 0.0
    %v934 = vsel %vm862, %v870, 0.0
    %v935 = vsel %vm863, %v871, 0.0
    %v936 = vsel %vm864, %v872, 0.0
    %v937 = vsel %vm865, %v873, 0.0
    %v938 = vsel %vm862, %v874, 0.0
    %v939 = vsel %vm863, %v875, 0.0
    %v940 = vsel %vm864, %v876, 0.0
    %v941 = vsel %vm865, %v877, 0.0
    %v942 = vsel %vm862, %v878, 0.0
    %v943 = vsel %vm863, %v879, 0.0
    %v944 = vsel %vm864, %v880, 0.0
    %v945 = vsel %vm865, %v881, 0.0
    %v946 = vsel %vm862, %v882, 0.0
    %v947 = vsel %vm863, %v883, 0.0
    %v948 = vsel %vm864, %v884, 0.0
    %v949 = vsel %vm865, %v885, 0.0
    %v950 = vsel %vm862, %v886, 0.0
    %v951 = vsel %vm863, %v887, 0.0
    %v952 = vsel %vm864, %v888, 0.0
    %v953 = vsel %vm865, %v889, 0.0
    %v954 = vsel %vm862, %v890, 0.0
    %v955 = vsel %vm863, %v891, 0.0
    %v956 = vsel %vm864, %v892, 0.0
    %v957 = vsel %vm865, %v893, 0.0
    %v958 = vsel %vm862, %v894, 0.0
    %v959 = vsel %vm863, %v895, 0.0
    %v960 = vsel %vm864, %v896, 0.0
    %v961 = vsel %vm865, %v897, 0.0
    %v994 = vrot.slane %v163, 7
    %vm995 = vcmask 1041409
    %v996 = vsel %vm995, %v994, %v159
    %v997 = vrot.slane %v167, 6
    %vm998 = vcmask 1042434
    %v999 = vsel %vm998, %v997, %v996
    %v1000 = vrot.slane %v171, 5
    %vm1001 = vcmask 1043459
    %v1002 = vsel %vm1001, %v1000, %v999
    %v1003 = vrot.slane %v175, 4
    %vm1004 = vcmask 1044484
    %v1005 = vsel %vm1004, %v1003, %v1002
    %v1006 = vrot.slane %v179, 3
    %vm1007 = vcmask 1045509
    %v1008 = vsel %vm1007, %v1006, %v1005
    %v1009 = vrot.slane %v183, 2
    %vm1010 = vcmask 1046534
    %v1011 = vsel %vm1010, %v1009, %v1008
    %v1012 = vrot.slane %v187, 1
    %vm1013 = vcmask 1047559
    %v1014 = vsel %vm1013, %v1012, %v1011
    %v1015 = vrot.slane %v164, 7
    %v1016 = vsel %vm995, %v1015, %v160
    %v1017 = vrot.slane %v168, 6
    %v1018 = vsel %vm998, %v1017, %v1016
    %v1019 = vrot.slane %v172, 5
    %v1020 = vsel %vm1001, %v1019, %v1018
    %v1021 = vrot.slane %v176, 4
    %v1022 = vsel %vm1004, %v1021, %v1020
    %v1023 = vrot.slane %v180, 3
    %v1024 = vsel %vm1007, %v1023, %v1022
    %v1025 = vrot.slane %v184, 2
    %v1026 = vsel %vm1010, %v1025, %v1024
    %v1027 = vrot.slane %v188, 1
    %v1028 = vsel %vm1013, %v1027, %v1026
    %v1029 = vrot.slane %v165, 7
    %v1030 = vsel %vm995, %v1029, %v161
    %v1031 = vrot.slane %v169, 6
    %v1032 = vsel %vm998, %v1031, %v1030
    %v1033 = vrot.slane %v173, 5
    %v1034 = vsel %vm1001, %v1033, %v1032
    %v1035 = vrot.slane %v177, 4
    %v1036 = vsel %vm1004, %v1035, %v1034
    %v1037 = vrot.slane %v181, 3
    %v1038 = vsel %vm1007, %v1037, %v1036
    %v1039 = vrot.slane %v185, 2
    %v1040 = vsel %vm1010, %v1039, %v1038
    %v1041 = vrot.slane %v189, 1
    %v1042 = vsel %vm1013, %v1041, %v1040
    %v1043 = vrot.slane %v166, 7
    %v1044 = vsel %vm995, %v1043, %v162
    %v1045 = vrot.slane %v170, 6
    %v1046 = vsel %vm998, %v1045, %v1044
    %v1047 = vrot.slane %v174, 5
    %v1048 = vsel %vm1001, %v1047, %v1046
    %v1049 = vrot.slane %v178, 4
    %v1050 = vsel %vm1004, %v1049, %v1048
    %v1051 = vrot.slane %v182, 3
    %v1052 = vsel %vm1007, %v1051, %v1050
    %v1053 = vrot.slane %v186, 2
    %v1054 = vsel %vm1010, %v1053, %v1052
    %v1055 = vrot.slane %v190, 1
    %v1056 = vsel %vm1013, %v1055, %v1054
    %v1093 = vrot.slane %v268, 1
    %v1094 = vsel %vm995, %v272, %v1093
    %v1095 = vrot.slane %v276, 7
    %v1096 = vsel %vm998, %v1095, %v1094
    %v1097 = vrot.slane %v280, 6
    %v1098 = vsel %vm1001, %v1097, %v1096
    %v1099 = vrot.slane %v284, 5
    %v1100 = vsel %vm1004, %v1099, %v1098
    %v1101 = vrot.slane %v288, 4
    %v1102 = vsel %vm1007, %v1101, %v1100
    %v1103 = vrot.slane %v292, 3
    %v1104 = vsel %vm1010, %v1103, %v1102
    %v1105 = vrot.slane %v296, 2
    %v1106 = vsel %vm1013, %v1105, %v1104
    %v1107 = vrot.slane %v269, 1
    %v1108 = vsel %vm995, %v273, %v1107
    %v1109 = vrot.slane %v277, 7
    %v1110 = vsel %vm998, %v1109, %v1108
    %v1111 = vrot.slane %v281, 6
    %v1112 = vsel %vm1001, %v1111, %v1110
    %v1113 = vrot.slane %v285, 5
    %v1114 = vsel %vm1004, %v1113, %v1112
    %v1115 = vrot.slane %v289, 4
    %v1116 = vsel %vm1007, %v1115, %v1114
    %v1117 = vrot.slane %v293, 3
    %v1118 = vsel %vm1010, %v1117, %v1116
    %v1119 = vrot.slane %v297, 2
    %v1120 = vsel %vm1013, %v1119, %v1118
    %v1121 = vrot.slane %v270, 1
    %v1122 = vsel %vm995, %v274, %v1121
    %v1123 = vrot.slane %v278, 7
    %v1124 = vsel %vm998, %v1123, %v1122
    %v1125 = vrot.slane %v282, 6
    %v1126 = vsel %vm1001, %v1125, %v1124
    %v1127 = vrot.slane %v286, 5
    %v1128 = vsel %vm1004, %v1127, %v1126
    %v1129 = vrot.slane %v290, 4
    %v1130 = vsel %vm1007, %v1129, %v1128
    %v1131 = vrot.slane %v294, 3
    %v1132 = vsel %vm1010, %v1131, %v1130
    %v1133 = vrot.slane %v298, 2
    %v1134 = vsel %vm1013, %v1133, %v1132
    %v1135 = vrot.slane %v271, 1
    %v1136 = vsel %vm995, %v275, %v1135
    %v1137 = vrot.slane %v279, 7
    %v1138 = vsel %vm998, %v1137, %v1136
    %v1139 = vrot.slane %v283, 6
    %v1140 = vsel %vm1001, %v1139, %v1138
    %v1141 = vrot.slane %v287, 5
    %v1142 = vsel %vm1004, %v1141, %v1140
    %v1143 = vrot.slane %v291, 4
    %v1144 = vsel %vm1007, %v1143, %v1142
    %v1145 = vrot.slane %v295, 3
    %v1146 = vsel %vm1010, %v1145, %v1144
    %v1147 = vrot.slane %v299, 2
    %v1148 = vsel %vm1013, %v1147, %v1146
    %v1185 = vrot.slane %v377, 2
    %v1186 = vrot.slane %v381, 1
    %v1187 = vsel %vm995, %v1186, %v1185
    %v1188 = vsel %vm998, %v385, %v1187
    %v1189 = vrot.slane %v389, 7
    %v1190 = vsel %vm1001, %v1189, %v1188
    %v1191 = vrot.slane %v393, 6
    %v1192 = vsel %vm1004, %v1191, %v1190
    %v1193 = vrot.slane %v397, 5
    %v1194 = vsel %vm1007, %v1193, %v1192
    %v1195 = vrot.slane %v401, 4
    %v1196 = vsel %vm1010, %v1195, %v1194
    %v1197 = vrot.slane %v405, 3
    %v1198 = vsel %vm1013, %v1197, %v1196
    %v1199 = vrot.slane %v378, 2
    %v1200 = vrot.slane %v382, 1
    %v1201 = vsel %vm995, %v1200, %v1199
    %v1202 = vsel %vm998, %v386, %v1201
    %v1203 = vrot.slane %v390, 7
    %v1204 = vsel %vm1001, %v1203, %v1202
    %v1205 = vrot.slane %v394, 6
    %v1206 = vsel %vm1004, %v1205, %v1204
    %v1207 = vrot.slane %v398, 5
    %v1208 = vsel %vm1007, %v1207, %v1206
    %v1209 = vrot.slane %v402, 4
    %v1210 = vsel %vm1010, %v1209, %v1208
    %v1211 = vrot.slane %v406, 3
    %v1212 = vsel %vm1013, %v1211, %v1210
    %v1213 = vrot.slane %v379, 2
    %v1214 = vrot.slane %v383, 1
    %v1215 = vsel %vm995, %v1214, %v1213
    %v1216 = vsel %vm998, %v387, %v1215
    %v1217 = vrot.slane %v391, 7
    %v1218 = vsel %vm1001, %v1217, %v1216
    %v1219 = vrot.slane %v395, 6
    %v1220 = vsel %vm1004, %v1219, %v1218
    %v1221 = vrot.slane %v399, 5
    %v1222 = vsel %vm1007, %v1221, %v1220
    %v1223 = vrot.slane %v403, 4
    %v1224 = vsel %vm1010, %v1223, %v1222
    %v1225 = vrot.slane %v407, 3
    %v1226 = vsel %vm1013, %v1225, %v1224
    %v1227 = vrot.slane %v380, 2
    %v1228 = vrot.slane %v384, 1
    %v1229 = vsel %vm995, %v1228, %v1227
    %v1230 = vsel %vm998, %v388, %v1229
    %v1231 = vrot.slane %v392, 7
    %v1232 = vsel %vm1001, %v1231, %v1230
    %v1233 = vrot.slane %v396, 6
    %v1234 = vsel %vm1004, %v1233, %v1232
    %v1235 = vrot.slane %v400, 5
    %v1236 = vsel %vm1007, %v1235, %v1234
    %v1237 = vrot.slane %v404, 4
    %v1238 = vsel %vm1010, %v1237, %v1236
    %v1239 = vrot.slane %v408, 3
    %v1240 = vsel %vm1013, %v1239, %v1238
    %v1277 = vrot.slane %v486, 3
    %v1278 = vrot.slane %v490, 2
    %v1279 = vsel %vm995, %v1278, %v1277
    %v1280 = vrot.slane %v494, 1
    %v1281 = vsel %vm998, %v1280, %v1279
    %v1282 = vsel %vm1001, %v498, %v1281
    %v1283 = vrot.slane %v502, 7
    %v1284 = vsel %vm1004, %v1283, %v1282
    %v1285 = vrot.slane %v506, 6
    %v1286 = vsel %vm1007, %v1285, %v1284
    %v1287 = vrot.slane %v510, 5
    %v1288 = vsel %vm1010, %v1287, %v1286
    %v1289 = vrot.slane %v514, 4
    %v1290 = vsel %vm1013, %v1289, %v1288
    %v1291 = vrot.slane %v487, 3
    %v1292 = vrot.slane %v491, 2
    %v1293 = vsel %vm995, %v1292, %v1291
    %v1294 = vrot.slane %v495, 1
    %v1295 = vsel %vm998, %v1294, %v1293
    %v1296 = vsel %vm1001, %v499, %v1295
    %v1297 = vrot.slane %v503, 7
    %v1298 = vsel %vm1004, %v1297, %v1296
    %v1299 = vrot.slane %v507, 6
    %v1300 = vsel %vm1007, %v1299, %v1298
    %v1301 = vrot.slane %v511, 5
    %v1302 = vsel %vm1010, %v1301, %v1300
    %v1303 = vrot.slane %v515, 4
    %v1304 = vsel %vm1013, %v1303, %v1302
    %v1305 = vrot.slane %v488, 3
    %v1306 = vrot.slane %v492, 2
    %v1307 = vsel %vm995, %v1306, %v1305
    %v1308 = vrot.slane %v496, 1
    %v1309 = vsel %vm998, %v1308, %v1307
    %v1310 = vsel %vm1001, %v500, %v1309
    %v1311 = vrot.slane %v504, 7
    %v1312 = vsel %vm1004, %v1311, %v1310
    %v1313 = vrot.slane %v508, 6
    %v1314 = vsel %vm1007, %v1313, %v1312
    %v1315 = vrot.slane %v512, 5
    %v1316 = vsel %vm1010, %v1315, %v1314
    %v1317 = vrot.slane %v516, 4
    %v1318 = vsel %vm1013, %v1317, %v1316
    %v1319 = vrot.slane %v489, 3
    %v1320 = vrot.slane %v493, 2
    %v1321 = vsel %vm995, %v1320, %v1319
    %v1322 = vrot.slane %v497, 1
    %v1323 = vsel %vm998, %v1322, %v1321
    %v1324 = vsel %vm1001, %v501, %v1323
    %v1325 = vrot.slane %v505, 7
    %v1326 = vsel %vm1004, %v1325, %v1324
    %v1327 = vrot.slane %v509, 6
    %v1328 = vsel %vm1007, %v1327, %v1326
    %v1329 = vrot.slane %v513, 5
    %v1330 = vsel %vm1010, %v1329, %v1328
    %v1331 = vrot.slane %v517, 4
    %v1332 = vsel %vm1013, %v1331, %v1330
    %v1369 = vrot.slane %v595, 5
    %v1370 = vrot.slane %v599, 4
    %v1371 = vsel %vm995, %v1370, %v1369
    %v1372 = vrot.slane %v603, 3
    %v1373 = vsel %vm998, %v1372, %v1371
    %v1374 = vrot.slane %v607, 2
    %v1375 = vsel %vm1001, %v1374, %v1373
    %v1376 = vrot.slane %v611, 1
    %v1377 = vsel %vm1004, %v1376, %v1375
    %v1378 = vsel %vm1007, %v615, %v1377
    %v1379 = vrot.slane %v619, 7
    %v1380 = vsel %vm1010, %v1379, %v1378
    %v1381 = vrot.slane %v623, 6
    %v1382 = vsel %vm1013, %v1381, %v1380
    %v1383 = vrot.slane %v596, 5
    %v1384 = vrot.slane %v600, 4
    %v1385 = vsel %vm995, %v1384, %v1383
    %v1386 = vrot.slane %v604, 3
    %v1387 = vsel %vm998, %v1386, %v1385
    %v1388 = vrot.slane %v608, 2
    %v1389 = vsel %vm1001, %v1388, %v1387
    %v1390 = vrot.slane %v612, 1
    %v1391 = vsel %vm1004, %v1390, %v1389
    %v1392 = vsel %vm1007, %v616, %v1391
    %v1393 = vrot.slane %v620, 7
    %v1394 = vsel %vm1010, %v1393, %v1392
    %v1395 = vrot.slane %v624, 6
    %v1396 = vsel %vm1013, %v1395, %v1394
    %v1397 = vrot.slane %v597, 5
    %v1398 = vrot.slane %v601, 4
    %v1399 = vsel %vm995, %v1398, %v1397
    %v1400 = vrot.slane %v605, 3
    %v1401 = vsel %vm998, %v1400, %v1399
    %v1402 = vrot.slane %v609, 2
    %v1403 = vsel %vm1001, %v1402, %v1401
    %v1404 = vrot.slane %v613, 1
    %v1405 = vsel %vm1004, %v1404, %v1403
    %v1406 = vsel %vm1007, %v617, %v1405
    %v1407 = vrot.slane %v621, 7
    %v1408 = vsel %vm1010, %v1407, %v1406
    %v1409 = vrot.slane %v625, 6
    %v1410 = vsel %vm1013, %v1409, %v1408
    %v1411 = vrot.slane %v598, 5
    %v1412 = vrot.slane %v602, 4
    %v1413 = vsel %vm995, %v1412, %v1411
    %v1414 = vrot.slane %v606, 3
    %v1415 = vsel %vm998, %v1414, %v1413
    %v1416 = vrot.slane %v610, 2
    %v1417 = vsel %vm1001, %v1416, %v1415
    %v1418 = vrot.slane %v614, 1
    %v1419 = vsel %vm1004, %v1418, %v1417
    %v1420 = vsel %vm1007, %v618, %v1419
    %v1421 = vrot.slane %v622, 7
    %v1422 = vsel %vm1010, %v1421, %v1420
    %v1423 = vrot.slane %v626, 6
    %v1424 = vsel %vm1013, %v1423, %v1422
    %v1461 = vrot.slane %v704, 6
    %v1462 = vrot.slane %v708, 5
    %v1463 = vsel %vm995, %v1462, %v1461
    %v1464 = vrot.slane %v712, 4
    %v1465 = vsel %vm998, %v1464, %v1463
    %v1466 = vrot.slane %v716, 3
    %v1467 = vsel %vm1001, %v1466, %v1465
    %v1468 = vrot.slane %v720, 2
    %v1469 = vsel %vm1004, %v1468, %v1467
    %v1470 = vrot.slane %v724, 1
    %v1471 = vsel %vm1007, %v1470, %v1469
    %v1472 = vsel %vm1010, %v728, %v1471
    %v1473 = vrot.slane %v732, 7
    %v1474 = vsel %vm1013, %v1473, %v1472
    %v1475 = vrot.slane %v705, 6
    %v1476 = vrot.slane %v709, 5
    %v1477 = vsel %vm995, %v1476, %v1475
    %v1478 = vrot.slane %v713, 4
    %v1479 = vsel %vm998, %v1478, %v1477
    %v1480 = vrot.slane %v717, 3
    %v1481 = vsel %vm1001, %v1480, %v1479
    %v1482 = vrot.slane %v721, 2
    %v1483 = vsel %vm1004, %v1482, %v1481
    %v1484 = vrot.slane %v725, 1
    %v1485 = vsel %vm1007, %v1484, %v1483
    %v1486 = vsel %vm1010, %v729, %v1485
    %v1487 = vrot.slane %v733, 7
    %v1488 = vsel %vm1013, %v1487, %v1486
    %v1489 = vrot.slane %v706, 6
    %v1490 = vrot.slane %v710, 5
    %v1491 = vsel %vm995, %v1490, %v1489
    %v1492 = vrot.slane %v714, 4
    %v1493 = vsel %vm998, %v1492, %v1491
    %v1494 = vrot.slane %v718, 3
    %v1495 = vsel %vm1001, %v1494, %v1493
    %v1496 = vrot.slane %v722, 2
    %v1497 = vsel %vm1004, %v1496, %v1495
    %v1498 = vrot.slane %v726, 1
    %v1499 = vsel %vm1007, %v1498, %v1497
    %v1500 = vsel %vm1010, %v730, %v1499
    %v1501 = vrot.slane %v734, 7
    %v1502 = vsel %vm1013, %v1501, %v1500
    %v1503 = vrot.slane %v707, 6
    %v1504 = vrot.slane %v711, 5
    %v1505 = vsel %vm995, %v1504, %v1503
    %v1506 = vrot.slane %v715, 4
    %v1507 = vsel %vm998, %v1506, %v1505
    %v1508 = vrot.slane %v719, 3
    %v1509 = vsel %vm1001, %v1508, %v1507
    %v1510 = vrot.slane %v723, 2
    %v1511 = vsel %vm1004, %v1510, %v1509
    %v1512 = vrot.slane %v727, 1
    %v1513 = vsel %vm1007, %v1512, %v1511
    %v1514 = vsel %vm1010, %v731, %v1513
    %v1515 = vrot.slane %v735, 7
    %v1516 = vsel %vm1013, %v1515, %v1514
    %v1553 = vrot.slane %v813, 7
    %v1554 = vrot.slane %v817, 6
    %v1555 = vsel %vm995, %v1554, %v1553
    %v1556 = vrot.slane %v821, 5
    %v1557 = vsel %vm998, %v1556, %v1555
    %v1558 = vrot.slane %v825, 4
    %v1559 = vsel %vm1001, %v1558, %v1557
    %v1560 = vrot.slane %v829, 3
    %v1561 = vsel %vm1004, %v1560, %v1559
    %v1562 = vrot.slane %v833, 2
    %v1563 = vsel %vm1007, %v1562, %v1561
    %v1564 = vrot.slane %v837, 1
    %v1565 = vsel %vm1010, %v1564, %v1563
    %v1566 = vsel %vm1013, %v841, %v1565
    %v1567 = vrot.slane %v814, 7
    %v1568 = vrot.slane %v818, 6
    %v1569 = vsel %vm995, %v1568, %v1567
    %v1570 = vrot.slane %v822, 5
    %v1571 = vsel %vm998, %v1570, %v1569
    %v1572 = vrot.slane %v826, 4
    %v1573 = vsel %vm1001, %v1572, %v1571
    %v1574 = vrot.slane %v830, 3
    %v1575 = vsel %vm1004, %v1574, %v1573
    %v1576 = vrot.slane %v834, 2
    %v1577 = vsel %vm1007, %v1576, %v1575
    %v1578 = vrot.slane %v838, 1
    %v1579 = vsel %vm1010, %v1578, %v1577
    %v1580 = vsel %vm1013, %v842, %v1579
    %v1581 = vrot.slane %v815, 7
    %v1582 = vrot.slane %v819, 6
    %v1583 = vsel %vm995, %v1582, %v1581
    %v1584 = vrot.slane %v823, 5
    %v1585 = vsel %vm998, %v1584, %v1583
    %v1586 = vrot.slane %v827, 4
    %v1587 = vsel %vm1001, %v1586, %v1585
    %v1588 = vrot.slane %v831, 3
    %v1589 = vsel %vm1004, %v1588, %v1587
    %v1590 = vrot.slane %v835, 2
    %v1591 = vsel %vm1007, %v1590, %v1589
    %v1592 = vrot.slane %v839, 1
    %v1593 = vsel %vm1010, %v1592, %v1591
    %v1594 = vsel %vm1013, %v843, %v1593
    %v1595 = vrot.slane %v816, 7
    %v1596 = vrot.slane %v820, 6
    %v1597 = vsel %vm995, %v1596, %v1595
    %v1598 = vrot.slane %v824, 5
    %v1599 = vsel %vm998, %v1598, %v1597
    %v1600 = vrot.slane %v828, 4
    %v1601 = vsel %vm1001, %v1600, %v1599
    %v1602 = vrot.slane %v832, 3
    %v1603 = vsel %vm1004, %v1602, %v1601
    %v1604 = vrot.slane %v836, 2
    %v1605 = vsel %vm1007, %v1604, %v1603
    %v1606 = vrot.slane %v840, 1
    %v1607 = vsel %vm1010, %v1606, %v1605
    %v1608 = vsel %vm1013, %v844, %v1607
    %v1645 = vrot.slane %v934, 7
    %v1646 = vsel %vm995, %v1645, %v930
    %v1647 = vrot.slane %v938, 6
    %v1648 = vsel %vm998, %v1647, %v1646
    %v1649 = vrot.slane %v942, 5
    %v1650 = vsel %vm1001, %v1649, %v1648
    %v1651 = vrot.slane %v946, 4
    %v1652 = vsel %vm1004, %v1651, %v1650
    %v1653 = vrot.slane %v950, 3
    %v1654 = vsel %vm1007, %v1653, %v1652
    %v1655 = vrot.slane %v954, 2
    %v1656 = vsel %vm1010, %v1655, %v1654
    %v1657 = vrot.slane %v958, 1
    %v1658 = vsel %vm1013, %v1657, %v1656
    %v1659 = vrot.slane %v935, 7
    %v1660 = vsel %vm995, %v1659, %v931
    %v1661 = vrot.slane %v939, 6
    %v1662 = vsel %vm998, %v1661, %v1660
    %v1663 = vrot.slane %v943, 5
    %v1664 = vsel %vm1001, %v1663, %v1662
    %v1665 = vrot.slane %v947, 4
    %v1666 = vsel %vm1004, %v1665, %v1664
    %v1667 = vrot.slane %v951, 3
    %v1668 = vsel %vm1007, %v1667, %v1666
    %v1669 = vrot.slane %v955, 2
    %v1670 = vsel %vm1010, %v1669, %v1668
    %v1671 = vrot.slane %v959, 1
    %v1672 = vsel %vm1013, %v1671, %v1670
    %v1673 = vrot.slane %v936, 7
    %v1674 = vsel %vm995, %v1673, %v932
    %v1675 = vrot.slane %v940, 6
    %v1676 = vsel %vm998, %v1675, %v1674
    %v1677 = vrot.slane %v944, 5
    %v1678 = vsel %vm1001, %v1677, %v1676
    %v1679 = vrot.slane %v948, 4
    %v1680 = vsel %vm1004, %v1679, %v1678
    %v1681 = vrot.slane %v952, 3
    %v1682 = vsel %vm1007, %v1681, %v1680
    %v1683 = vrot.slane %v956, 2
    %v1684 = vsel %vm1010, %v1683, %v1682
    %v1685 = vrot.slane %v960, 1
    %v1686 = vsel %vm1013, %v1685, %v1684
    %v1687 = vrot.slane %v937, 7
    %v1688 = vsel %vm995, %v1687, %v933
    %v1689 = vrot.slane %v941, 6
    %v1690 = vsel %vm998, %v1689, %v1688
    %v1691 = vrot.slane %v945, 5
    %v1692 = vsel %vm1001, %v1691, %v1690
    %v1693 = vrot.slane %v949, 4
    %v1694 = vsel %vm1004, %v1693, %v1692
    %v1695 = vrot.slane %v953, 3
    %v1696 = vsel %vm1007, %v1695, %v1694
    %v1697 = vrot.slane %v957, 2
    %v1698 = vsel %vm1010, %v1697, %v1696
    %v1699 = vrot.slane %v961, 1
    %v1700 = vsel %vm1013, %v1699, %v1698
    %1706 = vset.pattern.permute.xlu0 0
    %1707 = vperm.xlu0 %1706, %v45
    %v1708 = vpop.permute.xlu0 %1707
    %vm1710 = vcmask 588800
    %v1712 = vsel %vm1710, %v71, 0
    %1714 = vmatprep.subr.mxu0 0.0
    %1715 = vmatpush1.msra.mxu0 0.0
    %1716 = vmatprep.subr.mxu0 0.0
    %1717 = vmatpush1.msra.mxu0 0.0
    %1718 = vmatprep.subr.mxu0 0.0
    %1719 = vmatpush1.msra.mxu0 0.0
    %1720 = vmatprep.subr.mxu0 0.0
    %1721 = vmatpush1.msra.mxu0 0.0
    %1722 = vmatprep.subr.mxu0 0.0
    %1723 = vmatpush1.msra.mxu0 0.0
    %1724 = vmatprep.subr.mxu0 0.0
    %1725 = vmatpush1.msra.mxu0 0.0
    %1726 = vmatprep.subr.mxu0 0.0
    %1727 = vmatpush1.msra.mxu0 0.0
    %1728 = vmatprep.subr.mxu0 %v1672
    %1729 = vmatpush1.msra.mxu0 %v1658
    %1730 = vmatprep.subr.mxu0 %v1580
    %1731 = vmatpush1.msra.mxu0 %v1566
    %1732 = vmatprep.subr.mxu0 %v1488
    %1733 = vmatpush1.msra.mxu0 %v1474
    %1734 = vmatprep.subr.mxu0 %v1396
    %1735 = vmatpush1.msra.mxu0 %v1382
    %1736 = vmatprep.subr.mxu0 %v68
    %1737 = vmatpush1.msra.mxu0 %v67
    %1738 = vmatprep.subr.mxu0 %v1304
    %1739 = vmatpush1.msra.mxu0 %v1290
    %1740 = vmatprep.subr.mxu0 %v1212
    %1741 = vmatpush1.msra.mxu0 %v1198
    %1742 = vmatprep.subr.mxu0 %v1120
    %1743 = vmatpush1.msra.mxu0 %v1106
    %1744 = vmatprep.subr.mxu0 %v1028
    %1745 = vmatpush1.msra.mxu0 %v1014
    %1746 = vmatprep.subr.mxu0 0.0
    %1747 = vmatpush2.msra.mxu0 0.0
    %1748 = vmatprep.subr.mxu0 0.0
    %1749 = vmatpush2.msra.mxu0 0.0
    %1750 = vmatprep.subr.mxu0 0.0
    %1751 = vmatpush2.msra.mxu0 0.0
    %1752 = vmatprep.subr.mxu0 0.0
    %1753 = vmatpush2.msra.mxu0 0.0
    %1754 = vmatprep.subr.mxu0 0.0
    %1755 = vmatpush2.msra.mxu0 0.0
    %1756 = vmatprep.subr.mxu0 0.0
    %1757 = vmatpush2.msra.mxu0 0.0
    %1758 = vmatprep.subr.mxu0 0.0
    %1759 = vmatpush2.msra.mxu0 0.0
    %1760 = vmatprep.subr.mxu0 0.0
    %1761 = vmatpush2.msra.mxu0 0.0
    %1762 = vmatprep.subr.mxu0 0.0
    %1763 = vmatpush2.msra.mxu0 0.0
    %1764 = vmatprep.subr.mxu0 0.0
    %1765 = vmatpush2.msra.mxu0 0.0
    %1766 = vmatprep.subr.mxu0 0.0
    %1767 = vmatpush2.msra.mxu0 0.0
    %1768 = vmatprep.subr.mxu0 0.0
    %1769 = vmatpush2.msra.mxu0 0.0
    %1770 = vmatprep.subr.mxu0 0.0
    %1771 = vmatpush2.msra.mxu0 0.0
    %1772 = vmatprep.subr.mxu0 0.0
    %1773 = vmatpush2.msra.mxu0 0.0
    %1774 = vmatprep.subr.mxu0 0.0
    %1775 = vmatpush2.msra.mxu0 0.0
    %1776 = vmatprep.subr.mxu0 0.0
    %1777 = vmatpush2.msra.mxu0 0.0
    %1778 = vmatprep.mubr.f32.mxu0 0.0
    %1779 = vmatmul.mubr.f32.gmra.mxu0 %v1712
    %v1780 = vpop.f32.mrf.mxu0
    %v1781 = vadd.f32 %v1708, %v1780
    %v1782 = vpop.f32.mrf.mxu0
    %v1783 = vadd.f32 %v1708, %v1782
    %1784 = vdwg.mxu0
    %1785 = vmatprep.subr.mxu0 0.0
    %1786 = vmatpush1.msra.mxu0 0.0
    %1787 = vmatprep.subr.mxu0 0.0
    %1788 = vmatpush1.msra.mxu0 0.0
    %1789 = vmatprep.subr.mxu0 0.0
    %1790 = vmatpush1.msra.mxu0 0.0
    %1791 = vmatprep.subr.mxu0 0.0
    %1792 = vmatpush1.msra.mxu0 0.0
    %1793 = vmatprep.subr.mxu0 0.0
    %1794 = vmatpush1.msra.mxu0 0.0
    %1795 = vmatprep.subr.mxu0 0.0
    %1796 = vmatpush1.msra.mxu0 0.0
    %1797 = vmatprep.subr.mxu0 0.0
    %1798 = vmatpush1.msra.mxu0 0.0
    %1799 = vmatprep.subr.mxu0 %v1700
    %1800 = vmatpush1.msra.mxu0 %v1686
    %1801 = vmatprep.subr.mxu0 %v1608
    %1802 = vmatpush1.msra.mxu0 %v1594
    %1803 = vmatprep.subr.mxu0 %v1516
    %1804 = vmatpush1.msra.mxu0 %v1502
    %1805 = vmatprep.subr.mxu0 %v1424
    %1806 = vmatpush1.msra.mxu0 %v1410
    %1807 = vmatprep.subr.mxu0 %v70
    %1808 = vmatpush1.msra.mxu0 %v69
    %1809 = vmatprep.subr.mxu0 %v1332
    %1810 = vmatpush1.msra.mxu0 %v1318
    %1811 = vmatprep.subr.mxu0 %v1240
    %1812 = vmatpush1.msra.mxu0 %v1226
    %1813 = vmatprep.subr.mxu0 %v1148
    %1814 = vmatpush1.msra.mxu0 %v1134
    %1815 = vmatprep.subr.mxu0 %v1056
    %1816 = vmatpush1.msra.mxu0 %v1042
    %1817 = vmatprep.subr.mxu0 0.0
    %1818 = vmatpush2.msra.mxu0 0.0
    %1819 = vmatprep.subr.mxu0 0.0
    %1820 = vmatpush2.msra.mxu0 0.0
    %1821 = vmatprep.subr.mxu0 0.0
    %1822 = vmatpush2.msra.mxu0 0.0
    %1823 = vmatprep.subr.mxu0 0.0
    %1824 = vmatpush2.msra.mxu0 0.0
    %1825 = vmatprep.subr.mxu0 0.0
    %1826 = vmatpush2.msra.mxu0 0.0
    %1827 = vmatprep.subr.mxu0 0.0
    %1828 = vmatpush2.msra.mxu0 0.0
    %1829 = vmatprep.subr.mxu0 0.0
    %1830 = vmatpush2.msra.mxu0 0.0
    %1831 = vmatprep.subr.mxu0 0.0
    %1832 = vmatpush2.msra.mxu0 0.0
    %1833 = vmatprep.subr.mxu0 0.0
    %1834 = vmatpush2.msra.mxu0 0.0
    %1835 = vmatprep.subr.mxu0 0.0
    %1836 = vmatpush2.msra.mxu0 0.0
    %1837 = vmatprep.subr.mxu0 0.0
    %1838 = vmatpush2.msra.mxu0 0.0
    %1839 = vmatprep.subr.mxu0 0.0
    %1840 = vmatpush2.msra.mxu0 0.0
    %1841 = vmatprep.subr.mxu0 0.0
    %1842 = vmatpush2.msra.mxu0 0.0
    %1843 = vmatprep.subr.mxu0 0.0
    %1844 = vmatpush2.msra.mxu0 0.0
    %1845 = vmatprep.subr.mxu0 0.0
    %1846 = vmatpush2.msra.mxu0 0.0
    %1847 = vmatprep.subr.mxu0 0.0
    %1848 = vmatpush2.msra.mxu0 0.0
    %1849 = vmatprep.mubr.f32.mxu0 0.0
    %1850 = vmatmul.mubr.f32.gmra.mxu0 %v1712
    %v1851 = vpop.f32.mrf.mxu0
    %v1852 = vadd.f32 %v1708, %v1851
    %v1853 = vpop.f32.mrf.mxu0
    %v1854 = vadd.f32 %v1708, %v1853
    %1855 = vdwg.mxu0
    %v1856 = vmax.f32 %v1781, 0.0
    %v1857 = vmax.f32 %v1783, 0.0
    %v1858 = vmax.f32 %v1852, 0.0
    %v1859 = vmax.f32 %v1854, 0.0
    %s1860 = scalar_lea.vmem %s2, 32
    %v1861 = vld [vmem:[%s1860] sm:$0xff]
    %1862 = vrot.lane.b32.xlu0 %v1856, 17
    %v1863 = vpop.permute.xlu0 %1862
    %1864 = vrot.lane.b32.xlu0 %v1857, 17
    %v1865 = vpop.permute.xlu0 %1864
    %1866 = vrot.lane.b32.xlu0 %v1858, 17
    %v1867 = vpop.permute.xlu0 %1866
    %1868 = vrot.lane.b32.xlu0 %v1859, 17
    %v1869 = vpop.permute.xlu0 %1868
    %v1870 = vsel %vm82, %v1867, %v1869
    %v1871 = vsel %vm82, %v1865, %v1867
    %v1872 = vsel %vm82, %v1863, %v1865
    %v1873 = vsel %vm82, %v1869, %v1863
    %v1878 = vrot.slane %v1873, 1
    %v1879 = vrot.slane %v1872, 1
    %v1880 = vrot.slane %v1871, 1
    %v1881 = vrot.slane %v1870, 1
    %v1882 = vrot.slane %v1873, 2
    %v1883 = vrot.slane %v1872, 2
    %v1884 = vrot.slane %v1871, 2
    %v1885 = vrot.slane %v1870, 2
    %v1886 = vrot.slane %v1873, 3
    %v1887 = vrot.slane %v1872, 3
    %v1888 = vrot.slane %v1871, 3
    %v1889 = vrot.slane %v1870, 3
    %v1890 = vrot.slane %v1873, 4
    %v1891 = vrot.slane %v1872, 4
    %v1892 = vrot.slane %v1871, 4
    %v1893 = vrot.slane %v1870, 4
    %v1894 = vrot.slane %v1873, 5
    %v1895 = vrot.slane %v1872, 5
    %v1896 = vrot.slane %v1871, 5
    %v1897 = vrot.slane %v1870, 5
    %v1898 = vrot.slane %v1873, 6
    %v1899 = vrot.slane %v1872, 6
    %v1900 = vrot.slane %v1871, 6
    %v1901 = vrot.slane %v1870, 6
    %v1902 = vrot.slane %v1873, 7
    %v1903 = vrot.slane %v1872, 7
    %v1904 = vrot.slane %v1871, 7
    %v1905 = vrot.slane %v1870, 7
    %v1938 = vsel %vm91, %v1873, 0.0
    %v1939 = vsel %vm92, %v1872, 0.0
    %v1940 = vsel %vm93, %v1871, 0.0
    %v1941 = vsel %vm94, %v1870, 0.0
    %v1942 = vsel %vm91, %v1878, 0.0
    %v1943 = vsel %vm92, %v1879, 0.0
    %v1944 = vsel %vm93, %v1880, 0.0
    %v1945 = vsel %vm94, %v1881, 0.0
    %v1946 = vsel %vm91, %v1882, 0.0
    %v1947 = vsel %vm92, %v1883, 0.0
    %v1948 = vsel %vm93, %v1884, 0.0
    %v1949 = vsel %vm94, %v1885, 0.0
    %v1950 = vsel %vm91, %v1886, 0.0
    %v1951 = vsel %vm92, %v1887, 0.0
    %v1952 = vsel %vm93, %v1888, 0.0
    %v1953 = vsel %vm94, %v1889, 0.0
    %v1954 = vsel %vm91, %v1890, 0.0
    %v1955 = vsel %vm92, %v1891, 0.0
    %v1956 = vsel %vm93, %v1892, 0.0
    %v1957 = vsel %vm94, %v1893, 0.0
    %v1958 = vsel %vm91, %v1894, 0.0
    %v1959 = vsel %vm92, %v1895, 0.0
    %v1960 = vsel %vm93, %v1896, 0.0
    %v1961 = vsel %vm94, %v1897, 0.0
    %v1962 = vsel %vm91, %v1898, 0.0
    %v1963 = vsel %vm92, %v1899, 0.0
    %v1964 = vsel %vm93, %v1900, 0.0
    %v1965 = vsel %vm94, %v1901, 0.0
    %v1966 = vsel %vm91, %v1902, 0.0
    %v1967 = vsel %vm92, %v1903, 0.0
    %v1968 = vsel %vm93, %v1904, 0.0
    %v1969 = vsel %vm94, %v1905, 0.0
    %1970 = vrot.lane.b32.xlu0 %v1856, 16
    %v1971 = vpop.permute.xlu0 %1970
    %1972 = vrot.lane.b32.xlu0 %v1857, 16
    %v1973 = vpop.permute.xlu0 %1972
    %1974 = vrot.lane.b32.xlu0 %v1858, 16
    %v1975 = vpop.permute.xlu0 %1974
    %1976 = vrot.lane.b32.xlu0 %v1859, 16
    %v1977 = vpop.permute.xlu0 %1976
    %v1978 = vsel %vm199, %v1975, %v1977
    %v1979 = vsel %vm199, %v1973, %v1975
    %v1980 = vsel %vm199, %v1971, %v1973
    %v1981 = vsel %vm199, %v1977, %v1971
    %v1986 = vrot.slane %v1981, 7
    %v1987 = vrot.slane %v1980, 7
    %v1988 = vrot.slane %v1979, 7
    %v1989 = vrot.slane %v1978, 7
    %v1990 = vrot.slane %v1981, 1
    %v1991 = vrot.slane %v1980, 1
    %v1992 = vrot.slane %v1979, 1
    %v1993 = vrot.slane %v1978, 1
    %v1994 = vrot.slane %v1981, 2
    %v1995 = vrot.slane %v1980, 2
    %v1996 = vrot.slane %v1979, 2
    %v1997 = vrot.slane %v1978, 2
    %v1998 = vrot.slane %v1981, 3
    %v1999 = vrot.slane %v1980, 3
    %v2000 = vrot.slane %v1979, 3
    %v2001 = vrot.slane %v1978, 3
    %v2002 = vrot.slane %v1981, 4
    %v2003 = vrot.slane %v1980, 4
    %v2004 = vrot.slane %v1979, 4
    %v2005 = vrot.slane %v1978, 4
    %v2006 = vrot.slane %v1981, 5
    %v2007 = vrot.slane %v1980, 5
    %v2008 = vrot.slane %v1979, 5
    %v2009 = vrot.slane %v1978, 5
    %v2010 = vrot.slane %v1981, 6
    %v2011 = vrot.slane %v1980, 6
    %v2012 = vrot.slane %v1979, 6
    %v2013 = vrot.slane %v1978, 6
    %v2046 = vsel %vm91, %v1986, 0.0
    %v2047 = vsel %vm92, %v1987, 0.0
    %v2048 = vsel %vm93, %v1988, 0.0
    %v2049 = vsel %vm94, %v1989, 0.0
    %v2050 = vsel %vm91, %v1981, 0.0
    %v2051 = vsel %vm92, %v1980, 0.0
    %v2052 = vsel %vm93, %v1979, 0.0
    %v2053 = vsel %vm94, %v1978, 0.0
    %v2054 = vsel %vm91, %v1990, 0.0
    %v2055 = vsel %vm92, %v1991, 0.0
    %v2056 = vsel %vm93, %v1992, 0.0
    %v2057 = vsel %vm94, %v1993, 0.0
    %v2058 = vsel %vm91, %v1994, 0.0
    %v2059 = vsel %vm92, %v1995, 0.0
    %v2060 = vsel %vm93, %v1996, 0.0
    %v2061 = vsel %vm94, %v1997, 0.0
    %v2062 = vsel %vm91, %v1998, 0.0
    %v2063 = vsel %vm92, %v1999, 0.0
    %v2064 = vsel %vm93, %v2000, 0.0
    %v2065 = vsel %vm94, %v2001, 0.0
    %v2066 = vsel %vm91, %v2002, 0.0
    %v2067 = vsel %vm92, %v2003, 0.0
    %v2068 = vsel %vm93, %v2004, 0.0
    %v2069 = vsel %vm94, %v2005, 0.0
    %v2070 = vsel %vm91, %v2006, 0.0
    %v2071 = vsel %vm92, %v2007, 0.0
    %v2072 = vsel %vm93, %v2008, 0.0
    %v2073 = vsel %vm94, %v2009, 0.0
    %v2074 = vsel %vm91, %v2010, 0.0
    %v2075 = vsel %vm92, %v2011, 0.0
    %v2076 = vsel %vm93, %v2012, 0.0
    %v2077 = vsel %vm94, %v2013, 0.0
    %2078 = vrot.lane.b32.xlu0 %v1856, 15
    %v2079 = vpop.permute.xlu0 %2078
    %2080 = vrot.lane.b32.xlu0 %v1857, 15
    %v2081 = vpop.permute.xlu0 %2080
    %2082 = vrot.lane.b32.xlu0 %v1858, 15
    %v2083 = vpop.permute.xlu0 %2082
    %2084 = vrot.lane.b32.xlu0 %v1859, 15
    %v2085 = vpop.permute.xlu0 %2084
    %v2086 = vsel %vm308, %v2083, %v2085
    %v2087 = vsel %vm308, %v2081, %v2083
    %v2088 = vsel %vm308, %v2079, %v2081
    %v2089 = vsel %vm308, %v2085, %v2079
    %v2094 = vrot.slane %v2089, 6
    %v2095 = vrot.slane %v2088, 6
    %v2096 = vrot.slane %v2087, 6
    %v2097 = vrot.slane %v2086, 6
    %v2098 = vrot.slane %v2089, 7
    %v2099 = vrot.slane %v2088, 7
    %v2100 = vrot.slane %v2087, 7
    %v2101 = vrot.slane %v2086, 7
    %v2102 = vrot.slane %v2089, 1
    %v2103 = vrot.slane %v2088, 1
    %v2104 = vrot.slane %v2087, 1
    %v2105 = vrot.slane %v2086, 1
    %v2106 = vrot.slane %v2089, 2
    %v2107 = vrot.slane %v2088, 2
    %v2108 = vrot.slane %v2087, 2
    %v2109 = vrot.slane %v2086, 2
    %v2110 = vrot.slane %v2089, 3
    %v2111 = vrot.slane %v2088, 3
    %v2112 = vrot.slane %v2087, 3
    %v2113 = vrot.slane %v2086, 3
    %v2114 = vrot.slane %v2089, 4
    %v2115 = vrot.slane %v2088, 4
    %v2116 = vrot.slane %v2087, 4
    %v2117 = vrot.slane %v2086, 4
    %v2118 = vrot.slane %v2089, 5
    %v2119 = vrot.slane %v2088, 5
    %v2120 = vrot.slane %v2087, 5
    %v2121 = vrot.slane %v2086, 5
    %v2154 = vsel %vm91, %v2094, 0.0
    %v2155 = vsel %vm92, %v2095, 0.0
    %v2156 = vsel %vm93, %v2096, 0.0
    %v2157 = vsel %vm94, %v2097, 0.0
    %v2158 = vsel %vm91, %v2098, 0.0
    %v2159 = vsel %vm92, %v2099, 0.0
    %v2160 = vsel %vm93, %v2100, 0.0
    %v2161 = vsel %vm94, %v2101, 0.0
    %v2162 = vsel %vm91, %v2089, 0.0
    %v2163 = vsel %vm92, %v2088, 0.0
    %v2164 = vsel %vm93, %v2087, 0.0
    %v2165 = vsel %vm94, %v2086, 0.0
    %v2166 = vsel %vm91, %v2102, 0.0
    %v2167 = vsel %vm92, %v2103, 0.0
    %v2168 = vsel %vm93, %v2104, 0.0
    %v2169 = vsel %vm94, %v2105, 0.0
    %v2170 = vsel %vm91, %v2106, 0.0
    %v2171 = vsel %vm92, %v2107, 0.0
    %v2172 = vsel %vm93, %v2108, 0.0
    %v2173 = vsel %vm94, %v2109, 0.0
    %v2174 = vsel %vm91, %v2110, 0.0
    %v2175 = vsel %vm92, %v2111, 0.0
    %v2176 = vsel %vm93, %v2112, 0.0
    %v2177 = vsel %vm94, %v2113, 0.0
    %v2178 = vsel %vm91, %v2114, 0.0
    %v2179 = vsel %vm92, %v2115, 0.0
    %v2180 = vsel %vm93, %v2116, 0.0
    %v2181 = vsel %vm94, %v2117, 0.0
    %v2182 = vsel %vm91, %v2118, 0.0
    %v2183 = vsel %vm92, %v2119, 0.0
    %v2184 = vsel %vm93, %v2120, 0.0
    %v2185 = vsel %vm94, %v2121, 0.0
    %2186 = vrot.lane.b32.xlu0 %v1856, 1
    %v2187 = vpop.permute.xlu0 %2186
    %2188 = vrot.lane.b32.xlu0 %v1857, 1
    %v2189 = vpop.permute.xlu0 %2188
    %2190 = vrot.lane.b32.xlu0 %v1858, 1
    %v2191 = vpop.permute.xlu0 %2190
    %2192 = vrot.lane.b32.xlu0 %v1859, 1
    %v2193 = vpop.permute.xlu0 %2192
    %v2194 = vsel %vm417, %v2191, %v2193
    %v2195 = vsel %vm417, %v2189, %v2191
    %v2196 = vsel %vm417, %v2187, %v2189
    %v2197 = vsel %vm417, %v2193, %v2187
    %v2202 = vrot.slane %v2197, 5
    %v2203 = vrot.slane %v2196, 5
    %v2204 = vrot.slane %v2195, 5
    %v2205 = vrot.slane %v2194, 5
    %v2206 = vrot.slane %v2197, 6
    %v2207 = vrot.slane %v2196, 6
    %v2208 = vrot.slane %v2195, 6
    %v2209 = vrot.slane %v2194, 6
    %v2210 = vrot.slane %v2197, 7
    %v2211 = vrot.slane %v2196, 7
    %v2212 = vrot.slane %v2195, 7
    %v2213 = vrot.slane %v2194, 7
    %v2214 = vrot.slane %v2197, 1
    %v2215 = vrot.slane %v2196, 1
    %v2216 = vrot.slane %v2195, 1
    %v2217 = vrot.slane %v2194, 1
    %v2218 = vrot.slane %v2197, 2
    %v2219 = vrot.slane %v2196, 2
    %v2220 = vrot.slane %v2195, 2
    %v2221 = vrot.slane %v2194, 2
    %v2222 = vrot.slane %v2197, 3
    %v2223 = vrot.slane %v2196, 3
    %v2224 = vrot.slane %v2195, 3
    %v2225 = vrot.slane %v2194, 3
    %v2226 = vrot.slane %v2197, 4
    %v2227 = vrot.slane %v2196, 4
    %v2228 = vrot.slane %v2195, 4
    %v2229 = vrot.slane %v2194, 4
    %v2262 = vsel %vm91, %v2202, 0.0
    %v2263 = vsel %vm92, %v2203, 0.0
    %v2264 = vsel %vm93, %v2204, 0.0
    %v2265 = vsel %vm94, %v2205, 0.0
    %v2266 = vsel %vm91, %v2206, 0.0
    %v2267 = vsel %vm92, %v2207, 0.0
    %v2268 = vsel %vm93, %v2208, 0.0
    %v2269 = vsel %vm94, %v2209, 0.0
    %v2270 = vsel %vm91, %v2210, 0.0
    %v2271 = vsel %vm92, %v2211, 0.0
    %v2272 = vsel %vm93, %v2212, 0.0
    %v2273 = vsel %vm94, %v2213, 0.0
    %v2274 = vsel %vm91, %v2197, 0.0
    %v2275 = vsel %vm92, %v2196, 0.0
    %v2276 = vsel %vm93, %v2195, 0.0
    %v2277 = vsel %vm94, %v2194, 0.0
    %v2278 = vsel %vm91, %v2214, 0.0
    %v2279 = vsel %vm92, %v2215, 0.0
    %v2280 = vsel %vm93, %v2216, 0.0
    %v2281 = vsel %vm94, %v2217, 0.0
    %v2282 = vsel %vm91, %v2218, 0.0
    %v2283 = vsel %vm92, %v2219, 0.0
    %v2284 = vsel %vm93, %v2220, 0.0
    %v2285 = vsel %vm94, %v2221, 0.0
    %v2286 = vsel %vm91, %v2222, 0.0
    %v2287 = vsel %vm92, %v2223, 0.0
    %v2288 = vsel %vm93, %v2224, 0.0
    %v2289 = vsel %vm94, %v2225, 0.0
    %v2290 = vsel %vm91, %v2226, 0.0
    %v2291 = vsel %vm92, %v2227, 0.0
    %v2292 = vsel %vm93, %v2228, 0.0
    %v2293 = vsel %vm94, %v2229, 0.0
    %2294 = vrot.lane.b32.xlu0 %v1856, 127
    %v2295 = vpop.permute.xlu0 %2294
    %2296 = vrot.lane.b32.xlu0 %v1857, 127
    %v2297 = vpop.permute.xlu0 %2296
    %2298 = vrot.lane.b32.xlu0 %v1858, 127
    %v2299 = vpop.permute.xlu0 %2298
    %2300 = vrot.lane.b32.xlu0 %v1859, 127
    %v2301 = vpop.permute.xlu0 %2300
    %v2302 = vsel %vm526, %v2299, %v2301
    %v2303 = vsel %vm526, %v2297, %v2299
    %v2304 = vsel %vm526, %v2295, %v2297
    %v2305 = vsel %vm526, %v2301, %v2295
    %v2310 = vrot.slane %v2304, 3
    %v2311 = vrot.slane %v2303, 3
    %v2312 = vrot.slane %v2302, 3
    %v2313 = vrot.slane %v2305, 3
    %v2314 = vrot.slane %v2304, 4
    %v2315 = vrot.slane %v2303, 4
    %v2316 = vrot.slane %v2302, 4
    %v2317 = vrot.slane %v2305, 4
    %v2318 = vrot.slane %v2304, 5
    %v2319 = vrot.slane %v2303, 5
    %v2320 = vrot.slane %v2302, 5
    %v2321 = vrot.slane %v2305, 5
    %v2322 = vrot.slane %v2304, 6
    %v2323 = vrot.slane %v2303, 6
    %v2324 = vrot.slane %v2302, 6
    %v2325 = vrot.slane %v2305, 6
    %v2326 = vrot.slane %v2304, 7
    %v2327 = vrot.slane %v2303, 7
    %v2328 = vrot.slane %v2302, 7
    %v2329 = vrot.slane %v2305, 7
    %v2330 = vrot.slane %v2304, 1
    %v2331 = vrot.slane %v2303, 1
    %v2332 = vrot.slane %v2302, 1
    %v2333 = vrot.slane %v2305, 1
    %v2334 = vrot.slane %v2304, 2
    %v2335 = vrot.slane %v2303, 2
    %v2336 = vrot.slane %v2302, 2
    %v2337 = vrot.slane %v2305, 2
    %v2370 = vsel %vm91, %v2310, 0.0
    %v2371 = vsel %vm92, %v2311, 0.0
    %v2372 = vsel %vm93, %v2312, 0.0
    %v2373 = vsel %vm94, %v2313, 0.0
    %v2374 = vsel %vm91, %v2314, 0.0
    %v2375 = vsel %vm92, %v2315, 0.0
    %v2376 = vsel %vm93, %v2316, 0.0
    %v2377 = vsel %vm94, %v2317, 0.0
    %v2378 = vsel %vm91, %v2318, 0.0
    %v2379 = vsel %vm92, %v2319, 0.0
    %v2380 = vsel %vm93, %v2320, 0.0
    %v2381 = vsel %vm94, %v2321, 0.0
    %v2382 = vsel %vm91, %v2322, 0.0
    %v2383 = vsel %vm92, %v2323, 0.0
    %v2384 = vsel %vm93, %v2324, 0.0
    %v2385 = vsel %vm94, %v2325, 0.0
    %v2386 = vsel %vm91, %v2326, 0.0
    %v2387 = vsel %vm92, %v2327, 0.0
    %v2388 = vsel %vm93, %v2328, 0.0
    %v2389 = vsel %vm94, %v2329, 0.0
    %v2390 = vsel %vm91, %v2304, 0.0
    %v2391 = vsel %vm92, %v2303, 0.0
    %v2392 = vsel %vm93, %v2302, 0.0
    %v2393 = vsel %vm94, %v2305, 0.0
    %v2394 = vsel %vm91, %v2330, 0.0
    %v2395 = vsel %vm92, %v2331, 0.0
    %v2396 = vsel %vm93, %v2332, 0.0
    %v2397 = vsel %vm94, %v2333, 0.0
    %v2398 = vsel %vm91, %v2334, 0.0
    %v2399 = vsel %vm92, %v2335, 0.0
    %v2400 = vsel %vm93, %v2336, 0.0
    %v2401 = vsel %vm94, %v2337, 0.0
    %2402 = vrot.lane.b32.xlu0 %v1856, 113
    %v2403 = vpop.permute.xlu0 %2402
    %2404 = vrot.lane.b32.xlu0 %v1857, 113
    %v2405 = vpop.permute.xlu0 %2404
    %2406 = vrot.lane.b32.xlu0 %v1858, 113
    %v2407 = vpop.permute.xlu0 %2406
    %2408 = vrot.lane.b32.xlu0 %v1859, 113
    %v2409 = vpop.permute.xlu0 %2408
    %v2410 = vsel %vm635, %v2407, %v2409
    %v2411 = vsel %vm635, %v2405, %v2407
    %v2412 = vsel %vm635, %v2403, %v2405
    %v2413 = vsel %vm635, %v2409, %v2403
    %v2418 = vrot.slane %v2412, 2
    %v2419 = vrot.slane %v2411, 2
    %v2420 = vrot.slane %v2410, 2
    %v2421 = vrot.slane %v2413, 2
    %v2422 = vrot.slane %v2412, 3
    %v2423 = vrot.slane %v2411, 3
    %v2424 = vrot.slane %v2410, 3
    %v2425 = vrot.slane %v2413, 3
    %v2426 = vrot.slane %v2412, 4
    %v2427 = vrot.slane %v2411, 4
    %v2428 = vrot.slane %v2410, 4
    %v2429 = vrot.slane %v2413, 4
    %v2430 = vrot.slane %v2412, 5
    %v2431 = vrot.slane %v2411, 5
    %v2432 = vrot.slane %v2410, 5
    %v2433 = vrot.slane %v2413, 5
    %v2434 = vrot.slane %v2412, 6
    %v2435 = vrot.slane %v2411, 6
    %v2436 = vrot.slane %v2410, 6
    %v2437 = vrot.slane %v2413, 6
    %v2438 = vrot.slane %v2412, 7
    %v2439 = vrot.slane %v2411, 7
    %v2440 = vrot.slane %v2410, 7
    %v2441 = vrot.slane %v2413, 7
    %v2442 = vrot.slane %v2412, 1
    %v2443 = vrot.slane %v2411, 1
    %v2444 = vrot.slane %v2410, 1
    %v2445 = vrot.slane %v2413, 1
    %v2478 = vsel %vm91, %v2418, 0.0
    %v2479 = vsel %vm92, %v2419, 0.0
    %v2480 = vsel %vm93, %v2420, 0.0
    %v2481 = vsel %vm94, %v2421, 0.0
    %v2482 = vsel %vm91, %v2422, 0.0
    %v2483 = vsel %vm92, %v2423, 0.0
    %v2484 = vsel %vm93, %v2424, 0.0
    %v2485 = vsel %vm94, %v2425, 0.0
    %v2486 = vsel %vm91, %v2426, 0.0
    %v2487 = vsel %vm92, %v2427, 0.0
    %v2488 = vsel %vm93, %v2428, 0.0
    %v2489 = vsel %vm94, %v2429, 0.0
    %v2490 = vsel %vm91, %v2430, 0.0
    %v2491 = vsel %vm92, %v2431, 0.0
    %v2492 = vsel %vm93, %v2432, 0.0
    %v2493 = vsel %vm94, %v2433, 0.0
    %v2494 = vsel %vm91, %v2434, 0.0
    %v2495 = vsel %vm92, %v2435, 0.0
    %v2496 = vsel %vm93, %v2436, 0.0
    %v2497 = vsel %vm94, %v2437, 0.0
    %v2498 = vsel %vm91, %v2438, 0.0
    %v2499 = vsel %vm92, %v2439, 0.0
    %v2500 = vsel %vm93, %v2440, 0.0
    %v2501 = vsel %vm94, %v2441, 0.0
    %v2502 = vsel %vm91, %v2412, 0.0
    %v2503 = vsel %vm92, %v2411, 0.0
    %v2504 = vsel %vm93, %v2410, 0.0
    %v2505 = vsel %vm94, %v2413, 0.0
    %v2506 = vsel %vm91, %v2442, 0.0
    %v2507 = vsel %vm92, %v2443, 0.0
    %v2508 = vsel %vm93, %v2444, 0.0
    %v2509 = vsel %vm94, %v2445, 0.0
    %2510 = vrot.lane.b32.xlu0 %v1856, 112
    %v2511 = vpop.permute.xlu0 %2510
    %2512 = vrot.lane.b32.xlu0 %v1857, 112
    %v2513 = vpop.permute.xlu0 %2512
    %2514 = vrot.lane.b32.xlu0 %v1858, 112
    %v2515 = vpop.permute.xlu0 %2514
    %2516 = vrot.lane.b32.xlu0 %v1859, 112
    %v2517 = vpop.permute.xlu0 %2516
    %v2518 = vsel %vm744, %v2515, %v2517
    %v2519 = vsel %vm744, %v2513, %v2515
    %v2520 = vsel %vm744, %v2511, %v2513
    %v2521 = vsel %vm744, %v2517, %v2511
    %v2526 = vrot.slane %v2520, 1
    %v2527 = vrot.slane %v2519, 1
    %v2528 = vrot.slane %v2518, 1
    %v2529 = vrot.slane %v2521, 1
    %v2530 = vrot.slane %v2520, 2
    %v2531 = vrot.slane %v2519, 2
    %v2532 = vrot.slane %v2518, 2
    %v2533 = vrot.slane %v2521, 2
    %v2534 = vrot.slane %v2520, 3
    %v2535 = vrot.slane %v2519, 3
    %v2536 = vrot.slane %v2518, 3
    %v2537 = vrot.slane %v2521, 3
    %v2538 = vrot.slane %v2520, 4
    %v2539 = vrot.slane %v2519, 4
    %v2540 = vrot.slane %v2518, 4
    %v2541 = vrot.slane %v2521, 4
    %v2542 = vrot.slane %v2520, 5
    %v2543 = vrot.slane %v2519, 5
    %v2544 = vrot.slane %v2518, 5
    %v2545 = vrot.slane %v2521, 5
    %v2546 = vrot.slane %v2520, 6
    %v2547 = vrot.slane %v2519, 6
    %v2548 = vrot.slane %v2518, 6
    %v2549 = vrot.slane %v2521, 6
    %v2550 = vrot.slane %v2520, 7
    %v2551 = vrot.slane %v2519, 7
    %v2552 = vrot.slane %v2518, 7
    %v2553 = vrot.slane %v2521, 7
    %v2586 = vsel %vm91, %v2526, 0.0
    %v2587 = vsel %vm92, %v2527, 0.0
    %v2588 = vsel %vm93, %v2528, 0.0
    %v2589 = vsel %vm94, %v2529, 0.0
    %v2590 = vsel %vm91, %v2530, 0.0
    %v2591 = vsel %vm92, %v2531, 0.0
    %v2592 = vsel %vm93, %v2532, 0.0
    %v2593 = vsel %vm94, %v2533, 0.0
    %v2594 = vsel %vm91, %v2534, 0.0
    %v2595 = vsel %vm92, %v2535, 0.0
    %v2596 = vsel %vm93, %v2536, 0.0
    %v2597 = vsel %vm94, %v2537, 0.0
    %v2598 = vsel %vm91, %v2538, 0.0
    %v2599 = vsel %vm92, %v2539, 0.0
    %v2600 = vsel %vm93, %v2540, 0.0
    %v2601 = vsel %vm94, %v2541, 0.0
    %v2602 = vsel %vm91, %v2542, 0.0
    %v2603 = vsel %vm92, %v2543, 0.0
    %v2604 = vsel %vm93, %v2544, 0.0
    %v2605 = vsel %vm94, %v2545, 0.0
    %v2606 = vsel %vm91, %v2546, 0.0
    %v2607 = vsel %vm92, %v2547, 0.0
    %v2608 = vsel %vm93, %v2548, 0.0
    %v2609 = vsel %vm94, %v2549, 0.0
    %v2610 = vsel %vm91, %v2550, 0.0
    %v2611 = vsel %vm92, %v2551, 0.0
    %v2612 = vsel %vm93, %v2552, 0.0
    %v2613 = vsel %vm94, %v2553, 0.0
    %v2614 = vsel %vm91, %v2520, 0.0
    %v2615 = vsel %vm92, %v2519, 0.0
    %v2616 = vsel %vm93, %v2518, 0.0
    %v2617 = vsel %vm94, %v2521, 0.0
    %2618 = vrot.lane.b32.xlu0 %v1856, 111
    %v2619 = vpop.permute.xlu0 %2618
    %2620 = vrot.lane.b32.xlu0 %v1857, 111
    %v2621 = vpop.permute.xlu0 %2620
    %2622 = vrot.lane.b32.xlu0 %v1858, 111
    %v2623 = vpop.permute.xlu0 %2622
    %2624 = vrot.lane.b32.xlu0 %v1859, 111
    %v2625 = vpop.permute.xlu0 %2624
    %v2626 = vsel %vm853, %v2623, %v2625
    %v2627 = vsel %vm853, %v2621, %v2623
    %v2628 = vsel %vm853, %v2619, %v2621
    %v2629 = vsel %vm853, %v2625, %v2619
    %v2634 = vrot.slane %v2628, 1
    %v2635 = vrot.slane %v2627, 1
    %v2636 = vrot.slane %v2626, 1
    %v2637 = vrot.slane %v2629, 1
    %v2638 = vrot.slane %v2628, 2
    %v2639 = vrot.slane %v2627, 2
    %v2640 = vrot.slane %v2626, 2
    %v2641 = vrot.slane %v2629, 2
    %v2642 = vrot.slane %v2628, 3
    %v2643 = vrot.slane %v2627, 3
    %v2644 = vrot.slane %v2626, 3
    %v2645 = vrot.slane %v2629, 3
    %v2646 = vrot.slane %v2628, 4
    %v2647 = vrot.slane %v2627, 4
    %v2648 = vrot.slane %v2626, 4
    %v2649 = vrot.slane %v2629, 4
    %v2650 = vrot.slane %v2628, 5
    %v2651 = vrot.slane %v2627, 5
    %v2652 = vrot.slane %v2626, 5
    %v2653 = vrot.slane %v2629, 5
    %v2654 = vrot.slane %v2628, 6
    %v2655 = vrot.slane %v2627, 6
    %v2656 = vrot.slane %v2626, 6
    %v2657 = vrot.slane %v2629, 6
    %v2658 = vrot.slane %v2628, 7
    %v2659 = vrot.slane %v2627, 7
    %v2660 = vrot.slane %v2626, 7
    %v2661 = vrot.slane %v2629, 7
    %v2694 = vsel %vm862, %v2628, 0.0
    %v2695 = vsel %vm863, %v2627, 0.0
    %v2696 = vsel %vm864, %v2626, 0.0
    %v2697 = vsel %vm865, %v2629, 0.0
    %v2698 = vsel %vm862, %v2634, 0.0
    %v2699 = vsel %vm863, %v2635, 0.0
    %v2700 = vsel %vm864, %v2636, 0.0
    %v2701 = vsel %vm865, %v2637, 0.0
    %v2702 = vsel %vm862, %v2638, 0.0
    %v2703 = vsel %vm863, %v2639, 0.0
    %v2704 = vsel %vm864, %v2640, 0.0
    %v2705 = vsel %vm865, %v2641, 0.0
    %v2706 = vsel %vm862, %v2642, 0.0
    %v2707 = vsel %vm863, %v2643, 0.0
    %v2708 = vsel %vm864, %v2644, 0.0
    %v2709 = vsel %vm865, %v2645, 0.0
    %v2710 = vsel %vm862, %v2646, 0.0
    %v2711 = vsel %vm863, %v2647, 0.0
    %v2712 = vsel %vm864, %v2648, 0.0
    %v2713 = vsel %vm865, %v2649, 0.0
    %v2714 = vsel %vm862, %v2650, 0.0
    %v2715 = vsel %vm863, %v2651, 0.0
    %v2716 = vsel %vm864, %v2652, 0.0
    %v2717 = vsel %vm865, %v2653, 0.0
    %v2718 = vsel %vm862, %v2654, 0.0
    %v2719 = vsel %vm863, %v2655, 0.0
    %v2720 = vsel %vm864, %v2656, 0.0
    %v2721 = vsel %vm865, %v2657, 0.0
    %v2722 = vsel %vm862, %v2658, 0.0
    %v2723 = vsel %vm863, %v2659, 0.0
    %v2724 = vsel %vm864, %v2660, 0.0
    %v2725 = vsel %vm865, %v2661, 0.0
    %v2758 = vrot.slane %v1942, 7
    %v2759 = vsel %vm995, %v2758, %v1938
    %v2760 = vrot.slane %v1946, 6
    %v2761 = vsel %vm998, %v2760, %v2759
    %v2762 = vrot.slane %v1950, 5
    %v2763 = vsel %vm1001, %v2762, %v2761
    %v2764 = vrot.slane %v1954, 4
    %v2765 = vsel %vm1004, %v2764, %v2763
    %v2766 = vrot.slane %v1958, 3
    %v2767 = vsel %vm1007, %v2766, %v2765
    %v2768 = vrot.slane %v1962, 2
    %v2769 = vsel %vm1010, %v2768, %v2767
    %v2770 = vrot.slane %v1966, 1
    %v2771 = vsel %vm1013, %v2770, %v2769
    %v2772 = vrot.slane %v1943, 7
    %v2773 = vsel %vm995, %v2772, %v1939
    %v2774 = vrot.slane %v1947, 6
    %v2775 = vsel %vm998, %v2774, %v2773
    %v2776 = vrot.slane %v1951, 5
    %v2777 = vsel %vm1001, %v2776, %v2775
    %v2778 = vrot.slane %v1955, 4
    %v2779 = vsel %vm1004, %v2778, %v2777
    %v2780 = vrot.slane %v1959, 3
    %v2781 = vsel %vm1007, %v2780, %v2779
    %v2782 = vrot.slane %v1963, 2
    %v2783 = vsel %vm1010, %v2782, %v2781
    %v2784 = vrot.slane %v1967, 1
    %v2785 = vsel %vm1013, %v2784, %v2783
    %v2786 = vrot.slane %v1944, 7
    %v2787 = vsel %vm995, %v2786, %v1940
    %v2788 = vrot.slane %v1948, 6
    %v2789 = vsel %vm998, %v2788, %v2787
    %v2790 = vrot.slane %v1952, 5
    %v2791 = vsel %vm1001, %v2790, %v2789
    %v2792 = vrot.slane %v1956, 4
    %v2793 = vsel %vm1004, %v2792, %v2791
    %v2794 = vrot.slane %v1960, 3
    %v2795 = vsel %vm1007, %v2794, %v2793
    %v2796 = vrot.slane %v1964, 2
    %v2797 = vsel %vm1010, %v2796, %v2795
    %v2798 = vrot.slane %v1968, 1
    %v2799 = vsel %vm1013, %v2798, %v2797
    %v2800 = vrot.slane %v1945, 7
    %v2801 = vsel %vm995, %v2800, %v1941
    %v2802 = vrot.slane %v1949, 6
    %v2803 = vsel %vm998, %v2802, %v2801
    %v2804 = vrot.slane %v1953, 5
    %v2805 = vsel %vm1001, %v2804, %v2803
    %v2806 = vrot.slane %v1957, 4
    %v2807 = vsel %vm1004, %v2806, %v2805
    %v2808 = vrot.slane %v1961, 3
    %v2809 = vsel %vm1007, %v2808, %v2807
    %v2810 = vrot.slane %v1965, 2
    %v2811 = vsel %vm1010, %v2810, %v2809
    %v2812 = vrot.slane %v1969, 1
    %v2813 = vsel %vm1013, %v2812, %v2811
    %v2850 = vrot.slane %v2046, 1
    %v2851 = vsel %vm995, %v2050, %v2850
    %v2852 = vrot.slane %v2054, 7
    %v2853 = vsel %vm998, %v2852, %v2851
    %v2854 = vrot.slane %v2058, 6
    %v2855 = vsel %vm1001, %v2854, %v2853
    %v2856 = vrot.slane %v2062, 5
    %v2857 = vsel %vm1004, %v2856, %v2855
    %v2858 = vrot.slane %v2066, 4
    %v2859 = vsel %vm1007, %v2858, %v2857
    %v2860 = vrot.slane %v2070, 3
    %v2861 = vsel %vm1010, %v2860, %v2859
    %v2862 = vrot.slane %v2074, 2
    %v2863 = vsel %vm1013, %v2862, %v2861
    %v2864 = vrot.slane %v2047, 1
    %v2865 = vsel %vm995, %v2051, %v2864
    %v2866 = vrot.slane %v2055, 7
    %v2867 = vsel %vm998, %v2866, %v2865
    %v2868 = vrot.slane %v2059, 6
    %v2869 = vsel %vm1001, %v2868, %v2867
    %v2870 = vrot.slane %v2063, 5
    %v2871 = vsel %vm1004, %v2870, %v2869
    %v2872 = vrot.slane %v2067, 4
    %v2873 = vsel %vm1007, %v2872, %v2871
    %v2874 = vrot.slane %v2071, 3
    %v2875 = vsel %vm1010, %v2874, %v2873
    %v2876 = vrot.slane %v2075, 2
    %v2877 = vsel %vm1013, %v2876, %v2875
    %v2878 = vrot.slane %v2048, 1
    %v2879 = vsel %vm995, %v2052, %v2878
    %v2880 = vrot.slane %v2056, 7
    %v2881 = vsel %vm998, %v2880, %v2879
    %v2882 = vrot.slane %v2060, 6
    %v2883 = vsel %vm1001, %v2882, %v2881
    %v2884 = vrot.slane %v2064, 5
    %v2885 = vsel %vm1004, %v2884, %v2883
    %v2886 = vrot.slane %v2068, 4
    %v2887 = vsel %vm1007, %v2886, %v2885
    %v2888 = vrot.slane %v2072, 3
    %v2889 = vsel %vm1010, %v2888, %v2887
    %v2890 = vrot.slane %v2076, 2
    %v2891 = vsel %vm1013, %v2890, %v2889
    %v2892 = vrot.slane %v2049, 1
    %v2893 = vsel %vm995, %v2053, %v2892
    %v2894 = vrot.slane %v2057, 7
    %v2895 = vsel %vm998, %v2894, %v2893
    %v2896 = vrot.slane %v2061, 6
    %v2897 = vsel %vm1001, %v2896, %v2895
    %v2898 = vrot.slane %v2065, 5
    %v2899 = vsel %vm1004, %v2898, %v2897
    %v2900 = vrot.slane %v2069, 4
    %v2901 = vsel %vm1007, %v2900, %v2899
    %v2902 = vrot.slane %v2073, 3
    %v2903 = vsel %vm1010, %v2902, %v2901
    %v2904 = vrot.slane %v2077, 2
    %v2905 = vsel %vm1013, %v2904, %v2903
    %v2942 = vrot.slane %v2154, 2
    %v2943 = vrot.slane %v2158, 1
    %v2944 = vsel %vm995, %v2943, %v2942
    %v2945 = vsel %vm998, %v2162, %v2944
    %v2946 = vrot.slane %v2166, 7
    %v2947 = vsel %vm1001, %v2946, %v2945
    %v2948 = vrot.slane %v2170, 6
    %v2949 = vsel %vm1004, %v2948, %v2947
    %v2950 = vrot.slane %v2174, 5
    %v2951 = vsel %vm1007, %v2950, %v2949
    %v2952 = vrot.slane %v2178, 4
    %v2953 = vsel %vm1010, %v2952, %v2951
    %v2954 = vrot.slane %v2182, 3
    %v2955 = vsel %vm1013, %v2954, %v2953
    %v2956 = vrot.slane %v2155, 2
    %v2957 = vrot.slane %v2159, 1
    %v2958 = vsel %vm995, %v2957, %v2956
    %v2959 = vsel %vm998, %v2163, %v2958
    %v2960 = vrot.slane %v2167, 7
    %v2961 = vsel %vm1001, %v2960, %v2959
    %v2962 = vrot.slane %v2171, 6
    %v2963 = vsel %vm1004, %v2962, %v2961
    %v2964 = vrot.slane %v2175, 5
    %v2965 = vsel %vm1007, %v2964, %v2963
    %v2966 = vrot.slane %v2179, 4
    %v2967 = vsel %vm1010, %v2966, %v2965
    %v2968 = vrot.slane %v2183, 3
    %v2969 = vsel %vm1013, %v2968, %v2967
    %v2970 = vrot.slane %v2156, 2
    %v2971 = vrot.slane %v2160, 1
    %v2972 = vsel %vm995, %v2971, %v2970
    %v2973 = vsel %vm998, %v2164, %v2972
    %v2974 = vrot.slane %v2168, 7
    %v2975 = vsel %vm1001, %v2974, %v2973
    %v2976 = vrot.slane %v2172, 6
    %v2977 = vsel %vm1004, %v2976, %v2975
    %v2978 = vrot.slane %v2176, 5
    %v2979 = vsel %vm1007, %v2978, %v2977
    %v2980 = vrot.slane %v2180, 4
    %v2981 = vsel %vm1010, %v2980, %v2979
    %v2982 = vrot.slane %v2184, 3
    %v2983 = vsel %vm1013, %v2982, %v2981
    %v2984 = vrot.slane %v2157, 2
    %v2985 = vrot.slane %v2161, 1
    %v2986 = vsel %vm995, %v2985, %v2984
    %v2987 = vsel %vm998, %v2165, %v2986
    %v2988 = vrot.slane %v2169, 7
    %v2989 = vsel %vm1001, %v2988, %v2987
    %v2990 = vrot.slane %v2173, 6
    %v2991 = vsel %vm1004, %v2990, %v2989
    %v2992 = vrot.slane %v2177, 5
    %v2993 = vsel %vm1007, %v2992, %v2991
    %v2994 = vrot.slane %v2181, 4
    %v2995 = vsel %vm1010, %v2994, %v2993
    %v2996 = vrot.slane %v2185, 3
    %v2997 = vsel %vm1013, %v2996, %v2995
    %v3034 = vrot.slane %v2262, 3
    %v3035 = vrot.slane %v2266, 2
    %v3036 = vsel %vm995, %v3035, %v3034
    %v3037 = vrot.slane %v2270, 1
    %v3038 = vsel %vm998, %v3037, %v3036
    %v3039 = vsel %vm1001, %v2274, %v3038
    %v3040 = vrot.slane %v2278, 7
    %v3041 = vsel %vm1004, %v3040, %v3039
    %v3042 = vrot.slane %v2282, 6
    %v3043 = vsel %vm1007, %v3042, %v3041
    %v3044 = vrot.slane %v2286, 5
    %v3045 = vsel %vm1010, %v3044, %v3043
    %v3046 = vrot.slane %v2290, 4
    %v3047 = vsel %vm1013, %v3046, %v3045
    %v3048 = vrot.slane %v2263, 3
    %v3049 = vrot.slane %v2267, 2
    %v3050 = vsel %vm995, %v3049, %v3048
    %v3051 = vrot.slane %v2271, 1
    %v3052 = vsel %vm998, %v3051, %v3050
    %v3053 = vsel %vm1001, %v2275, %v3052
    %v3054 = vrot.slane %v2279, 7
    %v3055 = vsel %vm1004, %v3054, %v3053
    %v3056 = vrot.slane %v2283, 6
    %v3057 = vsel %vm1007, %v3056, %v3055
    %v3058 = vrot.slane %v2287, 5
    %v3059 = vsel %vm1010, %v3058, %v3057
    %v3060 = vrot.slane %v2291, 4
    %v3061 = vsel %vm1013, %v3060, %v3059
    %v3062 = vrot.slane %v2264, 3
    %v3063 = vrot.slane %v2268, 2
    %v3064 = vsel %vm995, %v3063, %v3062
    %v3065 = vrot.slane %v2272, 1
    %v3066 = vsel %vm998, %v3065, %v3064
    %v3067 = vsel %vm1001, %v2276, %v3066
    %v3068 = vrot.slane %v2280, 7
    %v3069 = vsel %vm1004, %v3068, %v3067
    %v3070 = vrot.slane %v2284, 6
    %v3071 = vsel %vm1007, %v3070, %v3069
    %v3072 = vrot.slane %v2288, 5
    %v3073 = vsel %vm1010, %v3072, %v3071
    %v3074 = vrot.slane %v2292, 4
    %v3075 = vsel %vm1013, %v3074, %v3073
    %v3076 = vrot.slane %v2265, 3
    %v3077 = vrot.slane %v2269, 2
    %v3078 = vsel %vm995, %v3077, %v3076
    %v3079 = vrot.slane %v2273, 1
    %v3080 = vsel %vm998, %v3079, %v3078
    %v3081 = vsel %vm1001, %v2277, %v3080
    %v3082 = vrot.slane %v2281, 7
    %v3083 = vsel %vm1004, %v3082, %v3081
    %v3084 = vrot.slane %v2285, 6
    %v3085 = vsel %vm1007, %v3084, %v3083
    %v3086 = vrot.slane %v2289, 5
    %v3087 = vsel %vm1010, %v3086, %v3085
    %v3088 = vrot.slane %v2293, 4
    %v3089 = vsel %vm1013, %v3088, %v3087
    %v3126 = vrot.slane %v2370, 5
    %v3127 = vrot.slane %v2374, 4
    %v3128 = vsel %vm995, %v3127, %v3126
    %v3129 = vrot.slane %v2378, 3
    %v3130 = vsel %vm998, %v3129, %v3128
    %v3131 = vrot.slane %v2382, 2
    %v3132 = vsel %vm1001, %v3131, %v3130
    %v3133 = vrot.slane %v2386, 1
    %v3134 = vsel %vm1004, %v3133, %v3132
    %v3135 = vsel %vm1007, %v2390, %v3134
    %v3136 = vrot.slane %v2394, 7
    %v3137 = vsel %vm1010, %v3136, %v3135
    %v3138 = vrot.slane %v2398, 6
    %v3139 = vsel %vm1013, %v3138, %v3137
    %v3140 = vrot.slane %v2371, 5
    %v3141 = vrot.slane %v2375, 4
    %v3142 = vsel %vm995, %v3141, %v3140
    %v3143 = vrot.slane %v2379, 3
    %v3144 = vsel %vm998, %v3143, %v3142
    %v3145 = vrot.slane %v2383, 2
    %v3146 = vsel %vm1001, %v3145, %v3144
    %v3147 = vrot.slane %v2387, 1
    %v3148 = vsel %vm1004, %v3147, %v3146
    %v3149 = vsel %vm1007, %v2391, %v3148
    %v3150 = vrot.slane %v2395, 7
    %v3151 = vsel %vm1010, %v3150, %v3149
    %v3152 = vrot.slane %v2399, 6
    %v3153 = vsel %vm1013, %v3152, %v3151
    %v3154 = vrot.slane %v2372, 5
    %v3155 = vrot.slane %v2376, 4
    %v3156 = vsel %vm995, %v3155, %v3154
    %v3157 = vrot.slane %v2380, 3
    %v3158 = vsel %vm998, %v3157, %v3156
    %v3159 = vrot.slane %v2384, 2
    %v3160 = vsel %vm1001, %v3159, %v3158
    %v3161 = vrot.slane %v2388, 1
    %v3162 = vsel %vm1004, %v3161, %v3160
    %v3163 = vsel %vm1007, %v2392, %v3162
    %v3164 = vrot.slane %v2396, 7
    %v3165 = vsel %vm1010, %v3164, %v3163
    %v3166 = vrot.slane %v2400, 6
    %v3167 = vsel %vm1013, %v3166, %v3165
    %v3168 = vrot.slane %v2373, 5
    %v3169 = vrot.slane %v2377, 4
    %v3170 = vsel %vm995, %v3169, %v3168
    %v3171 = vrot.slane %v2381, 3
    %v3172 = vsel %vm998, %v3171, %v3170
    %v3173 = vrot.slane %v2385, 2
    %v3174 = vsel %vm1001, %v3173, %v3172
    %v3175 = vrot.slane %v2389, 1
    %v3176 = vsel %vm1004, %v3175, %v3174
    %v3177 = vsel %vm1007, %v2393, %v3176
    %v3178 = vrot.slane %v2397, 7
    %v3179 = vsel %vm1010, %v3178, %v3177
    %v3180 = vrot.slane %v2401, 6
    %v3181 = vsel %vm1013, %v3180, %v3179
    %v3218 = vrot.slane %v2478, 6
    %v3219 = vrot.slane %v2482, 5
    %v3220 = vsel %vm995, %v3219, %v3218
    %v3221 = vrot.slane %v2486, 4
    %v3222 = vsel %vm998, %v3221, %v3220
    %v3223 = vrot.slane %v2490, 3
    %v3224 = vsel %vm1001, %v3223, %v3222
    %v3225 = vrot.slane %v2494, 2
    %v3226 = vsel %vm1004, %v3225, %v3224
    %v3227 = vrot.slane %v2498, 1
    %v3228 = vsel %vm1007, %v3227, %v3226
    %v3229 = vsel %vm1010, %v2502, %v3228
    %v3230 = vrot.slane %v2506, 7
    %v3231 = vsel %vm1013, %v3230, %v3229
    %v3232 = vrot.slane %v2479, 6
    %v3233 = vrot.slane %v2483, 5
    %v3234 = vsel %vm995, %v3233, %v3232
    %v3235 = vrot.slane %v2487, 4
    %v3236 = vsel %vm998, %v3235, %v3234
    %v3237 = vrot.slane %v2491, 3
    %v3238 = vsel %vm1001, %v3237, %v3236
    %v3239 = vrot.slane %v2495, 2
    %v3240 = vsel %vm1004, %v3239, %v3238
    %v3241 = vrot.slane %v2499, 1
    %v3242 = vsel %vm1007, %v3241, %v3240
    %v3243 = vsel %vm1010, %v2503, %v3242
    %v3244 = vrot.slane %v2507, 7
    %v3245 = vsel %vm1013, %v3244, %v3243
    %v3246 = vrot.slane %v2480, 6
    %v3247 = vrot.slane %v2484, 5
    %v3248 = vsel %vm995, %v3247, %v3246
    %v3249 = vrot.slane %v2488, 4
    %v3250 = vsel %vm998, %v3249, %v3248
    %v3251 = vrot.slane %v2492, 3
    %v3252 = vsel %vm1001, %v3251, %v3250
    %v3253 = vrot.slane %v2496, 2
    %v3254 = vsel %vm1004, %v3253, %v3252
    %v3255 = vrot.slane %v2500, 1
    %v3256 = vsel %vm1007, %v3255, %v3254
    %v3257 = vsel %vm1010, %v2504, %v3256
    %v3258 = vrot.slane %v2508, 7
    %v3259 = vsel %vm1013, %v3258, %v3257
    %v3260 = vrot.slane %v2481, 6
    %v3261 = vrot.slane %v2485, 5
    %v3262 = vsel %vm995, %v3261, %v3260
    %v3263 = vrot.slane %v2489, 4
    %v3264 = vsel %vm998, %v3263, %v3262
    %v3265 = vrot.slane %v2493, 3
    %v3266 = vsel %vm1001, %v3265, %v3264
    %v3267 = vrot.slane %v2497, 2
    %v3268 = vsel %vm1004, %v3267, %v3266
    %v3269 = vrot.slane %v2501, 1
    %v3270 = vsel %vm1007, %v3269, %v3268
    %v3271 = vsel %vm1010, %v2505, %v3270
    %v3272 = vrot.slane %v2509, 7
    %v3273 = vsel %vm1013, %v3272, %v3271
    %v3310 = vrot.slane %v2586, 7
    %v3311 = vrot.slane %v2590, 6
    %v3312 = vsel %vm995, %v3311, %v3310
    %v3313 = vrot.slane %v2594, 5
    %v3314 = vsel %vm998, %v3313, %v3312
    %v3315 = vrot.slane %v2598, 4
    %v3316 = vsel %vm1001, %v3315, %v3314
    %v3317 = vrot.slane %v2602, 3
    %v3318 = vsel %vm1004, %v3317, %v3316
    %v3319 = vrot.slane %v2606, 2
    %v3320 = vsel %vm1007, %v3319, %v3318
    %v3321 = vrot.slane %v2610, 1
    %v3322 = vsel %vm1010, %v3321, %v3320
    %v3323 = vsel %vm1013, %v2614, %v3322
    %v3324 = vrot.slane %v2587, 7
    %v3325 = vrot.slane %v2591, 6
    %v3326 = vsel %vm995, %v3325, %v3324
    %v3327 = vrot.slane %v2595, 5
    %v3328 = vsel %vm998, %v3327, %v3326
    %v3329 = vrot.slane %v2599, 4
    %v3330 = vsel %vm1001, %v3329, %v3328
    %v3331 = vrot.slane %v2603, 3
    %v3332 = vsel %vm1004, %v3331, %v3330
    %v3333 = vrot.slane %v2607, 2
    %v3334 = vsel %vm1007, %v3333, %v3332
    %v3335 = vrot.slane %v2611, 1
    %v3336 = vsel %vm1010, %v3335, %v3334
    %v3337 = vsel %vm1013, %v2615, %v3336
    %v3338 = vrot.slane %v2588, 7
    %v3339 = vrot.slane %v2592, 6
    %v3340 = vsel %vm995, %v3339, %v3338
    %v3341 = vrot.slane %v2596, 5
    %v3342 = vsel %vm998, %v3341, %v3340
    %v3343 = vrot.slane %v2600, 4
    %v3344 = vsel %vm1001, %v3343, %v3342
    %v3345 = vrot.slane %v2604, 3
    %v3346 = vsel %vm1004, %v3345, %v3344
    %v3347 = vrot.slane %v2608, 2
    %v3348 = vsel %vm1007, %v3347, %v3346
    %v3349 = vrot.slane %v2612, 1
    %v3350 = vsel %vm1010, %v3349, %v3348
    %v3351 = vsel %vm1013, %v2616, %v3350
    %v3352 = vrot.slane %v2589, 7
    %v3353 = vrot.slane %v2593, 6
    %v3354 = vsel %vm995, %v3353, %v3352
    %v3355 = vrot.slane %v2597, 5
    %v3356 = vsel %vm998, %v3355, %v3354
    %v3357 = vrot.slane %v2601, 4
    %v3358 = vsel %vm1001, %v3357, %v3356
    %v3359 = vrot.slane %v2605, 3
    %v3360 = vsel %vm1004, %v3359, %v3358
    %v3361 = vrot.slane %v2609, 2
    %v3362 = vsel %vm1007, %v3361, %v3360
    %v3363 = vrot.slane %v2613, 1
    %v3364 = vsel %vm1010, %v3363, %v3362
    %v3365 = vsel %vm1013, %v2617, %v3364
    %v3402 = vrot.slane %v2698, 7
    %v3403 = vsel %vm995, %v3402, %v2694
    %v3404 = vrot.slane %v2702, 6
    %v3405 = vsel %vm998, %v3404, %v3403
    %v3406 = vrot.slane %v2706, 5
    %v3407 = vsel %vm1001, %v3406, %v3405
    %v3408 = vrot.slane %v2710, 4
    %v3409 = vsel %vm1004, %v3408, %v3407
    %v3410 = vrot.slane %v2714, 3
    %v3411 = vsel %vm1007, %v3410, %v3409
    %v3412 = vrot.slane %v2718, 2
    %v3413 = vsel %vm1010, %v3412, %v3411
    %v3414 = vrot.slane %v2722, 1
    %v3415 = vsel %vm1013, %v3414, %v3413
    %v3416 = vrot.slane %v2699, 7
    %v3417 = vsel %vm995, %v3416, %v2695
    %v3418 = vrot.slane %v2703, 6
    %v3419 = vsel %vm998, %v3418, %v3417
    %v3420 = vrot.slane %v2707, 5
    %v3421 = vsel %vm1001, %v3420, %v3419
    %v3422 = vrot.slane %v2711, 4
    %v3423 = vsel %vm1004, %v3422, %v3421
    %v3424 = vrot.slane %v2715, 3
    %v3425 = vsel %vm1007, %v3424, %v3423
    %v3426 = vrot.slane %v2719, 2
    %v3427 = vsel %vm1010, %v3426, %v3425
    %v3428 = vrot.slane %v2723, 1
    %v3429 = vsel %vm1013, %v3428, %v3427
    %v3430 = vrot.slane %v2700, 7
    %v3431 = vsel %vm995, %v3430, %v2696
    %v3432 = vrot.slane %v2704, 6
    %v3433 = vsel %vm998, %v3432, %v3431
    %v3434 = vrot.slane %v2708, 5
    %v3435 = vsel %vm1001, %v3434, %v3433
    %v3436 = vrot.slane %v2712, 4
    %v3437 = vsel %vm1004, %v3436, %v3435
    %v3438 = vrot.slane %v2716, 3
    %v3439 = vsel %vm1007, %v3438, %v3437
    %v3440 = vrot.slane %v2720, 2
    %v3441 = vsel %vm1010, %v3440, %v3439
    %v3442 = vrot.slane %v2724, 1
    %v3443 = vsel %vm1013, %v3442, %v3441
    %v3444 = vrot.slane %v2701, 7
    %v3445 = vsel %vm995, %v3444, %v2697
    %v3446 = vrot.slane %v2705, 6
    %v3447 = vsel %vm998, %v3446, %v3445
    %v3448 = vrot.slane %v2709, 5
    %v3449 = vsel %vm1001, %v3448, %v3447
    %v3450 = vrot.slane %v2713, 4
    %v3451 = vsel %vm1004, %v3450, %v3449
    %v3452 = vrot.slane %v2717, 3
    %v3453 = vsel %vm1007, %v3452, %v3451
    %v3454 = vrot.slane %v2721, 2
    %v3455 = vsel %vm1010, %v3454, %v3453
    %v3456 = vrot.slane %v2725, 1
    %v3457 = vsel %vm1013, %v3456, %v3455
    %3462 = vset.pattern.permute.xlu0 1
    %3463 = vperm.xlu0 %3462, %v45
    %v3464 = vpop.permute.xlu0 %3463
    %v3467 = vsel %vm1710, %v1861, 0
    %3469 = vmatprep.subr.mxu0 0.0
    %3470 = vmatpush1.msra.mxu0 0.0
    %3471 = vmatprep.subr.mxu0 0.0
    %3472 = vmatpush1.msra.mxu0 0.0
    %3473 = vmatprep.subr.mxu0 0.0
    %3474 = vmatpush1.msra.mxu0 0.0
    %3475 = vmatprep.subr.mxu0 0.0
    %3476 = vmatpush1.msra.mxu0 0.0
    %3477 = vmatprep.subr.mxu0 0.0
    %3478 = vmatpush1.msra.mxu0 0.0
    %3479 = vmatprep.subr.mxu0 0.0
    %3480 = vmatpush1.msra.mxu0 0.0
    %3481 = vmatprep.subr.mxu0 0.0
    %3482 = vmatpush1.msra.mxu0 0.0
    %3483 = vmatprep.subr.mxu0 %v3429
    %3484 = vmatpush1.msra.mxu0 %v3415
    %3485 = vmatprep.subr.mxu0 %v3337
    %3486 = vmatpush1.msra.mxu0 %v3323
    %3487 = vmatprep.subr.mxu0 %v3245
    %3488 = vmatpush1.msra.mxu0 %v3231
    %3489 = vmatprep.subr.mxu0 %v3153
    %3490 = vmatpush1.msra.mxu0 %v3139
    %3491 = vmatprep.subr.mxu0 %v1857
    %3492 = vmatpush1.msra.mxu0 %v1856
    %3493 = vmatprep.subr.mxu0 %v3061
    %3494 = vmatpush1.msra.mxu0 %v3047
    %3495 = vmatprep.subr.mxu0 %v2969
    %3496 = vmatpush1.msra.mxu0 %v2955
    %3497 = vmatprep.subr.mxu0 %v2877
    %3498 = vmatpush1.msra.mxu0 %v2863
    %3499 = vmatprep.subr.mxu0 %v2785
    %3500 = vmatpush1.msra.mxu0 %v2771
    %3501 = vmatprep.subr.mxu0 0.0
    %3502 = vmatpush2.msra.mxu0 0.0
    %3503 = vmatprep.subr.mxu0 0.0
    %3504 = vmatpush2.msra.mxu0 0.0
    %3505 = vmatprep.subr.mxu0 0.0
    %3506 = vmatpush2.msra.mxu0 0.0
    %3507 = vmatprep.subr.mxu0 0.0
    %3508 = vmatpush2.msra.mxu0 0.0
    %3509 = vmatprep.subr.mxu0 0.0
    %3510 = vmatpush2.msra.mxu0 0.0
    %3511 = vmatprep.subr.mxu0 0.0
    %3512 = vmatpush2.msra.mxu0 0.0
    %3513 = vmatprep.subr.mxu0 0.0
    %3514 = vmatpush2.msra.mxu0 0.0
    %3515 = vmatprep.subr.mxu0 0.0
    %3516 = vmatpush2.msra.mxu0 0.0
    %3517 = vmatprep.subr.mxu0 0.0
    %3518 = vmatpush2.msra.mxu0 0.0
    %3519 = vmatprep.subr.mxu0 0.0
    %3520 = vmatpush2.msra.mxu0 0.0
    %3521 = vmatprep.subr.mxu0 0.0
    %3522 = vmatpush2.msra.mxu0 0.0
    %3523 = vmatprep.subr.mxu0 0.0
    %3524 = vmatpush2.msra.mxu0 0.0
    %3525 = vmatprep.subr.mxu0 0.0
    %3526 = vmatpush2.msra.mxu0 0.0
    %3527 = vmatprep.subr.mxu0 0.0
    %3528 = vmatpush2.msra.mxu0 0.0
    %3529 = vmatprep.subr.mxu0 0.0
    %3530 = vmatpush2.msra.mxu0 0.0
    %3531 = vmatprep.subr.mxu0 0.0
    %3532 = vmatpush2.msra.mxu0 0.0
    %3533 = vmatprep.mubr.f32.mxu0 0.0
    %3534 = vmatmul.mubr.f32.gmra.mxu0 %v3467
    %v3535 = vpop.f32.mrf.mxu0
    %v3536 = vadd.f32 %v3464, %v3535
    %v3537 = vpop.f32.mrf.mxu0
    %v3538 = vadd.f32 %v3464, %v3537
    %3539 = vdwg.mxu0
    %3540 = vmatprep.subr.mxu0 0.0
    %3541 = vmatpush1.msra.mxu0 0.0
    %3542 = vmatprep.subr.mxu0 0.0
    %3543 = vmatpush1.msra.mxu0 0.0
    %3544 = vmatprep.subr.mxu0 0.0
    %3545 = vmatpush1.msra.mxu0 0.0
    %3546 = vmatprep.subr.mxu0 0.0
    %3547 = vmatpush1.msra.mxu0 0.0
    %3548 = vmatprep.subr.mxu0 0.0
    %3549 = vmatpush1.msra.mxu0 0.0
    %3550 = vmatprep.subr.mxu0 0.0
    %3551 = vmatpush1.msra.mxu0 0.0
    %3552 = vmatprep.subr.mxu0 0.0
    %3553 = vmatpush1.msra.mxu0 0.0
    %3554 = vmatprep.subr.mxu0 %v3457
    %3555 = vmatpush1.msra.mxu0 %v3443
    %3556 = vmatprep.subr.mxu0 %v3365
    %3557 = vmatpush1.msra.mxu0 %v3351
    %3558 = vmatprep.subr.mxu0 %v3273
    %3559 = vmatpush1.msra.mxu0 %v3259
    %3560 = vmatprep.subr.mxu0 %v3181
    %3561 = vmatpush1.msra.mxu0 %v3167
    %3562 = vmatprep.subr.mxu0 %v1859
    %3563 = vmatpush1.msra.mxu0 %v1858
    %3564 = vmatprep.subr.mxu0 %v3089
    %3565 = vmatpush1.msra.mxu0 %v3075
    %3566 = vmatprep.subr.mxu0 %v2997
    %3567 = vmatpush1.msra.mxu0 %v2983
    %3568 = vmatprep.subr.mxu0 %v2905
    %3569 = vmatpush1.msra.mxu0 %v2891
    %3570 = vmatprep.subr.mxu0 %v2813
    %3571 = vmatpush1.msra.mxu0 %v2799
    %3572 = vmatprep.subr.mxu0 0.0
    %3573 = vmatpush2.msra.mxu0 0.0
    %3574 = vmatprep.subr.mxu0 0.0
    %3575 = vmatpush2.msra.mxu0 0.0
    %3576 = vmatprep.subr.mxu0 0.0
    %3577 = vmatpush2.msra.mxu0 0.0
    %3578 = vmatprep.subr.mxu0 0.0
    %3579 = vmatpush2.msra.mxu0 0.0
    %3580 = vmatprep.subr.mxu0 0.0
    %3581 = vmatpush2.msra.mxu0 0.0
    %3582 = vmatprep.subr.mxu0 0.0
    %3583 = vmatpush2.msra.mxu0 0.0
    %3584 = vmatprep.subr.mxu0 0.0
    %3585 = vmatpush2.msra.mxu0 0.0
    %3586 = vmatprep.subr.mxu0 0.0
    %3587 = vmatpush2.msra.mxu0 0.0
    %3588 = vmatprep.subr.mxu0 0.0
    %3589 = vmatpush2.msra.mxu0 0.0
    %3590 = vmatprep.subr.mxu0 0.0
    %3591 = vmatpush2.msra.mxu0 0.0
    %3592 = vmatprep.subr.mxu0 0.0
    %3593 = vmatpush2.msra.mxu0 0.0
    %3594 = vmatprep.subr.mxu0 0.0
    %3595 = vmatpush2.msra.mxu0 0.0
    %3596 = vmatprep.subr.mxu0 0.0
    %3597 = vmatpush2.msra.mxu0 0.0
    %3598 = vmatprep.subr.mxu0 0.0
    %3599 = vmatpush2.msra.mxu0 0.0
    %3600 = vmatprep.subr.mxu0 0.0
    %3601 = vmatpush2.msra.mxu0 0.0
    %3602 = vmatprep.subr.mxu0 0.0
    %3603 = vmatpush2.msra.mxu0 0.0
    %3604 = vmatprep.mubr.f32.mxu0 0.0
    %3605 = vmatmul.mubr.f32.gmra.mxu0 %v3467
    %v3606 = vpop.f32.mrf.mxu0
    %v3607 = vadd.f32 %v3464, %v3606
    %v3608 = vpop.f32.mrf.mxu0
    %v3609 = vadd.f32 %v3464, %v3608
    %3610 = vdwg.mxu0
    %v3611 = vadd.f32 %v3536, %v67
    %v3612 = vadd.f32 %v3538, %v68
    %v3613 = vadd.f32 %v3607, %v69
    %v3614 = vadd.f32 %v3609, %v70
    %v3615 = vmax.f32 %v3611, 0.0
    %v3616 = vmax.f32 %v3612, 0.0
    %v3617 = vmax.f32 %v3613, 0.0
    %v3618 = vmax.f32 %v3614, 0.0
    %s3619 = scalar_lea.vmem %s2, 64
    %v3620 = vld [vmem:[%s3619] sm:$0xff]
    %3621 = vrot.lane.b32.xlu0 %v3615, 17
    %v3622 = vpop.permute.xlu0 %3621
    %3623 = vrot.lane.b32.xlu0 %v3616, 17
    %v3624 = vpop.permute.xlu0 %3623
    %3625 = vrot.lane.b32.xlu0 %v3617, 17
    %v3626 = vpop.permute.xlu0 %3625
    %3627 = vrot.lane.b32.xlu0 %v3618, 17
    %v3628 = vpop.permute.xlu0 %3627
    %v3629 = vsel %vm82, %v3626, %v3628
    %v3630 = vsel %vm82, %v3624, %v3626
    %v3631 = vsel %vm82, %v3622, %v3624
    %v3632 = vsel %vm82, %v3628, %v3622
    %v3637 = vrot.slane %v3632, 1
    %v3638 = vrot.slane %v3631, 1
    %v3639 = vrot.slane %v3630, 1
    %v3640 = vrot.slane %v3629, 1
    %v3641 = vrot.slane %v3632, 2
    %v3642 = vrot.slane %v3631, 2
    %v3643 = vrot.slane %v3630, 2
    %v3644 = vrot.slane %v3629, 2
    %v3645 = vrot.slane %v3632, 3
    %v3646 = vrot.slane %v3631, 3
    %v3647 = vrot.slane %v3630, 3
    %v3648 = vrot.slane %v3629, 3
    %v3649 = vrot.slane %v3632, 4
    %v3650 = vrot.slane %v3631, 4
    %v3651 = vrot.slane %v3630, 4
    %v3652 = vrot.slane %v3629, 4
    %v3653 = vrot.slane %v3632, 5
    %v3654 = vrot.slane %v3631, 5
    %v3655 = vrot.slane %v3630, 5
    %v3656 = vrot.slane %v3629, 5
    %v3657 = vrot.slane %v3632, 6
    %v3658 = vrot.slane %v3631, 6
    %v3659 = vrot.slane %v3630, 6
    %v3660 = vrot.slane %v3629, 6
    %v3661 = vrot.slane %v3632, 7
    %v3662 = vrot.slane %v3631, 7
    %v3663 = vrot.slane %v3630, 7
    %v3664 = vrot.slane %v3629, 7
    %v3697 = vsel %vm91, %v3632, 0.0
    %v3698 = vsel %vm92, %v3631, 0.0
    %v3699 = vsel %vm93, %v3630, 0.0
    %v3700 = vsel %vm94, %v3629, 0.0
    %v3701 = vsel %vm91, %v3637, 0.0
    %v3702 = vsel %vm92, %v3638, 0.0
    %v3703 = vsel %vm93, %v3639, 0.0
    %v3704 = vsel %vm94, %v3640, 0.0
    %v3705 = vsel %vm91, %v3641, 0.0
    %v3706 = vsel %vm92, %v3642, 0.0
    %v3707 = vsel %vm93, %v3643, 0.0
    %v3708 = vsel %vm94, %v3644, 0.0
    %v3709 = vsel %vm91, %v3645, 0.0
    %v3710 = vsel %vm92, %v3646, 0.0
    %v3711 = vsel %vm93, %v3647, 0.0
    %v3712 = vsel %vm94, %v3648, 0.0
    %v3713 = vsel %vm91, %v3649, 0.0
    %v3714 = vsel %vm92, %v3650, 0.0
    %v3715 = vsel %vm93, %v3651, 0.0
    %v3716 = vsel %vm94, %v3652, 0.0
    %v3717 = vsel %vm91, %v3653, 0.0
    %v3718 = vsel %vm92, %v3654, 0.0
    %v3719 = vsel %vm93, %v3655, 0.0
    %v3720 = vsel %vm94, %v3656, 0.0
    %v3721 = vsel %vm91, %v3657, 0.0
    %v3722 = vsel %vm92, %v3658, 0.0
    %v3723 = vsel %vm93, %v3659, 0.0
    %v3724 = vsel %vm94, %v3660, 0.0
    %v3725 = vsel %vm91, %v3661, 0.0
    %v3726 = vsel %vm92, %v3662, 0.0
    %v3727 = vsel %vm93, %v3663, 0.0
    %v3728 = vsel %vm94, %v3664, 0.0
    %3729 = vrot.lane.b32.xlu0 %v3615, 16
    %v3730 = vpop.permute.xlu0 %3729
    %3731 = vrot.lane.b32.xlu0 %v3616, 16
    %v3732 = vpop.permute.xlu0 %3731
    %3733 = vrot.lane.b32.xlu0 %v3617, 16
    %v3734 = vpop.permute.xlu0 %3733
    %3735 = vrot.lane.b32.xlu0 %v3618, 16
    %v3736 = vpop.permute.xlu0 %3735
    %v3737 = vsel %vm199, %v3734, %v3736
    %v3738 = vsel %vm199, %v3732, %v3734
    %v3739 = vsel %vm199, %v3730, %v3732
    %v3740 = vsel %vm199, %v3736, %v3730
    %v3745 = vrot.slane %v3740, 7
    %v3746 = vrot.slane %v3739, 7
    %v3747 = vrot.slane %v3738, 7
    %v3748 = vrot.slane %v3737, 7
    %v3749 = vrot.slane %v3740, 1
    %v3750 = vrot.slane %v3739, 1
    %v3751 = vrot.slane %v3738, 1
    %v3752 = vrot.slane %v3737, 1
    %v3753 = vrot.slane %v3740, 2
    %v3754 = vrot.slane %v3739, 2
    %v3755 = vrot.slane %v3738, 2
    %v3756 = vrot.slane %v3737, 2
    %v3757 = vrot.slane %v3740, 3
    %v3758 = vrot.slane %v3739, 3
    %v3759 = vrot.slane %v3738, 3
    %v3760 = vrot.slane %v3737, 3
    %v3761 = vrot.slane %v3740, 4
    %v3762 = vrot.slane %v3739, 4
    %v3763 = vrot.slane %v3738, 4
    %v3764 = vrot.slane %v3737, 4
    %v3765 = vrot.slane %v3740, 5
    %v3766 = vrot.slane %v3739, 5
    %v3767 = vrot.slane %v3738, 5
    %v3768 = vrot.slane %v3737, 5
    %v3769 = vrot.slane %v3740, 6
    %v3770 = vrot.slane %v3739, 6
    %v3771 = vrot.slane %v3738, 6
    %v3772 = vrot.slane %v3737, 6
    %v3805 = vsel %vm91, %v3745, 0.0
    %v3806 = vsel %vm92, %v3746, 0.0
    %v3807 = vsel %vm93, %v3747, 0.0
    %v3808 = vsel %vm94, %v3748, 0.0
    %v3809 = vsel %vm91, %v3740, 0.0
    %v3810 = vsel %vm92, %v3739, 0.0
    %v3811 = vsel %vm93, %v3738, 0.0
    %v3812 = vsel %vm94, %v3737, 0.0
    %v3813 = vsel %vm91, %v3749, 0.0
    %v3814 = vsel %vm92, %v3750, 0.0
    %v3815 = vsel %vm93, %v3751, 0.0
    %v3816 = vsel %vm94, %v3752, 0.0
    %v3817 = vsel %vm91, %v3753, 0.0
    %v3818 = vsel %vm92, %v3754, 0.0
    %v3819 = vsel %vm93, %v3755, 0.0
    %v3820 = vsel %vm94, %v3756, 0.0
    %v3821 = vsel %vm91, %v3757, 0.0
    %v3822 = vsel %vm92, %v3758, 0.0
    %v3823 = vsel %vm93, %v3759, 0.0
    %v3824 = vsel %vm94, %v3760, 0.0
    %v3825 = vsel %vm91, %v3761, 0.0
    %v3826 = vsel %vm92, %v3762, 0.0
    %v3827 = vsel %vm93, %v3763, 0.0
    %v3828 = vsel %vm94, %v3764, 0.0
    %v3829 = vsel %vm91, %v3765, 0.0
    %v3830 = vsel %vm92, %v3766, 0.0
    %v3831 = vsel %vm93, %v3767, 0.0
    %v3832 = vsel %vm94, %v3768, 0.0
    %v3833 = vsel %vm91, %v3769, 0.0
    %v3834 = vsel %vm92, %v3770, 0.0
    %v3835 = vsel %vm93, %v3771, 0.0
    %v3836 = vsel %vm94, %v3772, 0.0
    %3837 = vrot.lane.b32.xlu0 %v3615, 15
    %v3838 = vpop.permute.xlu0 %3837
    %3839 = vrot.lane.b32.xlu0 %v3616, 15
    %v3840 = vpop.permute.xlu0 %3839
    %3841 = vrot.lane.b32.xlu0 %v3617, 15
    %v3842 = vpop.permute.xlu0 %3841
    %3843 = vrot.lane.b32.xlu0 %v3618, 15
    %v3844 = vpop.permute.xlu0 %3843
    %v3845 = vsel %vm308, %v3842, %v3844
    %v3846 = vsel %vm308, %v3840, %v3842
    %v3847 = vsel %vm308, %v3838, %v3840
    %v3848 = vsel %vm308, %v3844, %v3838
    %v3853 = vrot.slane %v3848, 6
    %v3854 = vrot.slane %v3847, 6
    %v3855 = vrot.slane %v3846, 6
    %v3856 = vrot.slane %v3845, 6
    %v3857 = vrot.slane %v3848, 7
    %v3858 = vrot.slane %v3847, 7
    %v3859 = vrot.slane %v3846, 7
    %v3860 = vrot.slane %v3845, 7
    %v3861 = vrot.slane %v3848, 1
    %v3862 = vrot.slane %v3847, 1
    %v3863 = vrot.slane %v3846, 1
    %v3864 = vrot.slane %v3845, 1
    %v3865 = vrot.slane %v3848, 2
    %v3866 = vrot.slane %v3847, 2
    %v3867 = vrot.slane %v3846, 2
    %v3868 = vrot.slane %v3845, 2
    %v3869 = vrot.slane %v3848, 3
    %v3870 = vrot.slane %v3847, 3
    %v3871 = vrot.slane %v3846, 3
    %v3872 = vrot.slane %v3845, 3
    %v3873 = vrot.slane %v3848, 4
    %v3874 = vrot.slane %v3847, 4
    %v3875 = vrot.slane %v3846, 4
    %v3876 = vrot.slane %v3845, 4
    %v3877 = vrot.slane %v3848, 5
    %v3878 = vrot.slane %v3847, 5
    %v3879 = vrot.slane %v3846, 5
    %v3880 = vrot.slane %v3845, 5
    %v3913 = vsel %vm91, %v3853, 0.0
    %v3914 = vsel %vm92, %v3854, 0.0
    %v3915 = vsel %vm93, %v3855, 0.0
    %v3916 = vsel %vm94, %v3856, 0.0
    %v3917 = vsel %vm91, %v3857, 0.0
    %v3918 = vsel %vm92, %v3858, 0.0
    %v3919 = vsel %vm93, %v3859, 0.0
    %v3920 = vsel %vm94, %v3860, 0.0
    %v3921 = vsel %vm91, %v3848, 0.0
    %v3922 = vsel %vm92, %v3847, 0.0
    %v3923 = vsel %vm93, %v3846, 0.0
    %v3924 = vsel %vm94, %v3845, 0.0
    %v3925 = vsel %vm91, %v3861, 0.0
    %v3926 = vsel %vm92, %v3862, 0.0
    %v3927 = vsel %vm93, %v3863, 0.0
    %v3928 = vsel %vm94, %v3864, 0.0
    %v3929 = vsel %vm91, %v3865, 0.0
    %v3930 = vsel %vm92, %v3866, 0.0
    %v3931 = vsel %vm93, %v3867, 0.0
    %v3932 = vsel %vm94, %v3868, 0.0
    %v3933 = vsel %vm91, %v3869, 0.0
    %v3934 = vsel %vm92, %v3870, 0.0
    %v3935 = vsel %vm93, %v3871, 0.0
    %v3936 = vsel %vm94, %v3872, 0.0
    %v3937 = vsel %vm91, %v3873, 0.0
    %v3938 = vsel %vm92, %v3874, 0.0
    %v3939 = vsel %vm93, %v3875, 0.0
    %v3940 = vsel %vm94, %v3876, 0.0
    %v3941 = vsel %vm91, %v3877, 0.0
    %v3942 = vsel %vm92, %v3878, 0.0
    %v3943 = vsel %vm93, %v3879, 0.0
    %v3944 = vsel %vm94, %v3880, 0.0
    %3945 = vrot.lane.b32.xlu0 %v3615, 1
    %v3946 = vpop.permute.xlu0 %3945
    %3947 = vrot.lane.b32.xlu0 %v3616, 1
    %v3948 = vpop.permute.xlu0 %3947
    %3949 = vrot.lane.b32.xlu0 %v3617, 1
    %v3950 = vpop.permute.xlu0 %3949
    %3951 = vrot.lane.b32.xlu0 %v3618, 1
    %v3952 = vpop.permute.xlu0 %3951
    %v3953 = vsel %vm417, %v3950, %v3952
    %v3954 = vsel %vm417, %v3948, %v3950
    %v3955 = vsel %vm417, %v3946, %v3948
    %v3956 = vsel %vm417, %v3952, %v3946
    %v3961 = vrot.slane %v3956, 5
    %v3962 = vrot.slane %v3955, 5
    %v3963 = vrot.slane %v3954, 5
    %v3964 = vrot.slane %v3953, 5
    %v3965 = vrot.slane %v3956, 6
    %v3966 = vrot.slane %v3955, 6
    %v3967 = vrot.slane %v3954, 6
    %v3968 = vrot.slane %v3953, 6
    %v3969 = vrot.slane %v3956, 7
    %v3970 = vrot.slane %v3955, 7
    %v3971 = vrot.slane %v3954, 7
    %v3972 = vrot.slane %v3953, 7
    %v3973 = vrot.slane %v3956, 1
    %v3974 = vrot.slane %v3955, 1
    %v3975 = vrot.slane %v3954, 1
    %v3976 = vrot.slane %v3953, 1
    %v3977 = vrot.slane %v3956, 2
    %v3978 = vrot.slane %v3955, 2
    %v3979 = vrot.slane %v3954, 2
    %v3980 = vrot.slane %v3953, 2
    %v3981 = vrot.slane %v3956, 3
    %v3982 = vrot.slane %v3955, 3
    %v3983 = vrot.slane %v3954, 3
    %v3984 = vrot.slane %v3953, 3
    %v3985 = vrot.slane %v3956, 4
    %v3986 = vrot.slane %v3955, 4
    %v3987 = vrot.slane %v3954, 4
    %v3988 = vrot.slane %v3953, 4
    %v4021 = vsel %vm91, %v3961, 0.0
    %v4022 = vsel %vm92, %v3962, 0.0
    %v4023 = vsel %vm93, %v3963, 0.0
    %v4024 = vsel %vm94, %v3964, 0.0
    %v4025 = vsel %vm91, %v3965, 0.0
    %v4026 = vsel %vm92, %v3966, 0.0
    %v4027 = vsel %vm93, %v3967, 0.0
    %v4028 = vsel %vm94, %v3968, 0.0
    %v4029 = vsel %vm91, %v3969, 0.0
    %v4030 = vsel %vm92, %v3970, 0.0
    %v4031 = vsel %vm93, %v3971, 0.0
    %v4032 = vsel %vm94, %v3972, 0.0
    %v4033 = vsel %vm91, %v3956, 0.0
    %v4034 = vsel %vm92, %v3955, 0.0
    %v4035 = vsel %vm93, %v3954, 0.0
    %v4036 = vsel %vm94, %v3953, 0.0
    %v4037 = vsel %vm91, %v3973, 0.0
    %v4038 = vsel %vm92, %v3974, 0.0
    %v4039 = vsel %vm93, %v3975, 0.0
    %v4040 = vsel %vm94, %v3976, 0.0
    %v4041 = vsel %vm91, %v3977, 0.0
    %v4042 = vsel %vm92, %v3978, 0.0
    %v4043 = vsel %vm93, %v3979, 0.0
    %v4044 = vsel %vm94, %v3980, 0.0
    %v4045 = vsel %vm91, %v3981, 0.0
    %v4046 = vsel %vm92, %v3982, 0.0
    %v4047 = vsel %vm93, %v3983, 0.0
    %v4048 = vsel %vm94, %v3984, 0.0
    %v4049 = vsel %vm91, %v3985, 0.0
    %v4050 = vsel %vm92, %v3986, 0.0
    %v4051 = vsel %vm93, %v3987, 0.0
    %v4052 = vsel %vm94, %v3988, 0.0
    %4053 = vrot.lane.b32.xlu0 %v3615, 127
    %v4054 = vpop.permute.xlu0 %4053
    %4055 = vrot.lane.b32.xlu0 %v3616, 127
    %v4056 = vpop.permute.xlu0 %4055
    %4057 = vrot.lane.b32.xlu0 %v3617, 127
    %v4058 = vpop.permute.xlu0 %4057
    %4059 = vrot.lane.b32.xlu0 %v3618, 127
    %v4060 = vpop.permute.xlu0 %4059
    %v4061 = vsel %vm526, %v4058, %v4060
    %v4062 = vsel %vm526, %v4056, %v4058
    %v4063 = vsel %vm526, %v4054, %v4056
    %v4064 = vsel %vm526, %v4060, %v4054
    %v4069 = vrot.slane %v4063, 3
    %v4070 = vrot.slane %v4062, 3
    %v4071 = vrot.slane %v4061, 3
    %v4072 = vrot.slane %v4064, 3
    %v4073 = vrot.slane %v4063, 4
    %v4074 = vrot.slane %v4062, 4
    %v4075 = vrot.slane %v4061, 4
    %v4076 = vrot.slane %v4064, 4
    %v4077 = vrot.slane %v4063, 5
    %v4078 = vrot.slane %v4062, 5
    %v4079 = vrot.slane %v4061, 5
    %v4080 = vrot.slane %v4064, 5
    %v4081 = vrot.slane %v4063, 6
    %v4082 = vrot.slane %v4062, 6
    %v4083 = vrot.slane %v4061, 6
    %v4084 = vrot.slane %v4064, 6
    %v4085 = vrot.slane %v4063, 7
    %v4086 = vrot.slane %v4062, 7
    %v4087 = vrot.slane %v4061, 7
    %v4088 = vrot.slane %v4064, 7
    %v4089 = vrot.slane %v4063, 1
    %v4090 = vrot.slane %v4062, 1
    %v4091 = vrot.slane %v4061, 1
    %v4092 = vrot.slane %v4064, 1
    %v4093 = vrot.slane %v4063, 2
    %v4094 = vrot.slane %v4062, 2
    %v4095 = vrot.slane %v4061, 2
    %v4096 = vrot.slane %v4064, 2
    %v4129 = vsel %vm91, %v4069, 0.0
    %v4130 = vsel %vm92, %v4070, 0.0
    %v4131 = vsel %vm93, %v4071, 0.0
    %v4132 = vsel %vm94, %v4072, 0.0
    %v4133 = vsel %vm91, %v4073, 0.0
    %v4134 = vsel %vm92, %v4074, 0.0
    %v4135 = vsel %vm93, %v4075, 0.0
    %v4136 = vsel %vm94, %v4076, 0.0
    %v4137 = vsel %vm91, %v4077, 0.0
    %v4138 = vsel %vm92, %v4078, 0.0
    %v4139 = vsel %vm93, %v4079, 0.0
    %v4140 = vsel %vm94, %v4080, 0.0
    %v4141 = vsel %vm91, %v4081, 0.0
    %v4142 = vsel %vm92, %v4082, 0.0
    %v4143 = vsel %vm93, %v4083, 0.0
    %v4144 = vsel %vm94, %v4084, 0.0
    %v4145 = vsel %vm91, %v4085, 0.0
    %v4146 = vsel %vm92, %v4086, 0.0
    %v4147 = vsel %vm93, %v4087, 0.0
    %v4148 = vsel %vm94, %v4088, 0.0
    %v4149 = vsel %vm91, %v4063, 0.0
    %v4150 = vsel %vm92, %v4062, 0.0
    %v4151 = vsel %vm93, %v4061, 0.0
    %v4152 = vsel %vm94, %v4064, 0.0
    %v4153 = vsel %vm91, %v4089, 0.0
    %v4154 = vsel %vm92, %v4090, 0.0
    %v4155 = vsel %vm93, %v4091, 0.0
    %v4156 = vsel %vm94, %v4092, 0.0
    %v4157 = vsel %vm91, %v4093, 0.0
    %v4158 = vsel %vm92, %v4094, 0.0
    %v4159 = vsel %vm93, %v4095, 0.0
    %v4160 = vsel %vm94, %v4096, 0.0
    %4161 = vrot.lane.b32.xlu0 %v3615, 113
    %v4162 = vpop.permute.xlu0 %4161
    %4163 = vrot.lane.b32.xlu0 %v3616, 113
    %v4164 = vpop.permute.xlu0 %4163
    %4165 = vrot.lane.b32.xlu0 %v3617, 113
    %v4166 = vpop.permute.xlu0 %4165
    %4167 = vrot.lane.b32.xlu0 %v3618, 113
    %v4168 = vpop.permute.xlu0 %4167
    %v4169 = vsel %vm635, %v4166, %v4168
    %v4170 = vsel %vm635, %v4164, %v4166
    %v4171 = vsel %vm635, %v4162, %v4164
    %v4172 = vsel %vm635, %v4168, %v4162
    %v4177 = vrot.slane %v4171, 2
    %v4178 = vrot.slane %v4170, 2
    %v4179 = vrot.slane %v4169, 2
    %v4180 = vrot.slane %v4172, 2
    %v4181 = vrot.slane %v4171, 3
    %v4182 = vrot.slane %v4170, 3
    %v4183 = vrot.slane %v4169, 3
    %v4184 = vrot.slane %v4172, 3
    %v4185 = vrot.slane %v4171, 4
    %v4186 = vrot.slane %v4170, 4
    %v4187 = vrot.slane %v4169, 4
    %v4188 = vrot.slane %v4172, 4
    %v4189 = vrot.slane %v4171, 5
    %v4190 = vrot.slane %v4170, 5
    %v4191 = vrot.slane %v4169, 5
    %v4192 = vrot.slane %v4172, 5
    %v4193 = vrot.slane %v4171, 6
    %v4194 = vrot.slane %v4170, 6
    %v4195 = vrot.slane %v4169, 6
    %v4196 = vrot.slane %v4172, 6
    %v4197 = vrot.slane %v4171, 7
    %v4198 = vrot.slane %v4170, 7
    %v4199 = vrot.slane %v4169, 7
    %v4200 = vrot.slane %v4172, 7
    %v4201 = vrot.slane %v4171, 1
    %v4202 = vrot.slane %v4170, 1
    %v4203 = vrot.slane %v4169, 1
    %v4204 = vrot.slane %v4172, 1
    %v4237 = vsel %vm91, %v4177, 0.0
    %v4238 = vsel %vm92, %v4178, 0.0
    %v4239 = vsel %vm93, %v4179, 0.0
    %v4240 = vsel %vm94, %v4180, 0.0
    %v4241 = vsel %vm91, %v4181, 0.0
    %v4242 = vsel %vm92, %v4182, 0.0
    %v4243 = vsel %vm93, %v4183, 0.0
    %v4244 = vsel %vm94, %v4184, 0.0
    %v4245 = vsel %vm91, %v4185, 0.0
    %v4246 = vsel %vm92, %v4186, 0.0
    %v4247 = vsel %vm93, %v4187, 0.0
    %v4248 = vsel %vm94, %v4188, 0.0
    %v4249 = vsel %vm91, %v4189, 0.0
    %v4250 = vsel %vm92, %v4190, 0.0
    %v4251 = vsel %vm93, %v4191, 0.0
    %v4252 = vsel %vm94, %v4192, 0.0
    %v4253 = vsel %vm91, %v4193, 0.0
    %v4254 = vsel %vm92, %v4194, 0.0
    %v4255 = vsel %vm93, %v4195, 0.0
    %v4256 = vsel %vm94, %v4196, 0.0
    %v4257 = vsel %vm91, %v4197, 0.0
    %v4258 = vsel %vm92, %v4198, 0.0
    %v4259 = vsel %vm93, %v4199, 0.0
    %v4260 = vsel %vm94, %v4200, 0.0
    %v4261 = vsel %vm91, %v4171, 0.0
    %v4262 = vsel %vm92, %v4170, 0.0
    %v4263 = vsel %vm93, %v4169, 0.0
    %v4264 = vsel %vm94, %v4172, 0.0
    %v4265 = vsel %vm91, %v4201, 0.0
    %v4266 = vsel %vm92, %v4202, 0.0
    %v4267 = vsel %vm93, %v4203, 0.0
    %v4268 = vsel %vm94, %v4204, 0.0
    %4269 = vrot.lane.b32.xlu0 %v3615, 112
    %v4270 = vpop.permute.xlu0 %4269
    %4271 = vrot.lane.b32.xlu0 %v3616, 112
    %v4272 = vpop.permute.xlu0 %4271
    %4273 = vrot.lane.b32.xlu0 %v3617, 112
    %v4274 = vpop.permute.xlu0 %4273
    %4275 = vrot.lane.b32.xlu0 %v3618, 112
    %v4276 = vpop.permute.xlu0 %4275
    %v4277 = vsel %vm744, %v4274, %v4276
    %v4278 = vsel %vm744, %v4272, %v4274
    %v4279 = vsel %vm744, %v4270, %v4272
    %v4280 = vsel %vm744, %v4276, %v4270
    %v4285 = vrot.slane %v4279, 1
    %v4286 = vrot.slane %v4278, 1
    %v4287 = vrot.slane %v4277, 1
    %v4288 = vrot.slane %v4280, 1
    %v4289 = vrot.slane %v4279, 2
    %v4290 = vrot.slane %v4278, 2
    %v4291 = vrot.slane %v4277, 2
    %v4292 = vrot.slane %v4280, 2
    %v4293 = vrot.slane %v4279, 3
    %v4294 = vrot.slane %v4278, 3
    %v4295 = vrot.slane %v4277, 3
    %v4296 = vrot.slane %v4280, 3
    %v4297 = vrot.slane %v4279, 4
    %v4298 = vrot.slane %v4278, 4
    %v4299 = vrot.slane %v4277, 4
    %v4300 = vrot.slane %v4280, 4
    %v4301 = vrot.slane %v4279, 5
    %v4302 = vrot.slane %v4278, 5
    %v4303 = vrot.slane %v4277, 5
    %v4304 = vrot.slane %v4280, 5
    %v4305 = vrot.slane %v4279, 6
    %v4306 = vrot.slane %v4278, 6
    %v4307 = vrot.slane %v4277, 6
    %v4308 = vrot.slane %v4280, 6
    %v4309 = vrot.slane %v4279, 7
    %v4310 = vrot.slane %v4278, 7
    %v4311 = vrot.slane %v4277, 7
    %v4312 = vrot.slane %v4280, 7
    %v4345 = vsel %vm91, %v4285, 0.0
    %v4346 = vsel %vm92, %v4286, 0.0
    %v4347 = vsel %vm93, %v4287, 0.0
    %v4348 = vsel %vm94, %v4288, 0.0
    %v4349 = vsel %vm91, %v4289, 0.0
    %v4350 = vsel %vm92, %v4290, 0.0
    %v4351 = vsel %vm93, %v4291, 0.0
    %v4352 = vsel %vm94, %v4292, 0.0
    %v4353 = vsel %vm91, %v4293, 0.0
    %v4354 = vsel %vm92, %v4294, 0.0
    %v4355 = vsel %vm93, %v4295, 0.0
    %v4356 = vsel %vm94, %v4296, 0.0
    %v4357 = vsel %vm91, %v4297, 0.0
    %v4358 = vsel %vm92, %v4298, 0.0
    %v4359 = vsel %vm93, %v4299, 0.0
    %v4360 = vsel %vm94, %v4300, 0.0
    %v4361 = vsel %vm91, %v4301, 0.0
    %v4362 = vsel %vm92, %v4302, 0.0
    %v4363 = vsel %vm93, %v4303, 0.0
    %v4364 = vsel %vm94, %v4304, 0.0
    %v4365 = vsel %vm91, %v4305, 0.0
    %v4366 = vsel %vm92, %v4306, 0.0
    %v4367 = vsel %vm93, %v4307, 0.0
    %v4368 = vsel %vm94, %v4308, 0.0
    %v4369 = vsel %vm91, %v4309, 0.0
    %v4370 = vsel %vm92, %v4310, 0.0
    %v4371 = vsel %vm93, %v4311, 0.0
    %v4372 = vsel %vm94, %v4312, 0.0
    %v4373 = vsel %vm91, %v4279, 0.0
    %v4374 = vsel %vm92, %v4278, 0.0
    %v4375 = vsel %vm93, %v4277, 0.0
    %v4376 = vsel %vm94, %v4280, 0.0
    %4377 = vrot.lane.b32.xlu0 %v3615, 111
    %v4378 = vpop.permute.xlu0 %4377
    %4379 = vrot.lane.b32.xlu0 %v3616, 111
    %v4380 = vpop.permute.xlu0 %4379
    %4381 = vrot.lane.b32.xlu0 %v3617, 111
    %v4382 = vpop.permute.xlu0 %4381
    %4383 = vrot.lane.b32.xlu0 %v3618, 111
    %v4384 = vpop.permute.xlu0 %4383
    %v4385 = vsel %vm853, %v4382, %v4384
    %v4386 = vsel %vm853, %v4380, %v4382
    %v4387 = vsel %vm853, %v4378, %v4380
    %v4388 = vsel %vm853, %v4384, %v4378
    %v4393 = vrot.slane %v4387, 1
    %v4394 = vrot.slane %v4386, 1
    %v4395 = vrot.slane %v4385, 1
    %v4396 = vrot.slane %v4388, 1
    %v4397 = vrot.slane %v4387, 2
    %v4398 = vrot.slane %v4386, 2
    %v4399 = vrot.slane %v4385, 2
    %v4400 = vrot.slane %v4388, 2
    %v4401 = vrot.slane %v4387, 3
    %v4402 = vrot.slane %v4386, 3
    %v4403 = vrot.slane %v4385, 3
    %v4404 = vrot.slane %v4388, 3
    %v4405 = vrot.slane %v4387, 4
    %v4406 = vrot.slane %v4386, 4
    %v4407 = vrot.slane %v4385, 4
    %v4408 = vrot.slane %v4388, 4
    %v4409 = vrot.slane %v4387, 5
    %v4410 = vrot.slane %v4386, 5
    %v4411 = vrot.slane %v4385, 5
    %v4412 = vrot.slane %v4388, 5
    %v4413 = vrot.slane %v4387, 6
    %v4414 = vrot.slane %v4386, 6
    %v4415 = vrot.slane %v4385, 6
    %v4416 = vrot.slane %v4388, 6
    %v4417 = vrot.slane %v4387, 7
    %v4418 = vrot.slane %v4386, 7
    %v4419 = vrot.slane %v4385, 7
    %v4420 = vrot.slane %v4388, 7
    %v4453 = vsel %vm862, %v4387, 0.0
    %v4454 = vsel %vm863, %v4386, 0.0
    %v4455 = vsel %vm864, %v4385, 0.0
    %v4456 = vsel %vm865, %v4388, 0.0
    %v4457 = vsel %vm862, %v4393, 0.0
    %v4458 = vsel %vm863, %v4394, 0.0
    %v4459 = vsel %vm864, %v4395, 0.0
    %v4460 = vsel %vm865, %v4396, 0.0
    %v4461 = vsel %vm862, %v4397, 0.0
    %v4462 = vsel %vm863, %v4398, 0.0
    %v4463 = vsel %vm864, %v4399, 0.0
    %v4464 = vsel %vm865, %v4400, 0.0
    %v4465 = vsel %vm862, %v4401, 0.0
    %v4466 = vsel %vm863, %v4402, 0.0
    %v4467 = vsel %vm864, %v4403, 0.0
    %v4468 = vsel %vm865, %v4404, 0.0
    %v4469 = vsel %vm862, %v4405, 0.0
    %v4470 = vsel %vm863, %v4406, 0.0
    %v4471 = vsel %vm864, %v4407, 0.0
    %v4472 = vsel %vm865, %v4408, 0.0
    %v4473 = vsel %vm862, %v4409, 0.0
    %v4474 = vsel %vm863, %v4410, 0.0
    %v4475 = vsel %vm864, %v4411, 0.0
    %v4476 = vsel %vm865, %v4412, 0.0
    %v4477 = vsel %vm862, %v4413, 0.0
    %v4478 = vsel %vm863, %v4414, 0.0
    %v4479 = vsel %vm864, %v4415, 0.0
    %v4480 = vsel %vm865, %v4416, 0.0
    %v4481 = vsel %vm862, %v4417, 0.0
    %v4482 = vsel %vm863, %v4418, 0.0
    %v4483 = vsel %vm864, %v4419, 0.0
    %v4484 = vsel %vm865, %v4420, 0.0
    %v4517 = vrot.slane %v3701, 7
    %v4518 = vsel %vm995, %v4517, %v3697
    %v4519 = vrot.slane %v3705, 6
    %v4520 = vsel %vm998, %v4519, %v4518
    %v4521 = vrot.slane %v3709, 5
    %v4522 = vsel %vm1001, %v4521, %v4520
    %v4523 = vrot.slane %v3713, 4
    %v4524 = vsel %vm1004, %v4523, %v4522
    %v4525 = vrot.slane %v3717, 3
    %v4526 = vsel %vm1007, %v4525, %v4524
    %v4527 = vrot.slane %v3721, 2
    %v4528 = vsel %vm1010, %v4527, %v4526
    %v4529 = vrot.slane %v3725, 1
    %v4530 = vsel %vm1013, %v4529, %v4528
    %v4531 = vrot.slane %v3702, 7
    %v4532 = vsel %vm995, %v4531, %v3698
    %v4533 = vrot.slane %v3706, 6
    %v4534 = vsel %vm998, %v4533, %v4532
    %v4535 = vrot.slane %v3710, 5
    %v4536 = vsel %vm1001, %v4535, %v4534
    %v4537 = vrot.slane %v3714, 4
    %v4538 = vsel %vm1004, %v4537, %v4536
    %v4539 = vrot.slane %v3718, 3
    %v4540 = vsel %vm1007, %v4539, %v4538
    %v4541 = vrot.slane %v3722, 2
    %v4542 = vsel %vm1010, %v4541, %v4540
    %v4543 = vrot.slane %v3726, 1
    %v4544 = vsel %vm1013, %v4543, %v4542
    %v4545 = vrot.slane %v3703, 7
    %v4546 = vsel %vm995, %v4545, %v3699
    %v4547 = vrot.slane %v3707, 6
    %v4548 = vsel %vm998, %v4547, %v4546
    %v4549 = vrot.slane %v3711, 5
    %v4550 = vsel %vm1001, %v4549, %v4548
    %v4551 = vrot.slane %v3715, 4
    %v4552 = vsel %vm1004, %v4551, %v4550
    %v4553 = vrot.slane %v3719, 3
    %v4554 = vsel %vm1007, %v4553, %v4552
    %v4555 = vrot.slane %v3723, 2
    %v4556 = vsel %vm1010, %v4555, %v4554
    %v4557 = vrot.slane %v3727, 1
    %v4558 = vsel %vm1013, %v4557, %v4556
    %v4559 = vrot.slane %v3704, 7
    %v4560 = vsel %vm995, %v4559, %v3700
    %v4561 = vrot.slane %v3708, 6
    %v4562 = vsel %vm998, %v4561, %v4560
    %v4563 = vrot.slane %v3712, 5
    %v4564 = vsel %vm1001, %v4563, %v4562
    %v4565 = vrot.slane %v3716, 4
    %v4566 = vsel %vm1004, %v4565, %v4564
    %v4567 = vrot.slane %v3720, 3
    %v4568 = vsel %vm1007, %v4567, %v4566
    %v4569 = vrot.slane %v3724, 2
    %v4570 = vsel %vm1010, %v4569, %v4568
    %v4571 = vrot.slane %v3728, 1
    %v4572 = vsel %vm1013, %v4571, %v4570
    %v4609 = vrot.slane %v3805, 1
    %v4610 = vsel %vm995, %v3809, %v4609
    %v4611 = vrot.slane %v3813, 7
    %v4612 = vsel %vm998, %v4611, %v4610
    %v4613 = vrot.slane %v3817, 6
    %v4614 = vsel %vm1001, %v4613, %v4612
    %v4615 = vrot.slane %v3821, 5
    %v4616 = vsel %vm1004, %v4615, %v4614
    %v4617 = vrot.slane %v3825, 4
    %v4618 = vsel %vm1007, %v4617, %v4616
    %v4619 = vrot.slane %v3829, 3
    %v4620 = vsel %vm1010, %v4619, %v4618
    %v4621 = vrot.slane %v3833, 2
    %v4622 = vsel %vm1013, %v4621, %v4620
    %v4623 = vrot.slane %v3806, 1
    %v4624 = vsel %vm995, %v3810, %v4623
    %v4625 = vrot.slane %v3814, 7
    %v4626 = vsel %vm998, %v4625, %v4624
    %v4627 = vrot.slane %v3818, 6
    %v4628 = vsel %vm1001, %v4627, %v4626
    %v4629 = vrot.slane %v3822, 5
    %v4630 = vsel %vm1004, %v4629, %v4628
    %v4631 = vrot.slane %v3826, 4
    %v4632 = vsel %vm1007, %v4631, %v4630
    %v4633 = vrot.slane %v3830, 3
    %v4634 = vsel %vm1010, %v4633, %v4632
    %v4635 = vrot.slane %v3834, 2
    %v4636 = vsel %vm1013, %v4635, %v4634
    %v4637 = vrot.slane %v3807, 1
    %v4638 = vsel %vm995, %v3811, %v4637
    %v4639 = vrot.slane %v3815, 7
    %v4640 = vsel %vm998, %v4639, %v4638
    %v4641 = vrot.slane %v3819, 6
    %v4642 = vsel %vm1001, %v4641, %v4640
    %v4643 = vrot.slane %v3823, 5
    %v4644 = vsel %vm1004, %v4643, %v4642
    %v4645 = vrot.slane %v3827, 4
    %v4646 = vsel %vm1007, %v4645, %v4644
    %v4647 = vrot.slane %v3831, 3
    %v4648 = vsel %vm1010, %v4647, %v4646
    %v4649 = vrot.slane %v3835, 2
    %v4650 = vsel %vm1013, %v4649, %v4648
    %v4651 = vrot.slane %v3808, 1
    %v4652 = vsel %vm995, %v3812, %v4651
    %v4653 = vrot.slane %v3816, 7
    %v4654 = vsel %vm998, %v4653, %v4652
    %v4655 = vrot.slane %v3820, 6
    %v4656 = vsel %vm1001, %v4655, %v4654
    %v4657 = vrot.slane %v3824, 5
    %v4658 = vsel %vm1004, %v4657, %v4656
    %v4659 = vrot.slane %v3828, 4
    %v4660 = vsel %vm1007, %v4659, %v4658
    %v4661 = vrot.slane %v3832, 3
    %v4662 = vsel %vm1010, %v4661, %v4660
    %v4663 = vrot.slane %v3836, 2
    %v4664 = vsel %vm1013, %v4663, %v4662
    %v4701 = vrot.slane %v3913, 2
    %v4702 = vrot.slane %v3917, 1
    %v4703 = vsel %vm995, %v4702, %v4701
    %v4704 = vsel %vm998, %v3921, %v4703
    %v4705 = vrot.slane %v3925, 7
    %v4706 = vsel %vm1001, %v4705, %v4704
    %v4707 = vrot.slane %v3929, 6
    %v4708 = vsel %vm1004, %v4707, %v4706
    %v4709 = vrot.slane %v3933, 5
    %v4710 = vsel %vm1007, %v4709, %v4708
    %v4711 = vrot.slane %v3937, 4
    %v4712 = vsel %vm1010, %v4711, %v4710
    %v4713 = vrot.slane %v3941, 3
    %v4714 = vsel %vm1013, %v4713, %v4712
    %v4715 = vrot.slane %v3914, 2
    %v4716 = vrot.slane %v3918, 1
    %v4717 = vsel %vm995, %v4716, %v4715
    %v4718 = vsel %vm998, %v3922, %v4717
    %v4719 = vrot.slane %v3926, 7
    %v4720 = vsel %vm1001, %v4719, %v4718
    %v4721 = vrot.slane %v3930, 6
    %v4722 = vsel %vm1004, %v4721, %v4720
    %v4723 = vrot.slane %v3934, 5
    %v4724 = vsel %vm1007, %v4723, %v4722
    %v4725 = vrot.slane %v3938, 4
    %v4726 = vsel %vm1010, %v4725, %v4724
    %v4727 = vrot.slane %v3942, 3
    %v4728 = vsel %vm1013, %v4727, %v4726
    %v4729 = vrot.slane %v3915, 2
    %v4730 = vrot.slane %v3919, 1
    %v4731 = vsel %vm995, %v4730, %v4729
    %v4732 = vsel %vm998, %v3923, %v4731
    %v4733 = vrot.slane %v3927, 7
    %v4734 = vsel %vm1001, %v4733, %v4732
    %v4735 = vrot.slane %v3931, 6
    %v4736 = vsel %vm1004, %v4735, %v4734
    %v4737 = vrot.slane %v3935, 5
    %v4738 = vsel %vm1007, %v4737, %v4736
    %v4739 = vrot.slane %v3939, 4
    %v4740 = vsel %vm1010, %v4739, %v4738
    %v4741 = vrot.slane %v3943, 3
    %v4742 = vsel %vm1013, %v4741, %v4740
    %v4743 = vrot.slane %v3916, 2
    %v4744 = vrot.slane %v3920, 1
    %v4745 = vsel %vm995, %v4744, %v4743
    %v4746 = vsel %vm998, %v3924, %v4745
    %v4747 = vrot.slane %v3928, 7
    %v4748 = vsel %vm1001, %v4747, %v4746
    %v4749 = vrot.slane %v3932, 6
    %v4750 = vsel %vm1004, %v4749, %v4748
    %v4751 = vrot.slane %v3936, 5
    %v4752 = vsel %vm1007, %v4751, %v4750
    %v4753 = vrot.slane %v3940, 4
    %v4754 = vsel %vm1010, %v4753, %v4752
    %v4755 = vrot.slane %v3944, 3
    %v4756 = vsel %vm1013, %v4755, %v4754
    %v4793 = vrot.slane %v4021, 3
    %v4794 = vrot.slane %v4025, 2
    %v4795 = vsel %vm995, %v4794, %v4793
    %v4796 = vrot.slane %v4029, 1
    %v4797 = vsel %vm998, %v4796, %v4795
    %v4798 = vsel %vm1001, %v4033, %v4797
    %v4799 = vrot.slane %v4037, 7
    %v4800 = vsel %vm1004, %v4799, %v4798
    %v4801 = vrot.slane %v4041, 6
    %v4802 = vsel %vm1007, %v4801, %v4800
    %v4803 = vrot.slane %v4045, 5
    %v4804 = vsel %vm1010, %v4803, %v4802
    %v4805 = vrot.slane %v4049, 4
    %v4806 = vsel %vm1013, %v4805, %v4804
    %v4807 = vrot.slane %v4022, 3
    %v4808 = vrot.slane %v4026, 2
    %v4809 = vsel %vm995, %v4808, %v4807
    %v4810 = vrot.slane %v4030, 1
    %v4811 = vsel %vm998, %v4810, %v4809
    %v4812 = vsel %vm1001, %v4034, %v4811
    %v4813 = vrot.slane %v4038, 7
    %v4814 = vsel %vm1004, %v4813, %v4812
    %v4815 = vrot.slane %v4042, 6
    %v4816 = vsel %vm1007, %v4815, %v4814
    %v4817 = vrot.slane %v4046, 5
    %v4818 = vsel %vm1010, %v4817, %v4816
    %v4819 = vrot.slane %v4050, 4
    %v4820 = vsel %vm1013, %v4819, %v4818
    %v4821 = vrot.slane %v4023, 3
    %v4822 = vrot.slane %v4027, 2
    %v4823 = vsel %vm995, %v4822, %v4821
    %v4824 = vrot.slane %v4031, 1
    %v4825 = vsel %vm998, %v4824, %v4823
    %v4826 = vsel %vm1001, %v4035, %v4825
    %v4827 = vrot.slane %v4039, 7
    %v4828 = vsel %vm1004, %v4827, %v4826
    %v4829 = vrot.slane %v4043, 6
    %v4830 = vsel %vm1007, %v4829, %v4828
    %v4831 = vrot.slane %v4047, 5
    %v4832 = vsel %vm1010, %v4831, %v4830
    %v4833 = vrot.slane %v4051, 4
    %v4834 = vsel %vm1013, %v4833, %v4832
    %v4835 = vrot.slane %v4024, 3
    %v4836 = vrot.slane %v4028, 2
    %v4837 = vsel %vm995, %v4836, %v4835
    %v4838 = vrot.slane %v4032, 1
    %v4839 = vsel %vm998, %v4838, %v4837
    %v4840 = vsel %vm1001, %v4036, %v4839
    %v4841 = vrot.slane %v4040, 7
    %v4842 = vsel %vm1004, %v4841, %v4840
    %v4843 = vrot.slane %v4044, 6
    %v4844 = vsel %vm1007, %v4843, %v4842
    %v4845 = vrot.slane %v4048, 5
    %v4846 = vsel %vm1010, %v4845, %v4844
    %v4847 = vrot.slane %v4052, 4
    %v4848 = vsel %vm1013, %v4847, %v4846
    %v4885 = vrot.slane %v4129, 5
    %v4886 = vrot.slane %v4133, 4
    %v4887 = vsel %vm995, %v4886, %v4885
    %v4888 = vrot.slane %v4137, 3
    %v4889 = vsel %vm998, %v4888, %v4887
    %v4890 = vrot.slane %v4141, 2
    %v4891 = vsel %vm1001, %v4890, %v4889
    %v4892 = vrot.slane %v4145, 1
    %v4893 = vsel %vm1004, %v4892, %v4891
    %v4894 = vsel %vm1007, %v4149, %v4893
    %v4895 = vrot.slane %v4153, 7
    %v4896 = vsel %vm1010, %v4895, %v4894
    %v4897 = vrot.slane %v4157, 6
    %v4898 = vsel %vm1013, %v4897, %v4896
    %v4899 = vrot.slane %v4130, 5
    %v4900 = vrot.slane %v4134, 4
    %v4901 = vsel %vm995, %v4900, %v4899
    %v4902 = vrot.slane %v4138, 3
    %v4903 = vsel %vm998, %v4902, %v4901
    %v4904 = vrot.slane %v4142, 2
    %v4905 = vsel %vm1001, %v4904, %v4903
    %v4906 = vrot.slane %v4146, 1
    %v4907 = vsel %vm1004, %v4906, %v4905
    %v4908 = vsel %vm1007, %v4150, %v4907
    %v4909 = vrot.slane %v4154, 7
    %v4910 = vsel %vm1010, %v4909, %v4908
    %v4911 = vrot.slane %v4158, 6
    %v4912 = vsel %vm1013, %v4911, %v4910
    %v4913 = vrot.slane %v4131, 5
    %v4914 = vrot.slane %v4135, 4
    %v4915 = vsel %vm995, %v4914, %v4913
    %v4916 = vrot.slane %v4139, 3
    %v4917 = vsel %vm998, %v4916, %v4915
    %v4918 = vrot.slane %v4143, 2
    %v4919 = vsel %vm1001, %v4918, %v4917
    %v4920 = vrot.slane %v4147, 1
    %v4921 = vsel %vm1004, %v4920, %v4919
    %v4922 = vsel %vm1007, %v4151, %v4921
    %v4923 = vrot.slane %v4155, 7
    %v4924 = vsel %vm1010, %v4923, %v4922
    %v4925 = vrot.slane %v4159, 6
    %v4926 = vsel %vm1013, %v4925, %v4924
    %v4927 = vrot.slane %v4132, 5
    %v4928 = vrot.slane %v4136, 4
    %v4929 = vsel %vm995, %v4928, %v4927
    %v4930 = vrot.slane %v4140, 3
    %v4931 = vsel %vm998, %v4930, %v4929
    %v4932 = vrot.slane %v4144, 2
    %v4933 = vsel %vm1001, %v4932, %v4931
    %v4934 = vrot.slane %v4148, 1
    %v4935 = vsel %vm1004, %v4934, %v4933
    %v4936 = vsel %vm1007, %v4152, %v4935
    %v4937 = vrot.slane %v4156, 7
    %v4938 = vsel %vm1010, %v4937, %v4936
    %v4939 = vrot.slane %v4160, 6
    %v4940 = vsel %vm1013, %v4939, %v4938
    %v4977 = vrot.slane %v4237, 6
    %v4978 = vrot.slane %v4241, 5
    %v4979 = vsel %vm995, %v4978, %v4977
    %v4980 = vrot.slane %v4245, 4
    %v4981 = vsel %vm998, %v4980, %v4979
    %v4982 = vrot.slane %v4249, 3
    %v4983 = vsel %vm1001, %v4982, %v4981
    %v4984 = vrot.slane %v4253, 2
    %v4985 = vsel %vm1004, %v4984, %v4983
    %v4986 = vrot.slane %v4257, 1
    %v4987 = vsel %vm1007, %v4986, %v4985
    %v4988 = vsel %vm1010, %v4261, %v4987
    %v4989 = vrot.slane %v4265, 7
    %v4990 = vsel %vm1013, %v4989, %v4988
    %v4991 = vrot.slane %v4238, 6
    %v4992 = vrot.slane %v4242, 5
    %v4993 = vsel %vm995, %v4992, %v4991
    %v4994 = vrot.slane %v4246, 4
    %v4995 = vsel %vm998, %v4994, %v4993
    %v4996 = vrot.slane %v4250, 3
    %v4997 = vsel %vm1001, %v4996, %v4995
    %v4998 = vrot.slane %v4254, 2
    %v4999 = vsel %vm1004, %v4998, %v4997
    %v5000 = vrot.slane %v4258, 1
    %v5001 = vsel %vm1007, %v5000, %v4999
    %v5002 = vsel %vm1010, %v4262, %v5001
    %v5003 = vrot.slane %v4266, 7
    %v5004 = vsel %vm1013, %v5003, %v5002
    %v5005 = vrot.slane %v4239, 6
    %v5006 = vrot.slane %v4243, 5
    %v5007 = vsel %vm995, %v5006, %v5005
    %v5008 = vrot.slane %v4247, 4
    %v5009 = vsel %vm998, %v5008, %v5007
    %v5010 = vrot.slane %v4251, 3
    %v5011 = vsel %vm1001, %v5010, %v5009
    %v5012 = vrot.slane %v4255, 2
    %v5013 = vsel %vm1004, %v5012, %v5011
    %v5014 = vrot.slane %v4259, 1
    %v5015 = vsel %vm1007, %v5014, %v5013
    %v5016 = vsel %vm1010, %v4263, %v5015
    %v5017 = vrot.slane %v4267, 7
    %v5018 = vsel %vm1013, %v5017, %v5016
    %v5019 = vrot.slane %v4240, 6
    %v5020 = vrot.slane %v4244, 5
    %v5021 = vsel %vm995, %v5020, %v5019
    %v5022 = vrot.slane %v4248, 4
    %v5023 = vsel %vm998, %v5022, %v5021
    %v5024 = vrot.slane %v4252, 3
    %v5025 = vsel %vm1001, %v5024, %v5023
    %v5026 = vrot.slane %v4256, 2
    %v5027 = vsel %vm1004, %v5026, %v5025
    %v5028 = vrot.slane %v4260, 1
    %v5029 = vsel %vm1007, %v5028, %v5027
    %v5030 = vsel %vm1010, %v4264, %v5029
    %v5031 = vrot.slane %v4268, 7
    %v5032 = vsel %vm1013, %v5031, %v5030
    %v5069 = vrot.slane %v4345, 7
    %v5070 = vrot.slane %v4349, 6
    %v5071 = vsel %vm995, %v5070, %v5069
    %v5072 = vrot.slane %v4353, 5
    %v5073 = vsel %vm998, %v5072, %v5071
    %v5074 = vrot.slane %v4357, 4
    %v5075 = vsel %vm1001, %v5074, %v5073
    %v5076 = vrot.slane %v4361, 3
    %v5077 = vsel %vm1004, %v5076, %v5075
    %v5078 = vrot.slane %v4365, 2
    %v5079 = vsel %vm1007, %v5078, %v5077
    %v5080 = vrot.slane %v4369, 1
    %v5081 = vsel %vm1010, %v5080, %v5079
    %v5082 = vsel %vm1013, %v4373, %v5081
    %v5083 = vrot.slane %v4346, 7
    %v5084 = vrot.slane %v4350, 6
    %v5085 = vsel %vm995, %v5084, %v5083
    %v5086 = vrot.slane %v4354, 5
    %v5087 = vsel %vm998, %v5086, %v5085
    %v5088 = vrot.slane %v4358, 4
    %v5089 = vsel %vm1001, %v5088, %v5087
    %v5090 = vrot.slane %v4362, 3
    %v5091 = vsel %vm1004, %v5090, %v5089
    %v5092 = vrot.slane %v4366, 2
    %v5093 = vsel %vm1007, %v5092, %v5091
    %v5094 = vrot.slane %v4370, 1
    %v5095 = vsel %vm1010, %v5094, %v5093
    %v5096 = vsel %vm1013, %v4374, %v5095
    %v5097 = vrot.slane %v4347, 7
    %v5098 = vrot.slane %v4351, 6
    %v5099 = vsel %vm995, %v5098, %v5097
    %v5100 = vrot.slane %v4355, 5
    %v5101 = vsel %vm998, %v5100, %v5099
    %v5102 = vrot.slane %v4359, 4
    %v5103 = vsel %vm1001, %v5102, %v5101
    %v5104 = vrot.slane %v4363, 3
    %v5105 = vsel %vm1004, %v5104, %v5103
    %v5106 = vrot.slane %v4367, 2
    %v5107 = vsel %vm1007, %v5106, %v5105
    %v5108 = vrot.slane %v4371, 1
    %v5109 = vsel %vm1010, %v5108, %v5107
    %v5110 = vsel %vm1013, %v4375, %v5109
    %v5111 = vrot.slane %v4348, 7
    %v5112 = vrot.slane %v4352, 6
    %v5113 = vsel %vm995, %v5112, %v5111
    %v5114 = vrot.slane %v4356, 5
    %v5115 = vsel %vm998, %v5114, %v5113
    %v5116 = vrot.slane %v4360, 4
    %v5117 = vsel %vm1001, %v5116, %v5115
    %v5118 = vrot.slane %v4364, 3
    %v5119 = vsel %vm1004, %v5118, %v5117
    %v5120 = vrot.slane %v4368, 2
    %v5121 = vsel %vm1007, %v5120, %v5119
    %v5122 = vrot.slane %v4372, 1
    %v5123 = vsel %vm1010, %v5122, %v5121
    %v5124 = vsel %vm1013, %v4376, %v5123
    %v5161 = vrot.slane %v4457, 7
    %v5162 = vsel %vm995, %v5161, %v4453
    %v5163 = vrot.slane %v4461, 6
    %v5164 = vsel %vm998, %v5163, %v5162
    %v5165 = vrot.slane %v4465, 5
    %v5166 = vsel %vm1001, %v5165, %v5164
    %v5167 = vrot.slane %v4469, 4
    %v5168 = vsel %vm1004, %v5167, %v5166
    %v5169 = vrot.slane %v4473, 3
    %v5170 = vsel %vm1007, %v5169, %v5168
    %v5171 = vrot.slane %v4477, 2
    %v5172 = vsel %vm1010, %v5171, %v5170
    %v5173 = vrot.slane %v4481, 1
    %v5174 = vsel %vm1013, %v5173, %v5172
    %v5175 = vrot.slane %v4458, 7
    %v5176 = vsel %vm995, %v5175, %v4454
    %v5177 = vrot.slane %v4462, 6
    %v5178 = vsel %vm998, %v5177, %v5176
    %v5179 = vrot.slane %v4466, 5
    %v5180 = vsel %vm1001, %v5179, %v5178
    %v5181 = vrot.slane %v4470, 4
    %v5182 = vsel %vm1004, %v5181, %v5180
    %v5183 = vrot.slane %v4474, 3
    %v5184 = vsel %vm1007, %v5183, %v5182
    %v5185 = vrot.slane %v4478, 2
    %v5186 = vsel %vm1010, %v5185, %v5184
    %v5187 = vrot.slane %v4482, 1
    %v5188 = vsel %vm1013, %v5187, %v5186
    %v5189 = vrot.slane %v4459, 7
    %v5190 = vsel %vm995, %v5189, %v4455
    %v5191 = vrot.slane %v4463, 6
    %v5192 = vsel %vm998, %v5191, %v5190
    %v5193 = vrot.slane %v4467, 5
    %v5194 = vsel %vm1001, %v5193, %v5192
    %v5195 = vrot.slane %v4471, 4
    %v5196 = vsel %vm1004, %v5195, %v5194
    %v5197 = vrot.slane %v4475, 3
    %v5198 = vsel %vm1007, %v5197, %v5196
    %v5199 = vrot.slane %v4479, 2
    %v5200 = vsel %vm1010, %v5199, %v5198
    %v5201 = vrot.slane %v4483, 1
    %v5202 = vsel %vm1013, %v5201, %v5200
    %v5203 = vrot.slane %v4460, 7
    %v5204 = vsel %vm995, %v5203, %v4456
    %v5205 = vrot.slane %v4464, 6
    %v5206 = vsel %vm998, %v5205, %v5204
    %v5207 = vrot.slane %v4468, 5
    %v5208 = vsel %vm1001, %v5207, %v5206
    %v5209 = vrot.slane %v4472, 4
    %v5210 = vsel %vm1004, %v5209, %v5208
    %v5211 = vrot.slane %v4476, 3
    %v5212 = vsel %vm1007, %v5211, %v5210
    %v5213 = vrot.slane %v4480, 2
    %v5214 = vsel %vm1010, %v5213, %v5212
    %v5215 = vrot.slane %v4484, 1
    %v5216 = vsel %vm1013, %v5215, %v5214
    %5221 = vset.pattern.permute.xlu0 2
    %5222 = vperm.xlu0 %5221, %v45
    %v5223 = vpop.permute.xlu0 %5222
    %v5226 = vsel %vm1710, %v3620, 0
    %5228 = vmatprep.subr.mxu0 0.0
    %5229 = vmatpush1.msra.mxu0 0.0
    %5230 = vmatprep.subr.mxu0 0.0
    %5231 = vmatpush1.msra.mxu0 0.0
    %5232 = vmatprep.subr.mxu0 0.0
    %5233 = vmatpush1.msra.mxu0 0.0
    %5234 = vmatprep.subr.mxu0 0.0
    %5235 = vmatpush1.msra.mxu0 0.0
    %5236 = vmatprep.subr.mxu0 0.0
    %5237 = vmatpush1.msra.mxu0 0.0
    %5238 = vmatprep.subr.mxu0 0.0
    %5239 = vmatpush1.msra.mxu0 0.0
    %5240 = vmatprep.subr.mxu0 0.0
    %5241 = vmatpush1.msra.mxu0 0.0
    %5242 = vmatprep.subr.mxu0 %v5188
    %5243 = vmatpush1.msra.mxu0 %v5174
    %5244 = vmatprep.subr.mxu0 %v5096
    %5245 = vmatpush1.msra.mxu0 %v5082
    %5246 = vmatprep.subr.mxu0 %v5004
    %5247 = vmatpush1.msra.mxu0 %v4990
    %5248 = vmatprep.subr.mxu0 %v4912
    %5249 = vmatpush1.msra.mxu0 %v4898
    %5250 = vmatprep.subr.mxu0 %v3616
    %5251 = vmatpush1.msra.mxu0 %v3615
    %5252 = vmatprep.subr.mxu0 %v4820
    %5253 = vmatpush1.msra.mxu0 %v4806
    %5254 = vmatprep.subr.mxu0 %v4728
    %5255 = vmatpush1.msra.mxu0 %v4714
    %5256 = vmatprep.subr.mxu0 %v4636
    %5257 = vmatpush1.msra.mxu0 %v4622
    %5258 = vmatprep.subr.mxu0 %v4544
    %5259 = vmatpush1.msra.mxu0 %v4530
    %5260 = vmatprep.subr.mxu0 0.0
    %5261 = vmatpush2.msra.mxu0 0.0
    %5262 = vmatprep.subr.mxu0 0.0
    %5263 = vmatpush2.msra.mxu0 0.0
    %5264 = vmatprep.subr.mxu0 0.0
    %5265 = vmatpush2.msra.mxu0 0.0
    %5266 = vmatprep.subr.mxu0 0.0
    %5267 = vmatpush2.msra.mxu0 0.0
    %5268 = vmatprep.subr.mxu0 0.0
    %5269 = vmatpush2.msra.mxu0 0.0
    %5270 = vmatprep.subr.mxu0 0.0
    %5271 = vmatpush2.msra.mxu0 0.0
    %5272 = vmatprep.subr.mxu0 0.0
    %5273 = vmatpush2.msra.mxu0 0.0
    %5274 = vmatprep.subr.mxu0 0.0
    %5275 = vmatpush2.msra.mxu0 0.0
    %5276 = vmatprep.subr.mxu0 0.0
    %5277 = vmatpush2.msra.mxu0 0.0
    %5278 = vmatprep.subr.mxu0 0.0
    %5279 = vmatpush2.msra.mxu0 0.0
    %5280 = vmatprep.subr.mxu0 0.0
    %5281 = vmatpush2.msra.mxu0 0.0
    %5282 = vmatprep.subr.mxu0 0.0
    %5283 = vmatpush2.msra.mxu0 0.0
    %5284 = vmatprep.subr.mxu0 0.0
    %5285 = vmatpush2.msra.mxu0 0.0
    %5286 = vmatprep.subr.mxu0 0.0
    %5287 = vmatpush2.msra.mxu0 0.0
    %5288 = vmatprep.subr.mxu0 0.0
    %5289 = vmatpush2.msra.mxu0 0.0
    %5290 = vmatprep.subr.mxu0 0.0
    %5291 = vmatpush2.msra.mxu0 0.0
    %5292 = vmatprep.mubr.f32.mxu0 0.0
    %5293 = vmatmul.mubr.f32.gmra.mxu0 %v5226
    %v5294 = vpop.f32.mrf.mxu0
    %v5295 = vadd.f32 %v5223, %v5294
    %v5296 = vpop.f32.mrf.mxu0
    %v5297 = vadd.f32 %v5223, %v5296
    %5298 = vdwg.mxu0
    %5299 = vmatprep.subr.mxu0 0.0
    %5300 = vmatpush1.msra.mxu0 0.0
    %5301 = vmatprep.subr.mxu0 0.0
    %5302 = vmatpush1.msra.mxu0 0.0
    %5303 = vmatprep.subr.mxu0 0.0
    %5304 = vmatpush1.msra.mxu0 0.0
    %5305 = vmatprep.subr.mxu0 0.0
    %5306 = vmatpush1.msra.mxu0 0.0
    %5307 = vmatprep.subr.mxu0 0.0
    %5308 = vmatpush1.msra.mxu0 0.0
    %5309 = vmatprep.subr.mxu0 0.0
    %5310 = vmatpush1.msra.mxu0 0.0
    %5311 = vmatprep.subr.mxu0 0.0
    %5312 = vmatpush1.msra.mxu0 0.0
    %5313 = vmatprep.subr.mxu0 %v5216
    %5314 = vmatpush1.msra.mxu0 %v5202
    %5315 = vmatprep.subr.mxu0 %v5124
    %5316 = vmatpush1.msra.mxu0 %v5110
    %5317 = vmatprep.subr.mxu0 %v5032
    %5318 = vmatpush1.msra.mxu0 %v5018
    %5319 = vmatprep.subr.mxu0 %v4940
    %5320 = vmatpush1.msra.mxu0 %v4926
    %5321 = vmatprep.subr.mxu0 %v3618
    %5322 = vmatpush1.msra.mxu0 %v3617
    %5323 = vmatprep.subr.mxu0 %v4848
    %5324 = vmatpush1.msra.mxu0 %v4834
    %5325 = vmatprep.subr.mxu0 %v4756
    %5326 = vmatpush1.msra.mxu0 %v4742
    %5327 = vmatprep.subr.mxu0 %v4664
    %5328 = vmatpush1.msra.mxu0 %v4650
    %5329 = vmatprep.subr.mxu0 %v4572
    %5330 = vmatpush1.msra.mxu0 %v4558
    %5331 = vmatprep.subr.mxu0 0.0
    %5332 = vmatpush2.msra.mxu0 0.0
    %5333 = vmatprep.subr.mxu0 0.0
    %5334 = vmatpush2.msra.mxu0 0.0
    %5335 = vmatprep.subr.mxu0 0.0
    %5336 = vmatpush2.msra.mxu0 0.0
    %5337 = vmatprep.subr.mxu0 0.0
    %5338 = vmatpush2.msra.mxu0 0.0
    %5339 = vmatprep.subr.mxu0 0.0
    %5340 = vmatpush2.msra.mxu0 0.0
    %5341 = vmatprep.subr.mxu0 0.0
    %5342 = vmatpush2.msra.mxu0 0.0
    %5343 = vmatprep.subr.mxu0 0.0
    %5344 = vmatpush2.msra.mxu0 0.0
    %5345 = vmatprep.subr.mxu0 0.0
    %5346 = vmatpush2.msra.mxu0 0.0
    %5347 = vmatprep.subr.mxu0 0.0
    %5348 = vmatpush2.msra.mxu0 0.0
    %5349 = vmatprep.subr.mxu0 0.0
    %5350 = vmatpush2.msra.mxu0 0.0
    %5351 = vmatprep.subr.mxu0 0.0
    %5352 = vmatpush2.msra.mxu0 0.0
    %5353 = vmatprep.subr.mxu0 0.0
    %5354 = vmatpush2.msra.mxu0 0.0
    %5355 = vmatprep.subr.mxu0 0.0
    %5356 = vmatpush2.msra.mxu0 0.0
    %5357 = vmatprep.subr.mxu0 0.0
    %5358 = vmatpush2.msra.mxu0 0.0
    %5359 = vmatprep.subr.mxu0 0.0
    %5360 = vmatpush2.msra.mxu0 0.0
    %5361 = vmatprep.subr.mxu0 0.0
    %5362 = vmatpush2.msra.mxu0 0.0
    %5363 = vmatprep.mubr.f32.mxu0 0.0
    %5364 = vmatmul.mubr.f32.gmra.mxu0 %v5226
    %v5365 = vpop.f32.mrf.mxu0
    %v5366 = vadd.f32 %v5223, %v5365
    %v5367 = vpop.f32.mrf.mxu0
    %v5368 = vadd.f32 %v5223, %v5367
    %5369 = vdwg.mxu0
    %v5370 = vmax.f32 %v5295, 0.0
    %v5371 = vmax.f32 %v5297, 0.0
    %v5372 = vmax.f32 %v5366, 0.0
    %v5373 = vmax.f32 %v5368, 0.0
    %s5374 = scalar_lea.vmem %s2, 96
    %v5375 = vld [vmem:[%s5374] sm:$0xff]
    %5376 = vrot.lane.b32.xlu0 %v5370, 17
    %v5377 = vpop.permute.xlu0 %5376
    %5378 = vrot.lane.b32.xlu0 %v5371, 17
    %v5379 = vpop.permute.xlu0 %5378
    %5380 = vrot.lane.b32.xlu0 %v5372, 17
    %v5381 = vpop.permute.xlu0 %5380
    %5382 = vrot.lane.b32.xlu0 %v5373, 17
    %v5383 = vpop.permute.xlu0 %5382
    %v5384 = vsel %vm82, %v5381, %v5383
    %v5385 = vsel %vm82, %v5379, %v5381
    %v5386 = vsel %vm82, %v5377, %v5379
    %v5387 = vsel %vm82, %v5383, %v5377
    %v5392 = vrot.slane %v5387, 1
    %v5393 = vrot.slane %v5386, 1
    %v5394 = vrot.slane %v5385, 1
    %v5395 = vrot.slane %v5384, 1
    %v5396 = vrot.slane %v5387, 2
    %v5397 = vrot.slane %v5386, 2
    %v5398 = vrot.slane %v5385, 2
    %v5399 = vrot.slane %v5384, 2
    %v5400 = vrot.slane %v5387, 3
    %v5401 = vrot.slane %v5386, 3
    %v5402 = vrot.slane %v5385, 3
    %v5403 = vrot.slane %v5384, 3
    %v5404 = vrot.slane %v5387, 4
    %v5405 = vrot.slane %v5386, 4
    %v5406 = vrot.slane %v5385, 4
    %v5407 = vrot.slane %v5384, 4
    %v5408 = vrot.slane %v5387, 5
    %v5409 = vrot.slane %v5386, 5
    %v5410 = vrot.slane %v5385, 5
    %v5411 = vrot.slane %v5384, 5
    %v5412 = vrot.slane %v5387, 6
    %v5413 = vrot.slane %v5386, 6
    %v5414 = vrot.slane %v5385, 6
    %v5415 = vrot.slane %v5384, 6
    %v5416 = vrot.slane %v5387, 7
    %v5417 = vrot.slane %v5386, 7
    %v5418 = vrot.slane %v5385, 7
    %v5419 = vrot.slane %v5384, 7
    %v5452 = vsel %vm91, %v5387, 0.0
    %v5453 = vsel %vm92, %v5386, 0.0
    %v5454 = vsel %vm93, %v5385, 0.0
    %v5455 = vsel %vm94, %v5384, 0.0
    %v5456 = vsel %vm91, %v5392, 0.0
    %v5457 = vsel %vm92, %v5393, 0.0
    %v5458 = vsel %vm93, %v5394, 0.0
    %v5459 = vsel %vm94, %v5395, 0.0
    %v5460 = vsel %vm91, %v5396, 0.0
    %v5461 = vsel %vm92, %v5397, 0.0
    %v5462 = vsel %vm93, %v5398, 0.0
    %v5463 = vsel %vm94, %v5399, 0.0
    %v5464 = vsel %vm91, %v5400, 0.0
    %v5465 = vsel %vm92, %v5401, 0.0
    %v5466 = vsel %vm93, %v5402, 0.0
    %v5467 = vsel %vm94, %v5403, 0.0
    %v5468 = vsel %vm91, %v5404, 0.0
    %v5469 = vsel %vm92, %v5405, 0.0
    %v5470 = vsel %vm93, %v5406, 0.0
    %v5471 = vsel %vm94, %v5407, 0.0
    %v5472 = vsel %vm91, %v5408, 0.0
    %v5473 = vsel %vm92, %v5409, 0.0
    %v5474 = vsel %vm93, %v5410, 0.0
    %v5475 = vsel %vm94, %v5411, 0.0
    %v5476 = vsel %vm91, %v5412, 0.0
    %v5477 = vsel %vm92, %v5413, 0.0
    %v5478 = vsel %vm93, %v5414, 0.0
    %v5479 = vsel %vm94, %v5415, 0.0
    %v5480 = vsel %vm91, %v5416, 0.0
    %v5481 = vsel %vm92, %v5417, 0.0
    %v5482 = vsel %vm93, %v5418, 0.0
    %v5483 = vsel %vm94, %v5419, 0.0
    %5484 = vrot.lane.b32.xlu0 %v5370, 16
    %v5485 = vpop.permute.xlu0 %5484
    %5486 = vrot.lane.b32.xlu0 %v5371, 16
    %v5487 = vpop.permute.xlu0 %5486
    %5488 = vrot.lane.b32.xlu0 %v5372, 16
    %v5489 = vpop.permute.xlu0 %5488
    %5490 = vrot.lane.b32.xlu0 %v5373, 16
    %v5491 = vpop.permute.xlu0 %5490
    %v5492 = vsel %vm199, %v5489, %v5491
    %v5493 = vsel %vm199, %v5487, %v5489
    %v5494 = vsel %vm199, %v5485, %v5487
    %v5495 = vsel %vm199, %v5491, %v5485
    %v5500 = vrot.slane %v5495, 7
    %v5501 = vrot.slane %v5494, 7
    %v5502 = vrot.slane %v5493, 7
    %v5503 = vrot.slane %v5492, 7
    %v5504 = vrot.slane %v5495, 1
    %v5505 = vrot.slane %v5494, 1
    %v5506 = vrot.slane %v5493, 1
    %v5507 = vrot.slane %v5492, 1
    %v5508 = vrot.slane %v5495, 2
    %v5509 = vrot.slane %v5494, 2
    %v5510 = vrot.slane %v5493, 2
    %v5511 = vrot.slane %v5492, 2
    %v5512 = vrot.slane %v5495, 3
    %v5513 = vrot.slane %v5494, 3
    %v5514 = vrot.slane %v5493, 3
    %v5515 = vrot.slane %v5492, 3
    %v5516 = vrot.slane %v5495, 4
    %v5517 = vrot.slane %v5494, 4
    %v5518 = vrot.slane %v5493, 4
    %v5519 = vrot.slane %v5492, 4
    %v5520 = vrot.slane %v5495, 5
    %v5521 = vrot.slane %v5494, 5
    %v5522 = vrot.slane %v5493, 5
    %v5523 = vrot.slane %v5492, 5
    %v5524 = vrot.slane %v5495, 6
    %v5525 = vrot.slane %v5494, 6
    %v5526 = vrot.slane %v5493, 6
    %v5527 = vrot.slane %v5492, 6
    %v5560 = vsel %vm91, %v5500, 0.0
    %v5561 = vsel %vm92, %v5501, 0.0
    %v5562 = vsel %vm93, %v5502, 0.0
    %v5563 = vsel %vm94, %v5503, 0.0
    %v5564 = vsel %vm91, %v5495, 0.0
    %v5565 = vsel %vm92, %v5494, 0.0
    %v5566 = vsel %vm93, %v5493, 0.0
    %v5567 = vsel %vm94, %v5492, 0.0
    %v5568 = vsel %vm91, %v5504, 0.0
    %v5569 = vsel %vm92, %v5505, 0.0
    %v5570 = vsel %vm93, %v5506, 0.0
    %v5571 = vsel %vm94, %v5507, 0.0
    %v5572 = vsel %vm91, %v5508, 0.0
    %v5573 = vsel %vm92, %v5509, 0.0
    %v5574 = vsel %vm93, %v5510, 0.0
    %v5575 = vsel %vm94, %v5511, 0.0
    %v5576 = vsel %vm91, %v5512, 0.0
    %v5577 = vsel %vm92, %v5513, 0.0
    %v5578 = vsel %vm93, %v5514, 0.0
    %v5579 = vsel %vm94, %v5515, 0.0
    %v5580 = vsel %vm91, %v5516, 0.0
    %v5581 = vsel %vm92, %v5517, 0.0
    %v5582 = vsel %vm93, %v5518, 0.0
    %v5583 = vsel %vm94, %v5519, 0.0
    %v5584 = vsel %vm91, %v5520, 0.0
    %v5585 = vsel %vm92, %v5521, 0.0
    %v5586 = vsel %vm93, %v5522, 0.0
    %v5587 = vsel %vm94, %v5523, 0.0
    %v5588 = vsel %vm91, %v5524, 0.0
    %v5589 = vsel %vm92, %v5525, 0.0
    %v5590 = vsel %vm93, %v5526, 0.0
    %v5591 = vsel %vm94, %v5527, 0.0
    %5592 = vrot.lane.b32.xlu0 %v5370, 15
    %v5593 = vpop.permute.xlu0 %5592
    %5594 = vrot.lane.b32.xlu0 %v5371, 15
    %v5595 = vpop.permute.xlu0 %5594
    %5596 = vrot.lane.b32.xlu0 %v5372, 15
    %v5597 = vpop.permute.xlu0 %5596
    %5598 = vrot.lane.b32.xlu0 %v5373, 15
    %v5599 = vpop.permute.xlu0 %5598
    %v5600 = vsel %vm308, %v5597, %v5599
    %v5601 = vsel %vm308, %v5595, %v5597
    %v5602 = vsel %vm308, %v5593, %v5595
    %v5603 = vsel %vm308, %v5599, %v5593
    %v5608 = vrot.slane %v5603, 6
    %v5609 = vrot.slane %v5602, 6
    %v5610 = vrot.slane %v5601, 6
    %v5611 = vrot.slane %v5600, 6
    %v5612 = vrot.slane %v5603, 7
    %v5613 = vrot.slane %v5602, 7
    %v5614 = vrot.slane %v5601, 7
    %v5615 = vrot.slane %v5600, 7
    %v5616 = vrot.slane %v5603, 1
    %v5617 = vrot.slane %v5602, 1
    %v5618 = vrot.slane %v5601, 1
    %v5619 = vrot.slane %v5600, 1
    %v5620 = vrot.slane %v5603, 2
    %v5621 = vrot.slane %v5602, 2
    %v5622 = vrot.slane %v5601, 2
    %v5623 = vrot.slane %v5600, 2
    %v5624 = vrot.slane %v5603, 3
    %v5625 = vrot.slane %v5602, 3
    %v5626 = vrot.slane %v5601, 3
    %v5627 = vrot.slane %v5600, 3
    %v5628 = vrot.slane %v5603, 4
    %v5629 = vrot.slane %v5602, 4
    %v5630 = vrot.slane %v5601, 4
    %v5631 = vrot.slane %v5600, 4
    %v5632 = vrot.slane %v5603, 5
    %v5633 = vrot.slane %v5602, 5
    %v5634 = vrot.slane %v5601, 5
    %v5635 = vrot.slane %v5600, 5
    %v5668 = vsel %vm91, %v5608, 0.0
    %v5669 = vsel %vm92, %v5609, 0.0
    %v5670 = vsel %vm93, %v5610, 0.0
    %v5671 = vsel %vm94, %v5611, 0.0
    %v5672 = vsel %vm91, %v5612, 0.0
    %v5673 = vsel %vm92, %v5613, 0.0
    %v5674 = vsel %vm93, %v5614, 0.0
    %v5675 = vsel %vm94, %v5615, 0.0
    %v5676 = vsel %vm91, %v5603, 0.0
    %v5677 = vsel %vm92, %v5602, 0.0
    %v5678 = vsel %vm93, %v5601, 0.0
    %v5679 = vsel %vm94, %v5600, 0.0
    %v5680 = vsel %vm91, %v5616, 0.0
    %v5681 = vsel %vm92, %v5617, 0.0
    %v5682 = vsel %vm93, %v5618, 0.0
    %v5683 = vsel %vm94, %v5619, 0.0
    %v5684 = vsel %vm91, %v5620, 0.0
    %v5685 = vsel %vm92, %v5621, 0.0
    %v5686 = vsel %vm93, %v5622, 0.0
    %v5687 = vsel %vm94, %v5623, 0.0
    %v5688 = vsel %vm91, %v5624, 0.0
    %v5689 = vsel %vm92, %v5625, 0.0
    %v5690 = vsel %vm93, %v5626, 0.0
    %v5691 = vsel %vm94, %v5627, 0.0
    %v5692 = vsel %vm91, %v5628, 0.0
    %v5693 = vsel %vm92, %v5629, 0.0
    %v5694 = vsel %vm93, %v5630, 0.0
    %v5695 = vsel %vm94, %v5631, 0.0
    %v5696 = vsel %vm91, %v5632, 0.0
    %v5697 = vsel %vm92, %v5633, 0.0
    %v5698 = vsel %vm93, %v5634, 0.0
    %v5699 = vsel %vm94, %v5635, 0.0
    %5700 = vrot.lane.b32.xlu0 %v5370, 1
    %v5701 = vpop.permute.xlu0 %5700
    %5702 = vrot.lane.b32.xlu0 %v5371, 1
    %v5703 = vpop.permute.xlu0 %5702
    %5704 = vrot.lane.b32.xlu0 %v5372, 1
    %v5705 = vpop.permute.xlu0 %5704
    %5706 = vrot.lane.b32.xlu0 %v5373, 1
    %v5707 = vpop.permute.xlu0 %5706
    %v5708 = vsel %vm417, %v5705, %v5707
    %v5709 = vsel %vm417, %v5703, %v5705
    %v5710 = vsel %vm417, %v5701, %v5703
    %v5711 = vsel %vm417, %v5707, %v5701
    %v5716 = vrot.slane %v5711, 5
    %v5717 = vrot.slane %v5710, 5
    %v5718 = vrot.slane %v5709, 5
    %v5719 = vrot.slane %v5708, 5
    %v5720 = vrot.slane %v5711, 6
    %v5721 = vrot.slane %v5710, 6
    %v5722 = vrot.slane %v5709, 6
    %v5723 = vrot.slane %v5708, 6
    %v5724 = vrot.slane %v5711, 7
    %v5725 = vrot.slane %v5710, 7
    %v5726 = vrot.slane %v5709, 7
    %v5727 = vrot.slane %v5708, 7
    %v5728 = vrot.slane %v5711, 1
    %v5729 = vrot.slane %v5710, 1
    %v5730 = vrot.slane %v5709, 1
    %v5731 = vrot.slane %v5708, 1
    %v5732 = vrot.slane %v5711, 2
    %v5733 = vrot.slane %v5710, 2
    %v5734 = vrot.slane %v5709, 2
    %v5735 = vrot.slane %v5708, 2
    %v5736 = vrot.slane %v5711, 3
    %v5737 = vrot.slane %v5710, 3
    %v5738 = vrot.slane %v5709, 3
    %v5739 = vrot.slane %v5708, 3
    %v5740 = vrot.slane %v5711, 4
    %v5741 = vrot.slane %v5710, 4
    %v5742 = vrot.slane %v5709, 4
    %v5743 = vrot.slane %v5708, 4
    %v5776 = vsel %vm91, %v5716, 0.0
    %v5777 = vsel %vm92, %v5717, 0.0
    %v5778 = vsel %vm93, %v5718, 0.0
    %v5779 = vsel %vm94, %v5719, 0.0
    %v5780 = vsel %vm91, %v5720, 0.0
    %v5781 = vsel %vm92, %v5721, 0.0
    %v5782 = vsel %vm93, %v5722, 0.0
    %v5783 = vsel %vm94, %v5723, 0.0
    %v5784 = vsel %vm91, %v5724, 0.0
    %v5785 = vsel %vm92, %v5725, 0.0
    %v5786 = vsel %vm93, %v5726, 0.0
    %v5787 = vsel %vm94, %v5727, 0.0
    %v5788 = vsel %vm91, %v5711, 0.0
    %v5789 = vsel %vm92, %v5710, 0.0
    %v5790 = vsel %vm93, %v5709, 0.0
    %v5791 = vsel %vm94, %v5708, 0.0
    %v5792 = vsel %vm91, %v5728, 0.0
    %v5793 = vsel %vm92, %v5729, 0.0
    %v5794 = vsel %vm93, %v5730, 0.0
    %v5795 = vsel %vm94, %v5731, 0.0
    %v5796 = vsel %vm91, %v5732, 0.0
    %v5797 = vsel %vm92, %v5733, 0.0
    %v5798 = vsel %vm93, %v5734, 0.0
    %v5799 = vsel %vm94, %v5735, 0.0
    %v5800 = vsel %vm91, %v5736, 0.0
    %v5801 = vsel %vm92, %v5737, 0.0
    %v5802 = vsel %vm93, %v5738, 0.0
    %v5803 = vsel %vm94, %v5739, 0.0
    %v5804 = vsel %vm91, %v5740, 0.0
    %v5805 = vsel %vm92, %v5741, 0.0
    %v5806 = vsel %vm93, %v5742, 0.0
    %v5807 = vsel %vm94, %v5743, 0.0
    %5808 = vrot.lane.b32.xlu0 %v5370, 127
    %v5809 = vpop.permute.xlu0 %5808
    %5810 = vrot.lane.b32.xlu0 %v5371, 127
    %v5811 = vpop.permute.xlu0 %5810
    %5812 = vrot.lane.b32.xlu0 %v5372, 127
    %v5813 = vpop.permute.xlu0 %5812
    %5814 = vrot.lane.b32.xlu0 %v5373, 127
    %v5815 = vpop.permute.xlu0 %5814
    %v5816 = vsel %vm526, %v5813, %v5815
    %v5817 = vsel %vm526, %v5811, %v5813
    %v5818 = vsel %vm526, %v5809, %v5811
    %v5819 = vsel %vm526, %v5815, %v5809
    %v5824 = vrot.slane %v5818, 3
    %v5825 = vrot.slane %v5817, 3
    %v5826 = vrot.slane %v5816, 3
    %v5827 = vrot.slane %v5819, 3
    %v5828 = vrot.slane %v5818, 4
    %v5829 = vrot.slane %v5817, 4
    %v5830 = vrot.slane %v5816, 4
    %v5831 = vrot.slane %v5819, 4
    %v5832 = vrot.slane %v5818, 5
    %v5833 = vrot.slane %v5817, 5
    %v5834 = vrot.slane %v5816, 5
    %v5835 = vrot.slane %v5819, 5
    %v5836 = vrot.slane %v5818, 6
    %v5837 = vrot.slane %v5817, 6
    %v5838 = vrot.slane %v5816, 6
    %v5839 = vrot.slane %v5819, 6
    %v5840 = vrot.slane %v5818, 7
    %v5841 = vrot.slane %v5817, 7
    %v5842 = vrot.slane %v5816, 7
    %v5843 = vrot.slane %v5819, 7
    %v5844 = vrot.slane %v5818, 1
    %v5845 = vrot.slane %v5817, 1
    %v5846 = vrot.slane %v5816, 1
    %v5847 = vrot.slane %v5819, 1
    %v5848 = vrot.slane %v5818, 2
    %v5849 = vrot.slane %v5817, 2
    %v5850 = vrot.slane %v5816, 2
    %v5851 = vrot.slane %v5819, 2
    %v5884 = vsel %vm91, %v5824, 0.0
    %v5885 = vsel %vm92, %v5825, 0.0
    %v5886 = vsel %vm93, %v5826, 0.0
    %v5887 = vsel %vm94, %v5827, 0.0
    %v5888 = vsel %vm91, %v5828, 0.0
    %v5889 = vsel %vm92, %v5829, 0.0
    %v5890 = vsel %vm93, %v5830, 0.0
    %v5891 = vsel %vm94, %v5831, 0.0
    %v5892 = vsel %vm91, %v5832, 0.0
    %v5893 = vsel %vm92, %v5833, 0.0
    %v5894 = vsel %vm93, %v5834, 0.0
    %v5895 = vsel %vm94, %v5835, 0.0
    %v5896 = vsel %vm91, %v5836, 0.0
    %v5897 = vsel %vm92, %v5837, 0.0
    %v5898 = vsel %vm93, %v5838, 0.0
    %v5899 = vsel %vm94, %v5839, 0.0
    %v5900 = vsel %vm91, %v5840, 0.0
    %v5901 = vsel %vm92, %v5841, 0.0
    %v5902 = vsel %vm93, %v5842, 0.0
    %v5903 = vsel %vm94, %v5843, 0.0
    %v5904 = vsel %vm91, %v5818, 0.0
    %v5905 = vsel %vm92, %v5817, 0.0
    %v5906 = vsel %vm93, %v5816, 0.0
    %v5907 = vsel %vm94, %v5819, 0.0
    %v5908 = vsel %vm91, %v5844, 0.0
    %v5909 = vsel %vm92, %v5845, 0.0
    %v5910 = vsel %vm93, %v5846, 0.0
    %v5911 = vsel %vm94, %v5847, 0.0
    %v5912 = vsel %vm91, %v5848, 0.0
    %v5913 = vsel %vm92, %v5849, 0.0
    %v5914 = vsel %vm93, %v5850, 0.0
    %v5915 = vsel %vm94, %v5851, 0.0
    %5916 = vrot.lane.b32.xlu0 %v5370, 113
    %v5917 = vpop.permute.xlu0 %5916
    %5918 = vrot.lane.b32.xlu0 %v5371, 113
    %v5919 = vpop.permute.xlu0 %5918
    %5920 = vrot.lane.b32.xlu0 %v5372, 113
    %v5921 = vpop.permute.xlu0 %5920
    %5922 = vrot.lane.b32.xlu0 %v5373, 113
    %v5923 = vpop.permute.xlu0 %5922
    %v5924 = vsel %vm635, %v5921, %v5923
    %v5925 = vsel %vm635, %v5919, %v5921
    %v5926 = vsel %vm635, %v5917, %v5919
    %v5927 = vsel %vm635, %v5923, %v5917
    %v5932 = vrot.slane %v5926, 2
    %v5933 = vrot.slane %v5925, 2
    %v5934 = vrot.slane %v5924, 2
    %v5935 = vrot.slane %v5927, 2
    %v5936 = vrot.slane %v5926, 3
    %v5937 = vrot.slane %v5925, 3
    %v5938 = vrot.slane %v5924, 3
    %v5939 = vrot.slane %v5927, 3
    %v5940 = vrot.slane %v5926, 4
    %v5941 = vrot.slane %v5925, 4
    %v5942 = vrot.slane %v5924, 4
    %v5943 = vrot.slane %v5927, 4
    %v5944 = vrot.slane %v5926, 5
    %v5945 = vrot.slane %v5925, 5
    %v5946 = vrot.slane %v5924, 5
    %v5947 = vrot.slane %v5927, 5
    %v5948 = vrot.slane %v5926, 6
    %v5949 = vrot.slane %v5925, 6
    %v5950 = vrot.slane %v5924, 6
    %v5951 = vrot.slane %v5927, 6
    %v5952 = vrot.slane %v5926, 7
    %v5953 = vrot.slane %v5925, 7
    %v5954 = vrot.slane %v5924, 7
    %v5955 = vrot.slane %v5927, 7
    %v5956 = vrot.slane %v5926, 1
    %v5957 = vrot.slane %v5925, 1
    %v5958 = vrot.slane %v5924, 1
    %v5959 = vrot.slane %v5927, 1
    %v5992 = vsel %vm91, %v5932, 0.0
    %v5993 = vsel %vm92, %v5933, 0.0
    %v5994 = vsel %vm93, %v5934, 0.0
    %v5995 = vsel %vm94, %v5935, 0.0
    %v5996 = vsel %vm91, %v5936, 0.0
    %v5997 = vsel %vm92, %v5937, 0.0
    %v5998 = vsel %vm93, %v5938, 0.0
    %v5999 = vsel %vm94, %v5939, 0.0
    %v6000 = vsel %vm91, %v5940, 0.0
    %v6001 = vsel %vm92, %v5941, 0.0
    %v6002 = vsel %vm93, %v5942, 0.0
    %v6003 = vsel %vm94, %v5943, 0.0
    %v6004 = vsel %vm91, %v5944, 0.0
    %v6005 = vsel %vm92, %v5945, 0.0
    %v6006 = vsel %vm93, %v5946, 0.0
    %v6007 = vsel %vm94, %v5947, 0.0
    %v6008 = vsel %vm91, %v5948, 0.0
    %v6009 = vsel %vm92, %v5949, 0.0
    %v6010 = vsel %vm93, %v5950, 0.0
    %v6011 = vsel %vm94, %v5951, 0.0
    %v6012 = vsel %vm91, %v5952, 0.0
    %v6013 = vsel %vm92, %v5953, 0.0
    %v6014 = vsel %vm93, %v5954, 0.0
    %v6015 = vsel %vm94, %v5955, 0.0
    %v6016 = vsel %vm91, %v5926, 0.0
    %v6017 = vsel %vm92, %v5925, 0.0
    %v6018 = vsel %vm93, %v5924, 0.0
    %v6019 = vsel %vm94, %v5927, 0.0
    %v6020 = vsel %vm91, %v5956, 0.0
    %v6021 = vsel %vm92, %v5957, 0.0
    %v6022 = vsel %vm93, %v5958, 0.0
    %v6023 = vsel %vm94, %v5959, 0.0
    %6024 = vrot.lane.b32.xlu0 %v5370, 112
    %v6025 = vpop.permute.xlu0 %6024
    %6026 = vrot.lane.b32.xlu0 %v5371, 112
    %v6027 = vpop.permute.xlu0 %6026
    %6028 = vrot.lane.b32.xlu0 %v5372, 112
    %v6029 = vpop.permute.xlu0 %6028
    %6030 = vrot.lane.b32.xlu0 %v5373, 112
    %v6031 = vpop.permute.xlu0 %6030
    %v6032 = vsel %vm744, %v6029, %v6031
    %v6033 = vsel %vm744, %v6027, %v6029
    %v6034 = vsel %vm744, %v6025, %v6027
    %v6035 = vsel %vm744, %v6031, %v6025
    %v6040 = vrot.slane %v6034, 1
    %v6041 = vrot.slane %v6033, 1
    %v6042 = vrot.slane %v6032, 1
    %v6043 = vrot.slane %v6035, 1
    %v6044 = vrot.slane %v6034, 2
    %v6045 = vrot.slane %v6033, 2
    %v6046 = vrot.slane %v6032, 2
    %v6047 = vrot.slane %v6035, 2
    %v6048 = vrot.slane %v6034, 3
    %v6049 = vrot.slane %v6033, 3
    %v6050 = vrot.slane %v6032, 3
    %v6051 = vrot.slane %v6035, 3
    %v6052 = vrot.slane %v6034, 4
    %v6053 = vrot.slane %v6033, 4
    %v6054 = vrot.slane %v6032, 4
    %v6055 = vrot.slane %v6035, 4
    %v6056 = vrot.slane %v6034, 5
    %v6057 = vrot.slane %v6033, 5
    %v6058 = vrot.slane %v6032, 5
    %v6059 = vrot.slane %v6035, 5
    %v6060 = vrot.slane %v6034, 6
    %v6061 = vrot.slane %v6033, 6
    %v6062 = vrot.slane %v6032, 6
    %v6063 = vrot.slane %v6035, 6
    %v6064 = vrot.slane %v6034, 7
    %v6065 = vrot.slane %v6033, 7
    %v6066 = vrot.slane %v6032, 7
    %v6067 = vrot.slane %v6035, 7
    %v6100 = vsel %vm91, %v6040, 0.0
    %v6101 = vsel %vm92, %v6041, 0.0
    %v6102 = vsel %vm93, %v6042, 0.0
    %v6103 = vsel %vm94, %v6043, 0.0
    %v6104 = vsel %vm91, %v6044, 0.0
    %v6105 = vsel %vm92, %v6045, 0.0
    %v6106 = vsel %vm93, %v6046, 0.0
    %v6107 = vsel %vm94, %v6047, 0.0
    %v6108 = vsel %vm91, %v6048, 0.0
    %v6109 = vsel %vm92, %v6049, 0.0
    %v6110 = vsel %vm93, %v6050, 0.0
    %v6111 = vsel %vm94, %v6051, 0.0
    %v6112 = vsel %vm91, %v6052, 0.0
    %v6113 = vsel %vm92, %v6053, 0.0
    %v6114 = vsel %vm93, %v6054, 0.0
    %v6115 = vsel %vm94, %v6055, 0.0
    %v6116 = vsel %vm91, %v6056, 0.0
    %v6117 = vsel %vm92, %v6057, 0.0
    %v6118 = vsel %vm93, %v6058, 0.0
    %v6119 = vsel %vm94, %v6059, 0.0
    %v6120 = vsel %vm91, %v6060, 0.0
    %v6121 = vsel %vm92, %v6061, 0.0
    %v6122 = vsel %vm93, %v6062, 0.0
    %v6123 = vsel %vm94, %v6063, 0.0
    %v6124 = vsel %vm91, %v6064, 0.0
    %v6125 = vsel %vm92, %v6065, 0.0
    %v6126 = vsel %vm93, %v6066, 0.0
    %v6127 = vsel %vm94, %v6067, 0.0
    %v6128 = vsel %vm91, %v6034, 0.0
    %v6129 = vsel %vm92, %v6033, 0.0
    %v6130 = vsel %vm93, %v6032, 0.0
    %v6131 = vsel %vm94, %v6035, 0.0
    %6132 = vrot.lane.b32.xlu0 %v5370, 111
    %v6133 = vpop.permute.xlu0 %6132
    %6134 = vrot.lane.b32.xlu0 %v5371, 111
    %v6135 = vpop.permute.xlu0 %6134
    %6136 = vrot.lane.b32.xlu0 %v5372, 111
    %v6137 = vpop.permute.xlu0 %6136
    %6138 = vrot.lane.b32.xlu0 %v5373, 111
    %v6139 = vpop.permute.xlu0 %6138
    %v6140 = vsel %vm853, %v6137, %v6139
    %v6141 = vsel %vm853, %v6135, %v6137
    %v6142 = vsel %vm853, %v6133, %v6135
    %v6143 = vsel %vm853, %v6139, %v6133
    %v6148 = vrot.slane %v6142, 1
    %v6149 = vrot.slane %v6141, 1
    %v6150 = vrot.slane %v6140, 1
    %v6151 = vrot.slane %v6143, 1
    %v6152 = vrot.slane %v6142, 2
    %v6153 = vrot.slane %v6141, 2
    %v6154 = vrot.slane %v6140, 2
    %v6155 = vrot.slane %v6143, 2
    %v6156 = vrot.slane %v6142, 3
    %v6157 = vrot.slane %v6141, 3
    %v6158 = vrot.slane %v6140, 3
    %v6159 = vrot.slane %v6143, 3
    %v6160 = vrot.slane %v6142, 4
    %v6161 = vrot.slane %v6141, 4
    %v6162 = vrot.slane %v6140, 4
    %v6163 = vrot.slane %v6143, 4
    %v6164 = vrot.slane %v6142, 5
    %v6165 = vrot.slane %v6141, 5
    %v6166 = vrot.slane %v6140, 5
    %v6167 = vrot.slane %v6143, 5
    %v6168 = vrot.slane %v6142, 6
    %v6169 = vrot.slane %v6141, 6
    %v6170 = vrot.slane %v6140, 6
    %v6171 = vrot.slane %v6143, 6
    %v6172 = vrot.slane %v6142, 7
    %v6173 = vrot.slane %v6141, 7
    %v6174 = vrot.slane %v6140, 7
    %v6175 = vrot.slane %v6143, 7
    %v6208 = vsel %vm862, %v6142, 0.0
    %v6209 = vsel %vm863, %v6141, 0.0
    %v6210 = vsel %vm864, %v6140, 0.0
    %v6211 = vsel %vm865, %v6143, 0.0
    %v6212 = vsel %vm862, %v6148, 0.0
    %v6213 = vsel %vm863, %v6149, 0.0
    %v6214 = vsel %vm864, %v6150, 0.0
    %v6215 = vsel %vm865, %v6151, 0.0
    %v6216 = vsel %vm862, %v6152, 0.0
    %v6217 = vsel %vm863, %v6153, 0.0
    %v6218 = vsel %vm864, %v6154, 0.0
    %v6219 = vsel %vm865, %v6155, 0.0
    %v6220 = vsel %vm862, %v6156, 0.0
    %v6221 = vsel %vm863, %v6157, 0.0
    %v6222 = vsel %vm864, %v6158, 0.0
    %v6223 = vsel %vm865, %v6159, 0.0
    %v6224 = vsel %vm862, %v6160, 0.0
    %v6225 = vsel %vm863, %v6161, 0.0
    %v6226 = vsel %vm864, %v6162, 0.0
    %v6227 = vsel %vm865, %v6163, 0.0
    %v6228 = vsel %vm862, %v6164, 0.0
    %v6229 = vsel %vm863, %v6165, 0.0
    %v6230 = vsel %vm864, %v6166, 0.0
    %v6231 = vsel %vm865, %v6167, 0.0
    %v6232 = vsel %vm862, %v6168, 0.0
    %v6233 = vsel %vm863, %v6169, 0.0
    %v6234 = vsel %vm864, %v6170, 0.0
    %v6235 = vsel %vm865, %v6171, 0.0
    %v6236 = vsel %vm862, %v6172, 0.0
    %v6237 = vsel %vm863, %v6173, 0.0
    %v6238 = vsel %vm864, %v6174, 0.0
    %v6239 = vsel %vm865, %v6175, 0.0
    %v6272 = vrot.slane %v5456, 7
    %v6273 = vsel %vm995, %v6272, %v5452
    %v6274 = vrot.slane %v5460, 6
    %v6275 = vsel %vm998, %v6274, %v6273
    %v6276 = vrot.slane %v5464, 5
    %v6277 = vsel %vm1001, %v6276, %v6275
    %v6278 = vrot.slane %v5468, 4
    %v6279 = vsel %vm1004, %v6278, %v6277
    %v6280 = vrot.slane %v5472, 3
    %v6281 = vsel %vm1007, %v6280, %v6279
    %v6282 = vrot.slane %v5476, 2
    %v6283 = vsel %vm1010, %v6282, %v6281
    %v6284 = vrot.slane %v5480, 1
    %v6285 = vsel %vm1013, %v6284, %v6283
    %v6286 = vrot.slane %v5457, 7
    %v6287 = vsel %vm995, %v6286, %v5453
    %v6288 = vrot.slane %v5461, 6
    %v6289 = vsel %vm998, %v6288, %v6287
    %v6290 = vrot.slane %v5465, 5
    %v6291 = vsel %vm1001, %v6290, %v6289
    %v6292 = vrot.slane %v5469, 4
    %v6293 = vsel %vm1004, %v6292, %v6291
    %v6294 = vrot.slane %v5473, 3
    %v6295 = vsel %vm1007, %v6294, %v6293
    %v6296 = vrot.slane %v5477, 2
    %v6297 = vsel %vm1010, %v6296, %v6295
    %v6298 = vrot.slane %v5481, 1
    %v6299 = vsel %vm1013, %v6298, %v6297
    %v6300 = vrot.slane %v5458, 7
    %v6301 = vsel %vm995, %v6300, %v5454
    %v6302 = vrot.slane %v5462, 6
    %v6303 = vsel %vm998, %v6302, %v6301
    %v6304 = vrot.slane %v5466, 5
    %v6305 = vsel %vm1001, %v6304, %v6303
    %v6306 = vrot.slane %v5470, 4
    %v6307 = vsel %vm1004, %v6306, %v6305
    %v6308 = vrot.slane %v5474, 3
    %v6309 = vsel %vm1007, %v6308, %v6307
    %v6310 = vrot.slane %v5478, 2
    %v6311 = vsel %vm1010, %v6310, %v6309
    %v6312 = vrot.slane %v5482, 1
    %v6313 = vsel %vm1013, %v6312, %v6311
    %v6314 = vrot.slane %v5459, 7
    %v6315 = vsel %vm995, %v6314, %v5455
    %v6316 = vrot.slane %v5463, 6
    %v6317 = vsel %vm998, %v6316, %v6315
    %v6318 = vrot.slane %v5467, 5
    %v6319 = vsel %vm1001, %v6318, %v6317
    %v6320 = vrot.slane %v5471, 4
    %v6321 = vsel %vm1004, %v6320, %v6319
    %v6322 = vrot.slane %v5475, 3
    %v6323 = vsel %vm1007, %v6322, %v6321
    %v6324 = vrot.slane %v5479, 2
    %v6325 = vsel %vm1010, %v6324, %v6323
    %v6326 = vrot.slane %v5483, 1
    %v6327 = vsel %vm1013, %v6326, %v6325
    %v6364 = vrot.slane %v5560, 1
    %v6365 = vsel %vm995, %v5564, %v6364
    %v6366 = vrot.slane %v5568, 7
    %v6367 = vsel %vm998, %v6366, %v6365
    %v6368 = vrot.slane %v5572, 6
    %v6369 = vsel %vm1001, %v6368, %v6367
    %v6370 = vrot.slane %v5576, 5
    %v6371 = vsel %vm1004, %v6370, %v6369
    %v6372 = vrot.slane %v5580, 4
    %v6373 = vsel %vm1007, %v6372, %v6371
    %v6374 = vrot.slane %v5584, 3
    %v6375 = vsel %vm1010, %v6374, %v6373
    %v6376 = vrot.slane %v5588, 2
    %v6377 = vsel %vm1013, %v6376, %v6375
    %v6378 = vrot.slane %v5561, 1
    %v6379 = vsel %vm995, %v5565, %v6378
    %v6380 = vrot.slane %v5569, 7
    %v6381 = vsel %vm998, %v6380, %v6379
    %v6382 = vrot.slane %v5573, 6
    %v6383 = vsel %vm1001, %v6382, %v6381
    %v6384 = vrot.slane %v5577, 5
    %v6385 = vsel %vm1004, %v6384, %v6383
    %v6386 = vrot.slane %v5581, 4
    %v6387 = vsel %vm1007, %v6386, %v6385
    %v6388 = vrot.slane %v5585, 3
    %v6389 = vsel %vm1010, %v6388, %v6387
    %v6390 = vrot.slane %v5589, 2
    %v6391 = vsel %vm1013, %v6390, %v6389
    %v6392 = vrot.slane %v5562, 1
    %v6393 = vsel %vm995, %v5566, %v6392
    %v6394 = vrot.slane %v5570, 7
    %v6395 = vsel %vm998, %v6394, %v6393
    %v6396 = vrot.slane %v5574, 6
    %v6397 = vsel %vm1001, %v6396, %v6395
    %v6398 = vrot.slane %v5578, 5
    %v6399 = vsel %vm1004, %v6398, %v6397
    %v6400 = vrot.slane %v5582, 4
    %v6401 = vsel %vm1007, %v6400, %v6399
    %v6402 = vrot.slane %v5586, 3
    %v6403 = vsel %vm1010, %v6402, %v6401
    %v6404 = vrot.slane %v5590, 2
    %v6405 = vsel %vm1013, %v6404, %v6403
    %v6406 = vrot.slane %v5563, 1
    %v6407 = vsel %vm995, %v5567, %v6406
    %v6408 = vrot.slane %v5571, 7
    %v6409 = vsel %vm998, %v6408, %v6407
    %v6410 = vrot.slane %v5575, 6
    %v6411 = vsel %vm1001, %v6410, %v6409
    %v6412 = vrot.slane %v5579, 5
    %v6413 = vsel %vm1004, %v6412, %v6411
    %v6414 = vrot.slane %v5583, 4
    %v6415 = vsel %vm1007, %v6414, %v6413
    %v6416 = vrot.slane %v5587, 3
    %v6417 = vsel %vm1010, %v6416, %v6415
    %v6418 = vrot.slane %v5591, 2
    %v6419 = vsel %vm1013, %v6418, %v6417
    %v6456 = vrot.slane %v5668, 2
    %v6457 = vrot.slane %v5672, 1
    %v6458 = vsel %vm995, %v6457, %v6456
    %v6459 = vsel %vm998, %v5676, %v6458
    %v6460 = vrot.slane %v5680, 7
    %v6461 = vsel %vm1001, %v6460, %v6459
    %v6462 = vrot.slane %v5684, 6
    %v6463 = vsel %vm1004, %v6462, %v6461
    %v6464 = vrot.slane %v5688, 5
    %v6465 = vsel %vm1007, %v6464, %v6463
    %v6466 = vrot.slane %v5692, 4
    %v6467 = vsel %vm1010, %v6466, %v6465
    %v6468 = vrot.slane %v5696, 3
    %v6469 = vsel %vm1013, %v6468, %v6467
    %v6470 = vrot.slane %v5669, 2
    %v6471 = vrot.slane %v5673, 1
    %v6472 = vsel %vm995, %v6471, %v6470
    %v6473 = vsel %vm998, %v5677, %v6472
    %v6474 = vrot.slane %v5681, 7
    %v6475 = vsel %vm1001, %v6474, %v6473
    %v6476 = vrot.slane %v5685, 6
    %v6477 = vsel %vm1004, %v6476, %v6475
    %v6478 = vrot.slane %v5689, 5
    %v6479 = vsel %vm1007, %v6478, %v6477
    %v6480 = vrot.slane %v5693, 4
    %v6481 = vsel %vm1010, %v6480, %v6479
    %v6482 = vrot.slane %v5697, 3
    %v6483 = vsel %vm1013, %v6482, %v6481
    %v6484 = vrot.slane %v5670, 2
    %v6485 = vrot.slane %v5674, 1
    %v6486 = vsel %vm995, %v6485, %v6484
    %v6487 = vsel %vm998, %v5678, %v6486
    %v6488 = vrot.slane %v5682, 7
    %v6489 = vsel %vm1001, %v6488, %v6487
    %v6490 = vrot.slane %v5686, 6
    %v6491 = vsel %vm1004, %v6490, %v6489
    %v6492 = vrot.slane %v5690, 5
    %v6493 = vsel %vm1007, %v6492, %v6491
    %v6494 = vrot.slane %v5694, 4
    %v6495 = vsel %vm1010, %v6494, %v6493
    %v6496 = vrot.slane %v5698, 3
    %v6497 = vsel %vm1013, %v6496, %v6495
    %v6498 = vrot.slane %v5671, 2
    %v6499 = vrot.slane %v5675, 1
    %v6500 = vsel %vm995, %v6499, %v6498
    %v6501 = vsel %vm998, %v5679, %v6500
    %v6502 = vrot.slane %v5683, 7
    %v6503 = vsel %vm1001, %v6502, %v6501
    %v6504 = vrot.slane %v5687, 6
    %v6505 = vsel %vm1004, %v6504, %v6503
    %v6506 = vrot.slane %v5691, 5
    %v6507 = vsel %vm1007, %v6506, %v6505
    %v6508 = vrot.slane %v5695, 4
    %v6509 = vsel %vm1010, %v6508, %v6507
    %v6510 = vrot.slane %v5699, 3
    %v6511 = vsel %vm1013, %v6510, %v6509
    %v6548 = vrot.slane %v5776, 3
    %v6549 = vrot.slane %v5780, 2
    %v6550 = vsel %vm995, %v6549, %v6548
    %v6551 = vrot.slane %v5784, 1
    %v6552 = vsel %vm998, %v6551, %v6550
    %v6553 = vsel %vm1001, %v5788, %v6552
    %v6554 = vrot.slane %v5792, 7
    %v6555 = vsel %vm1004, %v6554, %v6553
    %v6556 = vrot.slane %v5796, 6
    %v6557 = vsel %vm1007, %v6556, %v6555
    %v6558 = vrot.slane %v5800, 5
    %v6559 = vsel %vm1010, %v6558, %v6557
    %v6560 = vrot.slane %v5804, 4
    %v6561 = vsel %vm1013, %v6560, %v6559
    %v6562 = vrot.slane %v5777, 3
    %v6563 = vrot.slane %v5781, 2
    %v6564 = vsel %vm995, %v6563, %v6562
    %v6565 = vrot.slane %v5785, 1
    %v6566 = vsel %vm998, %v6565, %v6564
    %v6567 = vsel %vm1001, %v5789, %v6566
    %v6568 = vrot.slane %v5793, 7
    %v6569 = vsel %vm1004, %v6568, %v6567
    %v6570 = vrot.slane %v5797, 6
    %v6571 = vsel %vm1007, %v6570, %v6569
    %v6572 = vrot.slane %v5801, 5
    %v6573 = vsel %vm1010, %v6572, %v6571
    %v6574 = vrot.slane %v5805, 4
    %v6575 = vsel %vm1013, %v6574, %v6573
    %v6576 = vrot.slane %v5778, 3
    %v6577 = vrot.slane %v5782, 2
    %v6578 = vsel %vm995, %v6577, %v6576
    %v6579 = vrot.slane %v5786, 1
    %v6580 = vsel %vm998, %v6579, %v6578
    %v6581 = vsel %vm1001, %v5790, %v6580
    %v6582 = vrot.slane %v5794, 7
    %v6583 = vsel %vm1004, %v6582, %v6581
    %v6584 = vrot.slane %v5798, 6
    %v6585 = vsel %vm1007, %v6584, %v6583
    %v6586 = vrot.slane %v5802, 5
    %v6587 = vsel %vm1010, %v6586, %v6585
    %v6588 = vrot.slane %v5806, 4
    %v6589 = vsel %vm1013, %v6588, %v6587
    %v6590 = vrot.slane %v5779, 3
    %v6591 = vrot.slane %v5783, 2
    %v6592 = vsel %vm995, %v6591, %v6590
    %v6593 = vrot.slane %v5787, 1
    %v6594 = vsel %vm998, %v6593, %v6592
    %v6595 = vsel %vm1001, %v5791, %v6594
    %v6596 = vrot.slane %v5795, 7
    %v6597 = vsel %vm1004, %v6596, %v6595
    %v6598 = vrot.slane %v5799, 6
    %v6599 = vsel %vm1007, %v6598, %v6597
    %v6600 = vrot.slane %v5803, 5
    %v6601 = vsel %vm1010, %v6600, %v6599
    %v6602 = vrot.slane %v5807, 4
    %v6603 = vsel %vm1013, %v6602, %v6601
    %v6640 = vrot.slane %v5884, 5
    %v6641 = vrot.slane %v5888, 4
    %v6642 = vsel %vm995, %v6641, %v6640
    %v6643 = vrot.slane %v5892, 3
    %v6644 = vsel %vm998, %v6643, %v6642
    %v6645 = vrot.slane %v5896, 2
    %v6646 = vsel %vm1001, %v6645, %v6644
    %v6647 = vrot.slane %v5900, 1
    %v6648 = vsel %vm1004, %v6647, %v6646
    %v6649 = vsel %vm1007, %v5904, %v6648
    %v6650 = vrot.slane %v5908, 7
    %v6651 = vsel %vm1010, %v6650, %v6649
    %v6652 = vrot.slane %v5912, 6
    %v6653 = vsel %vm1013, %v6652, %v6651
    %v6654 = vrot.slane %v5885, 5
    %v6655 = vrot.slane %v5889, 4
    %v6656 = vsel %vm995, %v6655, %v6654
    %v6657 = vrot.slane %v5893, 3
    %v6658 = vsel %vm998, %v6657, %v6656
    %v6659 = vrot.slane %v5897, 2
    %v6660 = vsel %vm1001, %v6659, %v6658
    %v6661 = vrot.slane %v5901, 1
    %v6662 = vsel %vm1004, %v6661, %v6660
    %v6663 = vsel %vm1007, %v5905, %v6662
    %v6664 = vrot.slane %v5909, 7
    %v6665 = vsel %vm1010, %v6664, %v6663
    %v6666 = vrot.slane %v5913, 6
    %v6667 = vsel %vm1013, %v6666, %v6665
    %v6668 = vrot.slane %v5886, 5
    %v6669 = vrot.slane %v5890, 4
    %v6670 = vsel %vm995, %v6669, %v6668
    %v6671 = vrot.slane %v5894, 3
    %v6672 = vsel %vm998, %v6671, %v6670
    %v6673 = vrot.slane %v5898, 2
    %v6674 = vsel %vm1001, %v6673, %v6672
    %v6675 = vrot.slane %v5902, 1
    %v6676 = vsel %vm1004, %v6675, %v6674
    %v6677 = vsel %vm1007, %v5906, %v6676
    %v6678 = vrot.slane %v5910, 7
    %v6679 = vsel %vm1010, %v6678, %v6677
    %v6680 = vrot.slane %v5914, 6
    %v6681 = vsel %vm1013, %v6680, %v6679
    %v6682 = vrot.slane %v5887, 5
    %v6683 = vrot.slane %v5891, 4
    %v6684 = vsel %vm995, %v6683, %v6682
    %v6685 = vrot.slane %v5895, 3
    %v6686 = vsel %vm998, %v6685, %v6684
    %v6687 = vrot.slane %v5899, 2
    %v6688 = vsel %vm1001, %v6687, %v6686
    %v6689 = vrot.slane %v5903, 1
    %v6690 = vsel %vm1004, %v6689, %v6688
    %v6691 = vsel %vm1007, %v5907, %v6690
    %v6692 = vrot.slane %v5911, 7
    %v6693 = vsel %vm1010, %v6692, %v6691
    %v6694 = vrot.slane %v5915, 6
    %v6695 = vsel %vm1013, %v6694, %v6693
    %v6732 = vrot.slane %v5992, 6
    %v6733 = vrot.slane %v5996, 5
    %v6734 = vsel %vm995, %v6733, %v6732
    %v6735 = vrot.slane %v6000, 4
    %v6736 = vsel %vm998, %v6735, %v6734
    %v6737 = vrot.slane %v6004, 3
    %v6738 = vsel %vm1001, %v6737, %v6736
    %v6739 = vrot.slane %v6008, 2
    %v6740 = vsel %vm1004, %v6739, %v6738
    %v6741 = vrot.slane %v6012, 1
    %v6742 = vsel %vm1007, %v6741, %v6740
    %v6743 = vsel %vm1010, %v6016, %v6742
    %v6744 = vrot.slane %v6020, 7
    %v6745 = vsel %vm1013, %v6744, %v6743
    %v6746 = vrot.slane %v5993, 6
    %v6747 = vrot.slane %v5997, 5
    %v6748 = vsel %vm995, %v6747, %v6746
    %v6749 = vrot.slane %v6001, 4
    %v6750 = vsel %vm998, %v6749, %v6748
    %v6751 = vrot.slane %v6005, 3
    %v6752 = vsel %vm1001, %v6751, %v6750
    %v6753 = vrot.slane %v6009, 2
    %v6754 = vsel %vm1004, %v6753, %v6752
    %v6755 = vrot.slane %v6013, 1
    %v6756 = vsel %vm1007, %v6755, %v6754
    %v6757 = vsel %vm1010, %v6017, %v6756
    %v6758 = vrot.slane %v6021, 7
    %v6759 = vsel %vm1013, %v6758, %v6757
    %v6760 = vrot.slane %v5994, 6
    %v6761 = vrot.slane %v5998, 5
    %v6762 = vsel %vm995, %v6761, %v6760
    %v6763 = vrot.slane %v6002, 4
    %v6764 = vsel %vm998, %v6763, %v6762
    %v6765 = vrot.slane %v6006, 3
    %v6766 = vsel %vm1001, %v6765, %v6764
    %v6767 = vrot.slane %v6010, 2
    %v6768 = vsel %vm1004, %v6767, %v6766
    %v6769 = vrot.slane %v6014, 1
    %v6770 = vsel %vm1007, %v6769, %v6768
    %v6771 = vsel %vm1010, %v6018, %v6770
    %v6772 = vrot.slane %v6022, 7
    %v6773 = vsel %vm1013, %v6772, %v6771
    %v6774 = vrot.slane %v5995, 6
    %v6775 = vrot.slane %v5999, 5
    %v6776 = vsel %vm995, %v6775, %v6774
    %v6777 = vrot.slane %v6003, 4
    %v6778 = vsel %vm998, %v6777, %v6776
    %v6779 = vrot.slane %v6007, 3
    %v6780 = vsel %vm1001, %v6779, %v6778
    %v6781 = vrot.slane %v6011, 2
    %v6782 = vsel %vm1004, %v6781, %v6780
    %v6783 = vrot.slane %v6015, 1
    %v6784 = vsel %vm1007, %v6783, %v6782
    %v6785 = vsel %vm1010, %v6019, %v6784
    %v6786 = vrot.slane %v6023, 7
    %v6787 = vsel %vm1013, %v6786, %v6785
    %v6824 = vrot.slane %v6100, 7
    %v6825 = vrot.slane %v6104, 6
    %v6826 = vsel %vm995, %v6825, %v6824
    %v6827 = vrot.slane %v6108, 5
    %v6828 = vsel %vm998, %v6827, %v6826
    %v6829 = vrot.slane %v6112, 4
    %v6830 = vsel %vm1001, %v6829, %v6828
    %v6831 = vrot.slane %v6116, 3
    %v6832 = vsel %vm1004, %v6831, %v6830
    %v6833 = vrot.slane %v6120, 2
    %v6834 = vsel %vm1007, %v6833, %v6832
    %v6835 = vrot.slane %v6124, 1
    %v6836 = vsel %vm1010, %v6835, %v6834
    %v6837 = vsel %vm1013, %v6128, %v6836
    %v6838 = vrot.slane %v6101, 7
    %v6839 = vrot.slane %v6105, 6
    %v6840 = vsel %vm995, %v6839, %v6838
    %v6841 = vrot.slane %v6109, 5
    %v6842 = vsel %vm998, %v6841, %v6840
    %v6843 = vrot.slane %v6113, 4
    %v6844 = vsel %vm1001, %v6843, %v6842
    %v6845 = vrot.slane %v6117, 3
    %v6846 = vsel %vm1004, %v6845, %v6844
    %v6847 = vrot.slane %v6121, 2
    %v6848 = vsel %vm1007, %v6847, %v6846
    %v6849 = vrot.slane %v6125, 1
    %v6850 = vsel %vm1010, %v6849, %v6848
    %v6851 = vsel %vm1013, %v6129, %v6850
    %v6852 = vrot.slane %v6102, 7
    %v6853 = vrot.slane %v6106, 6
    %v6854 = vsel %vm995, %v6853, %v6852
    %v6855 = vrot.slane %v6110, 5
    %v6856 = vsel %vm998, %v6855, %v6854
    %v6857 = vrot.slane %v6114, 4
    %v6858 = vsel %vm1001, %v6857, %v6856
    %v6859 = vrot.slane %v6118, 3
    %v6860 = vsel %vm1004, %v6859, %v6858
    %v6861 = vrot.slane %v6122, 2
    %v6862 = vsel %vm1007, %v6861, %v6860
    %v6863 = vrot.slane %v6126, 1
    %v6864 = vsel %vm1010, %v6863, %v6862
    %v6865 = vsel %vm1013, %v6130, %v6864
    %v6866 = vrot.slane %v6103, 7
    %v6867 = vrot.slane %v6107, 6
    %v6868 = vsel %vm995, %v6867, %v6866
    %v6869 = vrot.slane %v6111, 5
    %v6870 = vsel %vm998, %v6869, %v6868
    %v6871 = vrot.slane %v6115, 4
    %v6872 = vsel %vm1001, %v6871, %v6870
    %v6873 = vrot.slane %v6119, 3
    %v6874 = vsel %vm1004, %v6873, %v6872
    %v6875 = vrot.slane %v6123, 2
    %v6876 = vsel %vm1007, %v6875, %v6874
    %v6877 = vrot.slane %v6127, 1
    %v6878 = vsel %vm1010, %v6877, %v6876
    %v6879 = vsel %vm1013, %v6131, %v6878
    %v6916 = vrot.slane %v6212, 7
    %v6917 = vsel %vm995, %v6916, %v6208
    %v6918 = vrot.slane %v6216, 6
    %v6919 = vsel %vm998, %v6918, %v6917
    %v6920 = vrot.slane %v6220, 5
    %v6921 = vsel %vm1001, %v6920, %v6919
    %v6922 = vrot.slane %v6224, 4
    %v6923 = vsel %vm1004, %v6922, %v6921
    %v6924 = vrot.slane %v6228, 3
    %v6925 = vsel %vm1007, %v6924, %v6923
    %v6926 = vrot.slane %v6232, 2
    %v6927 = vsel %vm1010, %v6926, %v6925
    %v6928 = vrot.slane %v6236, 1
    %v6929 = vsel %vm1013, %v6928, %v6927
    %v6930 = vrot.slane %v6213, 7
    %v6931 = vsel %vm995, %v6930, %v6209
    %v6932 = vrot.slane %v6217, 6
    %v6933 = vsel %vm998, %v6932, %v6931
    %v6934 = vrot.slane %v6221, 5
    %v6935 = vsel %vm1001, %v6934, %v6933
    %v6936 = vrot.slane %v6225, 4
    %v6937 = vsel %vm1004, %v6936, %v6935
    %v6938 = vrot.slane %v6229, 3
    %v6939 = vsel %vm1007, %v6938, %v6937
    %v6940 = vrot.slane %v6233, 2
    %v6941 = vsel %vm1010, %v6940, %v6939
    %v6942 = vrot.slane %v6237, 1
    %v6943 = vsel %vm1013, %v6942, %v6941
    %v6944 = vrot.slane %v6214, 7
    %v6945 = vsel %vm995, %v6944, %v6210
    %v6946 = vrot.slane %v6218, 6
    %v6947 = vsel %vm998, %v6946, %v6945
    %v6948 = vrot.slane %v6222, 5
    %v6949 = vsel %vm1001, %v6948, %v6947
    %v6950 = vrot.slane %v6226, 4
    %v6951 = vsel %vm1004, %v6950, %v6949
    %v6952 = vrot.slane %v6230, 3
    %v6953 = vsel %vm1007, %v6952, %v6951
    %v6954 = vrot.slane %v6234, 2
    %v6955 = vsel %vm1010, %v6954, %v6953
    %v6956 = vrot.slane %v6238, 1
    %v6957 = vsel %vm1013, %v6956, %v6955
    %v6958 = vrot.slane %v6215, 7
    %v6959 = vsel %vm995, %v6958, %v6211
    %v6960 = vrot.slane %v6219, 6
    %v6961 = vsel %vm998, %v6960, %v6959
    %v6962 = vrot.slane %v6223, 5
    %v6963 = vsel %vm1001, %v6962, %v6961
    %v6964 = vrot.slane %v6227, 4
    %v6965 = vsel %vm1004, %v6964, %v6963
    %v6966 = vrot.slane %v6231, 3
    %v6967 = vsel %vm1007, %v6966, %v6965
    %v6968 = vrot.slane %v6235, 2
    %v6969 = vsel %vm1010, %v6968, %v6967
    %v6970 = vrot.slane %v6239, 1
    %v6971 = vsel %vm1013, %v6970, %v6969
    %6976 = vset.pattern.permute.xlu0 3
    %6977 = vperm.xlu0 %6976, %v45
    %v6978 = vpop.permute.xlu0 %6977
    %v6981 = vsel %vm1710, %v5375, 0
    %6983 = vmatprep.subr.mxu0 0.0
    %6984 = vmatpush1.msra.mxu0 0.0
    %6985 = vmatprep.subr.mxu0 0.0
    %6986 = vmatpush1.msra.mxu0 0.0
    %6987 = vmatprep.subr.mxu0 0.0
    %6988 = vmatpush1.msra.mxu0 0.0
    %6989 = vmatprep.subr.mxu0 0.0
    %6990 = vmatpush1.msra.mxu0 0.0
    %6991 = vmatprep.subr.mxu0 0.0
    %6992 = vmatpush1.msra.mxu0 0.0
    %6993 = vmatprep.subr.mxu0 0.0
    %6994 = vmatpush1.msra.mxu0 0.0
    %6995 = vmatprep.subr.mxu0 0.0
    %6996 = vmatpush1.msra.mxu0 0.0
    %6997 = vmatprep.subr.mxu0 %v6943
    %6998 = vmatpush1.msra.mxu0 %v6929
    %6999 = vmatprep.subr.mxu0 %v6851
    %7000 = vmatpush1.msra.mxu0 %v6837
    %7001 = vmatprep.subr.mxu0 %v6759
    %7002 = vmatpush1.msra.mxu0 %v6745
    %7003 = vmatprep.subr.mxu0 %v6667
    %7004 = vmatpush1.msra.mxu0 %v6653
    %7005 = vmatprep.subr.mxu0 %v5371
    %7006 = vmatpush1.msra.mxu0 %v5370
    %7007 = vmatprep.subr.mxu0 %v6575
    %7008 = vmatpush1.msra.mxu0 %v6561
    %7009 = vmatprep.subr.mxu0 %v6483
    %7010 = vmatpush1.msra.mxu0 %v6469
    %7011 = vmatprep.subr.mxu0 %v6391
    %7012 = vmatpush1.msra.mxu0 %v6377
    %7013 = vmatprep.subr.mxu0 %v6299
    %7014 = vmatpush1.msra.mxu0 %v6285
    %7015 = vmatprep.subr.mxu0 0.0
    %7016 = vmatpush2.msra.mxu0 0.0
    %7017 = vmatprep.subr.mxu0 0.0
    %7018 = vmatpush2.msra.mxu0 0.0
    %7019 = vmatprep.subr.mxu0 0.0
    %7020 = vmatpush2.msra.mxu0 0.0
    %7021 = vmatprep.subr.mxu0 0.0
    %7022 = vmatpush2.msra.mxu0 0.0
    %7023 = vmatprep.subr.mxu0 0.0
    %7024 = vmatpush2.msra.mxu0 0.0
    %7025 = vmatprep.subr.mxu0 0.0
    %7026 = vmatpush2.msra.mxu0 0.0
    %7027 = vmatprep.subr.mxu0 0.0
    %7028 = vmatpush2.msra.mxu0 0.0
    %7029 = vmatprep.subr.mxu0 0.0
    %7030 = vmatpush2.msra.mxu0 0.0
    %7031 = vmatprep.subr.mxu0 0.0
    %7032 = vmatpush2.msra.mxu0 0.0
    %7033 = vmatprep.subr.mxu0 0.0
    %7034 = vmatpush2.msra.mxu0 0.0
    %7035 = vmatprep.subr.mxu0 0.0
    %7036 = vmatpush2.msra.mxu0 0.0
    %7037 = vmatprep.subr.mxu0 0.0
    %7038 = vmatpush2.msra.mxu0 0.0
    %7039 = vmatprep.subr.mxu0 0.0
    %7040 = vmatpush2.msra.mxu0 0.0
    %7041 = vmatprep.subr.mxu0 0.0
    %7042 = vmatpush2.msra.mxu0 0.0
    %7043 = vmatprep.subr.mxu0 0.0
    %7044 = vmatpush2.msra.mxu0 0.0
    %7045 = vmatprep.subr.mxu0 0.0
    %7046 = vmatpush2.msra.mxu0 0.0
    %7047 = vmatprep.mubr.f32.mxu0 0.0
    %7048 = vmatmul.mubr.f32.gmra.mxu0 %v6981
    %v7049 = vpop.f32.mrf.mxu0
    %v7050 = vadd.f32 %v6978, %v7049
    %v7051 = vpop.f32.mrf.mxu0
    %v7052 = vadd.f32 %v6978, %v7051
    %7053 = vdwg.mxu0
    %7054 = vmatprep.subr.mxu0 0.0
    %7055 = vmatpush1.msra.mxu0 0.0
    %7056 = vmatprep.subr.mxu0 0.0
    %7057 = vmatpush1.msra.mxu0 0.0
    %7058 = vmatprep.subr.mxu0 0.0
    %7059 = vmatpush1.msra.mxu0 0.0
    %7060 = vmatprep.subr.mxu0 0.0
    %7061 = vmatpush1.msra.mxu0 0.0
    %7062 = vmatprep.subr.mxu0 0.0
    %7063 = vmatpush1.msra.mxu0 0.0
    %7064 = vmatprep.subr.mxu0 0.0
    %7065 = vmatpush1.msra.mxu0 0.0
    %7066 = vmatprep.subr.mxu0 0.0
    %7067 = vmatpush1.msra.mxu0 0.0
    %7068 = vmatprep.subr.mxu0 %v6971
    %7069 = vmatpush1.msra.mxu0 %v6957
    %7070 = vmatprep.subr.mxu0 %v6879
    %7071 = vmatpush1.msra.mxu0 %v6865
    %7072 = vmatprep.subr.mxu0 %v6787
    %7073 = vmatpush1.msra.mxu0 %v6773
    %7074 = vmatprep.subr.mxu0 %v6695
    %7075 = vmatpush1.msra.mxu0 %v6681
    %7076 = vmatprep.subr.mxu0 %v5373
    %7077 = vmatpush1.msra.mxu0 %v5372
    %7078 = vmatprep.subr.mxu0 %v6603
    %7079 = vmatpush1.msra.mxu0 %v6589
    %7080 = vmatprep.subr.mxu0 %v6511
    %7081 = vmatpush1.msra.mxu0 %v6497
    %7082 = vmatprep.subr.mxu0 %v6419
    %7083 = vmatpush1.msra.mxu0 %v6405
    %7084 = vmatprep.subr.mxu0 %v6327
    %7085 = vmatpush1.msra.mxu0 %v6313
    %7086 = vmatprep.subr.mxu0 0.0
    %7087 = vmatpush2.msra.mxu0 0.0
    %7088 = vmatprep.subr.mxu0 0.0
    %7089 = vmatpush2.msra.mxu0 0.0
    %7090 = vmatprep.subr.mxu0 0.0
    %7091 = vmatpush2.msra.mxu0 0.0
    %7092 = vmatprep.subr.mxu0 0.0
    %7093 = vmatpush2.msra.mxu0 0.0
    %7094 = vmatprep.subr.mxu0 0.0
    %7095 = vmatpush2.msra.mxu0 0.0
    %7096 = vmatprep.subr.mxu0 0.0
    %7097 = vmatpush2.msra.mxu0 0.0
    %7098 = vmatprep.subr.mxu0 0.0
    %7099 = vmatpush2.msra.mxu0 0.0
    %7100 = vmatprep.subr.mxu0 0.0
    %7101 = vmatpush2.msra.mxu0 0.0
    %7102 = vmatprep.subr.mxu0 0.0
    %7103 = vmatpush2.msra.mxu0 0.0
    %7104 = vmatprep.subr.mxu0 0.0
    %7105 = vmatpush2.msra.mxu0 0.0
    %7106 = vmatprep.subr.mxu0 0.0
    %7107 = vmatpush2.msra.mxu0 0.0
    %7108 = vmatprep.subr.mxu0 0.0
    %7109 = vmatpush2.msra.mxu0 0.0
    %7110 = vmatprep.subr.mxu0 0.0
    %7111 = vmatpush2.msra.mxu0 0.0
    %7112 = vmatprep.subr.mxu0 0.0
    %7113 = vmatpush2.msra.mxu0 0.0
    %7114 = vmatprep.subr.mxu0 0.0
    %7115 = vmatpush2.msra.mxu0 0.0
    %7116 = vmatprep.subr.mxu0 0.0
    %7117 = vmatpush2.msra.mxu0 0.0
    %7118 = vmatprep.mubr.f32.mxu0 0.0
    %7119 = vmatmul.mubr.f32.gmra.mxu0 %v6981
    %v7120 = vpop.f32.mrf.mxu0
    %v7121 = vadd.f32 %v6978, %v7120
    %v7122 = vpop.f32.mrf.mxu0
    %v7123 = vadd.f32 %v6978, %v7122
    %7124 = vdwg.mxu0
    %v7125 = vadd.f32 %v7050, %v3615
    %v7126 = vadd.f32 %v7052, %v3616
    %v7127 = vadd.f32 %v7121, %v3617
    %v7128 = vadd.f32 %v7123, %v3618
    %v7129 = vmax.f32 %v7125, 0.0
    %v7130 = vmax.f32 %v7126, 0.0
    %v7131 = vmax.f32 %v7127, 0.0
    %v7132 = vmax.f32 %v7128, 0.0
    %v7133 = vld [vmem:[%s1] sm:$0xff]
    %v7134 = vld [vmem:[%s1 + $0x8] sm:$0xff]
    %s7135 = scalar_lea.vmem %s2, 128
    %v7136 = vld [vmem:[%s7135] sm:$0xff]
    %v7137 = vld [vmem:[%s7135 + $0x8] sm:$0xff]
    %v7138 = vld [vmem:[%s7135 + $0x10] sm:$0xff]
    %v7139 = vld [vmem:[%s7135 + $0x18] sm:$0xff]
    %7140 = vrot.lane.b32.xlu0 %v7133, 9
    %v7141 = vpop.permute.xlu0 %7140
    %7142 = vrot.lane.b32.xlu0 %v7134, 9
    %v7143 = vpop.permute.xlu0 %7142
    %v7144 = vsel %vm65, 1, 0
    %vm7145 = vcmp.eq.s32.totalorder %v7144, 1
    %v7148 = vrot.slane %v7141, 1
    %v7149 = vrot.slane %v7141, 2
    %v7150 = vrot.slane %v7141, 3
    %v7151 = vrot.slane %v7141, 4
    %v7152 = vrot.slane %v7141, 5
    %v7153 = vrot.slane %v7141, 6
    %v7154 = vrot.slane %v7141, 7
    %v7155 = vrot.slane %v7143, 1
    %v7156 = vrot.slane %v7143, 2
    %v7157 = vrot.slane %v7143, 3
    %v7158 = vrot.slane %v7143, 4
    %v7159 = vrot.slane %v7143, 5
    %v7160 = vrot.slane %v7143, 6
    %v7161 = vrot.slane %v7143, 7
    %v7178 = vsel %vm7145, %v7141, 0.0
    %v7179 = vsel %vm7145, %v7148, 0.0
    %v7180 = vsel %vm7145, %v7149, 0.0
    %v7181 = vsel %vm7145, %v7150, 0.0
    %v7182 = vsel %vm7145, %v7151, 0.0
    %v7183 = vsel %vm7145, %v7152, 0.0
    %v7184 = vsel %vm7145, %v7153, 0.0
    %v7185 = vsel %vm7145, %v7154, 0.0
    %v7186 = vsel %vm7145, %v7143, 0.0
    %v7187 = vsel %vm7145, %v7155, 0.0
    %v7188 = vsel %vm7145, %v7156, 0.0
    %v7189 = vsel %vm7145, %v7157, 0.0
    %v7190 = vsel %vm7145, %v7158, 0.0
    %v7191 = vsel %vm7145, %v7159, 0.0
    %v7192 = vsel %vm7145, %v7160, 0.0
    %v7193 = vsel %vm7145, %v7161, 0.0
    %7194 = vrot.lane.b32.xlu0 %v7133, 8
    %v7195 = vpop.permute.xlu0 %7194
    %7196 = vrot.lane.b32.xlu0 %v7134, 8
    %v7197 = vpop.permute.xlu0 %7196
    %v7200 = vrot.slane %v7195, 7
    %v7201 = vrot.slane %v7195, 1
    %v7202 = vrot.slane %v7195, 2
    %v7203 = vrot.slane %v7195, 3
    %v7204 = vrot.slane %v7195, 4
    %v7205 = vrot.slane %v7195, 5
    %v7206 = vrot.slane %v7195, 6
    %v7207 = vrot.slane %v7197, 7
    %v7208 = vrot.slane %v7197, 1
    %v7209 = vrot.slane %v7197, 2
    %v7210 = vrot.slane %v7197, 3
    %v7211 = vrot.slane %v7197, 4
    %v7212 = vrot.slane %v7197, 5
    %v7213 = vrot.slane %v7197, 6
    %v7230 = vsel %vm7145, %v7200, 0.0
    %v7231 = vsel %vm7145, %v7195, 0.0
    %v7232 = vsel %vm7145, %v7201, 0.0
    %v7233 = vsel %vm7145, %v7202, 0.0
    %v7234 = vsel %vm7145, %v7203, 0.0
    %v7235 = vsel %vm7145, %v7204, 0.0
    %v7236 = vsel %vm7145, %v7205, 0.0
    %v7237 = vsel %vm7145, %v7206, 0.0
    %v7238 = vsel %vm7145, %v7207, 0.0
    %v7239 = vsel %vm7145, %v7197, 0.0
    %v7240 = vsel %vm7145, %v7208, 0.0
    %v7241 = vsel %vm7145, %v7209, 0.0
    %v7242 = vsel %vm7145, %v7210, 0.0
    %v7243 = vsel %vm7145, %v7211, 0.0
    %v7244 = vsel %vm7145, %v7212, 0.0
    %v7245 = vsel %vm7145, %v7213, 0.0
    %7246 = vrot.lane.b32.xlu0 %v7133, 7
    %v7247 = vpop.permute.xlu0 %7246
    %7248 = vrot.lane.b32.xlu0 %v7134, 7
    %v7249 = vpop.permute.xlu0 %7248
    %v7252 = vrot.slane %v7247, 6
    %v7253 = vrot.slane %v7247, 7
    %v7254 = vrot.slane %v7247, 1
    %v7255 = vrot.slane %v7247, 2
    %v7256 = vrot.slane %v7247, 3
    %v7257 = vrot.slane %v7247, 4
    %v7258 = vrot.slane %v7247, 5
    %v7259 = vrot.slane %v7249, 6
    %v7260 = vrot.slane %v7249, 7
    %v7261 = vrot.slane %v7249, 1
    %v7262 = vrot.slane %v7249, 2
    %v7263 = vrot.slane %v7249, 3
    %v7264 = vrot.slane %v7249, 4
    %v7265 = vrot.slane %v7249, 5
    %v7282 = vsel %vm7145, %v7252, 0.0
    %v7283 = vsel %vm7145, %v7253, 0.0
    %v7284 = vsel %vm7145, %v7247, 0.0
    %v7285 = vsel %vm7145, %v7254, 0.0
    %v7286 = vsel %vm7145, %v7255, 0.0
    %v7287 = vsel %vm7145, %v7256, 0.0
    %v7288 = vsel %vm7145, %v7257, 0.0
    %v7289 = vsel %vm7145, %v7258, 0.0
    %v7290 = vsel %vm7145, %v7259, 0.0
    %v7291 = vsel %vm7145, %v7260, 0.0
    %v7292 = vsel %vm7145, %v7249, 0.0
    %v7293 = vsel %vm7145, %v7261, 0.0
    %v7294 = vsel %vm7145, %v7262, 0.0
    %v7295 = vsel %vm7145, %v7263, 0.0
    %v7296 = vsel %vm7145, %v7264, 0.0
    %v7297 = vsel %vm7145, %v7265, 0.0
    %7298 = vrot.lane.b32.xlu0 %v7133, 1
    %v7299 = vpop.permute.xlu0 %7298
    %7300 = vrot.lane.b32.xlu0 %v7134, 1
    %v7301 = vpop.permute.xlu0 %7300
    %v7304 = vrot.slane %v7299, 5
    %v7305 = vrot.slane %v7299, 6
    %v7306 = vrot.slane %v7299, 7
    %v7307 = vrot.slane %v7299, 1
    %v7308 = vrot.slane %v7299, 2
    %v7309 = vrot.slane %v7299, 3
    %v7310 = vrot.slane %v7299, 4
    %v7311 = vrot.slane %v7301, 5
    %v7312 = vrot.slane %v7301, 6
    %v7313 = vrot.slane %v7301, 7
    %v7314 = vrot.slane %v7301, 1
    %v7315 = vrot.slane %v7301, 2
    %v7316 = vrot.slane %v7301, 3
    %v7317 = vrot.slane %v7301, 4
    %v7334 = vsel %vm7145, %v7304, 0.0
    %v7335 = vsel %vm7145, %v7305, 0.0
    %v7336 = vsel %vm7145, %v7306, 0.0
    %v7337 = vsel %vm7145, %v7299, 0.0
    %v7338 = vsel %vm7145, %v7307, 0.0
    %v7339 = vsel %vm7145, %v7308, 0.0
    %v7340 = vsel %vm7145, %v7309, 0.0
    %v7341 = vsel %vm7145, %v7310, 0.0
    %v7342 = vsel %vm7145, %v7311, 0.0
    %v7343 = vsel %vm7145, %v7312, 0.0
    %v7344 = vsel %vm7145, %v7313, 0.0
    %v7345 = vsel %vm7145, %v7301, 0.0
    %v7346 = vsel %vm7145, %v7314, 0.0
    %v7347 = vsel %vm7145, %v7315, 0.0
    %v7348 = vsel %vm7145, %v7316, 0.0
    %v7349 = vsel %vm7145, %v7317, 0.0
    %7350 = vrot.lane.b32.xlu0 %v7133, 127
    %v7351 = vpop.permute.xlu0 %7350
    %7352 = vrot.lane.b32.xlu0 %v7134, 127
    %v7353 = vpop.permute.xlu0 %7352
    %v7356 = vrot.slane %v7351, 3
    %v7357 = vrot.slane %v7351, 4
    %v7358 = vrot.slane %v7351, 5
    %v7359 = vrot.slane %v7351, 6
    %v7360 = vrot.slane %v7351, 7
    %v7361 = vrot.slane %v7351, 1
    %v7362 = vrot.slane %v7351, 2
    %v7363 = vrot.slane %v7353, 3
    %v7364 = vrot.slane %v7353, 4
    %v7365 = vrot.slane %v7353, 5
    %v7366 = vrot.slane %v7353, 6
    %v7367 = vrot.slane %v7353, 7
    %v7368 = vrot.slane %v7353, 1
    %v7369 = vrot.slane %v7353, 2
    %v7386 = vsel %vm7145, %v7356, 0.0
    %v7387 = vsel %vm7145, %v7357, 0.0
    %v7388 = vsel %vm7145, %v7358, 0.0
    %v7389 = vsel %vm7145, %v7359, 0.0
    %v7390 = vsel %vm7145, %v7360, 0.0
    %v7391 = vsel %vm7145, %v7351, 0.0
    %v7392 = vsel %vm7145, %v7361, 0.0
    %v7393 = vsel %vm7145, %v7362, 0.0
    %v7394 = vsel %vm7145, %v7363, 0.0
    %v7395 = vsel %vm7145, %v7364, 0.0
    %v7396 = vsel %vm7145, %v7365, 0.0
    %v7397 = vsel %vm7145, %v7366, 0.0
    %v7398 = vsel %vm7145, %v7367, 0.0
    %v7399 = vsel %vm7145, %v7353, 0.0
    %v7400 = vsel %vm7145, %v7368, 0.0
    %v7401 = vsel %vm7145, %v7369, 0.0
    %7402 = vrot.lane.b32.xlu0 %v7133, 121
    %v7403 = vpop.permute.xlu0 %7402
    %7404 = vrot.lane.b32.xlu0 %v7134, 121
    %v7405 = vpop.permute.xlu0 %7404
    %v7408 = vrot.slane %v7403, 2
    %v7409 = vrot.slane %v7403, 3
    %v7410 = vrot.slane %v7403, 4
    %v7411 = vrot.slane %v7403, 5
    %v7412 = vrot.slane %v7403, 6
    %v7413 = vrot.slane %v7403, 7
    %v7414 = vrot.slane %v7403, 1
    %v7415 = vrot.slane %v7405, 2
    %v7416 = vrot.slane %v7405, 3
    %v7417 = vrot.slane %v7405, 4
    %v7418 = vrot.slane %v7405, 5
    %v7419 = vrot.slane %v7405, 6
    %v7420 = vrot.slane %v7405, 7
    %v7421 = vrot.slane %v7405, 1
    %v7438 = vsel %vm7145, %v7408, 0.0
    %v7439 = vsel %vm7145, %v7409, 0.0
    %v7440 = vsel %vm7145, %v7410, 0.0
    %v7441 = vsel %vm7145, %v7411, 0.0
    %v7442 = vsel %vm7145, %v7412, 0.0
    %v7443 = vsel %vm7145, %v7413, 0.0
    %v7444 = vsel %vm7145, %v7403, 0.0
    %v7445 = vsel %vm7145, %v7414, 0.0
    %v7446 = vsel %vm7145, %v7415, 0.0
    %v7447 = vsel %vm7145, %v7416, 0.0
    %v7448 = vsel %vm7145, %v7417, 0.0
    %v7449 = vsel %vm7145, %v7418, 0.0
    %v7450 = vsel %vm7145, %v7419, 0.0
    %v7451 = vsel %vm7145, %v7420, 0.0
    %v7452 = vsel %vm7145, %v7405, 0.0
    %v7453 = vsel %vm7145, %v7421, 0.0
    %7454 = vrot.lane.b32.xlu0 %v7133, 120
    %v7455 = vpop.permute.xlu0 %7454
    %7456 = vrot.lane.b32.xlu0 %v7134, 120
    %v7457 = vpop.permute.xlu0 %7456
    %v7460 = vrot.slane %v7455, 1
    %v7461 = vrot.slane %v7455, 2
    %v7462 = vrot.slane %v7455, 3
    %v7463 = vrot.slane %v7455, 4
    %v7464 = vrot.slane %v7455, 5
    %v7465 = vrot.slane %v7455, 6
    %v7466 = vrot.slane %v7455, 7
    %v7467 = vrot.slane %v7457, 1
    %v7468 = vrot.slane %v7457, 2
    %v7469 = vrot.slane %v7457, 3
    %v7470 = vrot.slane %v7457, 4
    %v7471 = vrot.slane %v7457, 5
    %v7472 = vrot.slane %v7457, 6
    %v7473 = vrot.slane %v7457, 7
    %v7490 = vsel %vm7145, %v7460, 0.0
    %v7491 = vsel %vm7145, %v7461, 0.0
    %v7492 = vsel %vm7145, %v7462, 0.0
    %v7493 = vsel %vm7145, %v7463, 0.0
    %v7494 = vsel %vm7145, %v7464, 0.0
    %v7495 = vsel %vm7145, %v7465, 0.0
    %v7496 = vsel %vm7145, %v7466, 0.0
    %v7497 = vsel %vm7145, %v7455, 0.0
    %v7498 = vsel %vm7145, %v7467, 0.0
    %v7499 = vsel %vm7145, %v7468, 0.0
    %v7500 = vsel %vm7145, %v7469, 0.0
    %v7501 = vsel %vm7145, %v7470, 0.0
    %v7502 = vsel %vm7145, %v7471, 0.0
    %v7503 = vsel %vm7145, %v7472, 0.0
    %v7504 = vsel %vm7145, %v7473, 0.0
    %v7505 = vsel %vm7145, %v7457, 0.0
    %7506 = vrot.lane.b32.xlu0 %v7133, 119
    %v7507 = vpop.permute.xlu0 %7506
    %7508 = vrot.lane.b32.xlu0 %v7134, 119
    %v7509 = vpop.permute.xlu0 %7508
    %v7510 = vsel %vm66, 1, 0
    %vm7511 = vcmp.eq.s32.totalorder %v7510, 1
    %v7514 = vrot.slane %v7507, 1
    %v7515 = vrot.slane %v7507, 2
    %v7516 = vrot.slane %v7507, 3
    %v7517 = vrot.slane %v7507, 4
    %v7518 = vrot.slane %v7507, 5
    %v7519 = vrot.slane %v7507, 6
    %v7520 = vrot.slane %v7507, 7
    %v7521 = vrot.slane %v7509, 1
    %v7522 = vrot.slane %v7509, 2
    %v7523 = vrot.slane %v7509, 3
    %v7524 = vrot.slane %v7509, 4
    %v7525 = vrot.slane %v7509, 5
    %v7526 = vrot.slane %v7509, 6
    %v7527 = vrot.slane %v7509, 7
    %v7544 = vsel %vm7511, %v7507, 0.0
    %v7545 = vsel %vm7511, %v7514, 0.0
    %v7546 = vsel %vm7511, %v7515, 0.0
    %v7547 = vsel %vm7511, %v7516, 0.0
    %v7548 = vsel %vm7511, %v7517, 0.0
    %v7549 = vsel %vm7511, %v7518, 0.0
    %v7550 = vsel %vm7511, %v7519, 0.0
    %v7551 = vsel %vm7511, %v7520, 0.0
    %v7552 = vsel %vm7511, %v7509, 0.0
    %v7553 = vsel %vm7511, %v7521, 0.0
    %v7554 = vsel %vm7511, %v7522, 0.0
    %v7555 = vsel %vm7511, %v7523, 0.0
    %v7556 = vsel %vm7511, %v7524, 0.0
    %v7557 = vsel %vm7511, %v7525, 0.0
    %v7558 = vsel %vm7511, %v7526, 0.0
    %v7559 = vsel %vm7511, %v7527, 0.0
    %v7576 = vrot.slane %v7179, 7
    %v7577 = vsel %vm995, %v7576, %v7178
    %v7578 = vrot.slane %v7180, 6
    %v7579 = vsel %vm998, %v7578, %v7577
    %v7580 = vrot.slane %v7181, 5
    %v7581 = vsel %vm1001, %v7580, %v7579
    %v7582 = vrot.slane %v7182, 4
    %v7583 = vsel %vm1004, %v7582, %v7581
    %v7584 = vrot.slane %v7183, 3
    %v7585 = vsel %vm1007, %v7584, %v7583
    %v7586 = vrot.slane %v7184, 2
    %v7587 = vsel %vm1010, %v7586, %v7585
    %v7588 = vrot.slane %v7185, 1
    %v7589 = vsel %vm1013, %v7588, %v7587
    %v7590 = vrot.slane %v7187, 7
    %v7591 = vsel %vm995, %v7590, %v7186
    %v7592 = vrot.slane %v7188, 6
    %v7593 = vsel %vm998, %v7592, %v7591
    %v7594 = vrot.slane %v7189, 5
    %v7595 = vsel %vm1001, %v7594, %v7593
    %v7596 = vrot.slane %v7190, 4
    %v7597 = vsel %vm1004, %v7596, %v7595
    %v7598 = vrot.slane %v7191, 3
    %v7599 = vsel %vm1007, %v7598, %v7597
    %v7600 = vrot.slane %v7192, 2
    %v7601 = vsel %vm1010, %v7600, %v7599
    %v7602 = vrot.slane %v7193, 1
    %v7603 = vsel %vm1013, %v7602, %v7601
    %v7622 = vrot.slane %v7230, 1
    %v7623 = vsel %vm995, %v7231, %v7622
    %v7624 = vrot.slane %v7232, 7
    %v7625 = vsel %vm998, %v7624, %v7623
    %v7626 = vrot.slane %v7233, 6
    %v7627 = vsel %vm1001, %v7626, %v7625
    %v7628 = vrot.slane %v7234, 5
    %v7629 = vsel %vm1004, %v7628, %v7627
    %v7630 = vrot.slane %v7235, 4
    %v7631 = vsel %vm1007, %v7630, %v7629
    %v7632 = vrot.slane %v7236, 3
    %v7633 = vsel %vm1010, %v7632, %v7631
    %v7634 = vrot.slane %v7237, 2
    %v7635 = vsel %vm1013, %v7634, %v7633
    %v7636 = vrot.slane %v7238, 1
    %v7637 = vsel %vm995, %v7239, %v7636
    %v7638 = vrot.slane %v7240, 7
    %v7639 = vsel %vm998, %v7638, %v7637
    %v7640 = vrot.slane %v7241, 6
    %v7641 = vsel %vm1001, %v7640, %v7639
    %v7642 = vrot.slane %v7242, 5
    %v7643 = vsel %vm1004, %v7642, %v7641
    %v7644 = vrot.slane %v7243, 4
    %v7645 = vsel %vm1007, %v7644, %v7643
    %v7646 = vrot.slane %v7244, 3
    %v7647 = vsel %vm1010, %v7646, %v7645
    %v7648 = vrot.slane %v7245, 2
    %v7649 = vsel %vm1013, %v7648, %v7647
    %v7668 = vrot.slane %v7282, 2
    %v7669 = vrot.slane %v7283, 1
    %v7670 = vsel %vm995, %v7669, %v7668
    %v7671 = vsel %vm998, %v7284, %v7670
    %v7672 = vrot.slane %v7285, 7
    %v7673 = vsel %vm1001, %v7672, %v7671
    %v7674 = vrot.slane %v7286, 6
    %v7675 = vsel %vm1004, %v7674, %v7673
    %v7676 = vrot.slane %v7287, 5
    %v7677 = vsel %vm1007, %v7676, %v7675
    %v7678 = vrot.slane %v7288, 4
    %v7679 = vsel %vm1010, %v7678, %v7677
    %v7680 = vrot.slane %v7289, 3
    %v7681 = vsel %vm1013, %v7680, %v7679
    %v7682 = vrot.slane %v7290, 2
    %v7683 = vrot.slane %v7291, 1
    %v7684 = vsel %vm995, %v7683, %v7682
    %v7685 = vsel %vm998, %v7292, %v7684
    %v7686 = vrot.slane %v7293, 7
    %v7687 = vsel %vm1001, %v7686, %v7685
    %v7688 = vrot.slane %v7294, 6
    %v7689 = vsel %vm1004, %v7688, %v7687
    %v7690 = vrot.slane %v7295, 5
    %v7691 = vsel %vm1007, %v7690, %v7689
    %v7692 = vrot.slane %v7296, 4
    %v7693 = vsel %vm1010, %v7692, %v7691
    %v7694 = vrot.slane %v7297, 3
    %v7695 = vsel %vm1013, %v7694, %v7693
    %v7714 = vrot.slane %v7334, 3
    %v7715 = vrot.slane %v7335, 2
    %v7716 = vsel %vm995, %v7715, %v7714
    %v7717 = vrot.slane %v7336, 1
    %v7718 = vsel %vm998, %v7717, %v7716
    %v7719 = vsel %vm1001, %v7337, %v7718
    %v7720 = vrot.slane %v7338, 7
    %v7721 = vsel %vm1004, %v7720, %v7719
    %v7722 = vrot.slane %v7339, 6
    %v7723 = vsel %vm1007, %v7722, %v7721
    %v7724 = vrot.slane %v7340, 5
    %v7725 = vsel %vm1010, %v7724, %v7723
    %v7726 = vrot.slane %v7341, 4
    %v7727 = vsel %vm1013, %v7726, %v7725
    %v7728 = vrot.slane %v7342, 3
    %v7729 = vrot.slane %v7343, 2
    %v7730 = vsel %vm995, %v7729, %v7728
    %v7731 = vrot.slane %v7344, 1
    %v7732 = vsel %vm998, %v7731, %v7730
    %v7733 = vsel %vm1001, %v7345, %v7732
    %v7734 = vrot.slane %v7346, 7
    %v7735 = vsel %vm1004, %v7734, %v7733
    %v7736 = vrot.slane %v7347, 6
    %v7737 = vsel %vm1007, %v7736, %v7735
    %v7738 = vrot.slane %v7348, 5
    %v7739 = vsel %vm1010, %v7738, %v7737
    %v7740 = vrot.slane %v7349, 4
    %v7741 = vsel %vm1013, %v7740, %v7739
    %v7760 = vrot.slane %v7386, 5
    %v7761 = vrot.slane %v7387, 4
    %v7762 = vsel %vm995, %v7761, %v7760
    %v7763 = vrot.slane %v7388, 3
    %v7764 = vsel %vm998, %v7763, %v7762
    %v7765 = vrot.slane %v7389, 2
    %v7766 = vsel %vm1001, %v7765, %v7764
    %v7767 = vrot.slane %v7390, 1
    %v7768 = vsel %vm1004, %v7767, %v7766
    %v7769 = vsel %vm1007, %v7391, %v7768
    %v7770 = vrot.slane %v7392, 7
    %v7771 = vsel %vm1010, %v7770, %v7769
    %v7772 = vrot.slane %v7393, 6
    %v7773 = vsel %vm1013, %v7772, %v7771
    %v7774 = vrot.slane %v7394, 5
    %v7775 = vrot.slane %v7395, 4
    %v7776 = vsel %vm995, %v7775, %v7774
    %v7777 = vrot.slane %v7396, 3
    %v7778 = vsel %vm998, %v7777, %v7776
    %v7779 = vrot.slane %v7397, 2
    %v7780 = vsel %vm1001, %v7779, %v7778
    %v7781 = vrot.slane %v7398, 1
    %v7782 = vsel %vm1004, %v7781, %v7780
    %v7783 = vsel %vm1007, %v7399, %v7782
    %v7784 = vrot.slane %v7400, 7
    %v7785 = vsel %vm1010, %v7784, %v7783
    %v7786 = vrot.slane %v7401, 6
    %v7787 = vsel %vm1013, %v7786, %v7785
    %v7806 = vrot.slane %v7438, 6
    %v7807 = vrot.slane %v7439, 5
    %v7808 = vsel %vm995, %v7807, %v7806
    %v7809 = vrot.slane %v7440, 4
    %v7810 = vsel %vm998, %v7809, %v7808
    %v7811 = vrot.slane %v7441, 3
    %v7812 = vsel %vm1001, %v7811, %v7810
    %v7813 = vrot.slane %v7442, 2
    %v7814 = vsel %vm1004, %v7813, %v7812
    %v7815 = vrot.slane %v7443, 1
    %v7816 = vsel %vm1007, %v7815, %v7814
    %v7817 = vsel %vm1010, %v7444, %v7816
    %v7818 = vrot.slane %v7445, 7
    %v7819 = vsel %vm1013, %v7818, %v7817
    %v7820 = vrot.slane %v7446, 6
    %v7821 = vrot.slane %v7447, 5
    %v7822 = vsel %vm995, %v7821, %v7820
    %v7823 = vrot.slane %v7448, 4
    %v7824 = vsel %vm998, %v7823, %v7822
    %v7825 = vrot.slane %v7449, 3
    %v7826 = vsel %vm1001, %v7825, %v7824
    %v7827 = vrot.slane %v7450, 2
    %v7828 = vsel %vm1004, %v7827, %v7826
    %v7829 = vrot.slane %v7451, 1
    %v7830 = vsel %vm1007, %v7829, %v7828
    %v7831 = vsel %vm1010, %v7452, %v7830
    %v7832 = vrot.slane %v7453, 7
    %v7833 = vsel %vm1013, %v7832, %v7831
    %v7852 = vrot.slane %v7490, 7
    %v7853 = vrot.slane %v7491, 6
    %v7854 = vsel %vm995, %v7853, %v7852
    %v7855 = vrot.slane %v7492, 5
    %v7856 = vsel %vm998, %v7855, %v7854
    %v7857 = vrot.slane %v7493, 4
    %v7858 = vsel %vm1001, %v7857, %v7856
    %v7859 = vrot.slane %v7494, 3
    %v7860 = vsel %vm1004, %v7859, %v7858
    %v7861 = vrot.slane %v7495, 2
    %v7862 = vsel %vm1007, %v7861, %v7860
    %v7863 = vrot.slane %v7496, 1
    %v7864 = vsel %vm1010, %v7863, %v7862
    %v7865 = vsel %vm1013, %v7497, %v7864
    %v7866 = vrot.slane %v7498, 7
    %v7867 = vrot.slane %v7499, 6
    %v7868 = vsel %vm995, %v7867, %v7866
    %v7869 = vrot.slane %v7500, 5
    %v7870 = vsel %vm998, %v7869, %v7868
    %v7871 = vrot.slane %v7501, 4
    %v7872 = vsel %vm1001, %v7871, %v7870
    %v7873 = vrot.slane %v7502, 3
    %v7874 = vsel %vm1004, %v7873, %v7872
    %v7875 = vrot.slane %v7503, 2
    %v7876 = vsel %vm1007, %v7875, %v7874
    %v7877 = vrot.slane %v7504, 1
    %v7878 = vsel %vm1010, %v7877, %v7876
    %v7879 = vsel %vm1013, %v7505, %v7878
    %v7898 = vrot.slane %v7545, 7
    %v7899 = vsel %vm995, %v7898, %v7544
    %v7900 = vrot.slane %v7546, 6
    %v7901 = vsel %vm998, %v7900, %v7899
    %v7902 = vrot.slane %v7547, 5
    %v7903 = vsel %vm1001, %v7902, %v7901
    %v7904 = vrot.slane %v7548, 4
    %v7905 = vsel %vm1004, %v7904, %v7903
    %v7906 = vrot.slane %v7549, 3
    %v7907 = vsel %vm1007, %v7906, %v7905
    %v7908 = vrot.slane %v7550, 2
    %v7909 = vsel %vm1010, %v7908, %v7907
    %v7910 = vrot.slane %v7551, 1
    %v7911 = vsel %vm1013, %v7910, %v7909
    %v7912 = vrot.slane %v7553, 7
    %v7913 = vsel %vm995, %v7912, %v7552
    %v7914 = vrot.slane %v7554, 6
    %v7915 = vsel %vm998, %v7914, %v7913
    %v7916 = vrot.slane %v7555, 5
    %v7917 = vsel %vm1001, %v7916, %v7915
    %v7918 = vrot.slane %v7556, 4
    %v7919 = vsel %vm1004, %v7918, %v7917
    %v7920 = vrot.slane %v7557, 3
    %v7921 = vsel %vm1007, %v7920, %v7919
    %v7922 = vrot.slane %v7558, 2
    %v7923 = vsel %vm1010, %v7922, %v7921
    %v7924 = vrot.slane %v7559, 1
    %v7925 = vsel %vm1013, %v7924, %v7923
    %7928 = vset.pattern.permute.xlu0 4
    %7929 = vperm.xlu0 %7928, %v45
    %v7930 = vpop.permute.xlu0 %7929
    %7933 = vset.pattern.permute.xlu0 4
    %7934 = vperm.xlu0 %7933, %v46
    %v7935 = vpop.permute.xlu0 %7934
    %vm7937 = vcmask 130048
    %v7939 = vsel %vm7937, %v7137, 0
    %v7942 = vsel %vm7937, %v7139, 0
    %7944 = vmatprep.subr.mxu0 0.0
    %7945 = vmatpush1.msra.mxu0 %v7879
    %7946 = vmatprep.subr.mxu0 0.0
    %7947 = vmatpush1.msra.mxu0 %v7865
    %7948 = vmatprep.subr.mxu0 0.0
    %7949 = vmatpush1.msra.mxu0 %v7833
    %7950 = vmatprep.subr.mxu0 0.0
    %7951 = vmatpush1.msra.mxu0 %v7819
    %7952 = vmatprep.subr.mxu0 0.0
    %7953 = vmatpush1.msra.mxu0 %v7787
    %7954 = vmatprep.subr.mxu0 0.0
    %7955 = vmatpush1.msra.mxu0 %v7773
    %7956 = vmatprep.subr.mxu0 0.0
    %7957 = vmatpush1.msra.mxu0 %v7134
    %7958 = vmatprep.subr.mxu0 0.0
    %7959 = vmatpush1.msra.mxu0 %v7133
    %7960 = vmatprep.subr.mxu0 0.0
    %7961 = vmatpush1.msra.mxu0 %v7741
    %7962 = vmatprep.subr.mxu0 0.0
    %7963 = vmatpush1.msra.mxu0 %v7727
    %7964 = vmatprep.subr.mxu0 0.0
    %7965 = vmatpush1.msra.mxu0 %v7695
    %7966 = vmatprep.subr.mxu0 0.0
    %7967 = vmatpush1.msra.mxu0 %v7681
    %7968 = vmatprep.subr.mxu0 0.0
    %7969 = vmatpush1.msra.mxu0 %v7649
    %7970 = vmatprep.subr.mxu0 0.0
    %7971 = vmatpush1.msra.mxu0 %v7635
    %7972 = vmatprep.subr.mxu0 0.0
    %7973 = vmatpush1.msra.mxu0 %v7603
    %7974 = vmatprep.subr.mxu0 0.0
    %7975 = vmatpush1.msra.mxu0 %v7589
    %7976 = vmatprep.subr.mxu0 0.0
    %7977 = vmatpush2.msra.mxu0 0.0
    %7978 = vmatprep.subr.mxu0 0.0
    %7979 = vmatpush2.msra.mxu0 0.0
    %7980 = vmatprep.subr.mxu0 0.0
    %7981 = vmatpush2.msra.mxu0 0.0
    %7982 = vmatprep.subr.mxu0 0.0
    %7983 = vmatpush2.msra.mxu0 0.0
    %7984 = vmatprep.subr.mxu0 0.0
    %7985 = vmatpush2.msra.mxu0 0.0
    %7986 = vmatprep.subr.mxu0 0.0
    %7987 = vmatpush2.msra.mxu0 0.0
    %7988 = vmatprep.subr.mxu0 0.0
    %7989 = vmatpush2.msra.mxu0 0.0
    %7990 = vmatprep.subr.mxu0 0.0
    %7991 = vmatpush2.msra.mxu0 0.0
    %7992 = vmatprep.subr.mxu0 0.0
    %7993 = vmatpush2.msra.mxu0 0.0
    %7994 = vmatprep.subr.mxu0 0.0
    %7995 = vmatpush2.msra.mxu0 0.0
    %7996 = vmatprep.subr.mxu0 0.0
    %7997 = vmatpush2.msra.mxu0 0.0
    %7998 = vmatprep.subr.mxu0 0.0
    %7999 = vmatpush2.msra.mxu0 0.0
    %8000 = vmatprep.subr.mxu0 0.0
    %8001 = vmatpush2.msra.mxu0 0.0
    %8002 = vmatprep.subr.mxu0 0.0
    %8003 = vmatpush2.msra.mxu0 0.0
    %8004 = vmatprep.subr.mxu0 0.0
    %8005 = vmatpush2.msra.mxu0 %v7925
    %8006 = vmatprep.subr.mxu0 0.0
    %8007 = vmatpush2.msra.mxu0 %v7911
    %8008 = vmatprep.mubr.f32.mxu0 %v7939
    %8009 = vmatmul.mubr.f32.gmra.mxu0 %v7136
    %v8010 = vpop.f32.mrf.mxu0
    %v8011 = vadd.f32 %v7930, %v8010
    %v8012 = vpop.f32.mrf.mxu0
    %8013 = vmatprep.mubr.f32.mxu0 %v7942
    %8014 = vmatmul.mubr.f32.gmra.mxu0 %v7138
    %v8015 = vpop.f32.mrf.mxu0
    %v8016 = vadd.f32 %v7935, %v8015
    %v8017 = vpop.f32.mrf.mxu0
    %8018 = vdwg.mxu0
    %v8019 = vmax.f32 %v8011, 0.0
    %v8020 = vmax.f32 %v8016, 0.0
    %s8021 = scalar_lea.vmem %s2, 160
    %v8022 = vld [vmem:[%s8021] sm:$0xff]
    %v8023 = vld [vmem:[%s8021 + $0x8] sm:$0xff]
    %v8024 = vld [vmem:[%s8021 + $0x10] sm:$0xff]
    %v8025 = vld [vmem:[%s8021 + $0x18] sm:$0xff]
    %8026 = vrot.lane.b32.xlu0 %v8019, 9
    %v8027 = vpop.permute.xlu0 %8026
    %8028 = vrot.lane.b32.xlu0 %v8020, 9
    %v8029 = vpop.permute.xlu0 %8028
    %v8032 = vrot.slane %v8027, 1
    %v8033 = vrot.slane %v8027, 2
    %v8034 = vrot.slane %v8027, 3
    %v8035 = vrot.slane %v8027, 4
    %v8036 = vrot.slane %v8027, 5
    %v8037 = vrot.slane %v8027, 6
    %v8038 = vrot.slane %v8027, 7
    %v8039 = vrot.slane %v8029, 1
    %v8040 = vrot.slane %v8029, 2
    %v8041 = vrot.slane %v8029, 3
    %v8042 = vrot.slane %v8029, 4
    %v8043 = vrot.slane %v8029, 5
    %v8044 = vrot.slane %v8029, 6
    %v8045 = vrot.slane %v8029, 7
    %v8062 = vsel %vm7145, %v8027, 0.0
    %v8063 = vsel %vm7145, %v8032, 0.0
    %v8064 = vsel %vm7145, %v8033, 0.0
    %v8065 = vsel %vm7145, %v8034, 0.0
    %v8066 = vsel %vm7145, %v8035, 0.0
    %v8067 = vsel %vm7145, %v8036, 0.0
    %v8068 = vsel %vm7145, %v8037, 0.0
    %v8069 = vsel %vm7145, %v8038, 0.0
    %v8070 = vsel %vm7145, %v8029, 0.0
    %v8071 = vsel %vm7145, %v8039, 0.0
    %v8072 = vsel %vm7145, %v8040, 0.0
    %v8073 = vsel %vm7145, %v8041, 0.0
    %v8074 = vsel %vm7145, %v8042, 0.0
    %v8075 = vsel %vm7145, %v8043, 0.0
    %v8076 = vsel %vm7145, %v8044, 0.0
    %v8077 = vsel %vm7145, %v8045, 0.0
    %8078 = vrot.lane.b32.xlu0 %v8019, 8
    %v8079 = vpop.permute.xlu0 %8078
    %8080 = vrot.lane.b32.xlu0 %v8020, 8
    %v8081 = vpop.permute.xlu0 %8080
    %v8084 = vrot.slane %v8079, 7
    %v8085 = vrot.slane %v8079, 1
    %v8086 = vrot.slane %v8079, 2
    %v8087 = vrot.slane %v8079, 3
    %v8088 = vrot.slane %v8079, 4
    %v8089 = vrot.slane %v8079, 5
    %v8090 = vrot.slane %v8079, 6
    %v8091 = vrot.slane %v8081, 7
    %v8092 = vrot.slane %v8081, 1
    %v8093 = vrot.slane %v8081, 2
    %v8094 = vrot.slane %v8081, 3
    %v8095 = vrot.slane %v8081, 4
    %v8096 = vrot.slane %v8081, 5
    %v8097 = vrot.slane %v8081, 6
    %v8114 = vsel %vm7145, %v8084, 0.0
    %v8115 = vsel %vm7145, %v8079, 0.0
    %v8116 = vsel %vm7145, %v8085, 0.0
    %v8117 = vsel %vm7145, %v8086, 0.0
    %v8118 = vsel %vm7145, %v8087, 0.0
    %v8119 = vsel %vm7145, %v8088, 0.0
    %v8120 = vsel %vm7145, %v8089, 0.0
    %v8121 = vsel %vm7145, %v8090, 0.0
    %v8122 = vsel %vm7145, %v8091, 0.0
    %v8123 = vsel %vm7145, %v8081, 0.0
    %v8124 = vsel %vm7145, %v8092, 0.0
    %v8125 = vsel %vm7145, %v8093, 0.0
    %v8126 = vsel %vm7145, %v8094, 0.0
    %v8127 = vsel %vm7145, %v8095, 0.0
    %v8128 = vsel %vm7145, %v8096, 0.0
    %v8129 = vsel %vm7145, %v8097, 0.0
    %8130 = vrot.lane.b32.xlu0 %v8019, 7
    %v8131 = vpop.permute.xlu0 %8130
    %8132 = vrot.lane.b32.xlu0 %v8020, 7
    %v8133 = vpop.permute.xlu0 %8132
    %v8136 = vrot.slane %v8131, 6
    %v8137 = vrot.slane %v8131, 7
    %v8138 = vrot.slane %v8131, 1
    %v8139 = vrot.slane %v8131, 2
    %v8140 = vrot.slane %v8131, 3
    %v8141 = vrot.slane %v8131, 4
    %v8142 = vrot.slane %v8131, 5
    %v8143 = vrot.slane %v8133, 6
    %v8144 = vrot.slane %v8133, 7
    %v8145 = vrot.slane %v8133, 1
    %v8146 = vrot.slane %v8133, 2
    %v8147 = vrot.slane %v8133, 3
    %v8148 = vrot.slane %v8133, 4
    %v8149 = vrot.slane %v8133, 5
    %v8166 = vsel %vm7145, %v8136, 0.0
    %v8167 = vsel %vm7145, %v8137, 0.0
    %v8168 = vsel %vm7145, %v8131, 0.0
    %v8169 = vsel %vm7145, %v8138, 0.0
    %v8170 = vsel %vm7145, %v8139, 0.0
    %v8171 = vsel %vm7145, %v8140, 0.0
    %v8172 = vsel %vm7145, %v8141, 0.0
    %v8173 = vsel %vm7145, %v8142, 0.0
    %v8174 = vsel %vm7145, %v8143, 0.0
    %v8175 = vsel %vm7145, %v8144, 0.0
    %v8176 = vsel %vm7145, %v8133, 0.0
    %v8177 = vsel %vm7145, %v8145, 0.0
    %v8178 = vsel %vm7145, %v8146, 0.0
    %v8179 = vsel %vm7145, %v8147, 0.0
    %v8180 = vsel %vm7145, %v8148, 0.0
    %v8181 = vsel %vm7145, %v8149, 0.0
    %8182 = vrot.lane.b32.xlu0 %v8019, 1
    %v8183 = vpop.permute.xlu0 %8182
    %8184 = vrot.lane.b32.xlu0 %v8020, 1
    %v8185 = vpop.permute.xlu0 %8184
    %v8188 = vrot.slane %v8183, 5
    %v8189 = vrot.slane %v8183, 6
    %v8190 = vrot.slane %v8183, 7
    %v8191 = vrot.slane %v8183, 1
    %v8192 = vrot.slane %v8183, 2
    %v8193 = vrot.slane %v8183, 3
    %v8194 = vrot.slane %v8183, 4
    %v8195 = vrot.slane %v8185, 5
    %v8196 = vrot.slane %v8185, 6
    %v8197 = vrot.slane %v8185, 7
    %v8198 = vrot.slane %v8185, 1
    %v8199 = vrot.slane %v8185, 2
    %v8200 = vrot.slane %v8185, 3
    %v8201 = vrot.slane %v8185, 4
    %v8218 = vsel %vm7145, %v8188, 0.0
    %v8219 = vsel %vm7145, %v8189, 0.0
    %v8220 = vsel %vm7145, %v8190, 0.0
    %v8221 = vsel %vm7145, %v8183, 0.0
    %v8222 = vsel %vm7145, %v8191, 0.0
    %v8223 = vsel %vm7145, %v8192, 0.0
    %v8224 = vsel %vm7145, %v8193, 0.0
    %v8225 = vsel %vm7145, %v8194, 0.0
    %v8226 = vsel %vm7145, %v8195, 0.0
    %v8227 = vsel %vm7145, %v8196, 0.0
    %v8228 = vsel %vm7145, %v8197, 0.0
    %v8229 = vsel %vm7145, %v8185, 0.0
    %v8230 = vsel %vm7145, %v8198, 0.0
    %v8231 = vsel %vm7145, %v8199, 0.0
    %v8232 = vsel %vm7145, %v8200, 0.0
    %v8233 = vsel %vm7145, %v8201, 0.0
    %8234 = vrot.lane.b32.xlu0 %v8019, 127
    %v8235 = vpop.permute.xlu0 %8234
    %8236 = vrot.lane.b32.xlu0 %v8020, 127
    %v8237 = vpop.permute.xlu0 %8236
    %v8240 = vrot.slane %v8235, 3
    %v8241 = vrot.slane %v8235, 4
    %v8242 = vrot.slane %v8235, 5
    %v8243 = vrot.slane %v8235, 6
    %v8244 = vrot.slane %v8235, 7
    %v8245 = vrot.slane %v8235, 1
    %v8246 = vrot.slane %v8235, 2
    %v8247 = vrot.slane %v8237, 3
    %v8248 = vrot.slane %v8237, 4
    %v8249 = vrot.slane %v8237, 5
    %v8250 = vrot.slane %v8237, 6
    %v8251 = vrot.slane %v8237, 7
    %v8252 = vrot.slane %v8237, 1
    %v8253 = vrot.slane %v8237, 2
    %v8270 = vsel %vm7145, %v8240, 0.0
    %v8271 = vsel %vm7145, %v8241, 0.0
    %v8272 = vsel %vm7145, %v8242, 0.0
    %v8273 = vsel %vm7145, %v8243, 0.0
    %v8274 = vsel %vm7145, %v8244, 0.0
    %v8275 = vsel %vm7145, %v8235, 0.0
    %v8276 = vsel %vm7145, %v8245, 0.0
    %v8277 = vsel %vm7145, %v8246, 0.0
    %v8278 = vsel %vm7145, %v8247, 0.0
    %v8279 = vsel %vm7145, %v8248, 0.0
    %v8280 = vsel %vm7145, %v8249, 0.0
    %v8281 = vsel %vm7145, %v8250, 0.0
    %v8282 = vsel %vm7145, %v8251, 0.0
    %v8283 = vsel %vm7145, %v8237, 0.0
    %v8284 = vsel %vm7145, %v8252, 0.0
    %v8285 = vsel %vm7145, %v8253, 0.0
    %8286 = vrot.lane.b32.xlu0 %v8019, 121
    %v8287 = vpop.permute.xlu0 %8286
    %8288 = vrot.lane.b32.xlu0 %v8020, 121
    %v8289 = vpop.permute.xlu0 %8288
    %v8292 = vrot.slane %v8287, 2
    %v8293 = vrot.slane %v8287, 3
    %v8294 = vrot.slane %v8287, 4
    %v8295 = vrot.slane %v8287, 5
    %v8296 = vrot.slane %v8287, 6
    %v8297 = vrot.slane %v8287, 7
    %v8298 = vrot.slane %v8287, 1
    %v8299 = vrot.slane %v8289, 2
    %v8300 = vrot.slane %v8289, 3
    %v8301 = vrot.slane %v8289, 4
    %v8302 = vrot.slane %v8289, 5
    %v8303 = vrot.slane %v8289, 6
    %v8304 = vrot.slane %v8289, 7
    %v8305 = vrot.slane %v8289, 1
    %v8322 = vsel %vm7145, %v8292, 0.0
    %v8323 = vsel %vm7145, %v8293, 0.0
    %v8324 = vsel %vm7145, %v8294, 0.0
    %v8325 = vsel %vm7145, %v8295, 0.0
    %v8326 = vsel %vm7145, %v8296, 0.0
    %v8327 = vsel %vm7145, %v8297, 0.0
    %v8328 = vsel %vm7145, %v8287, 0.0
    %v8329 = vsel %vm7145, %v8298, 0.0
    %v8330 = vsel %vm7145, %v8299, 0.0
    %v8331 = vsel %vm7145, %v8300, 0.0
    %v8332 = vsel %vm7145, %v8301, 0.0
    %v8333 = vsel %vm7145, %v8302, 0.0
    %v8334 = vsel %vm7145, %v8303, 0.0
    %v8335 = vsel %vm7145, %v8304, 0.0
    %v8336 = vsel %vm7145, %v8289, 0.0
    %v8337 = vsel %vm7145, %v8305, 0.0
    %8338 = vrot.lane.b32.xlu0 %v8019, 120
    %v8339 = vpop.permute.xlu0 %8338
    %8340 = vrot.lane.b32.xlu0 %v8020, 120
    %v8341 = vpop.permute.xlu0 %8340
    %v8344 = vrot.slane %v8339, 1
    %v8345 = vrot.slane %v8339, 2
    %v8346 = vrot.slane %v8339, 3
    %v8347 = vrot.slane %v8339, 4
    %v8348 = vrot.slane %v8339, 5
    %v8349 = vrot.slane %v8339, 6
    %v8350 = vrot.slane %v8339, 7
    %v8351 = vrot.slane %v8341, 1
    %v8352 = vrot.slane %v8341, 2
    %v8353 = vrot.slane %v8341, 3
    %v8354 = vrot.slane %v8341, 4
    %v8355 = vrot.slane %v8341, 5
    %v8356 = vrot.slane %v8341, 6
    %v8357 = vrot.slane %v8341, 7
    %v8374 = vsel %vm7145, %v8344, 0.0
    %v8375 = vsel %vm7145, %v8345, 0.0
    %v8376 = vsel %vm7145, %v8346, 0.0
    %v8377 = vsel %vm7145, %v8347, 0.0
    %v8378 = vsel %vm7145, %v8348, 0.0
    %v8379 = vsel %vm7145, %v8349, 0.0
    %v8380 = vsel %vm7145, %v8350, 0.0
    %v8381 = vsel %vm7145, %v8339, 0.0
    %v8382 = vsel %vm7145, %v8351, 0.0
    %v8383 = vsel %vm7145, %v8352, 0.0
    %v8384 = vsel %vm7145, %v8353, 0.0
    %v8385 = vsel %vm7145, %v8354, 0.0
    %v8386 = vsel %vm7145, %v8355, 0.0
    %v8387 = vsel %vm7145, %v8356, 0.0
    %v8388 = vsel %vm7145, %v8357, 0.0
    %v8389 = vsel %vm7145, %v8341, 0.0
    %8390 = vrot.lane.b32.xlu0 %v8019, 119
    %v8391 = vpop.permute.xlu0 %8390
    %8392 = vrot.lane.b32.xlu0 %v8020, 119
    %v8393 = vpop.permute.xlu0 %8392
    %v8396 = vrot.slane %v8391, 1
    %v8397 = vrot.slane %v8391, 2
    %v8398 = vrot.slane %v8391, 3
    %v8399 = vrot.slane %v8391, 4
    %v8400 = vrot.slane %v8391, 5
    %v8401 = vrot.slane %v8391, 6
    %v8402 = vrot.slane %v8391, 7
    %v8403 = vrot.slane %v8393, 1
    %v8404 = vrot.slane %v8393, 2
    %v8405 = vrot.slane %v8393, 3
    %v8406 = vrot.slane %v8393, 4
    %v8407 = vrot.slane %v8393, 5
    %v8408 = vrot.slane %v8393, 6
    %v8409 = vrot.slane %v8393, 7
    %v8426 = vsel %vm7511, %v8391, 0.0
    %v8427 = vsel %vm7511, %v8396, 0.0
    %v8428 = vsel %vm7511, %v8397, 0.0
    %v8429 = vsel %vm7511, %v8398, 0.0
    %v8430 = vsel %vm7511, %v8399, 0.0
    %v8431 = vsel %vm7511, %v8400, 0.0
    %v8432 = vsel %vm7511, %v8401, 0.0
    %v8433 = vsel %vm7511, %v8402, 0.0
    %v8434 = vsel %vm7511, %v8393, 0.0
    %v8435 = vsel %vm7511, %v8403, 0.0
    %v8436 = vsel %vm7511, %v8404, 0.0
    %v8437 = vsel %vm7511, %v8405, 0.0
    %v8438 = vsel %vm7511, %v8406, 0.0
    %v8439 = vsel %vm7511, %v8407, 0.0
    %v8440 = vsel %vm7511, %v8408, 0.0
    %v8441 = vsel %vm7511, %v8409, 0.0
    %v8458 = vrot.slane %v8063, 7
    %v8459 = vsel %vm995, %v8458, %v8062
    %v8460 = vrot.slane %v8064, 6
    %v8461 = vsel %vm998, %v8460, %v8459
    %v8462 = vrot.slane %v8065, 5
    %v8463 = vsel %vm1001, %v8462, %v8461
    %v8464 = vrot.slane %v8066, 4
    %v8465 = vsel %vm1004, %v8464, %v8463
    %v8466 = vrot.slane %v8067, 3
    %v8467 = vsel %vm1007, %v8466, %v8465
    %v8468 = vrot.slane %v8068, 2
    %v8469 = vsel %vm1010, %v8468, %v8467
    %v8470 = vrot.slane %v8069, 1
    %v8471 = vsel %vm1013, %v8470, %v8469
    %v8472 = vrot.slane %v8071, 7
    %v8473 = vsel %vm995, %v8472, %v8070
    %v8474 = vrot.slane %v8072, 6
    %v8475 = vsel %vm998, %v8474, %v8473
    %v8476 = vrot.slane %v8073, 5
    %v8477 = vsel %vm1001, %v8476, %v8475
    %v8478 = vrot.slane %v8074, 4
    %v8479 = vsel %vm1004, %v8478, %v8477
    %v8480 = vrot.slane %v8075, 3
    %v8481 = vsel %vm1007, %v8480, %v8479
    %v8482 = vrot.slane %v8076, 2
    %v8483 = vsel %vm1010, %v8482, %v8481
    %v8484 = vrot.slane %v8077, 1
    %v8485 = vsel %vm1013, %v8484, %v8483
    %v8504 = vrot.slane %v8114, 1
    %v8505 = vsel %vm995, %v8115, %v8504
    %v8506 = vrot.slane %v8116, 7
    %v8507 = vsel %vm998, %v8506, %v8505
    %v8508 = vrot.slane %v8117, 6
    %v8509 = vsel %vm1001, %v8508, %v8507
    %v8510 = vrot.slane %v8118, 5
    %v8511 = vsel %vm1004, %v8510, %v8509
    %v8512 = vrot.slane %v8119, 4
    %v8513 = vsel %vm1007, %v8512, %v8511
    %v8514 = vrot.slane %v8120, 3
    %v8515 = vsel %vm1010, %v8514, %v8513
    %v8516 = vrot.slane %v8121, 2
    %v8517 = vsel %vm1013, %v8516, %v8515
    %v8518 = vrot.slane %v8122, 1
    %v8519 = vsel %vm995, %v8123, %v8518
    %v8520 = vrot.slane %v8124, 7
    %v8521 = vsel %vm998, %v8520, %v8519
    %v8522 = vrot.slane %v8125, 6
    %v8523 = vsel %vm1001, %v8522, %v8521
    %v8524 = vrot.slane %v8126, 5
    %v8525 = vsel %vm1004, %v8524, %v8523
    %v8526 = vrot.slane %v8127, 4
    %v8527 = vsel %vm1007, %v8526, %v8525
    %v8528 = vrot.slane %v8128, 3
    %v8529 = vsel %vm1010, %v8528, %v8527
    %v8530 = vrot.slane %v8129, 2
    %v8531 = vsel %vm1013, %v8530, %v8529
    %v8550 = vrot.slane %v8166, 2
    %v8551 = vrot.slane %v8167, 1
    %v8552 = vsel %vm995, %v8551, %v8550
    %v8553 = vsel %vm998, %v8168, %v8552
    %v8554 = vrot.slane %v8169, 7
    %v8555 = vsel %vm1001, %v8554, %v8553
    %v8556 = vrot.slane %v8170, 6
    %v8557 = vsel %vm1004, %v8556, %v8555
    %v8558 = vrot.slane %v8171, 5
    %v8559 = vsel %vm1007, %v8558, %v8557
    %v8560 = vrot.slane %v8172, 4
    %v8561 = vsel %vm1010, %v8560, %v8559
    %v8562 = vrot.slane %v8173, 3
    %v8563 = vsel %vm1013, %v8562, %v8561
    %v8564 = vrot.slane %v8174, 2
    %v8565 = vrot.slane %v8175, 1
    %v8566 = vsel %vm995, %v8565, %v8564
    %v8567 = vsel %vm998, %v8176, %v8566
    %v8568 = vrot.slane %v8177, 7
    %v8569 = vsel %vm1001, %v8568, %v8567
    %v8570 = vrot.slane %v8178, 6
    %v8571 = vsel %vm1004, %v8570, %v8569
    %v8572 = vrot.slane %v8179, 5
    %v8573 = vsel %vm1007, %v8572, %v8571
    %v8574 = vrot.slane %v8180, 4
    %v8575 = vsel %vm1010, %v8574, %v8573
    %v8576 = vrot.slane %v8181, 3
    %v8577 = vsel %vm1013, %v8576, %v8575
    %v8596 = vrot.slane %v8218, 3
    %v8597 = vrot.slane %v8219, 2
    %v8598 = vsel %vm995, %v8597, %v8596
    %v8599 = vrot.slane %v8220, 1
    %v8600 = vsel %vm998, %v8599, %v8598
    %v8601 = vsel %vm1001, %v8221, %v8600
    %v8602 = vrot.slane %v8222, 7
    %v8603 = vsel %vm1004, %v8602, %v8601
    %v8604 = vrot.slane %v8223, 6
    %v8605 = vsel %vm1007, %v8604, %v8603
    %v8606 = vrot.slane %v8224, 5
    %v8607 = vsel %vm1010, %v8606, %v8605
    %v8608 = vrot.slane %v8225, 4
    %v8609 = vsel %vm1013, %v8608, %v8607
    %v8610 = vrot.slane %v8226, 3
    %v8611 = vrot.slane %v8227, 2
    %v8612 = vsel %vm995, %v8611, %v8610
    %v8613 = vrot.slane %v8228, 1
    %v8614 = vsel %vm998, %v8613, %v8612
    %v8615 = vsel %vm1001, %v8229, %v8614
    %v8616 = vrot.slane %v8230, 7
    %v8617 = vsel %vm1004, %v8616, %v8615
    %v8618 = vrot.slane %v8231, 6
    %v8619 = vsel %vm1007, %v8618, %v8617
    %v8620 = vrot.slane %v8232, 5
    %v8621 = vsel %vm1010, %v8620, %v8619
    %v8622 = vrot.slane %v8233, 4
    %v8623 = vsel %vm1013, %v8622, %v8621
    %v8642 = vrot.slane %v8270, 5
    %v8643 = vrot.slane %v8271, 4
    %v8644 = vsel %vm995, %v8643, %v8642
    %v8645 = vrot.slane %v8272, 3
    %v8646 = vsel %vm998, %v8645, %v8644
    %v8647 = vrot.slane %v8273, 2
    %v8648 = vsel %vm1001, %v8647, %v8646
    %v8649 = vrot.slane %v8274, 1
    %v8650 = vsel %vm1004, %v8649, %v8648
    %v8651 = vsel %vm1007, %v8275, %v8650
    %v8652 = vrot.slane %v8276, 7
    %v8653 = vsel %vm1010, %v8652, %v8651
    %v8654 = vrot.slane %v8277, 6
    %v8655 = vsel %vm1013, %v8654, %v8653
    %v8656 = vrot.slane %v8278, 5
    %v8657 = vrot.slane %v8279, 4
    %v8658 = vsel %vm995, %v8657, %v8656
    %v8659 = vrot.slane %v8280, 3
    %v8660 = vsel %vm998, %v8659, %v8658
    %v8661 = vrot.slane %v8281, 2
    %v8662 = vsel %vm1001, %v8661, %v8660
    %v8663 = vrot.slane %v8282, 1
    %v8664 = vsel %vm1004, %v8663, %v8662
    %v8665 = vsel %vm1007, %v8283, %v8664
    %v8666 = vrot.slane %v8284, 7
    %v8667 = vsel %vm1010, %v8666, %v8665
    %v8668 = vrot.slane %v8285, 6
    %v8669 = vsel %vm1013, %v8668, %v8667
    %v8688 = vrot.slane %v8322, 6
    %v8689 = vrot.slane %v8323, 5
    %v8690 = vsel %vm995, %v8689, %v8688
    %v8691 = vrot.slane %v8324, 4
    %v8692 = vsel %vm998, %v8691, %v8690
    %v8693 = vrot.slane %v8325, 3
    %v8694 = vsel %vm1001, %v8693, %v8692
    %v8695 = vrot.slane %v8326, 2
    %v8696 = vsel %vm1004, %v8695, %v8694
    %v8697 = vrot.slane %v8327, 1
    %v8698 = vsel %vm1007, %v8697, %v8696
    %v8699 = vsel %vm1010, %v8328, %v8698
    %v8700 = vrot.slane %v8329, 7
    %v8701 = vsel %vm1013, %v8700, %v8699
    %v8702 = vrot.slane %v8330, 6
    %v8703 = vrot.slane %v8331, 5
    %v8704 = vsel %vm995, %v8703, %v8702
    %v8705 = vrot.slane %v8332, 4
    %v8706 = vsel %vm998, %v8705, %v8704
    %v8707 = vrot.slane %v8333, 3
    %v8708 = vsel %vm1001, %v8707, %v8706
    %v8709 = vrot.slane %v8334, 2
    %v8710 = vsel %vm1004, %v8709, %v8708
    %v8711 = vrot.slane %v8335, 1
    %v8712 = vsel %vm1007, %v8711, %v8710
    %v8713 = vsel %vm1010, %v8336, %v8712
    %v8714 = vrot.slane %v8337, 7
    %v8715 = vsel %vm1013, %v8714, %v8713
    %v8734 = vrot.slane %v8374, 7
    %v8735 = vrot.slane %v8375, 6
    %v8736 = vsel %vm995, %v8735, %v8734
    %v8737 = vrot.slane %v8376, 5
    %v8738 = vsel %vm998, %v8737, %v8736
    %v8739 = vrot.slane %v8377, 4
    %v8740 = vsel %vm1001, %v8739, %v8738
    %v8741 = vrot.slane %v8378, 3
    %v8742 = vsel %vm1004, %v8741, %v8740
    %v8743 = vrot.slane %v8379, 2
    %v8744 = vsel %vm1007, %v8743, %v8742
    %v8745 = vrot.slane %v8380, 1
    %v8746 = vsel %vm1010, %v8745, %v8744
    %v8747 = vsel %vm1013, %v8381, %v8746
    %v8748 = vrot.slane %v8382, 7
    %v8749 = vrot.slane %v8383, 6
    %v8750 = vsel %vm995, %v8749, %v8748
    %v8751 = vrot.slane %v8384, 5
    %v8752 = vsel %vm998, %v8751, %v8750
    %v8753 = vrot.slane %v8385, 4
    %v8754 = vsel %vm1001, %v8753, %v8752
    %v8755 = vrot.slane %v8386, 3
    %v8756 = vsel %vm1004, %v8755, %v8754
    %v8757 = vrot.slane %v8387, 2
    %v8758 = vsel %vm1007, %v8757, %v8756
    %v8759 = vrot.slane %v8388, 1
    %v8760 = vsel %vm1010, %v8759, %v8758
    %v8761 = vsel %vm1013, %v8389, %v8760
    %v8780 = vrot.slane %v8427, 7
    %v8781 = vsel %vm995, %v8780, %v8426
    %v8782 = vrot.slane %v8428, 6
    %v8783 = vsel %vm998, %v8782, %v8781
    %v8784 = vrot.slane %v8429, 5
    %v8785 = vsel %vm1001, %v8784, %v8783
    %v8786 = vrot.slane %v8430, 4
    %v8787 = vsel %vm1004, %v8786, %v8785
    %v8788 = vrot.slane %v8431, 3
    %v8789 = vsel %vm1007, %v8788, %v8787
    %v8790 = vrot.slane %v8432, 2
    %v8791 = vsel %vm1010, %v8790, %v8789
    %v8792 = vrot.slane %v8433, 1
    %v8793 = vsel %vm1013, %v8792, %v8791
    %v8794 = vrot.slane %v8435, 7
    %v8795 = vsel %vm995, %v8794, %v8434
    %v8796 = vrot.slane %v8436, 6
    %v8797 = vsel %vm998, %v8796, %v8795
    %v8798 = vrot.slane %v8437, 5
    %v8799 = vsel %vm1001, %v8798, %v8797
    %v8800 = vrot.slane %v8438, 4
    %v8801 = vsel %vm1004, %v8800, %v8799
    %v8802 = vrot.slane %v8439, 3
    %v8803 = vsel %vm1007, %v8802, %v8801
    %v8804 = vrot.slane %v8440, 2
    %v8805 = vsel %vm1010, %v8804, %v8803
    %v8806 = vrot.slane %v8441, 1
    %v8807 = vsel %vm1013, %v8806, %v8805
    %8810 = vset.pattern.permute.xlu0 5
    %8811 = vperm.xlu0 %8810, %v45
    %v8812 = vpop.permute.xlu0 %8811
    %8814 = vset.pattern.permute.xlu0 5
    %8815 = vperm.xlu0 %8814, %v46
    %v8816 = vpop.permute.xlu0 %8815
    %v8819 = vsel %vm7937, %v8023, 0
    %v8822 = vsel %vm7937, %v8025, 0
    %8824 = vmatprep.subr.mxu0 0.0
    %8825 = vmatpush1.msra.mxu0 %v8761
    %8826 = vmatprep.subr.mxu0 0.0
    %8827 = vmatpush1.msra.mxu0 %v8747
    %8828 = vmatprep.subr.mxu0 0.0
    %8829 = vmatpush1.msra.mxu0 %v8715
    %8830 = vmatprep.subr.mxu0 0.0
    %8831 = vmatpush1.msra.mxu0 %v8701
    %8832 = vmatprep.subr.mxu0 0.0
    %8833 = vmatpush1.msra.mxu0 %v8669
    %8834 = vmatprep.subr.mxu0 0.0
    %8835 = vmatpush1.msra.mxu0 %v8655
    %8836 = vmatprep.subr.mxu0 0.0
    %8837 = vmatpush1.msra.mxu0 %v8020
    %8838 = vmatprep.subr.mxu0 0.0
    %8839 = vmatpush1.msra.mxu0 %v8019
    %8840 = vmatprep.subr.mxu0 0.0
    %8841 = vmatpush1.msra.mxu0 %v8623
    %8842 = vmatprep.subr.mxu0 0.0
    %8843 = vmatpush1.msra.mxu0 %v8609
    %8844 = vmatprep.subr.mxu0 0.0
    %8845 = vmatpush1.msra.mxu0 %v8577
    %8846 = vmatprep.subr.mxu0 0.0
    %8847 = vmatpush1.msra.mxu0 %v8563
    %8848 = vmatprep.subr.mxu0 0.0
    %8849 = vmatpush1.msra.mxu0 %v8531
    %8850 = vmatprep.subr.mxu0 0.0
    %8851 = vmatpush1.msra.mxu0 %v8517
    %8852 = vmatprep.subr.mxu0 0.0
    %8853 = vmatpush1.msra.mxu0 %v8485
    %8854 = vmatprep.subr.mxu0 0.0
    %8855 = vmatpush1.msra.mxu0 %v8471
    %8856 = vmatprep.subr.mxu0 0.0
    %8857 = vmatpush2.msra.mxu0 0.0
    %8858 = vmatprep.subr.mxu0 0.0
    %8859 = vmatpush2.msra.mxu0 0.0
    %8860 = vmatprep.subr.mxu0 0.0
    %8861 = vmatpush2.msra.mxu0 0.0
    %8862 = vmatprep.subr.mxu0 0.0
    %8863 = vmatpush2.msra.mxu0 0.0
    %8864 = vmatprep.subr.mxu0 0.0
    %8865 = vmatpush2.msra.mxu0 0.0
    %8866 = vmatprep.subr.mxu0 0.0
    %8867 = vmatpush2.msra.mxu0 0.0
    %8868 = vmatprep.subr.mxu0 0.0
    %8869 = vmatpush2.msra.mxu0 0.0
    %8870 = vmatprep.subr.mxu0 0.0
    %8871 = vmatpush2.msra.mxu0 0.0
    %8872 = vmatprep.subr.mxu0 0.0
    %8873 = vmatpush2.msra.mxu0 0.0
    %8874 = vmatprep.subr.mxu0 0.0
    %8875 = vmatpush2.msra.mxu0 0.0
    %8876 = vmatprep.subr.mxu0 0.0
    %8877 = vmatpush2.msra.mxu0 0.0
    %8878 = vmatprep.subr.mxu0 0.0
    %8879 = vmatpush2.msra.mxu0 0.0
    %8880 = vmatprep.subr.mxu0 0.0
    %8881 = vmatpush2.msra.mxu0 0.0
    %8882 = vmatprep.subr.mxu0 0.0
    %8883 = vmatpush2.msra.mxu0 0.0
    %8884 = vmatprep.subr.mxu0 0.0
    %8885 = vmatpush2.msra.mxu0 %v8807
    %8886 = vmatprep.subr.mxu0 0.0
    %8887 = vmatpush2.msra.mxu0 %v8793
    %8888 = vmatprep.mubr.f32.mxu0 %v8819
    %8889 = vmatmul.mubr.f32.gmra.mxu0 %v8022
    %v8890 = vpop.f32.mrf.mxu0
    %v8891 = vadd.f32 %v8812, %v8890
    %v8892 = vpop.f32.mrf.mxu0
    %8893 = vmatprep.mubr.f32.mxu0 %v8822
    %8894 = vmatmul.mubr.f32.gmra.mxu0 %v8024
    %v8895 = vpop.f32.mrf.mxu0
    %v8896 = vadd.f32 %v8816, %v8895
    %v8897 = vpop.f32.mrf.mxu0
    %8898 = vdwg.mxu0
    %v8899 = vadd.f32 %v8891, %v7133
    %v8900 = vadd.f32 %v8896, %v7134
    %v8901 = vmax.f32 %v8899, 0.0
    %v8902 = vmax.f32 %v8900, 0.0
    %s8903 = scalar_lea.vmem %s2, 192
    %v8904 = vld [vmem:[%s8903] sm:$0xff]
    %v8905 = vld [vmem:[%s8903 + $0x8] sm:$0xff]
    %v8906 = vld [vmem:[%s8903 + $0x10] sm:$0xff]
    %v8907 = vld [vmem:[%s8903 + $0x18] sm:$0xff]
    %8908 = vrot.lane.b32.xlu0 %v8901, 9
    %v8909 = vpop.permute.xlu0 %8908
    %8910 = vrot.lane.b32.xlu0 %v8902, 9
    %v8911 = vpop.permute.xlu0 %8910
    %v8914 = vrot.slane %v8909, 1
    %v8915 = vrot.slane %v8909, 2
    %v8916 = vrot.slane %v8909, 3
    %v8917 = vrot.slane %v8909, 4
    %v8918 = vrot.slane %v8909, 5
    %v8919 = vrot.slane %v8909, 6
    %v8920 = vrot.slane %v8909, 7
    %v8921 = vrot.slane %v8911, 1
    %v8922 = vrot.slane %v8911, 2
    %v8923 = vrot.slane %v8911, 3
    %v8924 = vrot.slane %v8911, 4
    %v8925 = vrot.slane %v8911, 5
    %v8926 = vrot.slane %v8911, 6
    %v8927 = vrot.slane %v8911, 7
    %v8944 = vsel %vm7145, %v8909, 0.0
    %v8945 = vsel %vm7145, %v8914, 0.0
    %v8946 = vsel %vm7145, %v8915, 0.0
    %v8947 = vsel %vm7145, %v8916, 0.0
    %v8948 = vsel %vm7145, %v8917, 0.0
    %v8949 = vsel %vm7145, %v8918, 0.0
    %v8950 = vsel %vm7145, %v8919, 0.0
    %v8951 = vsel %vm7145, %v8920, 0.0
    %v8952 = vsel %vm7145, %v8911, 0.0
    %v8953 = vsel %vm7145, %v8921, 0.0
    %v8954 = vsel %vm7145, %v8922, 0.0
    %v8955 = vsel %vm7145, %v8923, 0.0
    %v8956 = vsel %vm7145, %v8924, 0.0
    %v8957 = vsel %vm7145, %v8925, 0.0
    %v8958 = vsel %vm7145, %v8926, 0.0
    %v8959 = vsel %vm7145, %v8927, 0.0
    %8960 = vrot.lane.b32.xlu0 %v8901, 8
    %v8961 = vpop.permute.xlu0 %8960
    %8962 = vrot.lane.b32.xlu0 %v8902, 8
    %v8963 = vpop.permute.xlu0 %8962
    %v8966 = vrot.slane %v8961, 7
    %v8967 = vrot.slane %v8961, 1
    %v8968 = vrot.slane %v8961, 2
    %v8969 = vrot.slane %v8961, 3
    %v8970 = vrot.slane %v8961, 4
    %v8971 = vrot.slane %v8961, 5
    %v8972 = vrot.slane %v8961, 6
    %v8973 = vrot.slane %v8963, 7
    %v8974 = vrot.slane %v8963, 1
    %v8975 = vrot.slane %v8963, 2
    %v8976 = vrot.slane %v8963, 3
    %v8977 = vrot.slane %v8963, 4
    %v8978 = vrot.slane %v8963, 5
    %v8979 = vrot.slane %v8963, 6
    %v8996 = vsel %vm7145, %v8966, 0.0
    %v8997 = vsel %vm7145, %v8961, 0.0
    %v8998 = vsel %vm7145, %v8967, 0.0
    %v8999 = vsel %vm7145, %v8968, 0.0
    %v9000 = vsel %vm7145, %v8969, 0.0
    %v9001 = vsel %vm7145, %v8970, 0.0
    %v9002 = vsel %vm7145, %v8971, 0.0
    %v9003 = vsel %vm7145, %v8972, 0.0
    %v9004 = vsel %vm7145, %v8973, 0.0
    %v9005 = vsel %vm7145, %v8963, 0.0
    %v9006 = vsel %vm7145, %v8974, 0.0
    %v9007 = vsel %vm7145, %v8975, 0.0
    %v9008 = vsel %vm7145, %v8976, 0.0
    %v9009 = vsel %vm7145, %v8977, 0.0
    %v9010 = vsel %vm7145, %v8978, 0.0
    %v9011 = vsel %vm7145, %v8979, 0.0
    %9012 = vrot.lane.b32.xlu0 %v8901, 7
    %v9013 = vpop.permute.xlu0 %9012
    %9014 = vrot.lane.b32.xlu0 %v8902, 7
    %v9015 = vpop.permute.xlu0 %9014
    %v9018 = vrot.slane %v9013, 6
    %v9019 = vrot.slane %v9013, 7
    %v9020 = vrot.slane %v9013, 1
    %v9021 = vrot.slane %v9013, 2
    %v9022 = vrot.slane %v9013, 3
    %v9023 = vrot.slane %v9013, 4
    %v9024 = vrot.slane %v9013, 5
    %v9025 = vrot.slane %v9015, 6
    %v9026 = vrot.slane %v9015, 7
    %v9027 = vrot.slane %v9015, 1
    %v9028 = vrot.slane %v9015, 2
    %v9029 = vrot.slane %v9015, 3
    %v9030 = vrot.slane %v9015, 4
    %v9031 = vrot.slane %v9015, 5
    %v9048 = vsel %vm7145, %v9018, 0.0
    %v9049 = vsel %vm7145, %v9019, 0.0
    %v9050 = vsel %vm7145, %v9013, 0.0
    %v9051 = vsel %vm7145, %v9020, 0.0
    %v9052 = vsel %vm7145, %v9021, 0.0
    %v9053 = vsel %vm7145, %v9022, 0.0
    %v9054 = vsel %vm7145, %v9023, 0.0
    %v9055 = vsel %vm7145, %v9024, 0.0
    %v9056 = vsel %vm7145, %v9025, 0.0
    %v9057 = vsel %vm7145, %v9026, 0.0
    %v9058 = vsel %vm7145, %v9015, 0.0
    %v9059 = vsel %vm7145, %v9027, 0.0
    %v9060 = vsel %vm7145, %v9028, 0.0
    %v9061 = vsel %vm7145, %v9029, 0.0
    %v9062 = vsel %vm7145, %v9030, 0.0
    %v9063 = vsel %vm7145, %v9031, 0.0
    %9064 = vrot.lane.b32.xlu0 %v8901, 1
    %v9065 = vpop.permute.xlu0 %9064
    %9066 = vrot.lane.b32.xlu0 %v8902, 1
    %v9067 = vpop.permute.xlu0 %9066
    %v9070 = vrot.slane %v9065, 5
    %v9071 = vrot.slane %v9065, 6
    %v9072 = vrot.slane %v9065, 7
    %v9073 = vrot.slane %v9065, 1
    %v9074 = vrot.slane %v9065, 2
    %v9075 = vrot.slane %v9065, 3
    %v9076 = vrot.slane %v9065, 4
    %v9077 = vrot.slane %v9067, 5
    %v9078 = vrot.slane %v9067, 6
    %v9079 = vrot.slane %v9067, 7
    %v9080 = vrot.slane %v9067, 1
    %v9081 = vrot.slane %v9067, 2
    %v9082 = vrot.slane %v9067, 3
    %v9083 = vrot.slane %v9067, 4
    %v9100 = vsel %vm7145, %v9070, 0.0
    %v9101 = vsel %vm7145, %v9071, 0.0
    %v9102 = vsel %vm7145, %v9072, 0.0
    %v9103 = vsel %vm7145, %v9065, 0.0
    %v9104 = vsel %vm7145, %v9073, 0.0
    %v9105 = vsel %vm7145, %v9074, 0.0
    %v9106 = vsel %vm7145, %v9075, 0.0
    %v9107 = vsel %vm7145, %v9076, 0.0
    %v9108 = vsel %vm7145, %v9077, 0.0
    %v9109 = vsel %vm7145, %v9078, 0.0
    %v9110 = vsel %vm7145, %v9079, 0.0
    %v9111 = vsel %vm7145, %v9067, 0.0
    %v9112 = vsel %vm7145, %v9080, 0.0
    %v9113 = vsel %vm7145, %v9081, 0.0
    %v9114 = vsel %vm7145, %v9082, 0.0
    %v9115 = vsel %vm7145, %v9083, 0.0
    %9116 = vrot.lane.b32.xlu0 %v8901, 127
    %v9117 = vpop.permute.xlu0 %9116
    %9118 = vrot.lane.b32.xlu0 %v8902, 127
    %v9119 = vpop.permute.xlu0 %9118
    %v9122 = vrot.slane %v9117, 3
    %v9123 = vrot.slane %v9117, 4
    %v9124 = vrot.slane %v9117, 5
    %v9125 = vrot.slane %v9117, 6
    %v9126 = vrot.slane %v9117, 7
    %v9127 = vrot.slane %v9117, 1
    %v9128 = vrot.slane %v9117, 2
    %v9129 = vrot.slane %v9119, 3
    %v9130 = vrot.slane %v9119, 4
    %v9131 = vrot.slane %v9119, 5
    %v9132 = vrot.slane %v9119, 6
    %v9133 = vrot.slane %v9119, 7
    %v9134 = vrot.slane %v9119, 1
    %v9135 = vrot.slane %v9119, 2
    %v9152 = vsel %vm7145, %v9122, 0.0
    %v9153 = vsel %vm7145, %v9123, 0.0
    %v9154 = vsel %vm7145, %v9124, 0.0
    %v9155 = vsel %vm7145, %v9125, 0.0
    %v9156 = vsel %vm7145, %v9126, 0.0
    %v9157 = vsel %vm7145, %v9117, 0.0
    %v9158 = vsel %vm7145, %v9127, 0.0
    %v9159 = vsel %vm7145, %v9128, 0.0
    %v9160 = vsel %vm7145, %v9129, 0.0
    %v9161 = vsel %vm7145, %v9130, 0.0
    %v9162 = vsel %vm7145, %v9131, 0.0
    %v9163 = vsel %vm7145, %v9132, 0.0
    %v9164 = vsel %vm7145, %v9133, 0.0
    %v9165 = vsel %vm7145, %v9119, 0.0
    %v9166 = vsel %vm7145, %v9134, 0.0
    %v9167 = vsel %vm7145, %v9135, 0.0
    %9168 = vrot.lane.b32.xlu0 %v8901, 121
    %v9169 = vpop.permute.xlu0 %9168
    %9170 = vrot.lane.b32.xlu0 %v8902, 121
    %v9171 = vpop.permute.xlu0 %9170
    %v9174 = vrot.slane %v9169, 2
    %v9175 = vrot.slane %v9169, 3
    %v9176 = vrot.slane %v9169, 4
    %v9177 = vrot.slane %v9169, 5
    %v9178 = vrot.slane %v9169, 6
    %v9179 = vrot.slane %v9169, 7
    %v9180 = vrot.slane %v9169, 1
    %v9181 = vrot.slane %v9171, 2
    %v9182 = vrot.slane %v9171, 3
    %v9183 = vrot.slane %v9171, 4
    %v9184 = vrot.slane %v9171, 5
    %v9185 = vrot.slane %v9171, 6
    %v9186 = vrot.slane %v9171, 7
    %v9187 = vrot.slane %v9171, 1
    %v9204 = vsel %vm7145, %v9174, 0.0
    %v9205 = vsel %vm7145, %v9175, 0.0
    %v9206 = vsel %vm7145, %v9176, 0.0
    %v9207 = vsel %vm7145, %v9177, 0.0
    %v9208 = vsel %vm7145, %v9178, 0.0
    %v9209 = vsel %vm7145, %v9179, 0.0
    %v9210 = vsel %vm7145, %v9169, 0.0
    %v9211 = vsel %vm7145, %v9180, 0.0
    %v9212 = vsel %vm7145, %v9181, 0.0
    %v9213 = vsel %vm7145, %v9182, 0.0
    %v9214 = vsel %vm7145, %v9183, 0.0
    %v9215 = vsel %vm7145, %v9184, 0.0
    %v9216 = vsel %vm7145, %v9185, 0.0
    %v9217 = vsel %vm7145, %v9186, 0.0
    %v9218 = vsel %vm7145, %v9171, 0.0
    %v9219 = vsel %vm7145, %v9187, 0.0
    %9220 = vrot.lane.b32.xlu0 %v8901, 120
    %v9221 = vpop.permute.xlu0 %9220
    %9222 = vrot.lane.b32.xlu0 %v8902, 120
    %v9223 = vpop.permute.xlu0 %9222
    %v9226 = vrot.slane %v9221, 1
    %v9227 = vrot.slane %v9221, 2
    %v9228 = vrot.slane %v9221, 3
    %v9229 = vrot.slane %v9221, 4
    %v9230 = vrot.slane %v9221, 5
    %v9231 = vrot.slane %v9221, 6
    %v9232 = vrot.slane %v9221, 7
    %v9233 = vrot.slane %v9223, 1
    %v9234 = vrot.slane %v9223, 2
    %v9235 = vrot.slane %v9223, 3
    %v9236 = vrot.slane %v9223, 4
    %v9237 = vrot.slane %v9223, 5
    %v9238 = vrot.slane %v9223, 6
    %v9239 = vrot.slane %v9223, 7
    %v9256 = vsel %vm7145, %v9226, 0.0
    %v9257 = vsel %vm7145, %v9227, 0.0
    %v9258 = vsel %vm7145, %v9228, 0.0
    %v9259 = vsel %vm7145, %v9229, 0.0
    %v9260 = vsel %vm7145, %v9230, 0.0
    %v9261 = vsel %vm7145, %v9231, 0.0
    %v9262 = vsel %vm7145, %v9232, 0.0
    %v9263 = vsel %vm7145, %v9221, 0.0
    %v9264 = vsel %vm7145, %v9233, 0.0
    %v9265 = vsel %vm7145, %v9234, 0.0
    %v9266 = vsel %vm7145, %v9235, 0.0
    %v9267 = vsel %vm7145, %v9236, 0.0
    %v9268 = vsel %vm7145, %v9237, 0.0
    %v9269 = vsel %vm7145, %v9238, 0.0
    %v9270 = vsel %vm7145, %v9239, 0.0
    %v9271 = vsel %vm7145, %v9223, 0.0
    %9272 = vrot.lane.b32.xlu0 %v8901, 119
    %v9273 = vpop.permute.xlu0 %9272
    %9274 = vrot.lane.b32.xlu0 %v8902, 119
    %v9275 = vpop.permute.xlu0 %9274
    %v9278 = vrot.slane %v9273, 1
    %v9279 = vrot.slane %v9273, 2
    %v9280 = vrot.slane %v9273, 3
    %v9281 = vrot.slane %v9273, 4
    %v9282 = vrot.slane %v9273, 5
    %v9283 = vrot.slane %v9273, 6
    %v9284 = vrot.slane %v9273, 7
    %v9285 = vrot.slane %v9275, 1
    %v9286 = vrot.slane %v9275, 2
    %v9287 = vrot.slane %v9275, 3
    %v9288 = vrot.slane %v9275, 4
    %v9289 = vrot.slane %v9275, 5
    %v9290 = vrot.slane %v9275, 6
    %v9291 = vrot.slane %v9275, 7
    %v9308 = vsel %vm7511, %v9273, 0.0
    %v9309 = vsel %vm7511, %v9278, 0.0
    %v9310 = vsel %vm7511, %v9279, 0.0
    %v9311 = vsel %vm7511, %v9280, 0.0
    %v9312 = vsel %vm7511, %v9281, 0.0
    %v9313 = vsel %vm7511, %v9282, 0.0
    %v9314 = vsel %vm7511, %v9283, 0.0
    %v9315 = vsel %vm7511, %v9284, 0.0
    %v9316 = vsel %vm7511, %v9275, 0.0
    %v9317 = vsel %vm7511, %v9285, 0.0
    %v9318 = vsel %vm7511, %v9286, 0.0
    %v9319 = vsel %vm7511, %v9287, 0.0
    %v9320 = vsel %vm7511, %v9288, 0.0
    %v9321 = vsel %vm7511, %v9289, 0.0
    %v9322 = vsel %vm7511, %v9290, 0.0
    %v9323 = vsel %vm7511, %v9291, 0.0
    %v9340 = vrot.slane %v8945, 7
    %v9341 = vsel %vm995, %v9340, %v8944
    %v9342 = vrot.slane %v8946, 6
    %v9343 = vsel %vm998, %v9342, %v9341
    %v9344 = vrot.slane %v8947, 5
    %v9345 = vsel %vm1001, %v9344, %v9343
    %v9346 = vrot.slane %v8948, 4
    %v9347 = vsel %vm1004, %v9346, %v9345
    %v9348 = vrot.slane %v8949, 3
    %v9349 = vsel %vm1007, %v9348, %v9347
    %v9350 = vrot.slane %v8950, 2
    %v9351 = vsel %vm1010, %v9350, %v9349
    %v9352 = vrot.slane %v8951, 1
    %v9353 = vsel %vm1013, %v9352, %v9351
    %v9354 = vrot.slane %v8953, 7
    %v9355 = vsel %vm995, %v9354, %v8952
    %v9356 = vrot.slane %v8954, 6
    %v9357 = vsel %vm998, %v9356, %v9355
    %v9358 = vrot.slane %v8955, 5
    %v9359 = vsel %vm1001, %v9358, %v9357
    %v9360 = vrot.slane %v8956, 4
    %v9361 = vsel %vm1004, %v9360, %v9359
    %v9362 = vrot.slane %v8957, 3
    %v9363 = vsel %vm1007, %v9362, %v9361
    %v9364 = vrot.slane %v8958, 2
    %v9365 = vsel %vm1010, %v9364, %v9363
    %v9366 = vrot.slane %v8959, 1
    %v9367 = vsel %vm1013, %v9366, %v9365
    %v9386 = vrot.slane %v8996, 1
    %v9387 = vsel %vm995, %v8997, %v9386
    %v9388 = vrot.slane %v8998, 7
    %v9389 = vsel %vm998, %v9388, %v9387
    %v9390 = vrot.slane %v8999, 6
    %v9391 = vsel %vm1001, %v9390, %v9389
    %v9392 = vrot.slane %v9000, 5
    %v9393 = vsel %vm1004, %v9392, %v9391
    %v9394 = vrot.slane %v9001, 4
    %v9395 = vsel %vm1007, %v9394, %v9393
    %v9396 = vrot.slane %v9002, 3
    %v9397 = vsel %vm1010, %v9396, %v9395
    %v9398 = vrot.slane %v9003, 2
    %v9399 = vsel %vm1013, %v9398, %v9397
    %v9400 = vrot.slane %v9004, 1
    %v9401 = vsel %vm995, %v9005, %v9400
    %v9402 = vrot.slane %v9006, 7
    %v9403 = vsel %vm998, %v9402, %v9401
    %v9404 = vrot.slane %v9007, 6
    %v9405 = vsel %vm1001, %v9404, %v9403
    %v9406 = vrot.slane %v9008, 5
    %v9407 = vsel %vm1004, %v9406, %v9405
    %v9408 = vrot.slane %v9009, 4
    %v9409 = vsel %vm1007, %v9408, %v9407
    %v9410 = vrot.slane %v9010, 3
    %v9411 = vsel %vm1010, %v9410, %v9409
    %v9412 = vrot.slane %v9011, 2
    %v9413 = vsel %vm1013, %v9412, %v9411
    %v9432 = vrot.slane %v9048, 2
    %v9433 = vrot.slane %v9049, 1
    %v9434 = vsel %vm995, %v9433, %v9432
    %v9435 = vsel %vm998, %v9050, %v9434
    %v9436 = vrot.slane %v9051, 7
    %v9437 = vsel %vm1001, %v9436, %v9435
    %v9438 = vrot.slane %v9052, 6
    %v9439 = vsel %vm1004, %v9438, %v9437
    %v9440 = vrot.slane %v9053, 5
    %v9441 = vsel %vm1007, %v9440, %v9439
    %v9442 = vrot.slane %v9054, 4
    %v9443 = vsel %vm1010, %v9442, %v9441
    %v9444 = vrot.slane %v9055, 3
    %v9445 = vsel %vm1013, %v9444, %v9443
    %v9446 = vrot.slane %v9056, 2
    %v9447 = vrot.slane %v9057, 1
    %v9448 = vsel %vm995, %v9447, %v9446
    %v9449 = vsel %vm998, %v9058, %v9448
    %v9450 = vrot.slane %v9059, 7
    %v9451 = vsel %vm1001, %v9450, %v9449
    %v9452 = vrot.slane %v9060, 6
    %v9453 = vsel %vm1004, %v9452, %v9451
    %v9454 = vrot.slane %v9061, 5
    %v9455 = vsel %vm1007, %v9454, %v9453
    %v9456 = vrot.slane %v9062, 4
    %v9457 = vsel %vm1010, %v9456, %v9455
    %v9458 = vrot.slane %v9063, 3
    %v9459 = vsel %vm1013, %v9458, %v9457
    %v9478 = vrot.slane %v9100, 3
    %v9479 = vrot.slane %v9101, 2
    %v9480 = vsel %vm995, %v9479, %v9478
    %v9481 = vrot.slane %v9102, 1
    %v9482 = vsel %vm998, %v9481, %v9480
    %v9483 = vsel %vm1001, %v9103, %v9482
    %v9484 = vrot.slane %v9104, 7
    %v9485 = vsel %vm1004, %v9484, %v9483
    %v9486 = vrot.slane %v9105, 6
    %v9487 = vsel %vm1007, %v9486, %v9485
    %v9488 = vrot.slane %v9106, 5
    %v9489 = vsel %vm1010, %v9488, %v9487
    %v9490 = vrot.slane %v9107, 4
    %v9491 = vsel %vm1013, %v9490, %v9489
    %v9492 = vrot.slane %v9108, 3
    %v9493 = vrot.slane %v9109, 2
    %v9494 = vsel %vm995, %v9493, %v9492
    %v9495 = vrot.slane %v9110, 1
    %v9496 = vsel %vm998, %v9495, %v9494
    %v9497 = vsel %vm1001, %v9111, %v9496
    %v9498 = vrot.slane %v9112, 7
    %v9499 = vsel %vm1004, %v9498, %v9497
    %v9500 = vrot.slane %v9113, 6
    %v9501 = vsel %vm1007, %v9500, %v9499
    %v9502 = vrot.slane %v9114, 5
    %v9503 = vsel %vm1010, %v9502, %v9501
    %v9504 = vrot.slane %v9115, 4
    %v9505 = vsel %vm1013, %v9504, %v9503
    %v9524 = vrot.slane %v9152, 5
    %v9525 = vrot.slane %v9153, 4
    %v9526 = vsel %vm995, %v9525, %v9524
    %v9527 = vrot.slane %v9154, 3
    %v9528 = vsel %vm998, %v9527, %v9526
    %v9529 = vrot.slane %v9155, 2
    %v9530 = vsel %vm1001, %v9529, %v9528
    %v9531 = vrot.slane %v9156, 1
    %v9532 = vsel %vm1004, %v9531, %v9530
    %v9533 = vsel %vm1007, %v9157, %v9532
    %v9534 = vrot.slane %v9158, 7
    %v9535 = vsel %vm1010, %v9534, %v9533
    %v9536 = vrot.slane %v9159, 6
    %v9537 = vsel %vm1013, %v9536, %v9535
    %v9538 = vrot.slane %v9160, 5
    %v9539 = vrot.slane %v9161, 4
    %v9540 = vsel %vm995, %v9539, %v9538
    %v9541 = vrot.slane %v9162, 3
    %v9542 = vsel %vm998, %v9541, %v9540
    %v9543 = vrot.slane %v9163, 2
    %v9544 = vsel %vm1001, %v9543, %v9542
    %v9545 = vrot.slane %v9164, 1
    %v9546 = vsel %vm1004, %v9545, %v9544
    %v9547 = vsel %vm1007, %v9165, %v9546
    %v9548 = vrot.slane %v9166, 7
    %v9549 = vsel %vm1010, %v9548, %v9547
    %v9550 = vrot.slane %v9167, 6
    %v9551 = vsel %vm1013, %v9550, %v9549
    %v9570 = vrot.slane %v9204, 6
    %v9571 = vrot.slane %v9205, 5
    %v9572 = vsel %vm995, %v9571, %v9570
    %v9573 = vrot.slane %v9206, 4
    %v9574 = vsel %vm998, %v9573, %v9572
    %v9575 = vrot.slane %v9207, 3
    %v9576 = vsel %vm1001, %v9575, %v9574
    %v9577 = vrot.slane %v9208, 2
    %v9578 = vsel %vm1004, %v9577, %v9576
    %v9579 = vrot.slane %v9209, 1
    %v9580 = vsel %vm1007, %v9579, %v9578
    %v9581 = vsel %vm1010, %v9210, %v9580
    %v9582 = vrot.slane %v9211, 7
    %v9583 = vsel %vm1013, %v9582, %v9581
    %v9584 = vrot.slane %v9212, 6
    %v9585 = vrot.slane %v9213, 5
    %v9586 = vsel %vm995, %v9585, %v9584
    %v9587 = vrot.slane %v9214, 4
    %v9588 = vsel %vm998, %v9587, %v9586
    %v9589 = vrot.slane %v9215, 3
    %v9590 = vsel %vm1001, %v9589, %v9588
    %v9591 = vrot.slane %v9216, 2
    %v9592 = vsel %vm1004, %v9591, %v9590
    %v9593 = vrot.slane %v9217, 1
    %v9594 = vsel %vm1007, %v9593, %v9592
    %v9595 = vsel %vm1010, %v9218, %v9594
    %v9596 = vrot.slane %v9219, 7
    %v9597 = vsel %vm1013, %v9596, %v9595
    %v9616 = vrot.slane %v9256, 7
    %v9617 = vrot.slane %v9257, 6
    %v9618 = vsel %vm995, %v9617, %v9616
    %v9619 = vrot.slane %v9258, 5
    %v9620 = vsel %vm998, %v9619, %v9618
    %v9621 = vrot.slane %v9259, 4
    %v9622 = vsel %vm1001, %v9621, %v9620
    %v9623 = vrot.slane %v9260, 3
    %v9624 = vsel %vm1004, %v9623, %v9622
    %v9625 = vrot.slane %v9261, 2
    %v9626 = vsel %vm1007, %v9625, %v9624
    %v9627 = vrot.slane %v9262, 1
    %v9628 = vsel %vm1010, %v9627, %v9626
    %v9629 = vsel %vm1013, %v9263, %v9628
    %v9630 = vrot.slane %v9264, 7
    %v9631 = vrot.slane %v9265, 6
    %v9632 = vsel %vm995, %v9631, %v9630
    %v9633 = vrot.slane %v9266, 5
    %v9634 = vsel %vm998, %v9633, %v9632
    %v9635 = vrot.slane %v9267, 4
    %v9636 = vsel %vm1001, %v9635, %v9634
    %v9637 = vrot.slane %v9268, 3
    %v9638 = vsel %vm1004, %v9637, %v9636
    %v9639 = vrot.slane %v9269, 2
    %v9640 = vsel %vm1007, %v9639, %v9638
    %v9641 = vrot.slane %v9270, 1
    %v9642 = vsel %vm1010, %v9641, %v9640
    %v9643 = vsel %vm1013, %v9271, %v9642
    %v9662 = vrot.slane %v9309, 7
    %v9663 = vsel %vm995, %v9662, %v9308
    %v9664 = vrot.slane %v9310, 6
    %v9665 = vsel %vm998, %v9664, %v9663
    %v9666 = vrot.slane %v9311, 5
    %v9667 = vsel %vm1001, %v9666, %v9665
    %v9668 = vrot.slane %v9312, 4
    %v9669 = vsel %vm1004, %v9668, %v9667
    %v9670 = vrot.slane %v9313, 3
    %v9671 = vsel %vm1007, %v9670, %v9669
    %v9672 = vrot.slane %v9314, 2
    %v9673 = vsel %vm1010, %v9672, %v9671
    %v9674 = vrot.slane %v9315, 1
    %v9675 = vsel %vm1013, %v9674, %v9673
    %v9676 = vrot.slane %v9317, 7
    %v9677 = vsel %vm995, %v9676, %v9316
    %v9678 = vrot.slane %v9318, 6
    %v9679 = vsel %vm998, %v9678, %v9677
    %v9680 = vrot.slane %v9319, 5
    %v9681 = vsel %vm1001, %v9680, %v9679
    %v9682 = vrot.slane %v9320, 4
    %v9683 = vsel %vm1004, %v9682, %v9681
    %v9684 = vrot.slane %v9321, 3
    %v9685 = vsel %vm1007, %v9684, %v9683
    %v9686 = vrot.slane %v9322, 2
    %v9687 = vsel %vm1010, %v9686, %v9685
    %v9688 = vrot.slane %v9323, 1
    %v9689 = vsel %vm1013, %v9688, %v9687
    %9692 = vset.pattern.permute.xlu0 6
    %9693 = vperm.xlu0 %9692, %v45
    %v9694 = vpop.permute.xlu0 %9693
    %9696 = vset.pattern.permute.xlu0 6
    %9697 = vperm.xlu0 %9696, %v46
    %v9698 = vpop.permute.xlu0 %9697
    %v9701 = vsel %vm7937, %v8905, 0
    %v9704 = vsel %vm7937, %v8907, 0
    %9706 = vmatprep.subr.mxu0 0.0
    %9707 = vmatpush1.msra.mxu0 %v9643
    %9708 = vmatprep.subr.mxu0 0.0
    %9709 = vmatpush1.msra.mxu0 %v9629
    %9710 = vmatprep.subr.mxu0 0.0
    %9711 = vmatpush1.msra.mxu0 %v9597
    %9712 = vmatprep.subr.mxu0 0.0
    %9713 = vmatpush1.msra.mxu0 %v9583
    %9714 = vmatprep.subr.mxu0 0.0
    %9715 = vmatpush1.msra.mxu0 %v9551
    %9716 = vmatprep.subr.mxu0 0.0
    %9717 = vmatpush1.msra.mxu0 %v9537
    %9718 = vmatprep.subr.mxu0 0.0
    %9719 = vmatpush1.msra.mxu0 %v8902
    %9720 = vmatprep.subr.mxu0 0.0
    %9721 = vmatpush1.msra.mxu0 %v8901
    %9722 = vmatprep.subr.mxu0 0.0
    %9723 = vmatpush1.msra.mxu0 %v9505
    %9724 = vmatprep.subr.mxu0 0.0
    %9725 = vmatpush1.msra.mxu0 %v9491
    %9726 = vmatprep.subr.mxu0 0.0
    %9727 = vmatpush1.msra.mxu0 %v9459
    %9728 = vmatprep.subr.mxu0 0.0
    %9729 = vmatpush1.msra.mxu0 %v9445
    %9730 = vmatprep.subr.mxu0 0.0
    %9731 = vmatpush1.msra.mxu0 %v9413
    %9732 = vmatprep.subr.mxu0 0.0
    %9733 = vmatpush1.msra.mxu0 %v9399
    %9734 = vmatprep.subr.mxu0 0.0
    %9735 = vmatpush1.msra.mxu0 %v9367
    %9736 = vmatprep.subr.mxu0 0.0
    %9737 = vmatpush1.msra.mxu0 %v9353
    %9738 = vmatprep.subr.mxu0 0.0
    %9739 = vmatpush2.msra.mxu0 0.0
    %9740 = vmatprep.subr.mxu0 0.0
    %9741 = vmatpush2.msra.mxu0 0.0
    %9742 = vmatprep.subr.mxu0 0.0
    %9743 = vmatpush2.msra.mxu0 0.0
    %9744 = vmatprep.subr.mxu0 0.0
    %9745 = vmatpush2.msra.mxu0 0.0
    %9746 = vmatprep.subr.mxu0 0.0
    %9747 = vmatpush2.msra.mxu0 0.0
    %9748 = vmatprep.subr.mxu0 0.0
    %9749 = vmatpush2.msra.mxu0 0.0
    %9750 = vmatprep.subr.mxu0 0.0
    %9751 = vmatpush2.msra.mxu0 0.0
    %9752 = vmatprep.subr.mxu0 0.0
    %9753 = vmatpush2.msra.mxu0 0.0
    %9754 = vmatprep.subr.mxu0 0.0
    %9755 = vmatpush2.msra.mxu0 0.0
    %9756 = vmatprep.subr.mxu0 0.0
    %9757 = vmatpush2.msra.mxu0 0.0
    %9758 = vmatprep.subr.mxu0 0.0
    %9759 = vmatpush2.msra.mxu0 0.0
    %9760 = vmatprep.subr.mxu0 0.0
    %9761 = vmatpush2.msra.mxu0 0.0
    %9762 = vmatprep.subr.mxu0 0.0
    %9763 = vmatpush2.msra.mxu0 0.0
    %9764 = vmatprep.subr.mxu0 0.0
    %9765 = vmatpush2.msra.mxu0 0.0
    %9766 = vmatprep.subr.mxu0 0.0
    %9767 = vmatpush2.msra.mxu0 %v9689
    %9768 = vmatprep.subr.mxu0 0.0
    %9769 = vmatpush2.msra.mxu0 %v9675
    %9770 = vmatprep.mubr.f32.mxu0 %v9701
    %9771 = vmatmul.mubr.f32.gmra.mxu0 %v8904
    %v9772 = vpop.f32.mrf.mxu0
    %v9773 = vadd.f32 %v9694, %v9772
    %v9774 = vpop.f32.mrf.mxu0
    %9775 = vmatprep.mubr.f32.mxu0 %v9704
    %9776 = vmatmul.mubr.f32.gmra.mxu0 %v8906
    %v9777 = vpop.f32.mrf.mxu0
    %v9778 = vadd.f32 %v9698, %v9777
    %v9779 = vpop.f32.mrf.mxu0
    %9780 = vdwg.mxu0
    %v9781 = vmax.f32 %v9773, 0.0
    %v9782 = vmax.f32 %v9778, 0.0
    %s9783 = scalar_lea.vmem %s2, 224
    %v9784 = vld [vmem:[%s9783] sm:$0xff]
    %v9785 = vld [vmem:[%s9783 + $0x8] sm:$0xff]
    %v9786 = vld [vmem:[%s9783 + $0x10] sm:$0xff]
    %v9787 = vld [vmem:[%s9783 + $0x18] sm:$0xff]
    %9788 = vrot.lane.b32.xlu0 %v9781, 9
    %v9789 = vpop.permute.xlu0 %9788
    %9790 = vrot.lane.b32.xlu0 %v9782, 9
    %v9791 = vpop.permute.xlu0 %9790
    %v9794 = vrot.slane %v9789, 1
    %v9795 = vrot.slane %v9789, 2
    %v9796 = vrot.slane %v9789, 3
    %v9797 = vrot.slane %v9789, 4
    %v9798 = vrot.slane %v9789, 5
    %v9799 = vrot.slane %v9789, 6
    %v9800 = vrot.slane %v9789, 7
    %v9801 = vrot.slane %v9791, 1
    %v9802 = vrot.slane %v9791, 2
    %v9803 = vrot.slane %v9791, 3
    %v9804 = vrot.slane %v9791, 4
    %v9805 = vrot.slane %v9791, 5
    %v9806 = vrot.slane %v9791, 6
    %v9807 = vrot.slane %v9791, 7
    %v9824 = vsel %vm7145, %v9789, 0.0
    %v9825 = vsel %vm7145, %v9794, 0.0
    %v9826 = vsel %vm7145, %v9795, 0.0
    %v9827 = vsel %vm7145, %v9796, 0.0
    %v9828 = vsel %vm7145, %v9797, 0.0
    %v9829 = vsel %vm7145, %v9798, 0.0
    %v9830 = vsel %vm7145, %v9799, 0.0
    %v9831 = vsel %vm7145, %v9800, 0.0
    %v9832 = vsel %vm7145, %v9791, 0.0
    %v9833 = vsel %vm7145, %v9801, 0.0
    %v9834 = vsel %vm7145, %v9802, 0.0
    %v9835 = vsel %vm7145, %v9803, 0.0
    %v9836 = vsel %vm7145, %v9804, 0.0
    %v9837 = vsel %vm7145, %v9805, 0.0
    %v9838 = vsel %vm7145, %v9806, 0.0
    %v9839 = vsel %vm7145, %v9807, 0.0
    %9840 = vrot.lane.b32.xlu0 %v9781, 8
    %v9841 = vpop.permute.xlu0 %9840
    %9842 = vrot.lane.b32.xlu0 %v9782, 8
    %v9843 = vpop.permute.xlu0 %9842
    %v9846 = vrot.slane %v9841, 7
    %v9847 = vrot.slane %v9841, 1
    %v9848 = vrot.slane %v9841, 2
    %v9849 = vrot.slane %v9841, 3
    %v9850 = vrot.slane %v9841, 4
    %v9851 = vrot.slane %v9841, 5
    %v9852 = vrot.slane %v9841, 6
    %v9853 = vrot.slane %v9843, 7
    %v9854 = vrot.slane %v9843, 1
    %v9855 = vrot.slane %v9843, 2
    %v9856 = vrot.slane %v9843, 3
    %v9857 = vrot.slane %v9843, 4
    %v9858 = vrot.slane %v9843, 5
    %v9859 = vrot.slane %v9843, 6
    %v9876 = vsel %vm7145, %v9846, 0.0
    %v9877 = vsel %vm7145, %v9841, 0.0
    %v9878 = vsel %vm7145, %v9847, 0.0
    %v9879 = vsel %vm7145, %v9848, 0.0
    %v9880 = vsel %vm7145, %v9849, 0.0
    %v9881 = vsel %vm7145, %v9850, 0.0
    %v9882 = vsel %vm7145, %v9851, 0.0
    %v9883 = vsel %vm7145, %v9852, 0.0
    %v9884 = vsel %vm7145, %v9853, 0.0
    %v9885 = vsel %vm7145, %v9843, 0.0
    %v9886 = vsel %vm7145, %v9854, 0.0
    %v9887 = vsel %vm7145, %v9855, 0.0
    %v9888 = vsel %vm7145, %v9856, 0.0
    %v9889 = vsel %vm7145, %v9857, 0.0
    %v9890 = vsel %vm7145, %v9858, 0.0
    %v9891 = vsel %vm7145, %v9859, 0.0
    %9892 = vrot.lane.b32.xlu0 %v9781, 7
    %v9893 = vpop.permute.xlu0 %9892
    %9894 = vrot.lane.b32.xlu0 %v9782, 7
    %v9895 = vpop.permute.xlu0 %9894
    %v9898 = vrot.slane %v9893, 6
    %v9899 = vrot.slane %v9893, 7
    %v9900 = vrot.slane %v9893, 1
    %v9901 = vrot.slane %v9893, 2
    %v9902 = vrot.slane %v9893, 3
    %v9903 = vrot.slane %v9893, 4
    %v9904 = vrot.slane %v9893, 5
    %v9905 = vrot.slane %v9895, 6
    %v9906 = vrot.slane %v9895, 7
    %v9907 = vrot.slane %v9895, 1
    %v9908 = vrot.slane %v9895, 2
    %v9909 = vrot.slane %v9895, 3
    %v9910 = vrot.slane %v9895, 4
    %v9911 = vrot.slane %v9895, 5
    %v9928 = vsel %vm7145, %v9898, 0.0
    %v9929 = vsel %vm7145, %v9899, 0.0
    %v9930 = vsel %vm7145, %v9893, 0.0
    %v9931 = vsel %vm7145, %v9900, 0.0
    %v9932 = vsel %vm7145, %v9901, 0.0
    %v9933 = vsel %vm7145, %v9902, 0.0
    %v9934 = vsel %vm7145, %v9903, 0.0
    %v9935 = vsel %vm7145, %v9904, 0.0
    %v9936 = vsel %vm7145, %v9905, 0.0
    %v9937 = vsel %vm7145, %v9906, 0.0
    %v9938 = vsel %vm7145, %v9895, 0.0
    %v9939 = vsel %vm7145, %v9907, 0.0
    %v9940 = vsel %vm7145, %v9908, 0.0
    %v9941 = vsel %vm7145, %v9909, 0.0
    %v9942 = vsel %vm7145, %v9910, 0.0
    %v9943 = vsel %vm7145, %v9911, 0.0
    %9944 = vrot.lane.b32.xlu0 %v9781, 1
    %v9945 = vpop.permute.xlu0 %9944
    %9946 = vrot.lane.b32.xlu0 %v9782, 1
    %v9947 = vpop.permute.xlu0 %9946
    %v9950 = vrot.slane %v9945, 5
    %v9951 = vrot.slane %v9945, 6
    %v9952 = vrot.slane %v9945, 7
    %v9953 = vrot.slane %v9945, 1
    %v9954 = vrot.slane %v9945, 2
    %v9955 = vrot.slane %v9945, 3
    %v9956 = vrot.slane %v9945, 4
    %v9957 = vrot.slane %v9947, 5
    %v9958 = vrot.slane %v9947, 6
    %v9959 = vrot.slane %v9947, 7
    %v9960 = vrot.slane %v9947, 1
    %v9961 = vrot.slane %v9947, 2
    %v9962 = vrot.slane %v9947, 3
    %v9963 = vrot.slane %v9947, 4
    %v9980 = vsel %vm7145, %v9950, 0.0
    %v9981 = vsel %vm7145, %v9951, 0.0
    %v9982 = vsel %vm7145, %v9952, 0.0
    %v9983 = vsel %vm7145, %v9945, 0.0
    %v9984 = vsel %vm7145, %v9953, 0.0
    %v9985 = vsel %vm7145, %v9954, 0.0
    %v9986 = vsel %vm7145, %v9955, 0.0
    %v9987 = vsel %vm7145, %v9956, 0.0
    %v9988 = vsel %vm7145, %v9957, 0.0
    %v9989 = vsel %vm7145, %v9958, 0.0
    %v9990 = vsel %vm7145, %v9959, 0.0
    %v9991 = vsel %vm7145, %v9947, 0.0
    %v9992 = vsel %vm7145, %v9960, 0.0
    %v9993 = vsel %vm7145, %v9961, 0.0
    %v9994 = vsel %vm7145, %v9962, 0.0
    %v9995 = vsel %vm7145, %v9963, 0.0
    %9996 = vrot.lane.b32.xlu0 %v9781, 127
    %v9997 = vpop.permute.xlu0 %9996
    %9998 = vrot.lane.b32.xlu0 %v9782, 127
    %v9999 = vpop.permute.xlu0 %9998
    %v10002 = vrot.slane %v9997, 3
    %v10003 = vrot.slane %v9997, 4
    %v10004 = vrot.slane %v9997, 5
    %v10005 = vrot.slane %v9997, 6
    %v10006 = vrot.slane %v9997, 7
    %v10007 = vrot.slane %v9997, 1
    %v10008 = vrot.slane %v9997, 2
    %v10009 = vrot.slane %v9999, 3
    %v10010 = vrot.slane %v9999, 4
    %v10011 = vrot.slane %v9999, 5
    %v10012 = vrot.slane %v9999, 6
    %v10013 = vrot.slane %v9999, 7
    %v10014 = vrot.slane %v9999, 1
    %v10015 = vrot.slane %v9999, 2
    %v10032 = vsel %vm7145, %v10002, 0.0
    %v10033 = vsel %vm7145, %v10003, 0.0
    %v10034 = vsel %vm7145, %v10004, 0.0
    %v10035 = vsel %vm7145, %v10005, 0.0
    %v10036 = vsel %vm7145, %v10006, 0.0
    %v10037 = vsel %vm7145, %v9997, 0.0
    %v10038 = vsel %vm7145, %v10007, 0.0
    %v10039 = vsel %vm7145, %v10008, 0.0
    %v10040 = vsel %vm7145, %v10009, 0.0
    %v10041 = vsel %vm7145, %v10010, 0.0
    %v10042 = vsel %vm7145, %v10011, 0.0
    %v10043 = vsel %vm7145, %v10012, 0.0
    %v10044 = vsel %vm7145, %v10013, 0.0
    %v10045 = vsel %vm7145, %v9999, 0.0
    %v10046 = vsel %vm7145, %v10014, 0.0
    %v10047 = vsel %vm7145, %v10015, 0.0
    %10048 = vrot.lane.b32.xlu0 %v9781, 121
    %v10049 = vpop.permute.xlu0 %10048
    %10050 = vrot.lane.b32.xlu0 %v9782, 121
    %v10051 = vpop.permute.xlu0 %10050
    %v10054 = vrot.slane %v10049, 2
    %v10055 = vrot.slane %v10049, 3
    %v10056 = vrot.slane %v10049, 4
    %v10057 = vrot.slane %v10049, 5
    %v10058 = vrot.slane %v10049, 6
    %v10059 = vrot.slane %v10049, 7
    %v10060 = vrot.slane %v10049, 1
    %v10061 = vrot.slane %v10051, 2
    %v10062 = vrot.slane %v10051, 3
    %v10063 = vrot.slane %v10051, 4
    %v10064 = vrot.slane %v10051, 5
    %v10065 = vrot.slane %v10051, 6
    %v10066 = vrot.slane %v10051, 7
    %v10067 = vrot.slane %v10051, 1
    %v10084 = vsel %vm7145, %v10054, 0.0
    %v10085 = vsel %vm7145, %v10055, 0.0
    %v10086 = vsel %vm7145, %v10056, 0.0
    %v10087 = vsel %vm7145, %v10057, 0.0
    %v10088 = vsel %vm7145, %v10058, 0.0
    %v10089 = vsel %vm7145, %v10059, 0.0
    %v10090 = vsel %vm7145, %v10049, 0.0
    %v10091 = vsel %vm7145, %v10060, 0.0
    %v10092 = vsel %vm7145, %v10061, 0.0
    %v10093 = vsel %vm7145, %v10062, 0.0
    %v10094 = vsel %vm7145, %v10063, 0.0
    %v10095 = vsel %vm7145, %v10064, 0.0
    %v10096 = vsel %vm7145, %v10065, 0.0
    %v10097 = vsel %vm7145, %v10066, 0.0
    %v10098 = vsel %vm7145, %v10051, 0.0
    %v10099 = vsel %vm7145, %v10067, 0.0
    %10100 = vrot.lane.b32.xlu0 %v9781, 120
    %v10101 = vpop.permute.xlu0 %10100
    %10102 = vrot.lane.b32.xlu0 %v9782, 120
    %v10103 = vpop.permute.xlu0 %10102
    %v10106 = vrot.slane %v10101, 1
    %v10107 = vrot.slane %v10101, 2
    %v10108 = vrot.slane %v10101, 3
    %v10109 = vrot.slane %v10101, 4
    %v10110 = vrot.slane %v10101, 5
    %v10111 = vrot.slane %v10101, 6
    %v10112 = vrot.slane %v10101, 7
    %v10113 = vrot.slane %v10103, 1
    %v10114 = vrot.slane %v10103, 2
    %v10115 = vrot.slane %v10103, 3
    %v10116 = vrot.slane %v10103, 4
    %v10117 = vrot.slane %v10103, 5
    %v10118 = vrot.slane %v10103, 6
    %v10119 = vrot.slane %v10103, 7
    %v10136 = vsel %vm7145, %v10106, 0.0
    %v10137 = vsel %vm7145, %v10107, 0.0
    %v10138 = vsel %vm7145, %v10108, 0.0
    %v10139 = vsel %vm7145, %v10109, 0.0
    %v10140 = vsel %vm7145, %v10110, 0.0
    %v10141 = vsel %vm7145, %v10111, 0.0
    %v10142 = vsel %vm7145, %v10112, 0.0
    %v10143 = vsel %vm7145, %v10101, 0.0
    %v10144 = vsel %vm7145, %v10113, 0.0
    %v10145 = vsel %vm7145, %v10114, 0.0
    %v10146 = vsel %vm7145, %v10115, 0.0
    %v10147 = vsel %vm7145, %v10116, 0.0
    %v10148 = vsel %vm7145, %v10117, 0.0
    %v10149 = vsel %vm7145, %v10118, 0.0
    %v10150 = vsel %vm7145, %v10119, 0.0
    %v10151 = vsel %vm7145, %v10103, 0.0
    %10152 = vrot.lane.b32.xlu0 %v9781, 119
    %v10153 = vpop.permute.xlu0 %10152
    %10154 = vrot.lane.b32.xlu0 %v9782, 119
    %v10155 = vpop.permute.xlu0 %10154
    %v10158 = vrot.slane %v10153, 1
    %v10159 = vrot.slane %v10153, 2
    %v10160 = vrot.slane %v10153, 3
    %v10161 = vrot.slane %v10153, 4
    %v10162 = vrot.slane %v10153, 5
    %v10163 = vrot.slane %v10153, 6
    %v10164 = vrot.slane %v10153, 7
    %v10165 = vrot.slane %v10155, 1
    %v10166 = vrot.slane %v10155, 2
    %v10167 = vrot.slane %v10155, 3
    %v10168 = vrot.slane %v10155, 4
    %v10169 = vrot.slane %v10155, 5
    %v10170 = vrot.slane %v10155, 6
    %v10171 = vrot.slane %v10155, 7
    %v10188 = vsel %vm7511, %v10153, 0.0
    %v10189 = vsel %vm7511, %v10158, 0.0
    %v10190 = vsel %vm7511, %v10159, 0.0
    %v10191 = vsel %vm7511, %v10160, 0.0
    %v10192 = vsel %vm7511, %v10161, 0.0
    %v10193 = vsel %vm7511, %v10162, 0.0
    %v10194 = vsel %vm7511, %v10163, 0.0
    %v10195 = vsel %vm7511, %v10164, 0.0
    %v10196 = vsel %vm7511, %v10155, 0.0
    %v10197 = vsel %vm7511, %v10165, 0.0
    %v10198 = vsel %vm7511, %v10166, 0.0
    %v10199 = vsel %vm7511, %v10167, 0.0
    %v10200 = vsel %vm7511, %v10168, 0.0
    %v10201 = vsel %vm7511, %v10169, 0.0
    %v10202 = vsel %vm7511, %v10170, 0.0
    %v10203 = vsel %vm7511, %v10171, 0.0
    %v10220 = vrot.slane %v9825, 7
    %v10221 = vsel %vm995, %v10220, %v9824
    %v10222 = vrot.slane %v9826, 6
    %v10223 = vsel %vm998, %v10222, %v10221
    %v10224 = vrot.slane %v9827, 5
    %v10225 = vsel %vm1001, %v10224, %v10223
    %v10226 = vrot.slane %v9828, 4
    %v10227 = vsel %vm1004, %v10226, %v10225
    %v10228 = vrot.slane %v9829, 3
    %v10229 = vsel %vm1007, %v10228, %v10227
    %v10230 = vrot.slane %v9830, 2
    %v10231 = vsel %vm1010, %v10230, %v10229
    %v10232 = vrot.slane %v9831, 1
    %v10233 = vsel %vm1013, %v10232, %v10231
    %v10234 = vrot.slane %v9833, 7
    %v10235 = vsel %vm995, %v10234, %v9832
    %v10236 = vrot.slane %v9834, 6
    %v10237 = vsel %vm998, %v10236, %v10235
    %v10238 = vrot.slane %v9835, 5
    %v10239 = vsel %vm1001, %v10238, %v10237
    %v10240 = vrot.slane %v9836, 4
    %v10241 = vsel %vm1004, %v10240, %v10239
    %v10242 = vrot.slane %v9837, 3
    %v10243 = vsel %vm1007, %v10242, %v10241
    %v10244 = vrot.slane %v9838, 2
    %v10245 = vsel %vm1010, %v10244, %v10243
    %v10246 = vrot.slane %v9839, 1
    %v10247 = vsel %vm1013, %v10246, %v10245
    %v10266 = vrot.slane %v9876, 1
    %v10267 = vsel %vm995, %v9877, %v10266
    %v10268 = vrot.slane %v9878, 7
    %v10269 = vsel %vm998, %v10268, %v10267
    %v10270 = vrot.slane %v9879, 6
    %v10271 = vsel %vm1001, %v10270, %v10269
    %v10272 = vrot.slane %v9880, 5
    %v10273 = vsel %vm1004, %v10272, %v10271
    %v10274 = vrot.slane %v9881, 4
    %v10275 = vsel %vm1007, %v10274, %v10273
    %v10276 = vrot.slane %v9882, 3
    %v10277 = vsel %vm1010, %v10276, %v10275
    %v10278 = vrot.slane %v9883, 2
    %v10279 = vsel %vm1013, %v10278, %v10277
    %v10280 = vrot.slane %v9884, 1
    %v10281 = vsel %vm995, %v9885, %v10280
    %v10282 = vrot.slane %v9886, 7
    %v10283 = vsel %vm998, %v10282, %v10281
    %v10284 = vrot.slane %v9887, 6
    %v10285 = vsel %vm1001, %v10284, %v10283
    %v10286 = vrot.slane %v9888, 5
    %v10287 = vsel %vm1004, %v10286, %v10285
    %v10288 = vrot.slane %v9889, 4
    %v10289 = vsel %vm1007, %v10288, %v10287
    %v10290 = vrot.slane %v9890, 3
    %v10291 = vsel %vm1010, %v10290, %v10289
    %v10292 = vrot.slane %v9891, 2
    %v10293 = vsel %vm1013, %v10292, %v10291
    %v10312 = vrot.slane %v9928, 2
    %v10313 = vrot.slane %v9929, 1
    %v10314 = vsel %vm995, %v10313, %v10312
    %v10315 = vsel %vm998, %v9930, %v10314
    %v10316 = vrot.slane %v9931, 7
    %v10317 = vsel %vm1001, %v10316, %v10315
    %v10318 = vrot.slane %v9932, 6
    %v10319 = vsel %vm1004, %v10318, %v10317
    %v10320 = vrot.slane %v9933, 5
    %v10321 = vsel %vm1007, %v10320, %v10319
    %v10322 = vrot.slane %v9934, 4
    %v10323 = vsel %vm1010, %v10322, %v10321
    %v10324 = vrot.slane %v9935, 3
    %v10325 = vsel %vm1013, %v10324, %v10323
    %v10326 = vrot.slane %v9936, 2
    %v10327 = vrot.slane %v9937, 1
    %v10328 = vsel %vm995, %v10327, %v10326
    %v10329 = vsel %vm998, %v9938, %v10328
    %v10330 = vrot.slane %v9939, 7
    %v10331 = vsel %vm1001, %v10330, %v10329
    %v10332 = vrot.slane %v9940, 6
    %v10333 = vsel %vm1004, %v10332, %v10331
    %v10334 = vrot.slane %v9941, 5
    %v10335 = vsel %vm1007, %v10334, %v10333
    %v10336 = vrot.slane %v9942, 4
    %v10337 = vsel %vm1010, %v10336, %v10335
    %v10338 = vrot.slane %v9943, 3
    %v10339 = vsel %vm1013, %v10338, %v10337
    %v10358 = vrot.slane %v9980, 3
    %v10359 = vrot.slane %v9981, 2
    %v10360 = vsel %vm995, %v10359, %v10358
    %v10361 = vrot.slane %v9982, 1
    %v10362 = vsel %vm998, %v10361, %v10360
    %v10363 = vsel %vm1001, %v9983, %v10362
    %v10364 = vrot.slane %v9984, 7
    %v10365 = vsel %vm1004, %v10364, %v10363
    %v10366 = vrot.slane %v9985, 6
    %v10367 = vsel %vm1007, %v10366, %v10365
    %v10368 = vrot.slane %v9986, 5
    %v10369 = vsel %vm1010, %v10368, %v10367
    %v10370 = vrot.slane %v9987, 4
    %v10371 = vsel %vm1013, %v10370, %v10369
    %v10372 = vrot.slane %v9988, 3
    %v10373 = vrot.slane %v9989, 2
    %v10374 = vsel %vm995, %v10373, %v10372
    %v10375 = vrot.slane %v9990, 1
    %v10376 = vsel %vm998, %v10375, %v10374
    %v10377 = vsel %vm1001, %v9991, %v10376
    %v10378 = vrot.slane %v9992, 7
    %v10379 = vsel %vm1004, %v10378, %v10377
    %v10380 = vrot.slane %v9993, 6
    %v10381 = vsel %vm1007, %v10380, %v10379
    %v10382 = vrot.slane %v9994, 5
    %v10383 = vsel %vm1010, %v10382, %v10381
    %v10384 = vrot.slane %v9995, 4
    %v10385 = vsel %vm1013, %v10384, %v10383
    %v10404 = vrot.slane %v10032, 5
    %v10405 = vrot.slane %v10033, 4
    %v10406 = vsel %vm995, %v10405, %v10404
    %v10407 = vrot.slane %v10034, 3
    %v10408 = vsel %vm998, %v10407, %v10406
    %v10409 = vrot.slane %v10035, 2
    %v10410 = vsel %vm1001, %v10409, %v10408
    %v10411 = vrot.slane %v10036, 1
    %v10412 = vsel %vm1004, %v10411, %v10410
    %v10413 = vsel %vm1007, %v10037, %v10412
    %v10414 = vrot.slane %v10038, 7
    %v10415 = vsel %vm1010, %v10414, %v10413
    %v10416 = vrot.slane %v10039, 6
    %v10417 = vsel %vm1013, %v10416, %v10415
    %v10418 = vrot.slane %v10040, 5
    %v10419 = vrot.slane %v10041, 4
    %v10420 = vsel %vm995, %v10419, %v10418
    %v10421 = vrot.slane %v10042, 3
    %v10422 = vsel %vm998, %v10421, %v10420
    %v10423 = vrot.slane %v10043, 2
    %v10424 = vsel %vm1001, %v10423, %v10422
    %v10425 = vrot.slane %v10044, 1
    %v10426 = vsel %vm1004, %v10425, %v10424
    %v10427 = vsel %vm1007, %v10045, %v10426
    %v10428 = vrot.slane %v10046, 7
    %v10429 = vsel %vm1010, %v10428, %v10427
    %v10430 = vrot.slane %v10047, 6
    %v10431 = vsel %vm1013, %v10430, %v10429
    %v10450 = vrot.slane %v10084, 6
    %v10451 = vrot.slane %v10085, 5
    %v10452 = vsel %vm995, %v10451, %v10450
    %v10453 = vrot.slane %v10086, 4
    %v10454 = vsel %vm998, %v10453, %v10452
    %v10455 = vrot.slane %v10087, 3
    %v10456 = vsel %vm1001, %v10455, %v10454
    %v10457 = vrot.slane %v10088, 2
    %v10458 = vsel %vm1004, %v10457, %v10456
    %v10459 = vrot.slane %v10089, 1
    %v10460 = vsel %vm1007, %v10459, %v10458
    %v10461 = vsel %vm1010, %v10090, %v10460
    %v10462 = vrot.slane %v10091, 7
    %v10463 = vsel %vm1013, %v10462, %v10461
    %v10464 = vrot.slane %v10092, 6
    %v10465 = vrot.slane %v10093, 5
    %v10466 = vsel %vm995, %v10465, %v10464
    %v10467 = vrot.slane %v10094, 4
    %v10468 = vsel %vm998, %v10467, %v10466
    %v10469 = vrot.slane %v10095, 3
    %v10470 = vsel %vm1001, %v10469, %v10468
    %v10471 = vrot.slane %v10096, 2
    %v10472 = vsel %vm1004, %v10471, %v10470
    %v10473 = vrot.slane %v10097, 1
    %v10474 = vsel %vm1007, %v10473, %v10472
    %v10475 = vsel %vm1010, %v10098, %v10474
    %v10476 = vrot.slane %v10099, 7
    %v10477 = vsel %vm1013, %v10476, %v10475
    %v10496 = vrot.slane %v10136, 7
    %v10497 = vrot.slane %v10137, 6
    %v10498 = vsel %vm995, %v10497, %v10496
    %v10499 = vrot.slane %v10138, 5
    %v10500 = vsel %vm998, %v10499, %v10498
    %v10501 = vrot.slane %v10139, 4
    %v10502 = vsel %vm1001, %v10501, %v10500
    %v10503 = vrot.slane %v10140, 3
    %v10504 = vsel %vm1004, %v10503, %v10502
    %v10505 = vrot.slane %v10141, 2
    %v10506 = vsel %vm1007, %v10505, %v10504
    %v10507 = vrot.slane %v10142, 1
    %v10508 = vsel %vm1010, %v10507, %v10506
    %v10509 = vsel %vm1013, %v10143, %v10508
    %v10510 = vrot.slane %v10144, 7
    %v10511 = vrot.slane %v10145, 6
    %v10512 = vsel %vm995, %v10511, %v10510
    %v10513 = vrot.slane %v10146, 5
    %v10514 = vsel %vm998, %v10513, %v10512
    %v10515 = vrot.slane %v10147, 4
    %v10516 = vsel %vm1001, %v10515, %v10514
    %v10517 = vrot.slane %v10148, 3
    %v10518 = vsel %vm1004, %v10517, %v10516
    %v10519 = vrot.slane %v10149, 2
    %v10520 = vsel %vm1007, %v10519, %v10518
    %v10521 = vrot.slane %v10150, 1
    %v10522 = vsel %vm1010, %v10521, %v10520
    %v10523 = vsel %vm1013, %v10151, %v10522
    %v10542 = vrot.slane %v10189, 7
    %v10543 = vsel %vm995, %v10542, %v10188
    %v10544 = vrot.slane %v10190, 6
    %v10545 = vsel %vm998, %v10544, %v10543
    %v10546 = vrot.slane %v10191, 5
    %v10547 = vsel %vm1001, %v10546, %v10545
    %v10548 = vrot.slane %v10192, 4
    %v10549 = vsel %vm1004, %v10548, %v10547
    %v10550 = vrot.slane %v10193, 3
    %v10551 = vsel %vm1007, %v10550, %v10549
    %v10552 = vrot.slane %v10194, 2
    %v10553 = vsel %vm1010, %v10552, %v10551
    %v10554 = vrot.slane %v10195, 1
    %v10555 = vsel %vm1013, %v10554, %v10553
    %v10556 = vrot.slane %v10197, 7
    %v10557 = vsel %vm995, %v10556, %v10196
    %v10558 = vrot.slane %v10198, 6
    %v10559 = vsel %vm998, %v10558, %v10557
    %v10560 = vrot.slane %v10199, 5
    %v10561 = vsel %vm1001, %v10560, %v10559
    %v10562 = vrot.slane %v10200, 4
    %v10563 = vsel %vm1004, %v10562, %v10561
    %v10564 = vrot.slane %v10201, 3
    %v10565 = vsel %vm1007, %v10564, %v10563
    %v10566 = vrot.slane %v10202, 2
    %v10567 = vsel %vm1010, %v10566, %v10565
    %v10568 = vrot.slane %v10203, 1
    %v10569 = vsel %vm1013, %v10568, %v10567
    %10572 = vset.pattern.permute.xlu0 7
    %10573 = vperm.xlu0 %10572, %v45
    %v10574 = vpop.permute.xlu0 %10573
    %10576 = vset.pattern.permute.xlu0 7
    %10577 = vperm.xlu0 %10576, %v46
    %v10578 = vpop.permute.xlu0 %10577
    %v10581 = vsel %vm7937, %v9785, 0
    %v10584 = vsel %vm7937, %v9787, 0
    %10586 = vmatprep.subr.mxu0 0.0
    %10587 = vmatpush1.msra.mxu0 %v10523
    %10588 = vmatprep.subr.mxu0 0.0
    %10589 = vmatpush1.msra.mxu0 %v10509
    %10590 = vmatprep.subr.mxu0 0.0
    %10591 = vmatpush1.msra.mxu0 %v10477
    %10592 = vmatprep.subr.mxu0 0.0
    %10593 = vmatpush1.msra.mxu0 %v10463
    %10594 = vmatprep.subr.mxu0 0.0
    %10595 = vmatpush1.msra.mxu0 %v10431
    %10596 = vmatprep.subr.mxu0 0.0
    %10597 = vmatpush1.msra.mxu0 %v10417
    %10598 = vmatprep.subr.mxu0 0.0
    %10599 = vmatpush1.msra.mxu0 %v9782
    %10600 = vmatprep.subr.mxu0 0.0
    %10601 = vmatpush1.msra.mxu0 %v9781
    %10602 = vmatprep.subr.mxu0 0.0
    %10603 = vmatpush1.msra.mxu0 %v10385
    %10604 = vmatprep.subr.mxu0 0.0
    %10605 = vmatpush1.msra.mxu0 %v10371
    %10606 = vmatprep.subr.mxu0 0.0
    %10607 = vmatpush1.msra.mxu0 %v10339
    %10608 = vmatprep.subr.mxu0 0.0
    %10609 = vmatpush1.msra.mxu0 %v10325
    %10610 = vmatprep.subr.mxu0 0.0
    %10611 = vmatpush1.msra.mxu0 %v10293
    %10612 = vmatprep.subr.mxu0 0.0
    %10613 = vmatpush1.msra.mxu0 %v10279
    %10614 = vmatprep.subr.mxu0 0.0
    %10615 = vmatpush1.msra.mxu0 %v10247
    %10616 = vmatprep.subr.mxu0 0.0
    %10617 = vmatpush1.msra.mxu0 %v10233
    %10618 = vmatprep.subr.mxu0 0.0
    %10619 = vmatpush2.msra.mxu0 0.0
    %10620 = vmatprep.subr.mxu0 0.0
    %10621 = vmatpush2.msra.mxu0 0.0
    %10622 = vmatprep.subr.mxu0 0.0
    %10623 = vmatpush2.msra.mxu0 0.0
    %10624 = vmatprep.subr.mxu0 0.0
    %10625 = vmatpush2.msra.mxu0 0.0
    %10626 = vmatprep.subr.mxu0 0.0
    %10627 = vmatpush2.msra.mxu0 0.0
    %10628 = vmatprep.subr.mxu0 0.0
    %10629 = vmatpush2.msra.mxu0 0.0
    %10630 = vmatprep.subr.mxu0 0.0
    %10631 = vmatpush2.msra.mxu0 0.0
    %10632 = vmatprep.subr.mxu0 0.0
    %10633 = vmatpush2.msra.mxu0 0.0
    %10634 = vmatprep.subr.mxu0 0.0
    %10635 = vmatpush2.msra.mxu0 0.0
    %10636 = vmatprep.subr.mxu0 0.0
    %10637 = vmatpush2.msra.mxu0 0.0
    %10638 = vmatprep.subr.mxu0 0.0
    %10639 = vmatpush2.msra.mxu0 0.0
    %10640 = vmatprep.subr.mxu0 0.0
    %10641 = vmatpush2.msra.mxu0 0.0
    %10642 = vmatprep.subr.mxu0 0.0
    %10643 = vmatpush2.msra.mxu0 0.0
    %10644 = vmatprep.subr.mxu0 0.0
    %10645 = vmatpush2.msra.mxu0 0.0
    %10646 = vmatprep.subr.mxu0 0.0
    %10647 = vmatpush2.msra.mxu0 %v10569
    %10648 = vmatprep.subr.mxu0 0.0
    %10649 = vmatpush2.msra.mxu0 %v10555
    %10650 = vmatprep.mubr.f32.mxu0 %v10581
    %10651 = vmatmul.mubr.f32.gmra.mxu0 %v9784
    %v10652 = vpop.f32.mrf.mxu0
    %v10653 = vadd.f32 %v10574, %v10652
    %v10654 = vpop.f32.mrf.mxu0
    %10655 = vmatprep.mubr.f32.mxu0 %v10584
    %10656 = vmatmul.mubr.f32.gmra.mxu0 %v9786
    %v10657 = vpop.f32.mrf.mxu0
    %v10658 = vadd.f32 %v10578, %v10657
    %v10659 = vpop.f32.mrf.mxu0
    %10660 = vdwg.mxu0
    %v10661 = vadd.f32 %v10653, %v8901
    %v10662 = vadd.f32 %v10658, %v8902
    %v10663 = vmax.f32 %v10661, 0.0
    %v10664 = vmax.f32 %v10662, 0.0
    %s10665 = scalar_lea.vmem %s2, 256
    %v10666 = vld [vmem:[%s10665] sm:$0xff]
    %10667 = vset.pattern.permute.xlu0 8
    %10668 = vperm.xlu0 %10667, %v45
    %v10669 = vpop.permute.xlu0 %10668
    %v10672 = vsel %vm7937, %v10666, 0
    %10674 = vmatprep.subr.mxu0 0.0
    %10675 = vmatpush1.msra.mxu0 0.0
    %10676 = vmatprep.subr.mxu0 0.0
    %10677 = vmatpush1.msra.mxu0 0.0
    %10678 = vmatprep.subr.mxu0 0.0
    %10679 = vmatpush1.msra.mxu0 0.0
    %10680 = vmatprep.subr.mxu0 0.0
    %10681 = vmatpush1.msra.mxu0 0.0
    %10682 = vmatprep.subr.mxu0 0.0
    %10683 = vmatpush1.msra.mxu0 0.0
    %10684 = vmatprep.subr.mxu0 0.0
    %10685 = vmatpush1.msra.mxu0 0.0
    %10686 = vmatprep.subr.mxu0 0.0
    %10687 = vmatpush1.msra.mxu0 0.0
    %10688 = vmatprep.subr.mxu0 0.0
    %10689 = vmatpush1.msra.mxu0 0.0
    %10690 = vmatprep.subr.mxu0 0.0
    %10691 = vmatpush1.msra.mxu0 0.0
    %10692 = vmatprep.subr.mxu0 0.0
    %10693 = vmatpush1.msra.mxu0 0.0
    %10694 = vmatprep.subr.mxu0 0.0
    %10695 = vmatpush1.msra.mxu0 0.0
    %10696 = vmatprep.subr.mxu0 0.0
    %10697 = vmatpush1.msra.mxu0 0.0
    %10698 = vmatprep.subr.mxu0 0.0
    %10699 = vmatpush1.msra.mxu0 0.0
    %10700 = vmatprep.subr.mxu0 0.0
    %10701 = vmatpush1.msra.mxu0 0.0
    %10702 = vmatprep.subr.mxu0 0.0
    %10703 = vmatpush1.msra.mxu0 %v10664
    %10704 = vmatprep.subr.mxu0 0.0
    %10705 = vmatpush1.msra.mxu0 %v10663
    %10706 = vmatprep.subr.mxu0 0.0
    %10707 = vmatpush2.msra.mxu0 0.0
    %10708 = vmatprep.subr.mxu0 0.0
    %10709 = vmatpush2.msra.mxu0 0.0
    %10710 = vmatprep.subr.mxu0 0.0
    %10711 = vmatpush2.msra.mxu0 0.0
    %10712 = vmatprep.subr.mxu0 0.0
    %10713 = vmatpush2.msra.mxu0 0.0
    %10714 = vmatprep.subr.mxu0 0.0
    %10715 = vmatpush2.msra.mxu0 0.0
    %10716 = vmatprep.subr.mxu0 0.0
    %10717 = vmatpush2.msra.mxu0 0.0
    %10718 = vmatprep.subr.mxu0 0.0
    %10719 = vmatpush2.msra.mxu0 0.0
    %10720 = vmatprep.subr.mxu0 0.0
    %10721 = vmatpush2.msra.mxu0 0.0
    %10722 = vmatprep.subr.mxu0 0.0
    %10723 = vmatpush2.msra.mxu0 0.0
    %10724 = vmatprep.subr.mxu0 0.0
    %10725 = vmatpush2.msra.mxu0 0.0
    %10726 = vmatprep.subr.mxu0 0.0
    %10727 = vmatpush2.msra.mxu0 0.0
    %10728 = vmatprep.subr.mxu0 0.0
    %10729 = vmatpush2.msra.mxu0 0.0
    %10730 = vmatprep.subr.mxu0 0.0
    %10731 = vmatpush2.msra.mxu0 0.0
    %10732 = vmatprep.subr.mxu0 0.0
    %10733 = vmatpush2.msra.mxu0 0.0
    %10734 = vmatprep.subr.mxu0 0.0
    %10735 = vmatpush2.msra.mxu0 0.0
    %10736 = vmatprep.subr.mxu0 0.0
    %10737 = vmatpush2.msra.mxu0 0.0
    %10738 = vmatprep.mubr.f32.mxu0 0.0
    %10739 = vmatmul.mubr.f32.gmra.mxu0 %v10672
    %v10740 = vpop.f32.mrf.mxu0
    %v10741 = vadd.f32 %v10669, %v10740
    %v10742 = vpop.f32.mrf.mxu0
    %10743 = vdwg.mxu0
    %v10744 = vld [vmem:[%s6] sm:$0xff]
    %v10745 = vld [vmem:[%s6 + $0x8] sm:$0xff]
    %v10746 = vld [vmem:[%s6 + $0x10] sm:$0xff]
    %v10747 = vld [vmem:[%s6 + $0x18] sm:$0xff]
    %v10748 = vld [vmem:[%s6 + $0x20] sm:$0xff]
    %v10749 = vld [vmem:[%s6 + $0x28] sm:$0xff]
    %v10750 = vld [vmem:[%s6 + $0x30] sm:$0xff]
    %v10751 = vld [vmem:[%s6 + $0x38] sm:$0xff]
    %v10752 = vld [vmem:[%s6 + $0x40] sm:$0xff]
    %v10753 = vld [vmem:[%s6 + $0x48] sm:$0xff]
    %v10754 = vld [vmem:[%s6 + $0x50] sm:$0xff]
    %v10755 = vld [vmem:[%s6 + $0x58] sm:$0xff]
    %v10756 = vld [vmem:[%s6 + $0x60] sm:$0xff]
    %v10757 = vld [vmem:[%s6 + $0x68] sm:$0xff]
    %v10758 = vld [vmem:[%s6 + $0x70] sm:$0xff]
    %v10759 = vld [vmem:[%s6 + $0x78] sm:$0xff]
    %v10760 = vld [vmem:[%s6 + $0x80] sm:$0xff]
    %v10761 = vld [vmem:[%s6 + $0x88] sm:$0xff]
    %v10762 = vld [vmem:[%s6 + $0x90] sm:$0xff]
    %v10763 = vld [vmem:[%s6 + $0x98] sm:$0xff]
    %v10764 = vld [vmem:[%s6 + $0xa0] sm:$0xff]
    %v10765 = vld [vmem:[%s6 + $0xa8] sm:$0xff]
    %v10766 = vld [vmem:[%s6 + $0xb0] sm:$0xff]
    %v10767 = vld [vmem:[%s6 + $0xb8] sm:$0xff]
    %v10768 = vld [vmem:[%s6 + $0xc0] sm:$0xff]
    %v10769 = vld [vmem:[%s6 + $0xc8] sm:$0xff]
    %v10770 = vld [vmem:[%s6 + $0xd0] sm:$0xff]
    %v10771 = vld [vmem:[%s6 + $0xd8] sm:$0xff]
    %v10772 = vld [vmem:[%s6 + $0xe0] sm:$0xff]
    %v10773 = vld [vmem:[%s6 + $0xe8] sm:$0xff]
    %v10774 = vld [vmem:[%s6 + $0xf0] sm:$0xff]
    %v10775 = vld [vmem:[%s6 + $0xf8] sm:$0xff]
    %v10776 = vld [vmem:[%s6 + $0x100] sm:$0xff]
    %v10777 = vld [vmem:[%s6 + $0x108] sm:$0xff]
    %v10778 = vld [vmem:[%s6 + $0x110] sm:$0xff]
    %v10779 = vld [vmem:[%s6 + $0x118] sm:$0xff]
    %v10780 = vld [vmem:[%s6 + $0x120] sm:$0xff]
    %v10781 = vld [vmem:[%s6 + $0x128] sm:$0xff]
    %v10782 = vld [vmem:[%s6 + $0x130] sm:$0xff]
    %v10783 = vld [vmem:[%s6 + $0x138] sm:$0xff]
    %v10784 = vld [vmem:[%s6 + $0x140] sm:$0xff]
    %v10785 = vld [vmem:[%s6 + $0x148] sm:$0xff]
    %v10786 = vld [vmem:[%s6 + $0x150] sm:$0xff]
    %v10787 = vld [vmem:[%s6 + $0x158] sm:$0xff]
    %v10788 = vld [vmem:[%s6 + $0x160] sm:$0xff]
    %v10789 = vld [vmem:[%s6 + $0x168] sm:$0xff]
    %v10790 = vld [vmem:[%s6 + $0x170] sm:$0xff]
    %v10791 = vld [vmem:[%s6 + $0x178] sm:$0xff]
    %v10792 = vld [vmem:[%s6 + $0x180] sm:$0xff]
    %v10793 = vld [vmem:[%s6 + $0x188] sm:$0xff]
    %v10794 = vld [vmem:[%s6 + $0x190] sm:$0xff]
    %v10795 = vld [vmem:[%s6 + $0x198] sm:$0xff]
    %v10796 = vld [vmem:[%s6 + $0x1a0] sm:$0xff]
    %v10797 = vld [vmem:[%s6 + $0x1a8] sm:$0xff]
    %v10798 = vld [vmem:[%s6 + $0x1b0] sm:$0xff]
    %v10799 = vld [vmem:[%s6 + $0x1b8] sm:$0xff]
    %v10800 = vld [vmem:[%s6 + $0x1c0] sm:$0xff]
    %v10801 = vld [vmem:[%s6 + $0x1c8] sm:$0xff]
    %v10802 = vld [vmem:[%s6 + $0x1d0] sm:$0xff]
    %v10803 = vld [vmem:[%s6 + $0x1d8] sm:$0xff]
    %v10804 = vld [vmem:[%s6 + $0x1e0] sm:$0xff]
    %v10805 = vld [vmem:[%s6 + $0x1e8] sm:$0xff]
    %v10806 = vld [vmem:[%s6 + $0x1f0] sm:$0xff]
    %v10807 = vld [vmem:[%s6 + $0x1f8] sm:$0xff]
    %10808 = vmatprep.subr.mxu0 %v10805
    %10809 = vmatpush1.msra.mxu0 %v10804
    %10810 = vmatprep.subr.mxu0 %v10801
    %10811 = vmatpush1.msra.mxu0 %v10800
    %10812 = vmatprep.subr.mxu0 %v10797
    %10813 = vmatpush1.msra.mxu0 %v10796
    %10814 = vmatprep.subr.mxu0 %v10793
    %10815 = vmatpush1.msra.mxu0 %v10792
    %10816 = vmatprep.subr.mxu0 %v10789
    %10817 = vmatpush1.msra.mxu0 %v10788
    %10818 = vmatprep.subr.mxu0 %v10785
    %10819 = vmatpush1.msra.mxu0 %v10784
    %10820 = vmatprep.subr.mxu0 %v10781
    %10821 = vmatpush1.msra.mxu0 %v10780
    %10822 = vmatprep.subr.mxu0 %v10777
    %10823 = vmatpush1.msra.mxu0 %v10776
    %10824 = vmatprep.subr.mxu0 %v10773
    %10825 = vmatpush1.msra.mxu0 %v10772
    %10826 = vmatprep.subr.mxu0 %v10769
    %10827 = vmatpush1.msra.mxu0 %v10768
    %10828 = vmatprep.subr.mxu0 %v10765
    %10829 = vmatpush1.msra.mxu0 %v10764
    %10830 = vmatprep.subr.mxu0 %v10761
    %10831 = vmatpush1.msra.mxu0 %v10760
    %10832 = vmatprep.subr.mxu0 %v10757
    %10833 = vmatpush1.msra.mxu0 %v10756
    %10834 = vmatprep.subr.mxu0 %v10753
    %10835 = vmatpush1.msra.mxu0 %v10752
    %10836 = vmatprep.subr.mxu0 %v10749
    %10837 = vmatpush1.msra.mxu0 %v10748
    %10838 = vmatprep.subr.mxu0 %v10745
    %10839 = vmatpush1.msra.mxu0 %v10744
    %10840 = vmatprep.subr.mxu0 0.0
    %10841 = vmatpush2.msra.mxu0 0.0
    %10842 = vmatprep.subr.mxu0 0.0
    %10843 = vmatpush2.msra.mxu0 0.0
    %10844 = vmatprep.subr.mxu0 0.0
    %10845 = vmatpush2.msra.mxu0 0.0
    %10846 = vmatprep.subr.mxu0 0.0
    %10847 = vmatpush2.msra.mxu0 0.0
    %10848 = vmatprep.subr.mxu0 0.0
    %10849 = vmatpush2.msra.mxu0 0.0
    %10850 = vmatprep.subr.mxu0 0.0
    %10851 = vmatpush2.msra.mxu0 0.0
    %10852 = vmatprep.subr.mxu0 0.0
    %10853 = vmatpush2.msra.mxu0 0.0
    %10854 = vmatprep.subr.mxu0 0.0
    %10855 = vmatpush2.msra.mxu0 0.0
    %10856 = vmatprep.subr.mxu0 0.0
    %10857 = vmatpush2.msra.mxu0 0.0
    %10858 = vmatprep.subr.mxu0 0.0
    %10859 = vmatpush2.msra.mxu0 0.0
    %10860 = vmatprep.subr.mxu0 0.0
    %10861 = vmatpush2.msra.mxu0 0.0
    %10862 = vmatprep.subr.mxu0 0.0
    %10863 = vmatpush2.msra.mxu0 0.0
    %10864 = vmatprep.subr.mxu0 0.0
    %10865 = vmatpush2.msra.mxu0 0.0
    %10866 = vmatprep.subr.mxu0 0.0
    %10867 = vmatpush2.msra.mxu0 0.0
    %10868 = vmatprep.subr.mxu0 0.0
    %10869 = vmatpush2.msra.mxu0 0.0
    %10870 = vmatprep.subr.mxu0 0.0
    %10871 = vmatpush2.msra.mxu0 0.0
    %10872 = vmatprep.mubr.f32.mxu0 0.0
    %10873 = vmatmul.mubr.f32.gmra.mxu0 %v10741
    %v10874 = vpop.f32.mrf.mxu0
    %v10875 = vadd.f32 0.0, %v10874
    %v10876 = vpop.f32.mrf.mxu0
    %v10877 = vadd.f32 0.0, %v10876
    %10878 = vdwg.mxu0
    %10879 = vmatprep.subr.mxu0 %v10807
    %10880 = vmatpush1.msra.mxu0 %v10806
    %10881 = vmatprep.subr.mxu0 %v10803
    %10882 = vmatpush1.msra.mxu0 %v10802
    %10883 = vmatprep.subr.mxu0 %v10799
    %10884 = vmatpush1.msra.mxu0 %v10798
    %10885 = vmatprep.subr.mxu0 %v10795
    %10886 = vmatpush1.msra.mxu0 %v10794
    %10887 = vmatprep.subr.mxu0 %v10791
    %10888 = vmatpush1.msra.mxu0 %v10790
    %10889 = vmatprep.subr.mxu0 %v10787
    %10890 = vmatpush1.msra.mxu0 %v10786
    %10891 = vmatprep.subr.mxu0 %v10783
    %10892 = vmatpush1.msra.mxu0 %v10782
    %10893 = vmatprep.subr.mxu0 %v10779
    %10894 = vmatpush1.msra.mxu0 %v10778
    %10895 = vmatprep.subr.mxu0 %v10775
    %10896 = vmatpush1.msra.mxu0 %v10774
    %10897 = vmatprep.subr.mxu0 %v10771
    %10898 = vmatpush1.msra.mxu0 %v10770
    %10899 = vmatprep.subr.mxu0 %v10767
    %10900 = vmatpush1.msra.mxu0 %v10766
    %10901 = vmatprep.subr.mxu0 %v10763
    %10902 = vmatpush1.msra.mxu0 %v10762
    %10903 = vmatprep.subr.mxu0 %v10759
    %10904 = vmatpush1.msra.mxu0 %v10758
    %10905 = vmatprep.subr.mxu0 %v10755
    %10906 = vmatpush1.msra.mxu0 %v10754
    %10907 = vmatprep.subr.mxu0 %v10751
    %10908 = vmatpush1.msra.mxu0 %v10750
    %10909 = vmatprep.subr.mxu0 %v10747
    %10910 = vmatpush1.msra.mxu0 %v10746
    %10911 = vmatprep.subr.mxu0 0.0
    %10912 = vmatpush2.msra.mxu0 0.0
    %10913 = vmatprep.subr.mxu0 0.0
    %10914 = vmatpush2.msra.mxu0 0.0
    %10915 = vmatprep.subr.mxu0 0.0
    %10916 = vmatpush2.msra.mxu0 0.0
    %10917 = vmatprep.subr.mxu0 0.0
    %10918 = vmatpush2.msra.mxu0 0.0
    %10919 = vmatprep.subr.mxu0 0.0
    %10920 = vmatpush2.msra.mxu0 0.0
    %10921 = vmatprep.subr.mxu0 0.0
    %10922 = vmatpush2.msra.mxu0 0.0
    %10923 = vmatprep.subr.mxu0 0.0
    %10924 = vmatpush2.msra.mxu0 0.0
    %10925 = vmatprep.subr.mxu0 0.0
    %10926 = vmatpush2.msra.mxu0 0.0
    %10927 = vmatprep.subr.mxu0 0.0
    %10928 = vmatpush2.msra.mxu0 0.0
    %10929 = vmatprep.subr.mxu0 0.0
    %10930 = vmatpush2.msra.mxu0 0.0
    %10931 = vmatprep.subr.mxu0 0.0
    %10932 = vmatpush2.msra.mxu0 0.0
    %10933 = vmatprep.subr.mxu0 0.0
    %10934 = vmatpush2.msra.mxu0 0.0
    %10935 = vmatprep.subr.mxu0 0.0
    %10936 = vmatpush2.msra.mxu0 0.0
    %10937 = vmatprep.subr.mxu0 0.0
    %10938 = vmatpush2.msra.mxu0 0.0
    %10939 = vmatprep.subr.mxu0 0.0
    %10940 = vmatpush2.msra.mxu0 0.0
    %10941 = vmatprep.subr.mxu0 0.0
    %10942 = vmatpush2.msra.mxu0 0.0
    %10943 = vmatprep.mubr.f32.mxu0 0.0
    %10944 = vmatmul.mubr.f32.gmra.mxu0 %v10741
    %v10945 = vpop.f32.mrf.mxu0
    %v10946 = vadd.f32 0.0, %v10945
    %v10947 = vpop.f32.mrf.mxu0
    %v10948 = vadd.f32 0.0, %v10947
    %10949 = vdwg.mxu0
    %v10950 = vadd.f32 %v7129, %v10875
    %v10951 = vadd.f32 %v7130, %v10877
    %v10952 = vadd.f32 %v7131, %v10946
    %v10953 = vadd.f32 %v7132, %v10948
    %v10954 = vmax.f32 %v10950, 0.0
    %v10955 = vmax.f32 %v10951, 0.0
    %v10956 = vmax.f32 %v10952, 0.0
    %v10957 = vmax.f32 %v10953, 0.0
    %10958 = vst [vmem:[%s8] sm:$0xff] %v10954
    %10959 = vst [vmem:[%s8 + $0x8] sm:$0xff] %v10955
    %10960 = vst [vmem:[%s8 + $0x10] sm:$0xff] %v10956
    %10961 = vst [vmem:[%s8 + $0x18] sm:$0xff] %v10957
    %s10962 = scalar_lea.vmem %s2, 288
    %v10963 = vld [vmem:[%s10962] sm:$0xff]
    %v10964 = vld [vmem:[%s10962 + $0x10] sm:$0xff]
    %10965 = vrot.lane.b32.xlu0 %v7129, 17
    %v10966 = vpop.permute.xlu0 %10965
    %10967 = vrot.lane.b32.xlu0 %v7130, 17
    %v10968 = vpop.permute.xlu0 %10967
    %10969 = vrot.lane.b32.xlu0 %v7131, 17
    %v10970 = vpop.permute.xlu0 %10969
    %10971 = vrot.lane.b32.xlu0 %v7132, 17
    %v10972 = vpop.permute.xlu0 %10971
    %v10973 = vsel %vm82, %v10970, %v10972
    %v10974 = vsel %vm82, %v10968, %v10970
    %v10975 = vsel %vm82, %v10966, %v10968
    %v10976 = vsel %vm82, %v10972, %v10966
    %v10981 = vrot.slane %v10976, 1
    %v10982 = vrot.slane %v10975, 1
    %v10983 = vrot.slane %v10974, 1
    %v10984 = vrot.slane %v10973, 1
    %v10985 = vrot.slane %v10976, 2
    %v10986 = vrot.slane %v10975, 2
    %v10987 = vrot.slane %v10974, 2
    %v10988 = vrot.slane %v10973, 2
    %v10989 = vrot.slane %v10976, 3
    %v10990 = vrot.slane %v10975, 3
    %v10991 = vrot.slane %v10974, 3
    %v10992 = vrot.slane %v10973, 3
    %v10993 = vrot.slane %v10976, 4
    %v10994 = vrot.slane %v10975, 4
    %v10995 = vrot.slane %v10974, 4
    %v10996 = vrot.slane %v10973, 4
    %v10997 = vrot.slane %v10976, 5
    %v10998 = vrot.slane %v10975, 5
    %v10999 = vrot.slane %v10974, 5
    %v11000 = vrot.slane %v10973, 5
    %v11001 = vrot.slane %v10976, 6
    %v11002 = vrot.slane %v10975, 6
    %v11003 = vrot.slane %v10974, 6
    %v11004 = vrot.slane %v10973, 6
    %v11005 = vrot.slane %v10976, 7
    %v11006 = vrot.slane %v10975, 7
    %v11007 = vrot.slane %v10974, 7
    %v11008 = vrot.slane %v10973, 7
    %v11041 = vsel %vm91, %v10976, 0.0
    %v11042 = vsel %vm92, %v10975, 0.0
    %v11043 = vsel %vm93, %v10974, 0.0
    %v11044 = vsel %vm94, %v10973, 0.0
    %v11045 = vsel %vm91, %v10981, 0.0
    %v11046 = vsel %vm92, %v10982, 0.0
    %v11047 = vsel %vm93, %v10983, 0.0
    %v11048 = vsel %vm94, %v10984, 0.0
    %v11049 = vsel %vm91, %v10985, 0.0
    %v11050 = vsel %vm92, %v10986, 0.0
    %v11051 = vsel %vm93, %v10987, 0.0
    %v11052 = vsel %vm94, %v10988, 0.0
    %v11053 = vsel %vm91, %v10989, 0.0
    %v11054 = vsel %vm92, %v10990, 0.0
    %v11055 = vsel %vm93, %v10991, 0.0
    %v11056 = vsel %vm94, %v10992, 0.0
    %v11057 = vsel %vm91, %v10993, 0.0
    %v11058 = vsel %vm92, %v10994, 0.0
    %v11059 = vsel %vm93, %v10995, 0.0
    %v11060 = vsel %vm94, %v10996, 0.0
    %v11061 = vsel %vm91, %v10997, 0.0
    %v11062 = vsel %vm92, %v10998, 0.0
    %v11063 = vsel %vm93, %v10999, 0.0
    %v11064 = vsel %vm94, %v11000, 0.0
    %v11065 = vsel %vm91, %v11001, 0.0
    %v11066 = vsel %vm92, %v11002, 0.0
    %v11067 = vsel %vm93, %v11003, 0.0
    %v11068 = vsel %vm94, %v11004, 0.0
    %v11069 = vsel %vm91, %v11005, 0.0
    %v11070 = vsel %vm92, %v11006, 0.0
    %v11071 = vsel %vm93, %v11007, 0.0
    %v11072 = vsel %vm94, %v11008, 0.0
    %11073 = vrot.lane.b32.xlu0 %v7129, 16
    %v11074 = vpop.permute.xlu0 %11073
    %11075 = vrot.lane.b32.xlu0 %v7130, 16
    %v11076 = vpop.permute.xlu0 %11075
    %11077 = vrot.lane.b32.xlu0 %v7131, 16
    %v11078 = vpop.permute.xlu0 %11077
    %11079 = vrot.lane.b32.xlu0 %v7132, 16
    %v11080 = vpop.permute.xlu0 %11079
    %v11081 = vsel %vm199, %v11078, %v11080
    %v11082 = vsel %vm199, %v11076, %v11078
    %v11083 = vsel %vm199, %v11074, %v11076
    %v11084 = vsel %vm199, %v11080, %v11074
    %v11089 = vrot.slane %v11084, 7
    %v11090 = vrot.slane %v11083, 7
    %v11091 = vrot.slane %v11082, 7
    %v11092 = vrot.slane %v11081, 7
    %v11093 = vrot.slane %v11084, 1
    %v11094 = vrot.slane %v11083, 1
    %v11095 = vrot.slane %v11082, 1
    %v11096 = vrot.slane %v11081, 1
    %v11097 = vrot.slane %v11084, 2
    %v11098 = vrot.slane %v11083, 2
    %v11099 = vrot.slane %v11082, 2
    %v11100 = vrot.slane %v11081, 2
    %v11101 = vrot.slane %v11084, 3
    %v11102 = vrot.slane %v11083, 3
    %v11103 = vrot.slane %v11082, 3
    %v11104 = vrot.slane %v11081, 3
    %v11105 = vrot.slane %v11084, 4
    %v11106 = vrot.slane %v11083, 4
    %v11107 = vrot.slane %v11082, 4
    %v11108 = vrot.slane %v11081, 4
    %v11109 = vrot.slane %v11084, 5
    %v11110 = vrot.slane %v11083, 5
    %v11111 = vrot.slane %v11082, 5
    %v11112 = vrot.slane %v11081, 5
    %v11113 = vrot.slane %v11084, 6
    %v11114 = vrot.slane %v11083, 6
    %v11115 = vrot.slane %v11082, 6
    %v11116 = vrot.slane %v11081, 6
    %v11149 = vsel %vm91, %v11089, 0.0
    %v11150 = vsel %vm92, %v11090, 0.0
    %v11151 = vsel %vm93, %v11091, 0.0
    %v11152 = vsel %vm94, %v11092, 0.0
    %v11153 = vsel %vm91, %v11084, 0.0
    %v11154 = vsel %vm92, %v11083, 0.0
    %v11155 = vsel %vm93, %v11082, 0.0
    %v11156 = vsel %vm94, %v11081, 0.0
    %v11157 = vsel %vm91, %v11093, 0.0
    %v11158 = vsel %vm92, %v11094, 0.0
    %v11159 = vsel %vm93, %v11095, 0.0
    %v11160 = vsel %vm94, %v11096, 0.0
    %v11161 = vsel %vm91, %v11097, 0.0
    %v11162 = vsel %vm92, %v11098, 0.0
    %v11163 = vsel %vm93, %v11099, 0.0
    %v11164 = vsel %vm94, %v11100, 0.0
    %v11165 = vsel %vm91, %v11101, 0.0
    %v11166 = vsel %vm92, %v11102, 0.0
    %v11167 = vsel %vm93, %v11103, 0.0
    %v11168 = vsel %vm94, %v11104, 0.0
    %v11169 = vsel %vm91, %v11105, 0.0
    %v11170 = vsel %vm92, %v11106, 0.0
    %v11171 = vsel %vm93, %v11107, 0.0
    %v11172 = vsel %vm94, %v11108, 0.0
    %v11173 = vsel %vm91, %v11109, 0.0
    %v11174 = vsel %vm92, %v11110, 0.0
    %v11175 = vsel %vm93, %v11111, 0.0
    %v11176 = vsel %vm94, %v11112, 0.0
    %v11177 = vsel %vm91, %v11113, 0.0
    %v11178 = vsel %vm92, %v11114, 0.0
    %v11179 = vsel %vm93, %v11115, 0.0
    %v11180 = vsel %vm94, %v11116, 0.0
    %11181 = vrot.lane.b32.xlu0 %v7129, 15
    %v11182 = vpop.permute.xlu0 %11181
    %11183 = vrot.lane.b32.xlu0 %v7130, 15
    %v11184 = vpop.permute.xlu0 %11183
    %11185 = vrot.lane.b32.xlu0 %v7131, 15
    %v11186 = vpop.permute.xlu0 %11185
    %11187 = vrot.lane.b32.xlu0 %v7132, 15
    %v11188 = vpop.permute.xlu0 %11187
    %v11189 = vsel %vm308, %v11186, %v11188
    %v11190 = vsel %vm308, %v11184, %v11186
    %v11191 = vsel %vm308, %v11182, %v11184
    %v11192 = vsel %vm308, %v11188, %v11182
    %v11197 = vrot.slane %v11192, 6
    %v11198 = vrot.slane %v11191, 6
    %v11199 = vrot.slane %v11190, 6
    %v11200 = vrot.slane %v11189, 6
    %v11201 = vrot.slane %v11192, 7
    %v11202 = vrot.slane %v11191, 7
    %v11203 = vrot.slane %v11190, 7
    %v11204 = vrot.slane %v11189, 7
    %v11205 = vrot.slane %v11192, 1
    %v11206 = vrot.slane %v11191, 1
    %v11207 = vrot.slane %v11190, 1
    %v11208 = vrot.slane %v11189, 1
    %v11209 = vrot.slane %v11192, 2
    %v11210 = vrot.slane %v11191, 2
    %v11211 = vrot.slane %v11190, 2
    %v11212 = vrot.slane %v11189, 2
    %v11213 = vrot.slane %v11192, 3
    %v11214 = vrot.slane %v11191, 3
    %v11215 = vrot.slane %v11190, 3
    %v11216 = vrot.slane %v11189, 3
    %v11217 = vrot.slane %v11192, 4
    %v11218 = vrot.slane %v11191, 4
    %v11219 = vrot.slane %v11190, 4
    %v11220 = vrot.slane %v11189, 4
    %v11221 = vrot.slane %v11192, 5
    %v11222 = vrot.slane %v11191, 5
    %v11223 = vrot.slane %v11190, 5
    %v11224 = vrot.slane %v11189, 5
    %v11257 = vsel %vm91, %v11197, 0.0
    %v11258 = vsel %vm92, %v11198, 0.0
    %v11259 = vsel %vm93, %v11199, 0.0
    %v11260 = vsel %vm94, %v11200, 0.0
    %v11261 = vsel %vm91, %v11201, 0.0
    %v11262 = vsel %vm92, %v11202, 0.0
    %v11263 = vsel %vm93, %v11203, 0.0
    %v11264 = vsel %vm94, %v11204, 0.0
    %v11265 = vsel %vm91, %v11192, 0.0
    %v11266 = vsel %vm92, %v11191, 0.0
    %v11267 = vsel %vm93, %v11190, 0.0
    %v11268 = vsel %vm94, %v11189, 0.0
    %v11269 = vsel %vm91, %v11205, 0.0
    %v11270 = vsel %vm92, %v11206, 0.0
    %v11271 = vsel %vm93, %v11207, 0.0
    %v11272 = vsel %vm94, %v11208, 0.0
    %v11273 = vsel %vm91, %v11209, 0.0
    %v11274 = vsel %vm92, %v11210, 0.0
    %v11275 = vsel %vm93, %v11211, 0.0
    %v11276 = vsel %vm94, %v11212, 0.0
    %v11277 = vsel %vm91, %v11213, 0.0
    %v11278 = vsel %vm92, %v11214, 0.0
    %v11279 = vsel %vm93, %v11215, 0.0
    %v11280 = vsel %vm94, %v11216, 0.0
    %v11281 = vsel %vm91, %v11217, 0.0
    %v11282 = vsel %vm92, %v11218, 0.0
    %v11283 = vsel %vm93, %v11219, 0.0
    %v11284 = vsel %vm94, %v11220, 0.0
    %v11285 = vsel %vm91, %v11221, 0.0
    %v11286 = vsel %vm92, %v11222, 0.0
    %v11287 = vsel %vm93, %v11223, 0.0
    %v11288 = vsel %vm94, %v11224, 0.0
    %11289 = vrot.lane.b32.xlu0 %v7129, 1
    %v11290 = vpop.permute.xlu0 %11289
    %11291 = vrot.lane.b32.xlu0 %v7130, 1
    %v11292 = vpop.permute.xlu0 %11291
    %11293 = vrot.lane.b32.xlu0 %v7131, 1
    %v11294 = vpop.permute.xlu0 %11293
    %11295 = vrot.lane.b32.xlu0 %v7132, 1
    %v11296 = vpop.permute.xlu0 %11295
    %v11297 = vsel %vm417, %v11294, %v11296
    %v11298 = vsel %vm417, %v11292, %v11294
    %v11299 = vsel %vm417, %v11290, %v11292
    %v11300 = vsel %vm417, %v11296, %v11290
    %v11305 = vrot.slane %v11300, 5
    %v11306 = vrot.slane %v11299, 5
    %v11307 = vrot.slane %v11298, 5
    %v11308 = vrot.slane %v11297, 5
    %v11309 = vrot.slane %v11300, 6
    %v11310 = vrot.slane %v11299, 6
    %v11311 = vrot.slane %v11298, 6
    %v11312 = vrot.slane %v11297, 6
    %v11313 = vrot.slane %v11300, 7
    %v11314 = vrot.slane %v11299, 7
    %v11315 = vrot.slane %v11298, 7
    %v11316 = vrot.slane %v11297, 7
    %v11317 = vrot.slane %v11300, 1
    %v11318 = vrot.slane %v11299, 1
    %v11319 = vrot.slane %v11298, 1
    %v11320 = vrot.slane %v11297, 1
    %v11321 = vrot.slane %v11300, 2
    %v11322 = vrot.slane %v11299, 2
    %v11323 = vrot.slane %v11298, 2
    %v11324 = vrot.slane %v11297, 2
    %v11325 = vrot.slane %v11300, 3
    %v11326 = vrot.slane %v11299, 3
    %v11327 = vrot.slane %v11298, 3
    %v11328 = vrot.slane %v11297, 3
    %v11329 = vrot.slane %v11300, 4
    %v11330 = vrot.slane %v11299, 4
    %v11331 = vrot.slane %v11298, 4
    %v11332 = vrot.slane %v11297, 4
    %v11365 = vsel %vm91, %v11305, 0.0
    %v11366 = vsel %vm92, %v11306, 0.0
    %v11367 = vsel %vm93, %v11307, 0.0
    %v11368 = vsel %vm94, %v11308, 0.0
    %v11369 = vsel %vm91, %v11309, 0.0
    %v11370 = vsel %vm92, %v11310, 0.0
    %v11371 = vsel %vm93, %v11311, 0.0
    %v11372 = vsel %vm94, %v11312, 0.0
    %v11373 = vsel %vm91, %v11313, 0.0
    %v11374 = vsel %vm92, %v11314, 0.0
    %v11375 = vsel %vm93, %v11315, 0.0
    %v11376 = vsel %vm94, %v11316, 0.0
    %v11377 = vsel %vm91, %v11300, 0.0
    %v11378 = vsel %vm92, %v11299, 0.0
    %v11379 = vsel %vm93, %v11298, 0.0
    %v11380 = vsel %vm94, %v11297, 0.0
    %v11381 = vsel %vm91, %v11317, 0.0
    %v11382 = vsel %vm92, %v11318, 0.0
    %v11383 = vsel %vm93, %v11319, 0.0
    %v11384 = vsel %vm94, %v11320, 0.0
    %v11385 = vsel %vm91, %v11321, 0.0
    %v11386 = vsel %vm92, %v11322, 0.0
    %v11387 = vsel %vm93, %v11323, 0.0
    %v11388 = vsel %vm94, %v11324, 0.0
    %v11389 = vsel %vm91, %v11325, 0.0
    %v11390 = vsel %vm92, %v11326, 0.0
    %v11391 = vsel %vm93, %v11327, 0.0
    %v11392 = vsel %vm94, %v11328, 0.0
    %v11393 = vsel %vm91, %v11329, 0.0
    %v11394 = vsel %vm92, %v11330, 0.0
    %v11395 = vsel %vm93, %v11331, 0.0
    %v11396 = vsel %vm94, %v11332, 0.0
    %11397 = vrot.lane.b32.xlu0 %v7129, 127
    %v11398 = vpop.permute.xlu0 %11397
    %11399 = vrot.lane.b32.xlu0 %v7130, 127
    %v11400 = vpop.permute.xlu0 %11399
    %11401 = vrot.lane.b32.xlu0 %v7131, 127
    %v11402 = vpop.permute.xlu0 %11401
    %11403 = vrot.lane.b32.xlu0 %v7132, 127
    %v11404 = vpop.permute.xlu0 %11403
    %v11405 = vsel %vm526, %v11402, %v11404
    %v11406 = vsel %vm526, %v11400, %v11402
    %v11407 = vsel %vm526, %v11398, %v11400
    %v11408 = vsel %vm526, %v11404, %v11398
    %v11413 = vrot.slane %v11407, 3
    %v11414 = vrot.slane %v11406, 3
    %v11415 = vrot.slane %v11405, 3
    %v11416 = vrot.slane %v11408, 3
    %v11417 = vrot.slane %v11407, 4
    %v11418 = vrot.slane %v11406, 4
    %v11419 = vrot.slane %v11405, 4
    %v11420 = vrot.slane %v11408, 4
    %v11421 = vrot.slane %v11407, 5
    %v11422 = vrot.slane %v11406, 5
    %v11423 = vrot.slane %v11405, 5
    %v11424 = vrot.slane %v11408, 5
    %v11425 = vrot.slane %v11407, 6
    %v11426 = vrot.slane %v11406, 6
    %v11427 = vrot.slane %v11405, 6
    %v11428 = vrot.slane %v11408, 6
    %v11429 = vrot.slane %v11407, 7
    %v11430 = vrot.slane %v11406, 7
    %v11431 = vrot.slane %v11405, 7
    %v11432 = vrot.slane %v11408, 7
    %v11433 = vrot.slane %v11407, 1
    %v11434 = vrot.slane %v11406, 1
    %v11435 = vrot.slane %v11405, 1
    %v11436 = vrot.slane %v11408, 1
    %v11437 = vrot.slane %v11407, 2
    %v11438 = vrot.slane %v11406, 2
    %v11439 = vrot.slane %v11405, 2
    %v11440 = vrot.slane %v11408, 2
    %v11473 = vsel %vm91, %v11413, 0.0
    %v11474 = vsel %vm92, %v11414, 0.0
    %v11475 = vsel %vm93, %v11415, 0.0
    %v11476 = vsel %vm94, %v11416, 0.0
    %v11477 = vsel %vm91, %v11417, 0.0
    %v11478 = vsel %vm92, %v11418, 0.0
    %v11479 = vsel %vm93, %v11419, 0.0
    %v11480 = vsel %vm94, %v11420, 0.0
    %v11481 = vsel %vm91, %v11421, 0.0
    %v11482 = vsel %vm92, %v11422, 0.0
    %v11483 = vsel %vm93, %v11423, 0.0
    %v11484 = vsel %vm94, %v11424, 0.0
    %v11485 = vsel %vm91, %v11425, 0.0
    %v11486 = vsel %vm92, %v11426, 0.0
    %v11487 = vsel %vm93, %v11427, 0.0
    %v11488 = vsel %vm94, %v11428, 0.0
    %v11489 = vsel %vm91, %v11429, 0.0
    %v11490 = vsel %vm92, %v11430, 0.0
    %v11491 = vsel %vm93, %v11431, 0.0
    %v11492 = vsel %vm94, %v11432, 0.0
    %v11493 = vsel %vm91, %v11407, 0.0
    %v11494 = vsel %vm92, %v11406, 0.0
    %v11495 = vsel %vm93, %v11405, 0.0
    %v11496 = vsel %vm94, %v11408, 0.0
    %v11497 = vsel %vm91, %v11433, 0.0
    %v11498 = vsel %vm92, %v11434, 0.0
    %v11499 = vsel %vm93, %v11435, 0.0
    %v11500 = vsel %vm94, %v11436, 0.0
    %v11501 = vsel %vm91, %v11437, 0.0
    %v11502 = vsel %vm92, %v11438, 0.0
    %v11503 = vsel %vm93, %v11439, 0.0
    %v11504 = vsel %vm94, %v11440, 0.0
    %11505 = vrot.lane.b32.xlu0 %v7129, 113
    %v11506 = vpop.permute.xlu0 %11505
    %11507 = vrot.lane.b32.xlu0 %v7130, 113
    %v11508 = vpop.permute.xlu0 %11507
    %11509 = vrot.lane.b32.xlu0 %v7131, 113
    %v11510 = vpop.permute.xlu0 %11509
    %11511 = vrot.lane.b32.xlu0 %v7132, 113
    %v11512 = vpop.permute.xlu0 %11511
    %v11513 = vsel %vm635, %v11510, %v11512
    %v11514 = vsel %vm635, %v11508, %v11510
    %v11515 = vsel %vm635, %v11506, %v11508
    %v11516 = vsel %vm635, %v11512, %v11506
    %v11521 = vrot.slane %v11515, 2
    %v11522 = vrot.slane %v11514, 2
    %v11523 = vrot.slane %v11513, 2
    %v11524 = vrot.slane %v11516, 2
    %v11525 = vrot.slane %v11515, 3
    %v11526 = vrot.slane %v11514, 3
    %v11527 = vrot.slane %v11513, 3
    %v11528 = vrot.slane %v11516, 3
    %v11529 = vrot.slane %v11515, 4
    %v11530 = vrot.slane %v11514, 4
    %v11531 = vrot.slane %v11513, 4
    %v11532 = vrot.slane %v11516, 4
    %v11533 = vrot.slane %v11515, 5
    %v11534 = vrot.slane %v11514, 5
    %v11535 = vrot.slane %v11513, 5
    %v11536 = vrot.slane %v11516, 5
    %v11537 = vrot.slane %v11515, 6
    %v11538 = vrot.slane %v11514, 6
    %v11539 = vrot.slane %v11513, 6
    %v11540 = vrot.slane %v11516, 6
    %v11541 = vrot.slane %v11515, 7
    %v11542 = vrot.slane %v11514, 7
    %v11543 = vrot.slane %v11513, 7
    %v11544 = vrot.slane %v11516, 7
    %v11545 = vrot.slane %v11515, 1
    %v11546 = vrot.slane %v11514, 1
    %v11547 = vrot.slane %v11513, 1
    %v11548 = vrot.slane %v11516, 1
    %v11581 = vsel %vm91, %v11521, 0.0
    %v11582 = vsel %vm92, %v11522, 0.0
    %v11583 = vsel %vm93, %v11523, 0.0
    %v11584 = vsel %vm94, %v11524, 0.0
    %v11585 = vsel %vm91, %v11525, 0.0
    %v11586 = vsel %vm92, %v11526, 0.0
    %v11587 = vsel %vm93, %v11527, 0.0
    %v11588 = vsel %vm94, %v11528, 0.0
    %v11589 = vsel %vm91, %v11529, 0.0
    %v11590 = vsel %vm92, %v11530, 0.0
    %v11591 = vsel %vm93, %v11531, 0.0
    %v11592 = vsel %vm94, %v11532, 0.0
    %v11593 = vsel %vm91, %v11533, 0.0
    %v11594 = vsel %vm92, %v11534, 0.0
    %v11595 = vsel %vm93, %v11535, 0.0
    %v11596 = vsel %vm94, %v11536, 0.0
    %v11597 = vsel %vm91, %v11537, 0.0
    %v11598 = vsel %vm92, %v11538, 0.0
    %v11599 = vsel %vm93, %v11539, 0.0
    %v11600 = vsel %vm94, %v11540, 0.0
    %v11601 = vsel %vm91, %v11541, 0.0
    %v11602 = vsel %vm92, %v11542, 0.0
    %v11603 = vsel %vm93, %v11543, 0.0
    %v11604 = vsel %vm94, %v11544, 0.0
    %v11605 = vsel %vm91, %v11515, 0.0
    %v11606 = vsel %vm92, %v11514, 0.0
    %v11607 = vsel %vm93, %v11513, 0.0
    %v11608 = vsel %vm94, %v11516, 0.0
    %v11609 = vsel %vm91, %v11545, 0.0
    %v11610 = vsel %vm92, %v11546, 0.0
    %v11611 = vsel %vm93, %v11547, 0.0
    %v11612 = vsel %vm94, %v11548, 0.0
    %11613 = vrot.lane.b32.xlu0 %v7129, 112
    %v11614 = vpop.permute.xlu0 %11613
    %11615 = vrot.lane.b32.xlu0 %v7130, 112
    %v11616 = vpop.permute.xlu0 %11615
    %11617 = vrot.lane.b32.xlu0 %v7131, 112
    %v11618 = vpop.permute.xlu0 %11617
    %11619 = vrot.lane.b32.xlu0 %v7132, 112
    %v11620 = vpop.permute.xlu0 %11619
    %v11621 = vsel %vm744, %v11618, %v11620
    %v11622 = vsel %vm744, %v11616, %v11618
    %v11623 = vsel %vm744, %v11614, %v11616
    %v11624 = vsel %vm744, %v11620, %v11614
    %v11629 = vrot.slane %v11623, 1
    %v11630 = vrot.slane %v11622, 1
    %v11631 = vrot.slane %v11621, 1
    %v11632 = vrot.slane %v11624, 1
    %v11633 = vrot.slane %v11623, 2
    %v11634 = vrot.slane %v11622, 2
    %v11635 = vrot.slane %v11621, 2
    %v11636 = vrot.slane %v11624, 2
    %v11637 = vrot.slane %v11623, 3
    %v11638 = vrot.slane %v11622, 3
    %v11639 = vrot.slane %v11621, 3
    %v11640 = vrot.slane %v11624, 3
    %v11641 = vrot.slane %v11623, 4
    %v11642 = vrot.slane %v11622, 4
    %v11643 = vrot.slane %v11621, 4
    %v11644 = vrot.slane %v11624, 4
    %v11645 = vrot.slane %v11623, 5
    %v11646 = vrot.slane %v11622, 5
    %v11647 = vrot.slane %v11621, 5
    %v11648 = vrot.slane %v11624, 5
    %v11649 = vrot.slane %v11623, 6
    %v11650 = vrot.slane %v11622, 6
    %v11651 = vrot.slane %v11621, 6
    %v11652 = vrot.slane %v11624, 6
    %v11653 = vrot.slane %v11623, 7
    %v11654 = vrot.slane %v11622, 7
    %v11655 = vrot.slane %v11621, 7
    %v11656 = vrot.slane %v11624, 7
    %v11689 = vsel %vm91, %v11629, 0.0
    %v11690 = vsel %vm92, %v11630, 0.0
    %v11691 = vsel %vm93, %v11631, 0.0
    %v11692 = vsel %vm94, %v11632, 0.0
    %v11693 = vsel %vm91, %v11633, 0.0
    %v11694 = vsel %vm92, %v11634, 0.0
    %v11695 = vsel %vm93, %v11635, 0.0
    %v11696 = vsel %vm94, %v11636, 0.0
    %v11697 = vsel %vm91, %v11637, 0.0
    %v11698 = vsel %vm92, %v11638, 0.0
    %v11699 = vsel %vm93, %v11639, 0.0
    %v11700 = vsel %vm94, %v11640, 0.0
    %v11701 = vsel %vm91, %v11641, 0.0
    %v11702 = vsel %vm92, %v11642, 0.0
    %v11703 = vsel %vm93, %v11643, 0.0
    %v11704 = vsel %vm94, %v11644, 0.0
    %v11705 = vsel %vm91, %v11645, 0.0
    %v11706 = vsel %vm92, %v11646, 0.0
    %v11707 = vsel %vm93, %v11647, 0.0
    %v11708 = vsel %vm94, %v11648, 0.0
    %v11709 = vsel %vm91, %v11649, 0.0
    %v11710 = vsel %vm92, %v11650, 0.0
    %v11711 = vsel %vm93, %v11651, 0.0
    %v11712 = vsel %vm94, %v11652, 0.0
    %v11713 = vsel %vm91, %v11653, 0.0
    %v11714 = vsel %vm92, %v11654, 0.0
    %v11715 = vsel %vm93, %v11655, 0.0
    %v11716 = vsel %vm94, %v11656, 0.0
    %v11717 = vsel %vm91, %v11623, 0.0
    %v11718 = vsel %vm92, %v11622, 0.0
    %v11719 = vsel %vm93, %v11621, 0.0
    %v11720 = vsel %vm94, %v11624, 0.0
    %11721 = vrot.lane.b32.xlu0 %v7129, 111
    %v11722 = vpop.permute.xlu0 %11721
    %11723 = vrot.lane.b32.xlu0 %v7130, 111
    %v11724 = vpop.permute.xlu0 %11723
    %11725 = vrot.lane.b32.xlu0 %v7131, 111
    %v11726 = vpop.permute.xlu0 %11725
    %11727 = vrot.lane.b32.xlu0 %v7132, 111
    %v11728 = vpop.permute.xlu0 %11727
    %v11729 = vsel %vm853, %v11726, %v11728
    %v11730 = vsel %vm853, %v11724, %v11726
    %v11731 = vsel %vm853, %v11722, %v11724
    %v11732 = vsel %vm853, %v11728, %v11722
    %v11737 = vrot.slane %v11731, 1
    %v11738 = vrot.slane %v11730, 1
    %v11739 = vrot.slane %v11729, 1
    %v11740 = vrot.slane %v11732, 1
    %v11741 = vrot.slane %v11731, 2
    %v11742 = vrot.slane %v11730, 2
    %v11743 = vrot.slane %v11729, 2
    %v11744 = vrot.slane %v11732, 2
    %v11745 = vrot.slane %v11731, 3
    %v11746 = vrot.slane %v11730, 3
    %v11747 = vrot.slane %v11729, 3
    %v11748 = vrot.slane %v11732, 3
    %v11749 = vrot.slane %v11731, 4
    %v11750 = vrot.slane %v11730, 4
    %v11751 = vrot.slane %v11729, 4
    %v11752 = vrot.slane %v11732, 4
    %v11753 = vrot.slane %v11731, 5
    %v11754 = vrot.slane %v11730, 5
    %v11755 = vrot.slane %v11729, 5
    %v11756 = vrot.slane %v11732, 5
    %v11757 = vrot.slane %v11731, 6
    %v11758 = vrot.slane %v11730, 6
    %v11759 = vrot.slane %v11729, 6
    %v11760 = vrot.slane %v11732, 6
    %v11761 = vrot.slane %v11731, 7
    %v11762 = vrot.slane %v11730, 7
    %v11763 = vrot.slane %v11729, 7
    %v11764 = vrot.slane %v11732, 7
    %v11797 = vsel %vm862, %v11731, 0.0
    %v11798 = vsel %vm863, %v11730, 0.0
    %v11799 = vsel %vm864, %v11729, 0.0
    %v11800 = vsel %vm865, %v11732, 0.0
    %v11801 = vsel %vm862, %v11737, 0.0
    %v11802 = vsel %vm863, %v11738, 0.0
    %v11803 = vsel %vm864, %v11739, 0.0
    %v11804 = vsel %vm865, %v11740, 0.0
    %v11805 = vsel %vm862, %v11741, 0.0
    %v11806 = vsel %vm863, %v11742, 0.0
    %v11807 = vsel %vm864, %v11743, 0.0
    %v11808 = vsel %vm865, %v11744, 0.0
    %v11809 = vsel %vm862, %v11745, 0.0
    %v11810 = vsel %vm863, %v11746, 0.0
    %v11811 = vsel %vm864, %v11747, 0.0
    %v11812 = vsel %vm865, %v11748, 0.0
    %v11813 = vsel %vm862, %v11749, 0.0
    %v11814 = vsel %vm863, %v11750, 0.0
    %v11815 = vsel %vm864, %v11751, 0.0
    %v11816 = vsel %vm865, %v11752, 0.0
    %v11817 = vsel %vm862, %v11753, 0.0
    %v11818 = vsel %vm863, %v11754, 0.0
    %v11819 = vsel %vm864, %v11755, 0.0
    %v11820 = vsel %vm865, %v11756, 0.0
    %v11821 = vsel %vm862, %v11757, 0.0
    %v11822 = vsel %vm863, %v11758, 0.0
    %v11823 = vsel %vm864, %v11759, 0.0
    %v11824 = vsel %vm865, %v11760, 0.0
    %v11825 = vsel %vm862, %v11761, 0.0
    %v11826 = vsel %vm863, %v11762, 0.0
    %v11827 = vsel %vm864, %v11763, 0.0
    %v11828 = vsel %vm865, %v11764, 0.0
    %v11861 = vrot.slane %v11045, 7
    %v11862 = vsel %vm995, %v11861, %v11041
    %v11863 = vrot.slane %v11049, 6
    %v11864 = vsel %vm998, %v11863, %v11862
    %v11865 = vrot.slane %v11053, 5
    %v11866 = vsel %vm1001, %v11865, %v11864
    %v11867 = vrot.slane %v11057, 4
    %v11868 = vsel %vm1004, %v11867, %v11866
    %v11869 = vrot.slane %v11061, 3
    %v11870 = vsel %vm1007, %v11869, %v11868
    %v11871 = vrot.slane %v11065, 2
    %v11872 = vsel %vm1010, %v11871, %v11870
    %v11873 = vrot.slane %v11069, 1
    %v11874 = vsel %vm1013, %v11873, %v11872
    %v11875 = vrot.slane %v11046, 7
    %v11876 = vsel %vm995, %v11875, %v11042
    %v11877 = vrot.slane %v11050, 6
    %v11878 = vsel %vm998, %v11877, %v11876
    %v11879 = vrot.slane %v11054, 5
    %v11880 = vsel %vm1001, %v11879, %v11878
    %v11881 = vrot.slane %v11058, 4
    %v11882 = vsel %vm1004, %v11881, %v11880
    %v11883 = vrot.slane %v11062, 3
    %v11884 = vsel %vm1007, %v11883, %v11882
    %v11885 = vrot.slane %v11066, 2
    %v11886 = vsel %vm1010, %v11885, %v11884
    %v11887 = vrot.slane %v11070, 1
    %v11888 = vsel %vm1013, %v11887, %v11886
    %v11889 = vrot.slane %v11047, 7
    %v11890 = vsel %vm995, %v11889, %v11043
    %v11891 = vrot.slane %v11051, 6
    %v11892 = vsel %vm998, %v11891, %v11890
    %v11893 = vrot.slane %v11055, 5
    %v11894 = vsel %vm1001, %v11893, %v11892
    %v11895 = vrot.slane %v11059, 4
    %v11896 = vsel %vm1004, %v11895, %v11894
    %v11897 = vrot.slane %v11063, 3
    %v11898 = vsel %vm1007, %v11897, %v11896
    %v11899 = vrot.slane %v11067, 2
    %v11900 = vsel %vm1010, %v11899, %v11898
    %v11901 = vrot.slane %v11071, 1
    %v11902 = vsel %vm1013, %v11901, %v11900
    %v11903 = vrot.slane %v11048, 7
    %v11904 = vsel %vm995, %v11903, %v11044
    %v11905 = vrot.slane %v11052, 6
    %v11906 = vsel %vm998, %v11905, %v11904
    %v11907 = vrot.slane %v11056, 5
    %v11908 = vsel %vm1001, %v11907, %v11906
    %v11909 = vrot.slane %v11060, 4
    %v11910 = vsel %vm1004, %v11909, %v11908
    %v11911 = vrot.slane %v11064, 3
    %v11912 = vsel %vm1007, %v11911, %v11910
    %v11913 = vrot.slane %v11068, 2
    %v11914 = vsel %vm1010, %v11913, %v11912
    %v11915 = vrot.slane %v11072, 1
    %v11916 = vsel %vm1013, %v11915, %v11914
    %v11953 = vrot.slane %v11149, 1
    %v11954 = vsel %vm995, %v11153, %v11953
    %v11955 = vrot.slane %v11157, 7
    %v11956 = vsel %vm998, %v11955, %v11954
    %v11957 = vrot.slane %v11161, 6
    %v11958 = vsel %vm1001, %v11957, %v11956
    %v11959 = vrot.slane %v11165, 5
    %v11960 = vsel %vm1004, %v11959, %v11958
    %v11961 = vrot.slane %v11169, 4
    %v11962 = vsel %vm1007, %v11961, %v11960
    %v11963 = vrot.slane %v11173, 3
    %v11964 = vsel %vm1010, %v11963, %v11962
    %v11965 = vrot.slane %v11177, 2
    %v11966 = vsel %vm1013, %v11965, %v11964
    %v11967 = vrot.slane %v11150, 1
    %v11968 = vsel %vm995, %v11154, %v11967
    %v11969 = vrot.slane %v11158, 7
    %v11970 = vsel %vm998, %v11969, %v11968
    %v11971 = vrot.slane %v11162, 6
    %v11972 = vsel %vm1001, %v11971, %v11970
    %v11973 = vrot.slane %v11166, 5
    %v11974 = vsel %vm1004, %v11973, %v11972
    %v11975 = vrot.slane %v11170, 4
    %v11976 = vsel %vm1007, %v11975, %v11974
    %v11977 = vrot.slane %v11174, 3
    %v11978 = vsel %vm1010, %v11977, %v11976
    %v11979 = vrot.slane %v11178, 2
    %v11980 = vsel %vm1013, %v11979, %v11978
    %v11981 = vrot.slane %v11151, 1
    %v11982 = vsel %vm995, %v11155, %v11981
    %v11983 = vrot.slane %v11159, 7
    %v11984 = vsel %vm998, %v11983, %v11982
    %v11985 = vrot.slane %v11163, 6
    %v11986 = vsel %vm1001, %v11985, %v11984
    %v11987 = vrot.slane %v11167, 5
    %v11988 = vsel %vm1004, %v11987, %v11986
    %v11989 = vrot.slane %v11171, 4
    %v11990 = vsel %vm1007, %v11989, %v11988
    %v11991 = vrot.slane %v11175, 3
    %v11992 = vsel %vm1010, %v11991, %v11990
    %v11993 = vrot.slane %v11179, 2
    %v11994 = vsel %vm1013, %v11993, %v11992
    %v11995 = vrot.slane %v11152, 1
    %v11996 = vsel %vm995, %v11156, %v11995
    %v11997 = vrot.slane %v11160, 7
    %v11998 = vsel %vm998, %v11997, %v11996
    %v11999 = vrot.slane %v11164, 6
    %v12000 = vsel %vm1001, %v11999, %v11998
    %v12001 = vrot.slane %v11168, 5
    %v12002 = vsel %vm1004, %v12001, %v12000
    %v12003 = vrot.slane %v11172, 4
    %v12004 = vsel %vm1007, %v12003, %v12002
    %v12005 = vrot.slane %v11176, 3
    %v12006 = vsel %vm1010, %v12005, %v12004
    %v12007 = vrot.slane %v11180, 2
    %v12008 = vsel %vm1013, %v12007, %v12006
    %v12045 = vrot.slane %v11257, 2
    %v12046 = vrot.slane %v11261, 1
    %v12047 = vsel %vm995, %v12046, %v12045
    %v12048 = vsel %vm998, %v11265, %v12047
    %v12049 = vrot.slane %v11269, 7
    %v12050 = vsel %vm1001, %v12049, %v12048
    %v12051 = vrot.slane %v11273, 6
    %v12052 = vsel %vm1004, %v12051, %v12050
    %v12053 = vrot.slane %v11277, 5
    %v12054 = vsel %vm1007, %v12053, %v12052
    %v12055 = vrot.slane %v11281, 4
    %v12056 = vsel %vm1010, %v12055, %v12054
    %v12057 = vrot.slane %v11285, 3
    %v12058 = vsel %vm1013, %v12057, %v12056
    %v12059 = vrot.slane %v11258, 2
    %v12060 = vrot.slane %v11262, 1
    %v12061 = vsel %vm995, %v12060, %v12059
    %v12062 = vsel %vm998, %v11266, %v12061
    %v12063 = vrot.slane %v11270, 7
    %v12064 = vsel %vm1001, %v12063, %v12062
    %v12065 = vrot.slane %v11274, 6
    %v12066 = vsel %vm1004, %v12065, %v12064
    %v12067 = vrot.slane %v11278, 5
    %v12068 = vsel %vm1007, %v12067, %v12066
    %v12069 = vrot.slane %v11282, 4
    %v12070 = vsel %vm1010, %v12069, %v12068
    %v12071 = vrot.slane %v11286, 3
    %v12072 = vsel %vm1013, %v12071, %v12070
    %v12073 = vrot.slane %v11259, 2
    %v12074 = vrot.slane %v11263, 1
    %v12075 = vsel %vm995, %v12074, %v12073
    %v12076 = vsel %vm998, %v11267, %v12075
    %v12077 = vrot.slane %v11271, 7
    %v12078 = vsel %vm1001, %v12077, %v12076
    %v12079 = vrot.slane %v11275, 6
    %v12080 = vsel %vm1004, %v12079, %v12078
    %v12081 = vrot.slane %v11279, 5
    %v12082 = vsel %vm1007, %v12081, %v12080
    %v12083 = vrot.slane %v11283, 4
    %v12084 = vsel %vm1010, %v12083, %v12082
    %v12085 = vrot.slane %v11287, 3
    %v12086 = vsel %vm1013, %v12085, %v12084
    %v12087 = vrot.slane %v11260, 2
    %v12088 = vrot.slane %v11264, 1
    %v12089 = vsel %vm995, %v12088, %v12087
    %v12090 = vsel %vm998, %v11268, %v12089
    %v12091 = vrot.slane %v11272, 7
    %v12092 = vsel %vm1001, %v12091, %v12090
    %v12093 = vrot.slane %v11276, 6
    %v12094 = vsel %vm1004, %v12093, %v12092
    %v12095 = vrot.slane %v11280, 5
    %v12096 = vsel %vm1007, %v12095, %v12094
    %v12097 = vrot.slane %v11284, 4
    %v12098 = vsel %vm1010, %v12097, %v12096
    %v12099 = vrot.slane %v11288, 3
    %v12100 = vsel %vm1013, %v12099, %v12098
    %v12137 = vrot.slane %v11365, 3
    %v12138 = vrot.slane %v11369, 2
    %v12139 = vsel %vm995, %v12138, %v12137
    %v12140 = vrot.slane %v11373, 1
    %v12141 = vsel %vm998, %v12140, %v12139
    %v12142 = vsel %vm1001, %v11377, %v12141
    %v12143 = vrot.slane %v11381, 7
    %v12144 = vsel %vm1004, %v12143, %v12142
    %v12145 = vrot.slane %v11385, 6
    %v12146 = vsel %vm1007, %v12145, %v12144
    %v12147 = vrot.slane %v11389, 5
    %v12148 = vsel %vm1010, %v12147, %v12146
    %v12149 = vrot.slane %v11393, 4
    %v12150 = vsel %vm1013, %v12149, %v12148
    %v12151 = vrot.slane %v11366, 3
    %v12152 = vrot.slane %v11370, 2
    %v12153 = vsel %vm995, %v12152, %v12151
    %v12154 = vrot.slane %v11374, 1
    %v12155 = vsel %vm998, %v12154, %v12153
    %v12156 = vsel %vm1001, %v11378, %v12155
    %v12157 = vrot.slane %v11382, 7
    %v12158 = vsel %vm1004, %v12157, %v12156
    %v12159 = vrot.slane %v11386, 6
    %v12160 = vsel %vm1007, %v12159, %v12158
    %v12161 = vrot.slane %v11390, 5
    %v12162 = vsel %vm1010, %v12161, %v12160
    %v12163 = vrot.slane %v11394, 4
    %v12164 = vsel %vm1013, %v12163, %v12162
    %v12165 = vrot.slane %v11367, 3
    %v12166 = vrot.slane %v11371, 2
    %v12167 = vsel %vm995, %v12166, %v12165
    %v12168 = vrot.slane %v11375, 1
    %v12169 = vsel %vm998, %v12168, %v12167
    %v12170 = vsel %vm1001, %v11379, %v12169
    %v12171 = vrot.slane %v11383, 7
    %v12172 = vsel %vm1004, %v12171, %v12170
    %v12173 = vrot.slane %v11387, 6
    %v12174 = vsel %vm1007, %v12173, %v12172
    %v12175 = vrot.slane %v11391, 5
    %v12176 = vsel %vm1010, %v12175, %v12174
    %v12177 = vrot.slane %v11395, 4
    %v12178 = vsel %vm1013, %v12177, %v12176
    %v12179 = vrot.slane %v11368, 3
    %v12180 = vrot.slane %v11372, 2
    %v12181 = vsel %vm995, %v12180, %v12179
    %v12182 = vrot.slane %v11376, 1
    %v12183 = vsel %vm998, %v12182, %v12181
    %v12184 = vsel %vm1001, %v11380, %v12183
    %v12185 = vrot.slane %v11384, 7
    %v12186 = vsel %vm1004, %v12185, %v12184
    %v12187 = vrot.slane %v11388, 6
    %v12188 = vsel %vm1007, %v12187, %v12186
    %v12189 = vrot.slane %v11392, 5
    %v12190 = vsel %vm1010, %v12189, %v12188
    %v12191 = vrot.slane %v11396, 4
    %v12192 = vsel %vm1013, %v12191, %v12190
    %v12229 = vrot.slane %v11473, 5
    %v12230 = vrot.slane %v11477, 4
    %v12231 = vsel %vm995, %v12230, %v12229
    %v12232 = vrot.slane %v11481, 3
    %v12233 = vsel %vm998, %v12232, %v12231
    %v12234 = vrot.slane %v11485, 2
    %v12235 = vsel %vm1001, %v12234, %v12233
    %v12236 = vrot.slane %v11489, 1
    %v12237 = vsel %vm1004, %v12236, %v12235
    %v12238 = vsel %vm1007, %v11493, %v12237
    %v12239 = vrot.slane %v11497, 7
    %v12240 = vsel %vm1010, %v12239, %v12238
    %v12241 = vrot.slane %v11501, 6
    %v12242 = vsel %vm1013, %v12241, %v12240
    %v12243 = vrot.slane %v11474, 5
    %v12244 = vrot.slane %v11478, 4
    %v12245 = vsel %vm995, %v12244, %v12243
    %v12246 = vrot.slane %v11482, 3
    %v12247 = vsel %vm998, %v12246, %v12245
    %v12248 = vrot.slane %v11486, 2
    %v12249 = vsel %vm1001, %v12248, %v12247
    %v12250 = vrot.slane %v11490, 1
    %v12251 = vsel %vm1004, %v12250, %v12249
    %v12252 = vsel %vm1007, %v11494, %v12251
    %v12253 = vrot.slane %v11498, 7
    %v12254 = vsel %vm1010, %v12253, %v12252
    %v12255 = vrot.slane %v11502, 6
    %v12256 = vsel %vm1013, %v12255, %v12254
    %v12257 = vrot.slane %v11475, 5
    %v12258 = vrot.slane %v11479, 4
    %v12259 = vsel %vm995, %v12258, %v12257
    %v12260 = vrot.slane %v11483, 3
    %v12261 = vsel %vm998, %v12260, %v12259
    %v12262 = vrot.slane %v11487, 2
    %v12263 = vsel %vm1001, %v12262, %v12261
    %v12264 = vrot.slane %v11491, 1
    %v12265 = vsel %vm1004, %v12264, %v12263
    %v12266 = vsel %vm1007, %v11495, %v12265
    %v12267 = vrot.slane %v11499, 7
    %v12268 = vsel %vm1010, %v12267, %v12266
    %v12269 = vrot.slane %v11503, 6
    %v12270 = vsel %vm1013, %v12269, %v12268
    %v12271 = vrot.slane %v11476, 5
    %v12272 = vrot.slane %v11480, 4
    %v12273 = vsel %vm995, %v12272, %v12271
    %v12274 = vrot.slane %v11484, 3
    %v12275 = vsel %vm998, %v12274, %v12273
    %v12276 = vrot.slane %v11488, 2
    %v12277 = vsel %vm1001, %v12276, %v12275
    %v12278 = vrot.slane %v11492, 1
    %v12279 = vsel %vm1004, %v12278, %v12277
    %v12280 = vsel %vm1007, %v11496, %v12279
    %v12281 = vrot.slane %v11500, 7
    %v12282 = vsel %vm1010, %v12281, %v12280
    %v12283 = vrot.slane %v11504, 6
    %v12284 = vsel %vm1013, %v12283, %v12282
    %v12321 = vrot.slane %v11581, 6
    %v12322 = vrot.slane %v11585, 5
    %v12323 = vsel %vm995, %v12322, %v12321
    %v12324 = vrot.slane %v11589, 4
    %v12325 = vsel %vm998, %v12324, %v12323
    %v12326 = vrot.slane %v11593, 3
    %v12327 = vsel %vm1001, %v12326, %v12325
    %v12328 = vrot.slane %v11597, 2
    %v12329 = vsel %vm1004, %v12328, %v12327
    %v12330 = vrot.slane %v11601, 1
    %v12331 = vsel %vm1007, %v12330, %v12329
    %v12332 = vsel %vm1010, %v11605, %v12331
    %v12333 = vrot.slane %v11609, 7
    %v12334 = vsel %vm1013, %v12333, %v12332
    %v12335 = vrot.slane %v11582, 6
    %v12336 = vrot.slane %v11586, 5
    %v12337 = vsel %vm995, %v12336, %v12335
    %v12338 = vrot.slane %v11590, 4
    %v12339 = vsel %vm998, %v12338, %v12337
    %v12340 = vrot.slane %v11594, 3
    %v12341 = vsel %vm1001, %v12340, %v12339
    %v12342 = vrot.slane %v11598, 2
    %v12343 = vsel %vm1004, %v12342, %v12341
    %v12344 = vrot.slane %v11602, 1
    %v12345 = vsel %vm1007, %v12344, %v12343
    %v12346 = vsel %vm1010, %v11606, %v12345
    %v12347 = vrot.slane %v11610, 7
    %v12348 = vsel %vm1013, %v12347, %v12346
    %v12349 = vrot.slane %v11583, 6
    %v12350 = vrot.slane %v11587, 5
    %v12351 = vsel %vm995, %v12350, %v12349
    %v12352 = vrot.slane %v11591, 4
    %v12353 = vsel %vm998, %v12352, %v12351
    %v12354 = vrot.slane %v11595, 3
    %v12355 = vsel %vm1001, %v12354, %v12353
    %v12356 = vrot.slane %v11599, 2
    %v12357 = vsel %vm1004, %v12356, %v12355
    %v12358 = vrot.slane %v11603, 1
    %v12359 = vsel %vm1007, %v12358, %v12357
    %v12360 = vsel %vm1010, %v11607, %v12359
    %v12361 = vrot.slane %v11611, 7
    %v12362 = vsel %vm1013, %v12361, %v12360
    %v12363 = vrot.slane %v11584, 6
    %v12364 = vrot.slane %v11588, 5
    %v12365 = vsel %vm995, %v12364, %v12363
    %v12366 = vrot.slane %v11592, 4
    %v12367 = vsel %vm998, %v12366, %v12365
    %v12368 = vrot.slane %v11596, 3
    %v12369 = vsel %vm1001, %v12368, %v12367
    %v12370 = vrot.slane %v11600, 2
    %v12371 = vsel %vm1004, %v12370, %v12369
    %v12372 = vrot.slane %v11604, 1
    %v12373 = vsel %vm1007, %v12372, %v12371
    %v12374 = vsel %vm1010, %v11608, %v12373
    %v12375 = vrot.slane %v11612, 7
    %v12376 = vsel %vm1013, %v12375, %v12374
    %v12413 = vrot.slane %v11689, 7
    %v12414 = vrot.slane %v11693, 6
    %v12415 = vsel %vm995, %v12414, %v12413
    %v12416 = vrot.slane %v11697, 5
    %v12417 = vsel %vm998, %v12416, %v12415
    %v12418 = vrot.slane %v11701, 4
    %v12419 = vsel %vm1001, %v12418, %v12417
    %v12420 = vrot.slane %v11705, 3
    %v12421 = vsel %vm1004, %v12420, %v12419
    %v12422 = vrot.slane %v11709, 2
    %v12423 = vsel %vm1007, %v12422, %v12421
    %v12424 = vrot.slane %v11713, 1
    %v12425 = vsel %vm1010, %v12424, %v12423
    %v12426 = vsel %vm1013, %v11717, %v12425
    %v12427 = vrot.slane %v11690, 7
    %v12428 = vrot.slane %v11694, 6
    %v12429 = vsel %vm995, %v12428, %v12427
    %v12430 = vrot.slane %v11698, 5
    %v12431 = vsel %vm998, %v12430, %v12429
    %v12432 = vrot.slane %v11702, 4
    %v12433 = vsel %vm1001, %v12432, %v12431
    %v12434 = vrot.slane %v11706, 3
    %v12435 = vsel %vm1004, %v12434, %v12433
    %v12436 = vrot.slane %v11710, 2
    %v12437 = vsel %vm1007, %v12436, %v12435
    %v12438 = vrot.slane %v11714, 1
    %v12439 = vsel %vm1010, %v12438, %v12437
    %v12440 = vsel %vm1013, %v11718, %v12439
    %v12441 = vrot.slane %v11691, 7
    %v12442 = vrot.slane %v11695, 6
    %v12443 = vsel %vm995, %v12442, %v12441
    %v12444 = vrot.slane %v11699, 5
    %v12445 = vsel %vm998, %v12444, %v12443
    %v12446 = vrot.slane %v11703, 4
    %v12447 = vsel %vm1001, %v12446, %v12445
    %v12448 = vrot.slane %v11707, 3
    %v12449 = vsel %vm1004, %v12448, %v12447
    %v12450 = vrot.slane %v11711, 2
    %v12451 = vsel %vm1007, %v12450, %v12449
    %v12452 = vrot.slane %v11715, 1
    %v12453 = vsel %vm1010, %v12452, %v12451
    %v12454 = vsel %vm1013, %v11719, %v12453
    %v12455 = vrot.slane %v11692, 7
    %v12456 = vrot.slane %v11696, 6
    %v12457 = vsel %vm995, %v12456, %v12455
    %v12458 = vrot.slane %v11700, 5
    %v12459 = vsel %vm998, %v12458, %v12457
    %v12460 = vrot.slane %v11704, 4
    %v12461 = vsel %vm1001, %v12460, %v12459
    %v12462 = vrot.slane %v11708, 3
    %v12463 = vsel %vm1004, %v12462, %v12461
    %v12464 = vrot.slane %v11712, 2
    %v12465 = vsel %vm1007, %v12464, %v12463
    %v12466 = vrot.slane %v11716, 1
    %v12467 = vsel %vm1010, %v12466, %v12465
    %v12468 = vsel %vm1013, %v11720, %v12467
    %v12505 = vrot.slane %v11801, 7
    %v12506 = vsel %vm995, %v12505, %v11797
    %v12507 = vrot.slane %v11805, 6
    %v12508 = vsel %vm998, %v12507, %v12506
    %v12509 = vrot.slane %v11809, 5
    %v12510 = vsel %vm1001, %v12509, %v12508
    %v12511 = vrot.slane %v11813, 4
    %v12512 = vsel %vm1004, %v12511, %v12510
    %v12513 = vrot.slane %v11817, 3
    %v12514 = vsel %vm1007, %v12513, %v12512
    %v12515 = vrot.slane %v11821, 2
    %v12516 = vsel %vm1010, %v12515, %v12514
    %v12517 = vrot.slane %v11825, 1
    %v12518 = vsel %vm1013, %v12517, %v12516
    %v12519 = vrot.slane %v11802, 7
    %v12520 = vsel %vm995, %v12519, %v11798
    %v12521 = vrot.slane %v11806, 6
    %v12522 = vsel %vm998, %v12521, %v12520
    %v12523 = vrot.slane %v11810, 5
    %v12524 = vsel %vm1001, %v12523, %v12522
    %v12525 = vrot.slane %v11814, 4
    %v12526 = vsel %vm1004, %v12525, %v12524
    %v12527 = vrot.slane %v11818, 3
    %v12528 = vsel %vm1007, %v12527, %v12526
    %v12529 = vrot.slane %v11822, 2
    %v12530 = vsel %vm1010, %v12529, %v12528
    %v12531 = vrot.slane %v11826, 1
    %v12532 = vsel %vm1013, %v12531, %v12530
    %v12533 = vrot.slane %v11803, 7
    %v12534 = vsel %vm995, %v12533, %v11799
    %v12535 = vrot.slane %v11807, 6
    %v12536 = vsel %vm998, %v12535, %v12534
    %v12537 = vrot.slane %v11811, 5
    %v12538 = vsel %vm1001, %v12537, %v12536
    %v12539 = vrot.slane %v11815, 4
    %v12540 = vsel %vm1004, %v12539, %v12538
    %v12541 = vrot.slane %v11819, 3
    %v12542 = vsel %vm1007, %v12541, %v12540
    %v12543 = vrot.slane %v11823, 2
    %v12544 = vsel %vm1010, %v12543, %v12542
    %v12545 = vrot.slane %v11827, 1
    %v12546 = vsel %vm1013, %v12545, %v12544
    %v12547 = vrot.slane %v11804, 7
    %v12548 = vsel %vm995, %v12547, %v11800
    %v12549 = vrot.slane %v11808, 6
    %v12550 = vsel %vm998, %v12549, %v12548
    %v12551 = vrot.slane %v11812, 5
    %v12552 = vsel %vm1001, %v12551, %v12550
    %v12553 = vrot.slane %v11816, 4
    %v12554 = vsel %vm1004, %v12553, %v12552
    %v12555 = vrot.slane %v11820, 3
    %v12556 = vsel %vm1007, %v12555, %v12554
    %v12557 = vrot.slane %v11824, 2
    %v12558 = vsel %vm1010, %v12557, %v12556
    %v12559 = vrot.slane %v11828, 1
    %v12560 = vsel %vm1013, %v12559, %v12558
    %v12566 = vsel %vm1710, %v10963, 0
    %v12569 = vsel %vm1710, %v10964, 0
    %12571 = vmatprep.subr.mxu0 0.0
    %12572 = vmatpush1.msra.mxu0 0.0
    %12573 = vmatprep.subr.mxu0 0.0
    %12574 = vmatpush1.msra.mxu0 0.0
    %12575 = vmatprep.subr.mxu0 0.0
    %12576 = vmatpush1.msra.mxu0 0.0
    %12577 = vmatprep.subr.mxu0 0.0
    %12578 = vmatpush1.msra.mxu0 0.0
    %12579 = vmatprep.subr.mxu0 0.0
    %12580 = vmatpush1.msra.mxu0 0.0
    %12581 = vmatprep.subr.mxu0 0.0
    %12582 = vmatpush1.msra.mxu0 0.0
    %12583 = vmatprep.subr.mxu0 0.0
    %12584 = vmatpush1.msra.mxu0 0.0
    %12585 = vmatprep.subr.mxu0 %v12532
    %12586 = vmatpush1.msra.mxu0 %v12518
    %12587 = vmatprep.subr.mxu0 %v12440
    %12588 = vmatpush1.msra.mxu0 %v12426
    %12589 = vmatprep.subr.mxu0 %v12348
    %12590 = vmatpush1.msra.mxu0 %v12334
    %12591 = vmatprep.subr.mxu0 %v12256
    %12592 = vmatpush1.msra.mxu0 %v12242
    %12593 = vmatprep.subr.mxu0 %v7130
    %12594 = vmatpush1.msra.mxu0 %v7129
    %12595 = vmatprep.subr.mxu0 %v12164
    %12596 = vmatpush1.msra.mxu0 %v12150
    %12597 = vmatprep.subr.mxu0 %v12072
    %12598 = vmatpush1.msra.mxu0 %v12058
    %12599 = vmatprep.subr.mxu0 %v11980
    %12600 = vmatpush1.msra.mxu0 %v11966
    %12601 = vmatprep.subr.mxu0 %v11888
    %12602 = vmatpush1.msra.mxu0 %v11874
    %12603 = vmatprep.subr.mxu0 0.0
    %12604 = vmatpush2.msra.mxu0 0.0
    %12605 = vmatprep.subr.mxu0 0.0
    %12606 = vmatpush2.msra.mxu0 0.0
    %12607 = vmatprep.subr.mxu0 0.0
    %12608 = vmatpush2.msra.mxu0 0.0
    %12609 = vmatprep.subr.mxu0 0.0
    %12610 = vmatpush2.msra.mxu0 0.0
    %12611 = vmatprep.subr.mxu0 0.0
    %12612 = vmatpush2.msra.mxu0 0.0
    %12613 = vmatprep.subr.mxu0 0.0
    %12614 = vmatpush2.msra.mxu0 0.0
    %12615 = vmatprep.subr.mxu0 0.0
    %12616 = vmatpush2.msra.mxu0 0.0
    %12617 = vmatprep.subr.mxu0 0.0
    %12618 = vmatpush2.msra.mxu0 0.0
    %12619 = vmatprep.subr.mxu0 0.0
    %12620 = vmatpush2.msra.mxu0 0.0
    %12621 = vmatprep.subr.mxu0 0.0
    %12622 = vmatpush2.msra.mxu0 0.0
    %12623 = vmatprep.subr.mxu0 0.0
    %12624 = vmatpush2.msra.mxu0 0.0
    %12625 = vmatprep.subr.mxu0 0.0
    %12626 = vmatpush2.msra.mxu0 0.0
    %12627 = vmatprep.subr.mxu0 0.0
    %12628 = vmatpush2.msra.mxu0 0.0
    %12629 = vmatprep.subr.mxu0 0.0
    %12630 = vmatpush2.msra.mxu0 0.0
    %12631 = vmatprep.subr.mxu0 0.0
    %12632 = vmatpush2.msra.mxu0 0.0
    %12633 = vmatprep.subr.mxu0 0.0
    %12634 = vmatpush2.msra.mxu0 0.0
    %12635 = vmatprep.mubr.f32.mxu0 0.0
    %12636 = vmatmul.mubr.f32.gmra.mxu0 %v12566
    %v12637 = vpop.f32.mrf.mxu0
    %v12638 = vadd.f32 0.0, %v12637
    %v12639 = vpop.f32.mrf.mxu0
    %v12640 = vadd.f32 0.0, %v12639
    %12641 = vmatprep.mubr.f32.mxu0 0.0
    %12642 = vmatmul.mubr.f32.gmra.mxu0 %v12569
    %v12643 = vpop.f32.mrf.mxu0
    %v12644 = vadd.f32 0.0, %v12643
    %v12645 = vpop.f32.mrf.mxu0
    %v12646 = vadd.f32 0.0, %v12645
    %12647 = vdwg.mxu0
    %12648 = vmatprep.subr.mxu0 0.0
    %12649 = vmatpush1.msra.mxu0 0.0
    %12650 = vmatprep.subr.mxu0 0.0
    %12651 = vmatpush1.msra.mxu0 0.0
    %12652 = vmatprep.subr.mxu0 0.0
    %12653 = vmatpush1.msra.mxu0 0.0
    %12654 = vmatprep.subr.mxu0 0.0
    %12655 = vmatpush1.msra.mxu0 0.0
    %12656 = vmatprep.subr.mxu0 0.0
    %12657 = vmatpush1.msra.mxu0 0.0
    %12658 = vmatprep.subr.mxu0 0.0
    %12659 = vmatpush1.msra.mxu0 0.0
    %12660 = vmatprep.subr.mxu0 0.0
    %12661 = vmatpush1.msra.mxu0 0.0
    %12662 = vmatprep.subr.mxu0 %v12560
    %12663 = vmatpush1.msra.mxu0 %v12546
    %12664 = vmatprep.subr.mxu0 %v12468
    %12665 = vmatpush1.msra.mxu0 %v12454
    %12666 = vmatprep.subr.mxu0 %v12376
    %12667 = vmatpush1.msra.mxu0 %v12362
    %12668 = vmatprep.subr.mxu0 %v12284
    %12669 = vmatpush1.msra.mxu0 %v12270
    %12670 = vmatprep.subr.mxu0 %v7132
    %12671 = vmatpush1.msra.mxu0 %v7131
    %12672 = vmatprep.subr.mxu0 %v12192
    %12673 = vmatpush1.msra.mxu0 %v12178
    %12674 = vmatprep.subr.mxu0 %v12100
    %12675 = vmatpush1.msra.mxu0 %v12086
    %12676 = vmatprep.subr.mxu0 %v12008
    %12677 = vmatpush1.msra.mxu0 %v11994
    %12678 = vmatprep.subr.mxu0 %v11916
    %12679 = vmatpush1.msra.mxu0 %v11902
    %12680 = vmatprep.subr.mxu0 0.0
    %12681 = vmatpush2.msra.mxu0 0.0
    %12682 = vmatprep.subr.mxu0 0.0
    %12683 = vmatpush2.msra.mxu0 0.0
    %12684 = vmatprep.subr.mxu0 0.0
    %12685 = vmatpush2.msra.mxu0 0.0
    %12686 = vmatprep.subr.mxu0 0.0
    %12687 = vmatpush2.msra.mxu0 0.0
    %12688 = vmatprep.subr.mxu0 0.0
    %12689 = vmatpush2.msra.mxu0 0.0
    %12690 = vmatprep.subr.mxu0 0.0
    %12691 = vmatpush2.msra.mxu0 0.0
    %12692 = vmatprep.subr.mxu0 0.0
    %12693 = vmatpush2.msra.mxu0 0.0
    %12694 = vmatprep.subr.mxu0 0.0
    %12695 = vmatpush2.msra.mxu0 0.0
    %12696 = vmatprep.subr.mxu0 0.0
    %12697 = vmatpush2.msra.mxu0 0.0
    %12698 = vmatprep.subr.mxu0 0.0
    %12699 = vmatpush2.msra.mxu0 0.0
    %12700 = vmatprep.subr.mxu0 0.0
    %12701 = vmatpush2.msra.mxu0 0.0
    %12702 = vmatprep.subr.mxu0 0.0
    %12703 = vmatpush2.msra.mxu0 0.0
    %12704 = vmatprep.subr.mxu0 0.0
    %12705 = vmatpush2.msra.mxu0 0.0
    %12706 = vmatprep.subr.mxu0 0.0
    %12707 = vmatpush2.msra.mxu0 0.0
    %12708 = vmatprep.subr.mxu0 0.0
    %12709 = vmatpush2.msra.mxu0 0.0
    %12710 = vmatprep.subr.mxu0 0.0
    %12711 = vmatpush2.msra.mxu0 0.0
    %12712 = vmatprep.mubr.f32.mxu0 0.0
    %12713 = vmatmul.mubr.f32.gmra.mxu0 %v12566
    %v12714 = vpop.f32.mrf.mxu0
    %v12715 = vadd.f32 0.0, %v12714
    %v12716 = vpop.f32.mrf.mxu0
    %v12717 = vadd.f32 0.0, %v12716
    %12718 = vmatprep.mubr.f32.mxu0 0.0
    %12719 = vmatmul.mubr.f32.gmra.mxu0 %v12569
    %v12720 = vpop.f32.mrf.mxu0
    %v12721 = vadd.f32 0.0, %v12720
    %v12722 = vpop.f32.mrf.mxu0
    %v12723 = vadd.f32 0.0, %v12722
    %12724 = vdwg.mxu0
    %v12725 = vld [vmem:[#allocation2] sm:$0xff]
    %v12726 = vld [vmem:[#allocation2 + $0x8] sm:$0xff]
    %v12727 = vld [vmem:[#allocation2 + $0x10] sm:$0xff]
    %v12728 = vld [vmem:[#allocation2 + $0x18] sm:$0xff]
    %v12729 = vld [vmem:[#allocation2 + $0x20] sm:$0xff]
    %v12730 = vld [vmem:[#allocation2 + $0x28] sm:$0xff]
    %v12731 = vld [vmem:[#allocation2 + $0x30] sm:$0xff]
    %v12732 = vld [vmem:[#allocation2 + $0x38] sm:$0xff]
    %v12733 = vld [vmem:[#allocation2 + $0x40] sm:$0xff]
    %v12734 = vld [vmem:[#allocation2 + $0x48] sm:$0xff]
    %v12735 = vld [vmem:[#allocation2 + $0x50] sm:$0xff]
    %v12736 = vld [vmem:[#allocation2 + $0x58] sm:$0xff]
    %v12737 = vld [vmem:[#allocation2 + $0x60] sm:$0xff]
    %v12738 = vld [vmem:[#allocation2 + $0x68] sm:$0xff]
    %v12739 = vld [vmem:[#allocation2 + $0x70] sm:$0xff]
    %v12740 = vld [vmem:[#allocation2 + $0x78] sm:$0xff]
    %v12741 = vld [vmem:[#allocation2 + $0x80] sm:$0xff]
    %v12742 = vld [vmem:[#allocation2 + $0x88] sm:$0xff]
    %v12743 = vld [vmem:[#allocation2 + $0x90] sm:$0xff]
    %v12744 = vld [vmem:[#allocation2 + $0x98] sm:$0xff]
    %v12745 = vld [vmem:[#allocation2 + $0xa0] sm:$0xff]
    %v12746 = vld [vmem:[#allocation2 + $0xa8] sm:$0xff]
    %v12747 = vld [vmem:[#allocation2 + $0xb0] sm:$0xff]
    %v12748 = vld [vmem:[#allocation2 + $0xb8] sm:$0xff]
    %v12749 = vld [vmem:[#allocation2 + $0xc0] sm:$0xff]
    %v12750 = vld [vmem:[#allocation2 + $0xc8] sm:$0xff]
    %v12751 = vld [vmem:[#allocation2 + $0xd0] sm:$0xff]
    %v12752 = vld [vmem:[#allocation2 + $0xd8] sm:$0xff]
    %v12753 = vld [vmem:[#allocation2 + $0xe0] sm:$0xff]
    %v12754 = vld [vmem:[#allocation2 + $0xe8] sm:$0xff]
    %v12755 = vld [vmem:[#allocation2 + $0xf0] sm:$0xff]
    %v12756 = vld [vmem:[#allocation2 + $0xf8] sm:$0xff]
    %v12757 = vld [vmem:[#allocation2 + $0x100] sm:$0xff]
    %v12758 = vld [vmem:[#allocation2 + $0x108] sm:$0xff]
    %v12759 = vld [vmem:[#allocation2 + $0x110] sm:$0xff]
    %v12760 = vld [vmem:[#allocation2 + $0x118] sm:$0xff]
    %v12761 = vld [vmem:[#allocation2 + $0x120] sm:$0xff]
    %v12762 = vld [vmem:[#allocation2 + $0x128] sm:$0xff]
    %v12763 = vld [vmem:[#allocation2 + $0x130] sm:$0xff]
    %v12764 = vld [vmem:[#allocation2 + $0x138] sm:$0xff]
    %v12765 = vld [vmem:[#allocation2 + $0x140] sm:$0xff]
    %v12766 = vld [vmem:[#allocation2 + $0x148] sm:$0xff]
    %v12767 = vld [vmem:[#allocation2 + $0x150] sm:$0xff]
    %v12768 = vld [vmem:[#allocation2 + $0x158] sm:$0xff]
    %v12769 = vld [vmem:[#allocation2 + $0x160] sm:$0xff]
    %v12770 = vld [vmem:[#allocation2 + $0x168] sm:$0xff]
    %v12771 = vld [vmem:[#allocation2 + $0x170] sm:$0xff]
    %v12772 = vld [vmem:[#allocation2 + $0x178] sm:$0xff]
    %v12773 = vld [vmem:[#allocation2 + $0x180] sm:$0xff]
    %v12774 = vld [vmem:[#allocation2 + $0x188] sm:$0xff]
    %v12775 = vld [vmem:[#allocation2 + $0x190] sm:$0xff]
    %v12776 = vld [vmem:[#allocation2 + $0x198] sm:$0xff]
    %v12777 = vld [vmem:[#allocation2 + $0x1a0] sm:$0xff]
    %v12778 = vld [vmem:[#allocation2 + $0x1a8] sm:$0xff]
    %v12779 = vld [vmem:[#allocation2 + $0x1b0] sm:$0xff]
    %v12780 = vld [vmem:[#allocation2 + $0x1b8] sm:$0xff]
    %v12781 = vld [vmem:[#allocation2 + $0x1c0] sm:$0xff]
    %v12782 = vld [vmem:[#allocation2 + $0x1c8] sm:$0xff]
    %v12783 = vld [vmem:[#allocation2 + $0x1d0] sm:$0xff]
    %v12784 = vld [vmem:[#allocation2 + $0x1d8] sm:$0xff]
    %v12785 = vld [vmem:[#allocation2 + $0x1e0] sm:$0xff]
    %v12786 = vld [vmem:[#allocation2 + $0x1e8] sm:$0xff]
    %v12787 = vld [vmem:[#allocation2 + $0x1f0] sm:$0xff]
    %v12788 = vld [vmem:[#allocation2 + $0x1f8] sm:$0xff]
    %12789 = vset.pattern.permute.xlu0 9
    %12790 = vperm.xlu0 %12789, %v45
    %v12791 = vpop.permute.xlu0 %12790
    %12793 = vset.pattern.permute.xlu0 9
    %12794 = vperm.xlu0 %12793, %v46
    %v12795 = vpop.permute.xlu0 %12794
    %12797 = vmatprep.subr.mxu0 0.0
    %12798 = vmatpush1.msra.mxu0 %v12740
    %12799 = vmatprep.subr.mxu0 0.0
    %12800 = vmatpush1.msra.mxu0 %v12739
    %12801 = vmatprep.subr.mxu0 0.0
    %12802 = vmatpush1.msra.mxu0 %v12738
    %12803 = vmatprep.subr.mxu0 0.0
    %12804 = vmatpush1.msra.mxu0 %v12737
    %12805 = vmatprep.subr.mxu0 0.0
    %12806 = vmatpush1.msra.mxu0 %v12736
    %12807 = vmatprep.subr.mxu0 0.0
    %12808 = vmatpush1.msra.mxu0 %v12735
    %12809 = vmatprep.subr.mxu0 0.0
    %12810 = vmatpush1.msra.mxu0 %v12734
    %12811 = vmatprep.subr.mxu0 0.0
    %12812 = vmatpush1.msra.mxu0 %v12733
    %12813 = vmatprep.subr.mxu0 0.0
    %12814 = vmatpush1.msra.mxu0 %v12732
    %12815 = vmatprep.subr.mxu0 0.0
    %12816 = vmatpush1.msra.mxu0 %v12731
    %12817 = vmatprep.subr.mxu0 0.0
    %12818 = vmatpush1.msra.mxu0 %v12730
    %12819 = vmatprep.subr.mxu0 0.0
    %12820 = vmatpush1.msra.mxu0 %v12729
    %12821 = vmatprep.subr.mxu0 0.0
    %12822 = vmatpush1.msra.mxu0 %v12728
    %12823 = vmatprep.subr.mxu0 0.0
    %12824 = vmatpush1.msra.mxu0 %v12727
    %12825 = vmatprep.subr.mxu0 0.0
    %12826 = vmatpush1.msra.mxu0 %v12726
    %12827 = vmatprep.subr.mxu0 0.0
    %12828 = vmatpush1.msra.mxu0 %v12725
    %12829 = vmatprep.subr.mxu0 0.0
    %12830 = vmatpush2.msra.mxu0 %v12756
    %12831 = vmatprep.subr.mxu0 0.0
    %12832 = vmatpush2.msra.mxu0 %v12755
    %12833 = vmatprep.subr.mxu0 0.0
    %12834 = vmatpush2.msra.mxu0 %v12754
    %12835 = vmatprep.subr.mxu0 0.0
    %12836 = vmatpush2.msra.mxu0 %v12753
    %12837 = vmatprep.subr.mxu0 0.0
    %12838 = vmatpush2.msra.mxu0 %v12752
    %12839 = vmatprep.subr.mxu0 0.0
    %12840 = vmatpush2.msra.mxu0 %v12751
    %12841 = vmatprep.subr.mxu0 0.0
    %12842 = vmatpush2.msra.mxu0 %v12750
    %12843 = vmatprep.subr.mxu0 0.0
    %12844 = vmatpush2.msra.mxu0 %v12749
    %12845 = vmatprep.subr.mxu0 0.0
    %12846 = vmatpush2.msra.mxu0 %v12748
    %12847 = vmatprep.subr.mxu0 0.0
    %12848 = vmatpush2.msra.mxu0 %v12747
    %12849 = vmatprep.subr.mxu0 0.0
    %12850 = vmatpush2.msra.mxu0 %v12746
    %12851 = vmatprep.subr.mxu0 0.0
    %12852 = vmatpush2.msra.mxu0 %v12745
    %12853 = vmatprep.subr.mxu0 0.0
    %12854 = vmatpush2.msra.mxu0 %v12744
    %12855 = vmatprep.subr.mxu0 0.0
    %12856 = vmatpush2.msra.mxu0 %v12743
    %12857 = vmatprep.subr.mxu0 0.0
    %12858 = vmatpush2.msra.mxu0 %v12742
    %12859 = vmatprep.subr.mxu0 0.0
    %12860 = vmatpush2.msra.mxu0 %v12741
    %12861 = vmatprep.mubr.f32.mxu0 %v12640
    %12862 = vmatmul.mubr.f32.gmra.mxu0 %v12638
    %v12863 = vpop.f32.mrf.mxu0
    %v12864 = vadd.f32 %v12791, %v12863
    %v12865 = vpop.f32.mrf.mxu0
    %12866 = vmatprep.mubr.f32.mxu0 %v12646
    %12867 = vmatmul.mubr.f32.gmra.mxu0 %v12644
    %v12868 = vpop.f32.mrf.mxu0
    %v12869 = vadd.f32 %v12795, %v12868
    %v12870 = vpop.f32.mrf.mxu0
    %12871 = vdwg.mxu0
    %12872 = vmatprep.subr.mxu0 0.0
    %12873 = vmatpush1.msra.mxu0 %v12772
    %12874 = vmatprep.subr.mxu0 0.0
    %12875 = vmatpush1.msra.mxu0 %v12771
    %12876 = vmatprep.subr.mxu0 0.0
    %12877 = vmatpush1.msra.mxu0 %v12770
    %12878 = vmatprep.subr.mxu0 0.0
    %12879 = vmatpush1.msra.mxu0 %v12769
    %12880 = vmatprep.subr.mxu0 0.0
    %12881 = vmatpush1.msra.mxu0 %v12768
    %12882 = vmatprep.subr.mxu0 0.0
    %12883 = vmatpush1.msra.mxu0 %v12767
    %12884 = vmatprep.subr.mxu0 0.0
    %12885 = vmatpush1.msra.mxu0 %v12766
    %12886 = vmatprep.subr.mxu0 0.0
    %12887 = vmatpush1.msra.mxu0 %v12765
    %12888 = vmatprep.subr.mxu0 0.0
    %12889 = vmatpush1.msra.mxu0 %v12764
    %12890 = vmatprep.subr.mxu0 0.0
    %12891 = vmatpush1.msra.mxu0 %v12763
    %12892 = vmatprep.subr.mxu0 0.0
    %12893 = vmatpush1.msra.mxu0 %v12762
    %12894 = vmatprep.subr.mxu0 0.0
    %12895 = vmatpush1.msra.mxu0 %v12761
    %12896 = vmatprep.subr.mxu0 0.0
    %12897 = vmatpush1.msra.mxu0 %v12760
    %12898 = vmatprep.subr.mxu0 0.0
    %12899 = vmatpush1.msra.mxu0 %v12759
    %12900 = vmatprep.subr.mxu0 0.0
    %12901 = vmatpush1.msra.mxu0 %v12758
    %12902 = vmatprep.subr.mxu0 0.0
    %12903 = vmatpush1.msra.mxu0 %v12757
    %12904 = vmatprep.subr.mxu0 0.0
    %12905 = vmatpush2.msra.mxu0 %v12788
    %12906 = vmatprep.subr.mxu0 0.0
    %12907 = vmatpush2.msra.mxu0 %v12787
    %12908 = vmatprep.subr.mxu0 0.0
    %12909 = vmatpush2.msra.mxu0 %v12786
    %12910 = vmatprep.subr.mxu0 0.0
    %12911 = vmatpush2.msra.mxu0 %v12785
    %12912 = vmatprep.subr.mxu0 0.0
    %12913 = vmatpush2.msra.mxu0 %v12784
    %12914 = vmatprep.subr.mxu0 0.0
    %12915 = vmatpush2.msra.mxu0 %v12783
    %12916 = vmatprep.subr.mxu0 0.0
    %12917 = vmatpush2.msra.mxu0 %v12782
    %12918 = vmatprep.subr.mxu0 0.0
    %12919 = vmatpush2.msra.mxu0 %v12781
    %12920 = vmatprep.subr.mxu0 0.0
    %12921 = vmatpush2.msra.mxu0 %v12780
    %12922 = vmatprep.subr.mxu0 0.0
    %12923 = vmatpush2.msra.mxu0 %v12779
    %12924 = vmatprep.subr.mxu0 0.0
    %12925 = vmatpush2.msra.mxu0 %v12778
    %12926 = vmatprep.subr.mxu0 0.0
    %12927 = vmatpush2.msra.mxu0 %v12777
    %12928 = vmatprep.subr.mxu0 0.0
    %12929 = vmatpush2.msra.mxu0 %v12776
    %12930 = vmatprep.subr.mxu0 0.0
    %12931 = vmatpush2.msra.mxu0 %v12775
    %12932 = vmatprep.subr.mxu0 0.0
    %12933 = vmatpush2.msra.mxu0 %v12774
    %12934 = vmatprep.subr.mxu0 0.0
    %12935 = vmatpush2.msra.mxu0 %v12773
    %12936 = vmatprep.mubr.f32.mxu0 %v12717
    %12937 = vmatmul.mubr.f32.gmra.mxu0 %v12715
    %v12938 = vpop.f32.mrf.mxu0
    %v12939 = vadd.f32 %v12864, %v12938
    %v12940 = vpop.f32.mrf.mxu0
    %12941 = vmatprep.mubr.f32.mxu0 %v12723
    %12942 = vmatmul.mubr.f32.gmra.mxu0 %v12721
    %v12943 = vpop.f32.mrf.mxu0
    %v12944 = vadd.f32 %v12869, %v12943
    %v12945 = vpop.f32.mrf.mxu0
    %12946 = vdwg.mxu0
    %v12947 = vadd.f32 %v10663, %v12939
    %v12948 = vadd.f32 %v10664, %v12944
    %v12949 = vmax.f32 %v12947, 0.0
    %v12950 = vmax.f32 %v12948, 0.0
    %12951 = vst [vmem:[%s9] sm:$0xff] %v12949
    %12952 = vst [vmem:[%s9 + $0x8] sm:$0xff] %v12950
    // Predicated region
    $region38: #{run.1} parent=1 // pred_check
      _
    $region39: #{run.1} parent=1 // pred_check_branch
      %12954 = sbr.rel (0) target = $region41
    $region40: #{run.1} parent=1 // pred_region
      _
    $region41: #{run.1} parent=1 // pred_fallthru
      _
    // Predicated region
    $region42: #{run.1} parent=1 // pred_check
      _
    $region43: #{run.1} parent=1 // pred_check_branch
      %12956 = sbr.rel (0) target = $region45
    $region44: #{run.1} parent=1 // pred_region
      _
    $region45: #{run.1} parent=1 // pred_fallthru
      _
    // Predicated region
    $region46: #{run.1} parent=1 // pred_check
      _
    $region47: #{run.1} parent=1 // pred_check_branch
      %12958 = sbr.rel (0) target = $region49
    $region48: #{run.1} parent=1 // pred_region
      _
    $region49: #{run.1} parent=1 // pred_fallthru
      _
    // Predicated region
    $region50: #{run.1} parent=1 // pred_check
      _
    $region51: #{run.1} parent=1 // pred_check_branch
      %12960 = sbr.rel (0) target = $region53
    $region52: #{run.1} parent=1 // pred_region
      _
    $region53: #{run.1} parent=1 // pred_fallthru
      _
    %12961 = vsyncpa [#allocation3], 1

</llo_original>
